<compile_context>
chip_gen: v7x
topology: tpu7x:2x2x1
jax: 0.10.0
libtpu: 0.0.40
codegen_flags: <defaults>
</compile_context>

<pallas_src>
import jax
import jax.numpy as jnp
from jax.experimental import pallas as pl
from jax.experimental.pallas import tpu as pltpu


CPAD = 128   # lane-padded channel count (conv1: 48->128, conv2: 96->128, logits: 10->128)
K1 = 128     # conv1 im2col contraction: 9 taps * 3 channels = 27 real, lane-padded


# ---------------------------------------------------------------------------
# Fused kernel: conv1(3x3)+ReLU+pool2  ->  conv2(3x3)+ReLU+pool2, per batch tile
# ---------------------------------------------------------------------------
def _conv_block_kernel(xpat_ref, w1_ref, b1_ref, w2_ref, b2_ref, o_ref, ebuf, obuf):
    # xpat_ref: (B, 1024, 128) bf16  conv1 im2col patches; row = ((r*32 + h)*8 + q),
    #           output column w = 4*q + r; lane = (dy*3+dx)*3 + cin (27 real).
    # w1_ref:   (128, 128) bf16      rows match xpat lanes, cols = cout (48 real)
    # b1_ref:   (1, 128)  f32
    # w2_ref:   (1152, 128) bf16     rows = (dy*3+dx)*128 + cin, cols = cout (96 real)
    # b2_ref:   (1, 128)  f32
    # o_ref:    (B, 8, 8, 128) bf16  pooled conv2 output (batch, row, col, channel)
    # ebuf/obuf: VMEM (B, 18, 9, 128) bf16 scratch: conv1 pooled output, spatially
    #           zero-padded and split into even / odd padded columns for conv2.
    B = xpat_ref.shape[0]

    # ---- conv1: one MXU GEMM over all taps / residues / rows ----------------
    x = xpat_ref[...].reshape(B * 1024, K1)
    y1 = jnp.dot(x, w1_ref[...], preferred_element_type=jnp.float32)
    y1 = y1.reshape(B, 4, 32, 8, CPAD)            # (batch, r, h, q, c); col = 4q + r

    # 2x2/stride-2 max-pool (bias + ReLU after the pool is exact by monotonicity).
    pe = jnp.maximum(y1[:, 0], y1[:, 1])          # W-pool, even pooled cols (B,32,8,C)
    po = jnp.maximum(y1[:, 2], y1[:, 3])          # W-pool, odd pooled cols
    pe = pe.reshape(B, 16, 2, 8, CPAD)
    pe = jnp.maximum(pe[:, :, 0], pe[:, :, 1])    # H-pool -> (B,16,8,C)
    po = po.reshape(B, 16, 2, 8, CPAD)
    po = jnp.maximum(po[:, :, 0], po[:, :, 1])
    b1 = b1_ref[...]
    a_even = jnp.maximum(pe + b1, 0.0).astype(jnp.bfloat16)   # pooled cols 0,2,...,14
    a_odd = jnp.maximum(po + b1, 0.0).astype(jnp.bfloat16)    # pooled cols 1,3,...,15

    # ---- build conv2's zero-padded, parity-split input in VMEM scratch ------
    # padded col j <-> pooled col j-1; rows/cols 0 and 17 are zero.
    # even padded cols {0,2,...,16} = [zero, odd pooled cols]  -> ebuf
    # odd  padded cols {1,3,...,17} = [even pooled cols, zero] -> obuf
    ebuf[...] = jnp.zeros(ebuf.shape, ebuf.dtype)
    obuf[...] = jnp.zeros(obuf.shape, obuf.dtype)
    ebuf[:, 1:17, 1:9, :] = a_odd
    obuf[:, 1:17, 0:8, :] = a_even

    # ---- conv2: K-concatenated patches (9 taps x 128 ch), one GEMM per parity
    taps_e, taps_o = [], []
    for dy in range(3):
        for dx in range(3):
            s = dx                                 # even output cols: w = 2a, reads col 2a+s
            src = ebuf if s % 2 == 0 else obuf
            taps_e.append(src[:, dy:dy + 16, s // 2:s // 2 + 8, :])
            s = 1 + dx                             # odd output cols: w = 2a+1
            src = ebuf if s % 2 == 0 else obuf
            taps_o.append(src[:, dy:dy + 16, s // 2:s // 2 + 8, :])
    pat_e = jnp.concatenate(taps_e, axis=-1).reshape(B * 16 * 8, 9 * CPAD)
    pat_o = jnp.concatenate(taps_o, axis=-1).reshape(B * 16 * 8, 9 * CPAD)

    w2 = w2_ref[...]
    ye = jnp.dot(pat_e, w2, preferred_element_type=jnp.float32).reshape(B, 16, 8, CPAD)
    yo = jnp.dot(pat_o, w2, preferred_element_type=jnp.float32).reshape(B, 16, 8, CPAD)

    # 2x2/stride-2 max-pool + bias + ReLU, emit bf16.
    m = jnp.maximum(ye, yo)                        # W-pool -> (B,16,8,C)
    m = m.reshape(B, 8, 2, 8, CPAD)
    m = jnp.maximum(m[:, :, 0], m[:, :, 1])        # H-pool -> (B,8,8,C)
    o_ref[...] = jnp.maximum(m + b2_ref[...], 0.0).astype(o_ref.dtype)


def conv_block(xpat, w1k, b1k, w2k, b2k, bt):
    N = xpat.shape[0]
    return pl.pallas_call(
        _conv_block_kernel,
        out_shape=jax.ShapeDtypeStruct((N, 8, 8, CPAD), jnp.bfloat16),
        grid=(N // bt,),
        in_specs=[
            pl.BlockSpec((bt, 1024, K1), lambda n: (n, 0, 0)),
            pl.BlockSpec((K1, CPAD), lambda n: (0, 0)),
            pl.BlockSpec((1, CPAD), lambda n: (0, 0)),
            pl.BlockSpec((9 * CPAD, CPAD), lambda n: (0, 0)),
            pl.BlockSpec((1, CPAD), lambda n: (0, 0)),
        ],
        out_specs=pl.BlockSpec((bt, 8, 8, CPAD), lambda n: (n, 0, 0, 0)),
        scratch_shapes=[
            pltpu.VMEM((bt, 18, 9, CPAD), jnp.bfloat16),
            pltpu.VMEM((bt, 18, 9, CPAD), jnp.bfloat16),
        ],
        compiler_params=pltpu.CompilerParams(dimension_semantics=("parallel",)),
    )(xpat, w1k, b1k, w2k, b2k)


# ---------------------------------------------------------------------------
# Classifier: lane-dense GEMM (K = 6144 real channels), tiled over the batch.
# ---------------------------------------------------------------------------
def _linear_kernel(x_ref, w_ref, b_ref, o_ref):
    acc = jnp.dot(x_ref[...], w_ref[...], preferred_element_type=jnp.float32)
    o_ref[...] = (acc + b_ref[...]).astype(o_ref.dtype)


def linear_fc(x, w, b, tile_n):
    N, K = x.shape
    Cout = w.shape[1]
    return pl.pallas_call(
        _linear_kernel,
        out_shape=jax.ShapeDtypeStruct((N, Cout), jnp.float32),
        grid=(N // tile_n,),
        in_specs=[
            pl.BlockSpec((tile_n, K), lambda i: (i, 0)),
            pl.BlockSpec((K, Cout), lambda i: (0, 0)),
            pl.BlockSpec((1, Cout), lambda i: (0, 0)),
        ],
        out_specs=pl.BlockSpec((tile_n, Cout), lambda i: (i, 0)),
        compiler_params=pltpu.CompilerParams(dimension_semantics=("parallel",)),
    )(x, w, b)


# ---------------------------------------------------------------------------
# One-time weight repack (hoisted out of the jitted forward).
# ---------------------------------------------------------------------------
def prepare_params(params):
    w1, b1, w2, b2, wl, bl = params              # torch layouts: OIHW conv, (10, 6144) linear
    # conv1 (48,3,3,3) -> rows (dy*3+dx)*3 + cin (27 real), cols cout; pad to (128,128)
    w1k = jnp.transpose(w1, (2, 3, 1, 0)).reshape(27, 48)
    w1k = jnp.pad(w1k, ((0, K1 - 27), (0, CPAD - 48))).astype(jnp.bfloat16)
    b1k = jnp.pad(b1, (0, CPAD - 48)).reshape(1, CPAD).astype(jnp.float32)
    # conv2 (96,48,3,3) -> rows (dy*3+dx)*128 + cin, cols cout; (1152,128)
    w2k = jnp.pad(w2, ((0, CPAD - 96), (0, CPAD - 48), (0, 0), (0, 0)))
    w2k = jnp.transpose(w2k, (2, 3, 1, 0)).reshape(9 * CPAD, CPAD).astype(jnp.bfloat16)
    b2k = jnp.pad(b2, (0, CPAD - 96)).reshape(1, CPAD).astype(jnp.float32)
    # linear (10, 96*8*8): torch flattens (c,h,w); our features are (h,w,c) -> (6144,128)
    wlk = jnp.transpose(wl.reshape(10, 96, 8, 8), (2, 3, 1, 0)).reshape(96 * 64, 10)
    wlk = jnp.pad(wlk, ((0, 0), (0, CPAD - 10))).astype(jnp.bfloat16)
    blk = jnp.pad(bl, (0, CPAD - 10)).reshape(1, CPAD).astype(jnp.float32)
    return (w1k, b1k, w2k, b2k, wlk, blk)


def _largest_divisor(n, candidates):
    for c in candidates:
        if n % c == 0:
            return c
    return 1


# ---------------------------------------------------------------------------
# Forward pass (only input-side im2col + the final channel slice remain as glue).
# ---------------------------------------------------------------------------
@jax.jit
def cnn_forward(x_nchw, packed):
    w1k, b1k, w2k, b2k, wlk, blk = packed
    N = x_nchw.shape[0]
    bt = _largest_divisor(N, (4, 2))

    # conv1 im2col in glue (input is tiny): lanes = 9 taps * 3 ch (pad 128);
    # output columns pre-split by residue mod 4 so in-kernel pooling never strides.
    x = jnp.transpose(x_nchw, (0, 2, 3, 1)).astype(jnp.bfloat16)       # NHWC
    xp = jnp.pad(x, ((0, 0), (1, 1), (1, 1), (0, 0)))                  # (N,34,34,3)
    slabs = [xp[:, dy:dy + 32, dx:dx + 32, :] for dy in range(3) for dx in range(3)]
    pat = jnp.concatenate(slabs, axis=-1)                              # (N,32,32,27)
    pat = jnp.pad(pat, ((0, 0), (0, 0), (0, 0), (0, K1 - 27)))         # (N,32,32,128)
    pat = pat.reshape(N, 32, 8, 4, K1).transpose(0, 3, 1, 2, 4)        # (N,4,32,8,128)
    pat = pat.reshape(N, 1024, K1)

    y2 = conv_block(pat, w1k, b1k, w2k, b2k, bt)                       # (N,8,8,128) bf16

    # classifier over the 96 real channels only (K = 6144), lane-dense 128 logits
    feat = y2[..., :96].reshape(N, 96 * 64)
    tile_n = _largest_divisor(N, (256, 128, 64, 32, 16, 8))
    tile_n = tile_n if tile_n >= 8 else N
    logits = linear_fc(feat, wlk, blk, tile_n)
    return logits[:, :10]


# ---------------------------------------------------------------------------
# Pure-JAX f32 reference (correctness check only)
# ---------------------------------------------------------------------------
def reference_forward(x_nchw, params):
    w1, b1, w2, b2, wl, bl = params

    def block(x, w, b):
        y = jax.lax.conv_general_dilated(
            x, w, window_strides=(1, 1), padding=((1, 1), (1, 1)),
            dimension_numbers=("NCHW", "OIHW", "NCHW"))
        y = jnp.maximum(y + b[None, :, None, None], 0.0)
        return jax.lax.reduce_window(y, -jnp.inf, jax.lax.max,
                                     (1, 1, 2, 2), (1, 1, 2, 2), "VALID")

    y = block(x_nchw, w1, b1)
    y = block(y, w2, b2)
    flat = y.reshape(y.shape[0], -1)
    return flat @ wl.T + bl


# ---------------------------------------------------------------------------
if __name__ == "__main__":
    key = jax.random.PRNGKey(0)
    ks = jax.random.split(key, 7)

    def uniform_init(k, shape, fan_in):
        bound = 1.0 / (fan_in ** 0.5)
        return jax.random.uniform(k, shape, jnp.float32, -bound, bound)

    x = jax.random.normal(ks[0], (2, 3, 32, 32), jnp.float32)
    w1 = uniform_init(ks[1], (48, 3, 3, 3), 3 * 9)
    b1 = uniform_init(ks[2], (48,), 3 * 9)
    w2 = uniform_init(ks[3], (96, 48, 3, 3), 48 * 9)
    b2 = uniform_init(ks[4], (96,), 48 * 9)
    wl = uniform_init(ks[5], (10, 96 * 8 * 8), 96 * 8 * 8)
    bl = uniform_init(ks[6], (10,), 96 * 8 * 8)
    params = (w1, b1, w2, b2, wl, bl)

    packed = prepare_params(params)          # one-time repack, outside the jitted forward
    out = jax.block_until_ready(cnn_forward(x, packed))
    ref = jax.block_until_ready(reference_forward(x, params))

    assert out.shape == (2, 10), out.shape
    # bf16 MXU operands / bf16 inter-layer activations (f32 accumulation) vs f32 reference.
    if not jnp.allclose(out, ref, atol=5e-2, rtol=5e-2):
        raise AssertionError(
            f"mismatch vs reference, max abs diff {float(jnp.max(jnp.abs(out - ref)))}")
    print("KERNEL_OK")
</pallas_src>

<mosaic_0001>
module attributes {stable_mosaic.version = 11 : i64} {
  func.func @_conv_block_kernel(%arg0: i32, %arg1: memref<2x1024x128xbf16, #tpu.memory_space<vmem>>, %arg2: memref<128x128xbf16, #tpu.memory_space<vmem>>, %arg3: memref<1x128xf32, #tpu.memory_space<vmem>>, %arg4: memref<1152x128xbf16, #tpu.memory_space<vmem>>, %arg5: memref<1x128xf32, #tpu.memory_space<vmem>>, %arg6: memref<2x8x8x128xbf16, #tpu.memory_space<vmem>>, %arg7: memref<2x18x9x128xbf16, #tpu.memory_space<vmem>>, %arg8: memref<2x18x9x128xbf16, #tpu.memory_space<vmem>>) attributes {dimension_semantics = [#tpu.dimension_semantics<parallel>], iteration_bounds = array<i64: 1>, scalar_prefetch = 0 : i64, scratch_operands = 2 : i64, tpu.core_type = #tpu.core_type<tc>, window_params = [{transform_indices = @transform_0, window_bounds = array<i64: 2, 1024, 128>}, {pipeline_mode = #tpu.pipeline_mode<synchronous>, transform_indices = @transform_1, window_bounds = array<i64: 128, 128>}, {pipeline_mode = #tpu.pipeline_mode<synchronous>, transform_indices = @transform_2, window_bounds = array<i64: 1, 128>}, {pipeline_mode = #tpu.pipeline_mode<synchronous>, transform_indices = @transform_3, window_bounds = array<i64: 1152, 128>}, {pipeline_mode = #tpu.pipeline_mode<synchronous>, transform_indices = @transform_4, window_bounds = array<i64: 1, 128>}, {transform_indices = @transform_5, window_bounds = array<i64: 2, 8, 8, 128>}]} {
    %c0 = arith.constant 0 : index
    %c0_0 = arith.constant 0 : index
    %c0_1 = arith.constant 0 : index
    %0 = vector.load %arg1[%c0, %c0_0, %c0_1] : memref<2x1024x128xbf16, #tpu.memory_space<vmem>>, vector<2x1024x128xbf16>
    %1 = vector.shape_cast %0 : vector<2x1024x128xbf16> to vector<2048x128xbf16>
    %c0_2 = arith.constant 0 : index
    %c0_3 = arith.constant 0 : index
    %2 = vector.load %arg2[%c0_2, %c0_3] : memref<128x128xbf16, #tpu.memory_space<vmem>>, vector<128x128xbf16>
    %cst = arith.constant dense<0.000000e+00> : vector<2048x128xf32>
    %3 = tpu.matmul %1, %2, %cst {dimension_numbers = #tpu.dot_dimension_numbers<[1], [0], [0], [1], [0, 0, 1, 1], [], []>} : vector<2048x128xbf16>, vector<128x128xbf16>, vector<2048x128xf32> -> vector<2048x128xf32>
    %4 = vector.shape_cast %3 : vector<2048x128xf32> to vector<2x4x32x8x128xf32>
    %5 = vector.extract_strided_slice %4 {offsets = [0, 0, 0, 0, 0], sizes = [2, 1, 32, 8, 128], strides = [1, 1, 1, 1, 1]} : vector<2x4x32x8x128xf32> to vector<2x1x32x8x128xf32>
    %6 = vector.shape_cast %5 : vector<2x1x32x8x128xf32> to vector<2x32x8x128xf32>
    %7 = vector.extract_strided_slice %4 {offsets = [0, 1, 0, 0, 0], sizes = [2, 1, 32, 8, 128], strides = [1, 1, 1, 1, 1]} : vector<2x4x32x8x128xf32> to vector<2x1x32x8x128xf32>
    %8 = vector.shape_cast %7 : vector<2x1x32x8x128xf32> to vector<2x32x8x128xf32>
    %9 = arith.maximumf %6, %8 : vector<2x32x8x128xf32>
    %10 = vector.extract_strided_slice %4 {offsets = [0, 2, 0, 0, 0], sizes = [2, 1, 32, 8, 128], strides = [1, 1, 1, 1, 1]} : vector<2x4x32x8x128xf32> to vector<2x1x32x8x128xf32>
    %11 = vector.shape_cast %10 : vector<2x1x32x8x128xf32> to vector<2x32x8x128xf32>
    %12 = vector.extract_strided_slice %4 {offsets = [0, 3, 0, 0, 0], sizes = [2, 1, 32, 8, 128], strides = [1, 1, 1, 1, 1]} : vector<2x4x32x8x128xf32> to vector<2x1x32x8x128xf32>
    %13 = vector.shape_cast %12 : vector<2x1x32x8x128xf32> to vector<2x32x8x128xf32>
    %14 = arith.maximumf %11, %13 : vector<2x32x8x128xf32>
    %15 = vector.shape_cast %9 : vector<2x32x8x128xf32> to vector<2x16x2x8x128xf32>
    %16 = vector.extract_strided_slice %15 {offsets = [0, 0, 0, 0, 0], sizes = [2, 16, 1, 8, 128], strides = [1, 1, 1, 1, 1]} : vector<2x16x2x8x128xf32> to vector<2x16x1x8x128xf32>
    %17 = vector.shape_cast %16 : vector<2x16x1x8x128xf32> to vector<2x16x8x128xf32>
    %18 = vector.extract_strided_slice %15 {offsets = [0, 0, 1, 0, 0], sizes = [2, 16, 1, 8, 128], strides = [1, 1, 1, 1, 1]} : vector<2x16x2x8x128xf32> to vector<2x16x1x8x128xf32>
    %19 = vector.shape_cast %18 : vector<2x16x1x8x128xf32> to vector<2x16x8x128xf32>
    %20 = arith.maximumf %17, %19 : vector<2x16x8x128xf32>
    %21 = vector.shape_cast %14 : vector<2x32x8x128xf32> to vector<2x16x2x8x128xf32>
    %22 = vector.extract_strided_slice %21 {offsets = [0, 0, 0, 0, 0], sizes = [2, 16, 1, 8, 128], strides = [1, 1, 1, 1, 1]} : vector<2x16x2x8x128xf32> to vector<2x16x1x8x128xf32>
    %23 = vector.shape_cast %22 : vector<2x16x1x8x128xf32> to vector<2x16x8x128xf32>
    %24 = vector.extract_strided_slice %21 {offsets = [0, 0, 1, 0, 0], sizes = [2, 16, 1, 8, 128], strides = [1, 1, 1, 1, 1]} : vector<2x16x2x8x128xf32> to vector<2x16x1x8x128xf32>
    %25 = vector.shape_cast %24 : vector<2x16x1x8x128xf32> to vector<2x16x8x128xf32>
    %26 = arith.maximumf %23, %25 : vector<2x16x8x128xf32>
    %c0_4 = arith.constant 0 : index
    %c0_5 = arith.constant 0 : index
    %27 = vector.load %arg3[%c0_4, %c0_5] : memref<1x128xf32, #tpu.memory_space<vmem>>, vector<1x128xf32>
    %28 = vector.shape_cast %27 : vector<1x128xf32> to vector<1x1x1x128xf32>
    %29 = vector.broadcast %28 : vector<1x1x1x128xf32> to vector<2x16x8x128xf32>
    %30 = arith.addf %20, %29 : vector<2x16x8x128xf32>
    %cst_6 = arith.constant 0.000000e+00 : f32
    %31 = vector.broadcast %cst_6 : f32 to vector<2x16x8x128xf32>
    %32 = arith.maximumf %30, %31 : vector<2x16x8x128xf32>
    %33 = arith.truncf %32 : vector<2x16x8x128xf32> to vector<2x16x8x128xbf16>
    %34 = vector.shape_cast %27 : vector<1x128xf32> to vector<1x1x1x128xf32>
    %35 = vector.broadcast %34 : vector<1x1x1x128xf32> to vector<2x16x8x128xf32>
    %36 = arith.addf %26, %35 : vector<2x16x8x128xf32>
    %cst_7 = arith.constant 0.000000e+00 : f32
    %37 = vector.broadcast %cst_7 : f32 to vector<2x16x8x128xf32>
    %38 = arith.maximumf %36, %37 : vector<2x16x8x128xf32>
    %39 = arith.truncf %38 : vector<2x16x8x128xf32> to vector<2x16x8x128xbf16>
    %cst_8 = arith.constant 0.000000e+00 : bf16
    %40 = vector.broadcast %cst_8 : bf16 to vector<2x18x9x128xbf16>
    %c0_9 = arith.constant 0 : index
    %c0_10 = arith.constant 0 : index
    %c0_11 = arith.constant 0 : index
    %c0_12 = arith.constant 0 : index
    %41 = vector.load %arg7[%c0_9, %c0_10, %c0_11, %c0_12] : memref<2x18x9x128xbf16, #tpu.memory_space<vmem>>, vector<2x18x9x128xbf16>
    tpu.vector_store %arg7[%c0_9, %c0_10, %c0_11, %c0_12], %40 {strides = array<i32>} : memref<2x18x9x128xbf16, #tpu.memory_space<vmem>>, vector<2x18x9x128xbf16>,
    %cst_13 = arith.constant 0.000000e+00 : bf16
    %42 = vector.broadcast %cst_13 : bf16 to vector<2x18x9x128xbf16>
    %c0_14 = arith.constant 0 : index
    %c0_15 = arith.constant 0 : index
    %c0_16 = arith.constant 0 : index
    %c0_17 = arith.constant 0 : index
    %43 = vector.load %arg8[%c0_14, %c0_15, %c0_16, %c0_17] : memref<2x18x9x128xbf16, #tpu.memory_space<vmem>>, vector<2x18x9x128xbf16>
    tpu.vector_store %arg8[%c0_14, %c0_15, %c0_16, %c0_17], %42 {strides = array<i32>} : memref<2x18x9x128xbf16, #tpu.memory_space<vmem>>, vector<2x18x9x128xbf16>,
    %c0_18 = arith.constant 0 : index
    %c1 = arith.constant 1 : index
    %c1_19 = arith.constant 1 : index
    %c0_20 = arith.constant 0 : index
    %44 = vector.load %arg7[%c0_18, %c1, %c1_19, %c0_20] : memref<2x18x9x128xbf16, #tpu.memory_space<vmem>>, vector<2x16x8x128xbf16>
    tpu.vector_store %arg7[%c0_18, %c1, %c1_19, %c0_20], %39 {strides = array<i32>} : memref<2x18x9x128xbf16, #tpu.memory_space<vmem>>, vector<2x16x8x128xbf16>,
    %c0_21 = arith.constant 0 : index
    %c1_22 = arith.constant 1 : index
    %c0_23 = arith.constant 0 : index
    %c0_24 = arith.constant 0 : index
    %45 = vector.load %arg8[%c0_21, %c1_22, %c0_23, %c0_24] : memref<2x18x9x128xbf16, #tpu.memory_space<vmem>>, vector<2x16x8x128xbf16>
    tpu.vector_store %arg8[%c0_21, %c1_22, %c0_23, %c0_24], %33 {strides = array<i32>} : memref<2x18x9x128xbf16, #tpu.memory_space<vmem>>, vector<2x16x8x128xbf16>,
    %c0_25 = arith.constant 0 : index
    %c0_26 = arith.constant 0 : index
    %c0_27 = arith.constant 0 : index
    %c0_28 = arith.constant 0 : index
    %46 = vector.load %arg7[%c0_25, %c0_26, %c0_27, %c0_28] : memref<2x18x9x128xbf16, #tpu.memory_space<vmem>>, vector<2x16x8x128xbf16>
    %c0_29 = arith.constant 0 : index
    %c0_30 = arith.constant 0 : index
    %c0_31 = arith.constant 0 : index
    %c0_32 = arith.constant 0 : index
    %47 = vector.load %arg8[%c0_29, %c0_30, %c0_31, %c0_32] : memref<2x18x9x128xbf16, #tpu.memory_space<vmem>>, vector<2x16x8x128xbf16>
    %c0_33 = arith.constant 0 : index
    %c0_34 = arith.constant 0 : index
    %c0_35 = arith.constant 0 : index
    %c0_36 = arith.constant 0 : index
    %48 = vector.load %arg8[%c0_33, %c0_34, %c0_35, %c0_36] : memref<2x18x9x128xbf16, #tpu.memory_space<vmem>>, vector<2x16x8x128xbf16>
    %c0_37 = arith.constant 0 : index
    %c0_38 = arith.constant 0 : index
    %c1_39 = arith.constant 1 : index
    %c0_40 = arith.constant 0 : index
    %49 = vector.load %arg7[%c0_37, %c0_38, %c1_39, %c0_40] : memref<2x18x9x128xbf16, #tpu.memory_space<vmem>>, vector<2x16x8x128xbf16>
    %c0_41 = arith.constant 0 : index
    %c0_42 = arith.constant 0 : index
    %c1_43 = arith.constant 1 : index
    %c0_44 = arith.constant 0 : index
    %50 = vector.load %arg7[%c0_41, %c0_42, %c1_43, %c0_44] : memref<2x18x9x128xbf16, #tpu.memory_space<vmem>>, vector<2x16x8x128xbf16>
    %c0_45 = arith.constant 0 : index
    %c0_46 = arith.constant 0 : index
    %c1_47 = arith.constant 1 : index
    %c0_48 = arith.constant 0 : index
    %51 = vector.load %arg8[%c0_45, %c0_46, %c1_47, %c0_48] : memref<2x18x9x128xbf16, #tpu.memory_space<vmem>>, vector<2x16x8x128xbf16>
    %c0_49 = arith.constant 0 : index
    %c1_50 = arith.constant 1 : index
    %c0_51 = arith.constant 0 : index
    %c0_52 = arith.constant 0 : index
    %52 = vector.load %arg7[%c0_49, %c1_50, %c0_51, %c0_52] : memref<2x18x9x128xbf16, #tpu.memory_space<vmem>>, vector<2x16x8x128xbf16>
    %c0_53 = arith.constant 0 : index
    %c1_54 = arith.constant 1 : index
    %c0_55 = arith.constant 0 : index
    %c0_56 = arith.constant 0 : index
    %53 = vector.load %arg8[%c0_53, %c1_54, %c0_55, %c0_56] : memref<2x18x9x128xbf16, #tpu.memory_space<vmem>>, vector<2x16x8x128xbf16>
    %c0_57 = arith.constant 0 : index
    %c1_58 = arith.constant 1 : index
    %c0_59 = arith.constant 0 : index
    %c0_60 = arith.constant 0 : index
    %54 = vector.load %arg8[%c0_57, %c1_58, %c0_59, %c0_60] : memref<2x18x9x128xbf16, #tpu.memory_space<vmem>>, vector<2x16x8x128xbf16>
    %c0_61 = arith.constant 0 : index
    %c1_62 = arith.constant 1 : index
    %c1_63 = arith.constant 1 : index
    %c0_64 = arith.constant 0 : index
    %55 = vector.load %arg7[%c0_61, %c1_62, %c1_63, %c0_64] : memref<2x18x9x128xbf16, #tpu.memory_space<vmem>>, vector<2x16x8x128xbf16>
    %c0_65 = arith.constant 0 : index
    %c1_66 = arith.constant 1 : index
    %c1_67 = arith.constant 1 : index
    %c0_68 = arith.constant 0 : index
    %56 = vector.load %arg7[%c0_65, %c1_66, %c1_67, %c0_68] : memref<2x18x9x128xbf16, #tpu.memory_space<vmem>>, vector<2x16x8x128xbf16>
    %c0_69 = arith.constant 0 : index
    %c1_70 = arith.constant 1 : index
    %c1_71 = arith.constant 1 : index
    %c0_72 = arith.constant 0 : index
    %57 = vector.load %arg8[%c0_69, %c1_70, %c1_71, %c0_72] : memref<2x18x9x128xbf16, #tpu.memory_space<vmem>>, vector<2x16x8x128xbf16>
    %c0_73 = arith.constant 0 : index
    %c2 = arith.constant 2 : index
    %c0_74 = arith.constant 0 : index
    %c0_75 = arith.constant 0 : index
    %58 = vector.load %arg7[%c0_73, %c2, %c0_74, %c0_75] : memref<2x18x9x128xbf16, #tpu.memory_space<vmem>>, vector<2x16x8x128xbf16>
    %c0_76 = arith.constant 0 : index
    %c2_77 = arith.constant 2 : index
    %c0_78 = arith.constant 0 : index
    %c0_79 = arith.constant 0 : index
    %59 = vector.load %arg8[%c0_76, %c2_77, %c0_78, %c0_79] : memref<2x18x9x128xbf16, #tpu.memory_space<vmem>>, vector<2x16x8x128xbf16>
    %c0_80 = arith.constant 0 : index
    %c2_81 = arith.constant 2 : index
    %c0_82 = arith.constant 0 : index
    %c0_83 = arith.constant 0 : index
    %60 = vector.load %arg8[%c0_80, %c2_81, %c0_82, %c0_83] : memref<2x18x9x128xbf16, #tpu.memory_space<vmem>>, vector<2x16x8x128xbf16>
    %c0_84 = arith.constant 0 : index
    %c2_85 = arith.constant 2 : index
    %c1_86 = arith.constant 1 : index
    %c0_87 = arith.constant 0 : index
    %61 = vector.load %arg7[%c0_84, %c2_85, %c1_86, %c0_87] : memref<2x18x9x128xbf16, #tpu.memory_space<vmem>>, vector<2x16x8x128xbf16>
    %c0_88 = arith.constant 0 : index
    %c2_89 = arith.constant 2 : index
    %c1_90 = arith.constant 1 : index
    %c0_91 = arith.constant 0 : index
    %62 = vector.load %arg7[%c0_88, %c2_89, %c1_90, %c0_91] : memref<2x18x9x128xbf16, #tpu.memory_space<vmem>>, vector<2x16x8x128xbf16>
    %c0_92 = arith.constant 0 : index
    %c2_93 = arith.constant 2 : index
    %c1_94 = arith.constant 1 : index
    %c0_95 = arith.constant 0 : index
    %63 = vector.load %arg8[%c0_92, %c2_93, %c1_94, %c0_95] : memref<2x18x9x128xbf16, #tpu.memory_space<vmem>>, vector<2x16x8x128xbf16>
    %64 = tpu.concatenate %46, %48, %50, %52, %54, %56, %58, %60, %62 in 3 : vector<2x16x8x128xbf16>, vector<2x16x8x128xbf16>, vector<2x16x8x128xbf16>, vector<2x16x8x128xbf16>, vector<2x16x8x128xbf16>, vector<2x16x8x128xbf16>, vector<2x16x8x128xbf16>, vector<2x16x8x128xbf16>, vector<2x16x8x128xbf16> -> vector<2x16x8x1152xbf16>
    %65 = vector.shape_cast %64 : vector<2x16x8x1152xbf16> to vector<256x1152xbf16>
    %66 = tpu.concatenate %47, %49, %51, %53, %55, %57, %59, %61, %63 in 3 : vector<2x16x8x128xbf16>, vector<2x16x8x128xbf16>, vector<2x16x8x128xbf16>, vector<2x16x8x128xbf16>, vector<2x16x8x128xbf16>, vector<2x16x8x128xbf16>, vector<2x16x8x128xbf16>, vector<2x16x8x128xbf16>, vector<2x16x8x128xbf16> -> vector<2x16x8x1152xbf16>
    %67 = vector.shape_cast %66 : vector<2x16x8x1152xbf16> to vector<256x1152xbf16>
    %c0_96 = arith.constant 0 : index
    %c0_97 = arith.constant 0 : index
    %68 = vector.load %arg4[%c0_96, %c0_97] : memref<1152x128xbf16, #tpu.memory_space<vmem>>, vector<1152x128xbf16>
    %cst_98 = arith.constant dense<0.000000e+00> : vector<256x128xf32>
    %69 = tpu.matmul %65, %68, %cst_98 {dimension_numbers = #tpu.dot_dimension_numbers<[1], [0], [0], [1], [0, 0, 1, 1], [], []>} : vector<256x1152xbf16>, vector<1152x128xbf16>, vector<256x128xf32> -> vector<256x128xf32>
    %70 = vector.shape_cast %69 : vector<256x128xf32> to vector<2x16x8x128xf32>
    %cst_99 = arith.constant dense<0.000000e+00> : vector<256x128xf32>
    %71 = tpu.matmul %67, %68, %cst_99 {dimension_numbers = #tpu.dot_dimension_numbers<[1], [0], [0], [1], [0, 0, 1, 1], [], []>} : vector<256x1152xbf16>, vector<1152x128xbf16>, vector<256x128xf32> -> vector<256x128xf32>
    %72 = vector.shape_cast %71 : vector<256x128xf32> to vector<2x16x8x128xf32>
    %73 = arith.maximumf %70, %72 : vector<2x16x8x128xf32>
    %74 = vector.shape_cast %73 : vector<2x16x8x128xf32> to vector<2x8x2x8x128xf32>
    %75 = vector.extract_strided_slice %74 {offsets = [0, 0, 0, 0, 0], sizes = [2, 8, 1, 8, 128], strides = [1, 1, 1, 1, 1]} : vector<2x8x2x8x128xf32> to vector<2x8x1x8x128xf32>
    %76 = vector.shape_cast %75 : vector<2x8x1x8x128xf32> to vector<2x8x8x128xf32>
    %77 = vector.extract_strided_slice %74 {offsets = [0, 0, 1, 0, 0], sizes = [2, 8, 1, 8, 128], strides = [1, 1, 1, 1, 1]} : vector<2x8x2x8x128xf32> to vector<2x8x1x8x128xf32>
    %78 = vector.shape_cast %77 : vector<2x8x1x8x128xf32> to vector<2x8x8x128xf32>
    %79 = arith.maximumf %76, %78 : vector<2x8x8x128xf32>
    %c0_100 = arith.constant 0 : index
    %c0_101 = arith.constant 0 : index
    %80 = vector.load %arg5[%c0_100, %c0_101] : memref<1x128xf32, #tpu.memory_space<vmem>>, vector<1x128xf32>
    %81 = vector.shape_cast %80 : vector<1x128xf32> to vector<1x1x1x128xf32>
    %82 = vector.broadcast %81 : vector<1x1x1x128xf32> to vector<2x8x8x128xf32>
    %83 = arith.addf %79, %82 : vector<2x8x8x128xf32>
    %cst_102 = arith.constant 0.000000e+00 : f32
    %84 = vector.broadcast %cst_102 : f32 to vector<2x8x8x128xf32>
    %85 = arith.maximumf %83, %84 : vector<2x8x8x128xf32>
    %86 = arith.truncf %85 : vector<2x8x8x128xf32> to vector<2x8x8x128xbf16>
    %c0_103 = arith.constant 0 : index
    %c0_104 = arith.constant 0 : index
    %c0_105 = arith.constant 0 : index
    %c0_106 = arith.constant 0 : index
    %87 = vector.load %arg6[%c0_103, %c0_104, %c0_105, %c0_106] : memref<2x8x8x128xbf16, #tpu.memory_space<vmem>>, vector<2x8x8x128xbf16>
    tpu.vector_store %arg6[%c0_103, %c0_104, %c0_105, %c0_106], %86 {strides = array<i32>} : memref<2x8x8x128xbf16, #tpu.memory_space<vmem>>, vector<2x8x8x128xbf16>,
    return
  }
  func.func @transform_0(%arg0: i32) -> (i32, i32, i32) {
    %c0_i32 = arith.constant 0 : i32
    %c0_i32_0 = arith.constant 0 : i32
    %c0_i32_1 = arith.constant 0 : i32
    return %arg0, %c0_i32, %c0_i32_0 : i32, i32, i32
  }
  func.func @transform_1(%arg0: i32) -> (i32, i32) {
    %c0_i32 = arith.constant 0 : i32
    %c0_i32_0 = arith.constant 0 : i32
    %c0_i32_1 = arith.constant 0 : i32
    return %c0_i32, %c0_i32_0 : i32, i32
  }
  func.func @transform_2(%arg0: i32) -> (i32, i32) {
    %c0_i32 = arith.constant 0 : i32
    %c0_i32_0 = arith.constant 0 : i32
    %c0_i32_1 = arith.constant 0 : i32
    return %c0_i32, %c0_i32_0 : i32, i32
  }
  func.func @transform_3(%arg0: i32) -> (i32, i32) {
    %c0_i32 = arith.constant 0 : i32
    %c0_i32_0 = arith.constant 0 : i32
    %c0_i32_1 = arith.constant 0 : i32
    return %c0_i32, %c0_i32_0 : i32, i32
  }
  func.func @transform_4(%arg0: i32) -> (i32, i32) {
    %c0_i32 = arith.constant 0 : i32
    %c0_i32_0 = arith.constant 0 : i32
    %c0_i32_1 = arith.constant 0 : i32
    return %c0_i32, %c0_i32_0 : i32, i32
  }
  func.func @transform_5(%arg0: i32) -> (i32, i32, i32, i32) {
    %c0_i32 = arith.constant 0 : i32
    %c0_i32_0 = arith.constant 0 : i32
    %c0_i32_1 = arith.constant 0 : i32
    %c0_i32_2 = arith.constant 0 : i32
    return %arg0, %c0_i32, %c0_i32_0, %c0_i32_1 : i32, i32, i32, i32
  }
}

module attributes {stable_mosaic.version = 11 : i64} {
  func.func @_linear_kernel(%arg0: i32, %arg1: memref<2x6144xbf16, #tpu.memory_space<vmem>>, %arg2: memref<6144x128xbf16, #tpu.memory_space<vmem>>, %arg3: memref<1x128xf32, #tpu.memory_space<vmem>>, %arg4: memref<2x128xf32, #tpu.memory_space<vmem>>) attributes {dimension_semantics = [#tpu.dimension_semantics<parallel>], iteration_bounds = array<i64: 1>, scalar_prefetch = 0 : i64, scratch_operands = 0 : i64, tpu.core_type = #tpu.core_type<tc>, window_params = [{transform_indices = @transform_0, window_bounds = array<i64: 2, 6144>}, {pipeline_mode = #tpu.pipeline_mode<synchronous>, transform_indices = @transform_1, window_bounds = array<i64: 6144, 128>}, {pipeline_mode = #tpu.pipeline_mode<synchronous>, transform_indices = @transform_2, window_bounds = array<i64: 1, 128>}, {transform_indices = @transform_3, window_bounds = array<i64: 2, 128>}]} {
    %c0 = arith.constant 0 : index
    %c0_0 = arith.constant 0 : index
    %0 = vector.load %arg1[%c0, %c0_0] : memref<2x6144xbf16, #tpu.memory_space<vmem>>, vector<2x6144xbf16>
    %c0_1 = arith.constant 0 : index
    %c0_2 = arith.constant 0 : index
    %1 = vector.load %arg2[%c0_1, %c0_2] : memref<6144x128xbf16, #tpu.memory_space<vmem>>, vector<6144x128xbf16>
    %cst = arith.constant dense<0.000000e+00> : vector<2x128xf32>
    %2 = tpu.matmul %0, %1, %cst {dimension_numbers = #tpu.dot_dimension_numbers<[1], [0], [0], [1], [0, 0, 1, 1], [], []>} : vector<2x6144xbf16>, vector<6144x128xbf16>, vector<2x128xf32> -> vector<2x128xf32>
    %c0_3 = arith.constant 0 : index
    %c0_4 = arith.constant 0 : index
    %3 = vector.load %arg3[%c0_3, %c0_4] : memref<1x128xf32, #tpu.memory_space<vmem>>, vector<1x128xf32>
    %4 = vector.broadcast %3 : vector<1x128xf32> to vector<2x128xf32>
    %5 = arith.addf %2, %4 : vector<2x128xf32>
    %c0_5 = arith.constant 0 : index
    %c0_6 = arith.constant 0 : index
    %6 = vector.load %arg4[%c0_5, %c0_6] : memref<2x128xf32, #tpu.memory_space<vmem>>, vector<2x128xf32>
    tpu.vector_store %arg4[%c0_5, %c0_6], %5 {strides = array<i32>} : memref<2x128xf32, #tpu.memory_space<vmem>>, vector<2x128xf32>,
    return
  }
  func.func @transform_0(%arg0: i32) -> (i32, i32) {
    %c0_i32 = arith.constant 0 : i32
    %c0_i32_0 = arith.constant 0 : i32
    return %arg0, %c0_i32 : i32, i32
  }
  func.func @transform_1(%arg0: i32) -> (i32, i32) {
    %c0_i32 = arith.constant 0 : i32
    %c0_i32_0 = arith.constant 0 : i32
    %c0_i32_1 = arith.constant 0 : i32
    return %c0_i32, %c0_i32_0 : i32, i32
  }
  func.func @transform_2(%arg0: i32) -> (i32, i32) {
    %c0_i32 = arith.constant 0 : i32
    %c0_i32_0 = arith.constant 0 : i32
    %c0_i32_1 = arith.constant 0 : i32
    return %c0_i32, %c0_i32_0 : i32, i32
  }
  func.func @transform_3(%arg0: i32) -> (i32, i32) {
    %c0_i32 = arith.constant 0 : i32
    %c0_i32_0 = arith.constant 0 : i32
    return %arg0, %c0_i32 : i32, i32
  }
}

</mosaic_0001>

<llo_original>
// kernel: cnn_forward.3
$region0: #{cnn_forward.3}
  #allocation0 [shape = 'u32[]', space=smem, size = 0x4, offset = 0x4, fixed_abs, tag = 'smem constant byte address 0x4 - core index']
  #allocation1 [shape = 'u32[144,128]{1,0:T(1,128)}', space=vmem, size = 0x12000, scoped, tag = 'internal scratch']
  %s0 = inlined_call_operand.vmem [shape: bf16[2,6144], index: 0, kind: input, shape index: {}]
  %s1 = inlined_call_operand.vmem [shape: bf16[6144,128], index: 1, kind: input, shape index: {}]
  %s2 = inlined_call_operand.vmem [shape: f32[1,128], index: 2, kind: input, shape index: {}]
  %s3 = inlined_call_operand.hbm [shape: f32[2,128], index: 3, kind: output, shape index: {}]
  %s4 = sld [smem:[#allocation0]]
  $region22: #{cnn_forward.3} parent=0
    _
  %s6 = ssub.s32 1, %s4
  %s7 = scalar_select 0, %s6, %s4
  $region1: #{cnn_forward.3} parent=0
    #allocation2 [shape = 'u8[1024]{0}', space=vmem, size = 0x400, scoped, tag = 'output window, operand 0, single buffered']
    #allocation3 [shape = 's32[1]{0}', space=sflag, size = 0x4, scoped, tag = 'scoped memory for cnn_forward.3']
    %8 = vsyncpa [#allocation3], 0
    // Predicated region
    $region2: #{cnn_forward.3} parent=1 // pred_check
      _
    $region3: #{cnn_forward.3} parent=1 // pred_check_branch
      %10 = sbr.rel (0) target = $region5
    $region4: #{cnn_forward.3} parent=1 // pred_region
      _
    $region5: #{cnn_forward.3} parent=1 // pred_fallthru
      _
    // Predicated region
    $region6: #{cnn_forward.3} parent=1 // pred_check
      _
    $region7: #{cnn_forward.3} parent=1 // pred_check_branch
      %12 = sbr.rel (0) target = $region9
    $region8: #{cnn_forward.3} parent=1 // pred_region
      _
    $region9: #{cnn_forward.3} parent=1 // pred_fallthru
      _
    // Predicated region
    $region10: #{cnn_forward.3} parent=1 // pred_check
      _
    $region11: #{cnn_forward.3} parent=1 // pred_check_branch
      %14 = sbr.rel (0) target = $region13
    $region12: #{cnn_forward.3} parent=1 // pred_region
      _
    $region13: #{cnn_forward.3} parent=1 // pred_fallthru
      _
    %v16 = vld [vmem:[%s0] sm:$0xff]
    %v17 = vld [vmem:[%s0 + $0x8] sm:$0xff]
    %v18 = vld [vmem:[%s0 + $0x10] sm:$0xff]
    %v19 = vld [vmem:[%s0 + $0x18] sm:$0xff]
    %v20 = vld [vmem:[%s0 + $0x20] sm:$0xff]
    %v21 = vld [vmem:[%s0 + $0x28] sm:$0xff]
    %v22 = vld [vmem:[%s1] sm:$0xf]
    %v23 = vld [vmem:[%s1 + $0x4] sm:$0xf]
    %v24 = vld [vmem:[%s1 + $0x8] sm:$0xf]
    %v25 = vld [vmem:[%s1 + $0xc] sm:$0xf]
    %v26 = vld [vmem:[%s1 + $0x10] sm:$0xf]
    %v27 = vld [vmem:[%s1 + $0x14] sm:$0xf]
    %v28 = vld [vmem:[%s1 + $0x18] sm:$0xf]
    %v29 = vld [vmem:[%s1 + $0x1c] sm:$0xf]
    %v30 = vld [vmem:[%s1 + $0x20] sm:$0xf]
    %v31 = vld [vmem:[%s1 + $0x24] sm:$0xf]
    %v32 = vld [vmem:[%s1 + $0x28] sm:$0xf]
    %v33 = vld [vmem:[%s1 + $0x2c] sm:$0xf]
    %v34 = vld [vmem:[%s1 + $0x30] sm:$0xf]
    %v35 = vld [vmem:[%s1 + $0x34] sm:$0xf]
    %v36 = vld [vmem:[%s1 + $0x38] sm:$0xf]
    %v37 = vld [vmem:[%s1 + $0x3c] sm:$0xf]
    %v38 = vld [vmem:[%s1 + $0x40] sm:$0xf]
    %v39 = vld [vmem:[%s1 + $0x44] sm:$0xf]
    %v40 = vld [vmem:[%s1 + $0x48] sm:$0xf]
    %v41 = vld [vmem:[%s1 + $0x4c] sm:$0xf]
    %v42 = vld [vmem:[%s1 + $0x50] sm:$0xf]
    %v43 = vld [vmem:[%s1 + $0x54] sm:$0xf]
    %v44 = vld [vmem:[%s1 + $0x58] sm:$0xf]
    %v45 = vld [vmem:[%s1 + $0x5c] sm:$0xf]
    %v46 = vld [vmem:[%s1 + $0x60] sm:$0xf]
    %v47 = vld [vmem:[%s1 + $0x64] sm:$0xf]
    %v48 = vld [vmem:[%s1 + $0x68] sm:$0xf]
    %v49 = vld [vmem:[%s1 + $0x6c] sm:$0xf]
    %v50 = vld [vmem:[%s1 + $0x70] sm:$0xf]
    %v51 = vld [vmem:[%s1 + $0x74] sm:$0xf]
    %v52 = vld [vmem:[%s1 + $0x78] sm:$0xf]
    %v53 = vld [vmem:[%s1 + $0x7c] sm:$0xf]
    %v54 = vld [vmem:[%s1 + $0x80] sm:$0xf]
    %v55 = vld [vmem:[%s1 + $0x84] sm:$0xf]
    %v56 = vld [vmem:[%s1 + $0x88] sm:$0xf]
    %v57 = vld [vmem:[%s1 + $0x8c] sm:$0xf]
    %v58 = vld [vmem:[%s1 + $0x90] sm:$0xf]
    %v59 = vld [vmem:[%s1 + $0x94] sm:$0xf]
    %v60 = vld [vmem:[%s1 + $0x98] sm:$0xf]
    %v61 = vld [vmem:[%s1 + $0x9c] sm:$0xf]
    %v62 = vld [vmem:[%s1 + $0xa0] sm:$0xf]
    %v63 = vld [vmem:[%s1 + $0xa4] sm:$0xf]
    %v64 = vld [vmem:[%s1 + $0xa8] sm:$0xf]
    %v65 = vld [vmem:[%s1 + $0xac] sm:$0xf]
    %v66 = vld [vmem:[%s1 + $0xb0] sm:$0xf]
    %v67 = vld [vmem:[%s1 + $0xb4] sm:$0xf]
    %v68 = vld [vmem:[%s1 + $0xb8] sm:$0xf]
    %v69 = vld [vmem:[%s1 + $0xbc] sm:$0xf]
    %v70 = vld [vmem:[%s1 + $0xc0] sm:$0xf]
    %v71 = vld [vmem:[%s1 + $0xc4] sm:$0xf]
    %v72 = vld [vmem:[%s1 + $0xc8] sm:$0xf]
    %v73 = vld [vmem:[%s1 + $0xcc] sm:$0xf]
    %v74 = vld [vmem:[%s1 + $0xd0] sm:$0xf]
    %v75 = vld [vmem:[%s1 + $0xd4] sm:$0xf]
    %v76 = vld [vmem:[%s1 + $0xd8] sm:$0xf]
    %v77 = vld [vmem:[%s1 + $0xdc] sm:$0xf]
    %v78 = vld [vmem:[%s1 + $0xe0] sm:$0xf]
    %v79 = vld [vmem:[%s1 + $0xe4] sm:$0xf]
    %v80 = vld [vmem:[%s1 + $0xe8] sm:$0xf]
    %v81 = vld [vmem:[%s1 + $0xec] sm:$0xf]
    %v82 = vld [vmem:[%s1 + $0xf0] sm:$0xf]
    %v83 = vld [vmem:[%s1 + $0xf4] sm:$0xf]
    %v84 = vld [vmem:[%s1 + $0xf8] sm:$0xf]
    %v85 = vld [vmem:[%s1 + $0xfc] sm:$0xf]
    %v86 = vld [vmem:[%s1 + $0x100] sm:$0xf]
    %v87 = vld [vmem:[%s1 + $0x104] sm:$0xf]
    %v88 = vld [vmem:[%s1 + $0x108] sm:$0xf]
    %v89 = vld [vmem:[%s1 + $0x10c] sm:$0xf]
    %v90 = vld [vmem:[%s1 + $0x110] sm:$0xf]
    %v91 = vld [vmem:[%s1 + $0x114] sm:$0xf]
    %v92 = vld [vmem:[%s1 + $0x118] sm:$0xf]
    %v93 = vld [vmem:[%s1 + $0x11c] sm:$0xf]
    %v94 = vld [vmem:[%s1 + $0x120] sm:$0xf]
    %v95 = vld [vmem:[%s1 + $0x124] sm:$0xf]
    %v96 = vld [vmem:[%s1 + $0x128] sm:$0xf]
    %v97 = vld [vmem:[%s1 + $0x12c] sm:$0xf]
    %v98 = vld [vmem:[%s1 + $0x130] sm:$0xf]
    %v99 = vld [vmem:[%s1 + $0x134] sm:$0xf]
    %v100 = vld [vmem:[%s1 + $0x138] sm:$0xf]
    %v101 = vld [vmem:[%s1 + $0x13c] sm:$0xf]
    %v102 = vld [vmem:[%s1 + $0x140] sm:$0xf]
    %v103 = vld [vmem:[%s1 + $0x144] sm:$0xf]
    %v104 = vld [vmem:[%s1 + $0x148] sm:$0xf]
    %v105 = vld [vmem:[%s1 + $0x14c] sm:$0xf]
    %v106 = vld [vmem:[%s1 + $0x150] sm:$0xf]
    %v107 = vld [vmem:[%s1 + $0x154] sm:$0xf]
    %v108 = vld [vmem:[%s1 + $0x158] sm:$0xf]
    %v109 = vld [vmem:[%s1 + $0x15c] sm:$0xf]
    %v110 = vld [vmem:[%s1 + $0x160] sm:$0xf]
    %v111 = vld [vmem:[%s1 + $0x164] sm:$0xf]
    %v112 = vld [vmem:[%s1 + $0x168] sm:$0xf]
    %v113 = vld [vmem:[%s1 + $0x16c] sm:$0xf]
    %v114 = vld [vmem:[%s1 + $0x170] sm:$0xf]
    %v115 = vld [vmem:[%s1 + $0x174] sm:$0xf]
    %v116 = vld [vmem:[%s1 + $0x178] sm:$0xf]
    %v117 = vld [vmem:[%s1 + $0x17c] sm:$0xf]
    %v118 = vld [vmem:[%s1 + $0x180] sm:$0xf]
    %v119 = vld [vmem:[%s1 + $0x184] sm:$0xf]
    %v120 = vld [vmem:[%s1 + $0x188] sm:$0xf]
    %v121 = vld [vmem:[%s1 + $0x18c] sm:$0xf]
    %v122 = vld [vmem:[%s1 + $0x190] sm:$0xf]
    %v123 = vld [vmem:[%s1 + $0x194] sm:$0xf]
    %v124 = vld [vmem:[%s1 + $0x198] sm:$0xf]
    %v125 = vld [vmem:[%s1 + $0x19c] sm:$0xf]
    %v126 = vld [vmem:[%s1 + $0x1a0] sm:$0xf]
    %v127 = vld [vmem:[%s1 + $0x1a4] sm:$0xf]
    %v128 = vld [vmem:[%s1 + $0x1a8] sm:$0xf]
    %v129 = vld [vmem:[%s1 + $0x1ac] sm:$0xf]
    %v130 = vld [vmem:[%s1 + $0x1b0] sm:$0xf]
    %v131 = vld [vmem:[%s1 + $0x1b4] sm:$0xf]
    %v132 = vld [vmem:[%s1 + $0x1b8] sm:$0xf]
    %v133 = vld [vmem:[%s1 + $0x1bc] sm:$0xf]
    %v134 = vld [vmem:[%s1 + $0x1c0] sm:$0xf]
    %v135 = vld [vmem:[%s1 + $0x1c4] sm:$0xf]
    %v136 = vld [vmem:[%s1 + $0x1c8] sm:$0xf]
    %v137 = vld [vmem:[%s1 + $0x1cc] sm:$0xf]
    %v138 = vld [vmem:[%s1 + $0x1d0] sm:$0xf]
    %v139 = vld [vmem:[%s1 + $0x1d4] sm:$0xf]
    %v140 = vld [vmem:[%s1 + $0x1d8] sm:$0xf]
    %v141 = vld [vmem:[%s1 + $0x1dc] sm:$0xf]
    %v142 = vld [vmem:[%s1 + $0x1e0] sm:$0xf]
    %v143 = vld [vmem:[%s1 + $0x1e4] sm:$0xf]
    %v144 = vld [vmem:[%s1 + $0x1e8] sm:$0xf]
    %v145 = vld [vmem:[%s1 + $0x1ec] sm:$0xf]
    %v146 = vld [vmem:[%s1 + $0x1f0] sm:$0xf]
    %v147 = vld [vmem:[%s1 + $0x1f4] sm:$0xf]
    %v148 = vld [vmem:[%s1 + $0x1f8] sm:$0xf]
    %v149 = vld [vmem:[%s1 + $0x1fc] sm:$0xf]
    %v150 = vld [vmem:[%s1 + $0x200] sm:$0xf]
    %v151 = vld [vmem:[%s1 + $0x204] sm:$0xf]
    %v152 = vld [vmem:[%s1 + $0x208] sm:$0xf]
    %v153 = vld [vmem:[%s1 + $0x20c] sm:$0xf]
    %v154 = vld [vmem:[%s1 + $0x210] sm:$0xf]
    %v155 = vld [vmem:[%s1 + $0x214] sm:$0xf]
    %v156 = vld [vmem:[%s1 + $0x218] sm:$0xf]
    %v157 = vld [vmem:[%s1 + $0x21c] sm:$0xf]
    %v158 = vld [vmem:[%s1 + $0x220] sm:$0xf]
    %v159 = vld [vmem:[%s1 + $0x224] sm:$0xf]
    %v160 = vld [vmem:[%s1 + $0x228] sm:$0xf]
    %v161 = vld [vmem:[%s1 + $0x22c] sm:$0xf]
    %v162 = vld [vmem:[%s1 + $0x230] sm:$0xf]
    %v163 = vld [vmem:[%s1 + $0x234] sm:$0xf]
    %v164 = vld [vmem:[%s1 + $0x238] sm:$0xf]
    %v165 = vld [vmem:[%s1 + $0x23c] sm:$0xf]
    %v166 = vld [vmem:[%s1 + $0x240] sm:$0xf]
    %v167 = vld [vmem:[%s1 + $0x244] sm:$0xf]
    %v168 = vld [vmem:[%s1 + $0x248] sm:$0xf]
    %v169 = vld [vmem:[%s1 + $0x24c] sm:$0xf]
    %v170 = vld [vmem:[%s1 + $0x250] sm:$0xf]
    %v171 = vld [vmem:[%s1 + $0x254] sm:$0xf]
    %v172 = vld [vmem:[%s1 + $0x258] sm:$0xf]
    %v173 = vld [vmem:[%s1 + $0x25c] sm:$0xf]
    %v174 = vld [vmem:[%s1 + $0x260] sm:$0xf]
    %v175 = vld [vmem:[%s1 + $0x264] sm:$0xf]
    %v176 = vld [vmem:[%s1 + $0x268] sm:$0xf]
    %v177 = vld [vmem:[%s1 + $0x26c] sm:$0xf]
    %v178 = vld [vmem:[%s1 + $0x270] sm:$0xf]
    %v179 = vld [vmem:[%s1 + $0x274] sm:$0xf]
    %v180 = vld [vmem:[%s1 + $0x278] sm:$0xf]
    %v181 = vld [vmem:[%s1 + $0x27c] sm:$0xf]
    %v182 = vld [vmem:[%s1 + $0x280] sm:$0xf]
    %v183 = vld [vmem:[%s1 + $0x284] sm:$0xf]
    %v184 = vld [vmem:[%s1 + $0x288] sm:$0xf]
    %v185 = vld [vmem:[%s1 + $0x28c] sm:$0xf]
    %v186 = vld [vmem:[%s1 + $0x290] sm:$0xf]
    %v187 = vld [vmem:[%s1 + $0x294] sm:$0xf]
    %v188 = vld [vmem:[%s1 + $0x298] sm:$0xf]
    %v189 = vld [vmem:[%s1 + $0x29c] sm:$0xf]
    %v190 = vld [vmem:[%s1 + $0x2a0] sm:$0xf]
    %v191 = vld [vmem:[%s1 + $0x2a4] sm:$0xf]
    %v192 = vld [vmem:[%s1 + $0x2a8] sm:$0xf]
    %v193 = vld [vmem:[%s1 + $0x2ac] sm:$0xf]
    %v194 = vld [vmem:[%s1 + $0x2b0] sm:$0xf]
    %v195 = vld [vmem:[%s1 + $0x2b4] sm:$0xf]
    %v196 = vld [vmem:[%s1 + $0x2b8] sm:$0xf]
    %v197 = vld [vmem:[%s1 + $0x2bc] sm:$0xf]
    %v198 = vld [vmem:[%s1 + $0x2c0] sm:$0xf]
    %v199 = vld [vmem:[%s1 + $0x2c4] sm:$0xf]
    %v200 = vld [vmem:[%s1 + $0x2c8] sm:$0xf]
    %v201 = vld [vmem:[%s1 + $0x2cc] sm:$0xf]
    %v202 = vld [vmem:[%s1 + $0x2d0] sm:$0xf]
    %v203 = vld [vmem:[%s1 + $0x2d4] sm:$0xf]
    %v204 = vld [vmem:[%s1 + $0x2d8] sm:$0xf]
    %v205 = vld [vmem:[%s1 + $0x2dc] sm:$0xf]
    %v206 = vld [vmem:[%s1 + $0x2e0] sm:$0xf]
    %v207 = vld [vmem:[%s1 + $0x2e4] sm:$0xf]
    %v208 = vld [vmem:[%s1 + $0x2e8] sm:$0xf]
    %v209 = vld [vmem:[%s1 + $0x2ec] sm:$0xf]
    %v210 = vld [vmem:[%s1 + $0x2f0] sm:$0xf]
    %v211 = vld [vmem:[%s1 + $0x2f4] sm:$0xf]
    %v212 = vld [vmem:[%s1 + $0x2f8] sm:$0xf]
    %v213 = vld [vmem:[%s1 + $0x2fc] sm:$0xf]
    %v214 = vld [vmem:[%s1 + $0x300] sm:$0xf]
    %v215 = vld [vmem:[%s1 + $0x304] sm:$0xf]
    %v216 = vld [vmem:[%s1 + $0x308] sm:$0xf]
    %v217 = vld [vmem:[%s1 + $0x30c] sm:$0xf]
    %v218 = vld [vmem:[%s1 + $0x310] sm:$0xf]
    %v219 = vld [vmem:[%s1 + $0x314] sm:$0xf]
    %v220 = vld [vmem:[%s1 + $0x318] sm:$0xf]
    %v221 = vld [vmem:[%s1 + $0x31c] sm:$0xf]
    %v222 = vld [vmem:[%s1 + $0x320] sm:$0xf]
    %v223 = vld [vmem:[%s1 + $0x324] sm:$0xf]
    %v224 = vld [vmem:[%s1 + $0x328] sm:$0xf]
    %v225 = vld [vmem:[%s1 + $0x32c] sm:$0xf]
    %v226 = vld [vmem:[%s1 + $0x330] sm:$0xf]
    %v227 = vld [vmem:[%s1 + $0x334] sm:$0xf]
    %v228 = vld [vmem:[%s1 + $0x338] sm:$0xf]
    %v229 = vld [vmem:[%s1 + $0x33c] sm:$0xf]
    %v230 = vld [vmem:[%s1 + $0x340] sm:$0xf]
    %v231 = vld [vmem:[%s1 + $0x344] sm:$0xf]
    %v232 = vld [vmem:[%s1 + $0x348] sm:$0xf]
    %v233 = vld [vmem:[%s1 + $0x34c] sm:$0xf]
    %v234 = vld [vmem:[%s1 + $0x350] sm:$0xf]
    %v235 = vld [vmem:[%s1 + $0x354] sm:$0xf]
    %v236 = vld [vmem:[%s1 + $0x358] sm:$0xf]
    %v237 = vld [vmem:[%s1 + $0x35c] sm:$0xf]
    %v238 = vld [vmem:[%s1 + $0x360] sm:$0xf]
    %v239 = vld [vmem:[%s1 + $0x364] sm:$0xf]
    %v240 = vld [vmem:[%s1 + $0x368] sm:$0xf]
    %v241 = vld [vmem:[%s1 + $0x36c] sm:$0xf]
    %v242 = vld [vmem:[%s1 + $0x370] sm:$0xf]
    %v243 = vld [vmem:[%s1 + $0x374] sm:$0xf]
    %v244 = vld [vmem:[%s1 + $0x378] sm:$0xf]
    %v245 = vld [vmem:[%s1 + $0x37c] sm:$0xf]
    %v246 = vld [vmem:[%s1 + $0x380] sm:$0xf]
    %v247 = vld [vmem:[%s1 + $0x384] sm:$0xf]
    %v248 = vld [vmem:[%s1 + $0x388] sm:$0xf]
    %v249 = vld [vmem:[%s1 + $0x38c] sm:$0xf]
    %v250 = vld [vmem:[%s1 + $0x390] sm:$0xf]
    %v251 = vld [vmem:[%s1 + $0x394] sm:$0xf]
    %v252 = vld [vmem:[%s1 + $0x398] sm:$0xf]
    %v253 = vld [vmem:[%s1 + $0x39c] sm:$0xf]
    %v254 = vld [vmem:[%s1 + $0x3a0] sm:$0xf]
    %v255 = vld [vmem:[%s1 + $0x3a4] sm:$0xf]
    %v256 = vld [vmem:[%s1 + $0x3a8] sm:$0xf]
    %v257 = vld [vmem:[%s1 + $0x3ac] sm:$0xf]
    %v258 = vld [vmem:[%s1 + $0x3b0] sm:$0xf]
    %v259 = vld [vmem:[%s1 + $0x3b4] sm:$0xf]
    %v260 = vld [vmem:[%s1 + $0x3b8] sm:$0xf]
    %v261 = vld [vmem:[%s1 + $0x3bc] sm:$0xf]
    %v262 = vld [vmem:[%s1 + $0x3c0] sm:$0xf]
    %v263 = vld [vmem:[%s1 + $0x3c4] sm:$0xf]
    %v264 = vld [vmem:[%s1 + $0x3c8] sm:$0xf]
    %v265 = vld [vmem:[%s1 + $0x3cc] sm:$0xf]
    %v266 = vld [vmem:[%s1 + $0x3d0] sm:$0xf]
    %v267 = vld [vmem:[%s1 + $0x3d4] sm:$0xf]
    %v268 = vld [vmem:[%s1 + $0x3d8] sm:$0xf]
    %v269 = vld [vmem:[%s1 + $0x3dc] sm:$0xf]
    %v270 = vld [vmem:[%s1 + $0x3e0] sm:$0xf]
    %v271 = vld [vmem:[%s1 + $0x3e4] sm:$0xf]
    %v272 = vld [vmem:[%s1 + $0x3e8] sm:$0xf]
    %v273 = vld [vmem:[%s1 + $0x3ec] sm:$0xf]
    %v274 = vld [vmem:[%s1 + $0x3f0] sm:$0xf]
    %v275 = vld [vmem:[%s1 + $0x3f4] sm:$0xf]
    %v276 = vld [vmem:[%s1 + $0x3f8] sm:$0xf]
    %v277 = vld [vmem:[%s1 + $0x3fc] sm:$0xf]
    %v278 = vld [vmem:[%s1 + $0x400] sm:$0xf]
    %v279 = vld [vmem:[%s1 + $0x404] sm:$0xf]
    %v280 = vld [vmem:[%s1 + $0x408] sm:$0xf]
    %v281 = vld [vmem:[%s1 + $0x40c] sm:$0xf]
    %v282 = vld [vmem:[%s1 + $0x410] sm:$0xf]
    %v283 = vld [vmem:[%s1 + $0x414] sm:$0xf]
    %v284 = vld [vmem:[%s1 + $0x418] sm:$0xf]
    %v285 = vld [vmem:[%s1 + $0x41c] sm:$0xf]
    %v286 = vld [vmem:[%s1 + $0x420] sm:$0xf]
    %v287 = vld [vmem:[%s1 + $0x424] sm:$0xf]
    %v288 = vld [vmem:[%s1 + $0x428] sm:$0xf]
    %v289 = vld [vmem:[%s1 + $0x42c] sm:$0xf]
    %v290 = vld [vmem:[%s1 + $0x430] sm:$0xf]
    %v291 = vld [vmem:[%s1 + $0x434] sm:$0xf]
    %v292 = vld [vmem:[%s1 + $0x438] sm:$0xf]
    %v293 = vld [vmem:[%s1 + $0x43c] sm:$0xf]
    %v294 = vld [vmem:[%s1 + $0x440] sm:$0xf]
    %v295 = vld [vmem:[%s1 + $0x444] sm:$0xf]
    %v296 = vld [vmem:[%s1 + $0x448] sm:$0xf]
    %v297 = vld [vmem:[%s1 + $0x44c] sm:$0xf]
    %v298 = vld [vmem:[%s1 + $0x450] sm:$0xf]
    %v299 = vld [vmem:[%s1 + $0x454] sm:$0xf]
    %v300 = vld [vmem:[%s1 + $0x458] sm:$0xf]
    %v301 = vld [vmem:[%s1 + $0x45c] sm:$0xf]
    %v302 = vld [vmem:[%s1 + $0x460] sm:$0xf]
    %v303 = vld [vmem:[%s1 + $0x464] sm:$0xf]
    %v304 = vld [vmem:[%s1 + $0x468] sm:$0xf]
    %v305 = vld [vmem:[%s1 + $0x46c] sm:$0xf]
    %v306 = vld [vmem:[%s1 + $0x470] sm:$0xf]
    %v307 = vld [vmem:[%s1 + $0x474] sm:$0xf]
    %v308 = vld [vmem:[%s1 + $0x478] sm:$0xf]
    %v309 = vld [vmem:[%s1 + $0x47c] sm:$0xf]
    %v310 = vld [vmem:[%s1 + $0x480] sm:$0xf]
    %v311 = vld [vmem:[%s1 + $0x484] sm:$0xf]
    %v312 = vld [vmem:[%s1 + $0x488] sm:$0xf]
    %v313 = vld [vmem:[%s1 + $0x48c] sm:$0xf]
    %v314 = vld [vmem:[%s1 + $0x490] sm:$0xf]
    %v315 = vld [vmem:[%s1 + $0x494] sm:$0xf]
    %v316 = vld [vmem:[%s1 + $0x498] sm:$0xf]
    %v317 = vld [vmem:[%s1 + $0x49c] sm:$0xf]
    %v318 = vld [vmem:[%s1 + $0x4a0] sm:$0xf]
    %v319 = vld [vmem:[%s1 + $0x4a4] sm:$0xf]
    %v320 = vld [vmem:[%s1 + $0x4a8] sm:$0xf]
    %v321 = vld [vmem:[%s1 + $0x4ac] sm:$0xf]
    %v322 = vld [vmem:[%s1 + $0x4b0] sm:$0xf]
    %v323 = vld [vmem:[%s1 + $0x4b4] sm:$0xf]
    %v324 = vld [vmem:[%s1 + $0x4b8] sm:$0xf]
    %v325 = vld [vmem:[%s1 + $0x4bc] sm:$0xf]
    %v326 = vld [vmem:[%s1 + $0x4c0] sm:$0xf]
    %v327 = vld [vmem:[%s1 + $0x4c4] sm:$0xf]
    %v328 = vld [vmem:[%s1 + $0x4c8] sm:$0xf]
    %v329 = vld [vmem:[%s1 + $0x4cc] sm:$0xf]
    %v330 = vld [vmem:[%s1 + $0x4d0] sm:$0xf]
    %v331 = vld [vmem:[%s1 + $0x4d4] sm:$0xf]
    %v332 = vld [vmem:[%s1 + $0x4d8] sm:$0xf]
    %v333 = vld [vmem:[%s1 + $0x4dc] sm:$0xf]
    %v334 = vld [vmem:[%s1 + $0x4e0] sm:$0xf]
    %v335 = vld [vmem:[%s1 + $0x4e4] sm:$0xf]
    %v336 = vld [vmem:[%s1 + $0x4e8] sm:$0xf]
    %v337 = vld [vmem:[%s1 + $0x4ec] sm:$0xf]
    %v338 = vld [vmem:[%s1 + $0x4f0] sm:$0xf]
    %v339 = vld [vmem:[%s1 + $0x4f4] sm:$0xf]
    %v340 = vld [vmem:[%s1 + $0x4f8] sm:$0xf]
    %v341 = vld [vmem:[%s1 + $0x4fc] sm:$0xf]
    %v342 = vld [vmem:[%s1 + $0x500] sm:$0xf]
    %v343 = vld [vmem:[%s1 + $0x504] sm:$0xf]
    %v344 = vld [vmem:[%s1 + $0x508] sm:$0xf]
    %v345 = vld [vmem:[%s1 + $0x50c] sm:$0xf]
    %v346 = vld [vmem:[%s1 + $0x510] sm:$0xf]
    %v347 = vld [vmem:[%s1 + $0x514] sm:$0xf]
    %v348 = vld [vmem:[%s1 + $0x518] sm:$0xf]
    %v349 = vld [vmem:[%s1 + $0x51c] sm:$0xf]
    %v350 = vld [vmem:[%s1 + $0x520] sm:$0xf]
    %v351 = vld [vmem:[%s1 + $0x524] sm:$0xf]
    %v352 = vld [vmem:[%s1 + $0x528] sm:$0xf]
    %v353 = vld [vmem:[%s1 + $0x52c] sm:$0xf]
    %v354 = vld [vmem:[%s1 + $0x530] sm:$0xf]
    %v355 = vld [vmem:[%s1 + $0x534] sm:$0xf]
    %v356 = vld [vmem:[%s1 + $0x538] sm:$0xf]
    %v357 = vld [vmem:[%s1 + $0x53c] sm:$0xf]
    %v358 = vld [vmem:[%s1 + $0x540] sm:$0xf]
    %v359 = vld [vmem:[%s1 + $0x544] sm:$0xf]
    %v360 = vld [vmem:[%s1 + $0x548] sm:$0xf]
    %v361 = vld [vmem:[%s1 + $0x54c] sm:$0xf]
    %v362 = vld [vmem:[%s1 + $0x550] sm:$0xf]
    %v363 = vld [vmem:[%s1 + $0x554] sm:$0xf]
    %v364 = vld [vmem:[%s1 + $0x558] sm:$0xf]
    %v365 = vld [vmem:[%s1 + $0x55c] sm:$0xf]
    %v366 = vld [vmem:[%s1 + $0x560] sm:$0xf]
    %v367 = vld [vmem:[%s1 + $0x564] sm:$0xf]
    %v368 = vld [vmem:[%s1 + $0x568] sm:$0xf]
    %v369 = vld [vmem:[%s1 + $0x56c] sm:$0xf]
    %v370 = vld [vmem:[%s1 + $0x570] sm:$0xf]
    %v371 = vld [vmem:[%s1 + $0x574] sm:$0xf]
    %v372 = vld [vmem:[%s1 + $0x578] sm:$0xf]
    %v373 = vld [vmem:[%s1 + $0x57c] sm:$0xf]
    %v374 = vld [vmem:[%s1 + $0x580] sm:$0xf]
    %v375 = vld [vmem:[%s1 + $0x584] sm:$0xf]
    %v376 = vld [vmem:[%s1 + $0x588] sm:$0xf]
    %v377 = vld [vmem:[%s1 + $0x58c] sm:$0xf]
    %v378 = vld [vmem:[%s1 + $0x590] sm:$0xf]
    %v379 = vld [vmem:[%s1 + $0x594] sm:$0xf]
    %v380 = vld [vmem:[%s1 + $0x598] sm:$0xf]
    %v381 = vld [vmem:[%s1 + $0x59c] sm:$0xf]
    %v382 = vld [vmem:[%s1 + $0x5a0] sm:$0xf]
    %v383 = vld [vmem:[%s1 + $0x5a4] sm:$0xf]
    %v384 = vld [vmem:[%s1 + $0x5a8] sm:$0xf]
    %v385 = vld [vmem:[%s1 + $0x5ac] sm:$0xf]
    %v386 = vld [vmem:[%s1 + $0x5b0] sm:$0xf]
    %v387 = vld [vmem:[%s1 + $0x5b4] sm:$0xf]
    %v388 = vld [vmem:[%s1 + $0x5b8] sm:$0xf]
    %v389 = vld [vmem:[%s1 + $0x5bc] sm:$0xf]
    %v390 = vld [vmem:[%s1 + $0x5c0] sm:$0xf]
    %v391 = vld [vmem:[%s1 + $0x5c4] sm:$0xf]
    %v392 = vld [vmem:[%s1 + $0x5c8] sm:$0xf]
    %v393 = vld [vmem:[%s1 + $0x5cc] sm:$0xf]
    %v394 = vld [vmem:[%s1 + $0x5d0] sm:$0xf]
    %v395 = vld [vmem:[%s1 + $0x5d4] sm:$0xf]
    %v396 = vld [vmem:[%s1 + $0x5d8] sm:$0xf]
    %v397 = vld [vmem:[%s1 + $0x5dc] sm:$0xf]
    %v398 = vld [vmem:[%s1 + $0x5e0] sm:$0xf]
    %v399 = vld [vmem:[%s1 + $0x5e4] sm:$0xf]
    %v400 = vld [vmem:[%s1 + $0x5e8] sm:$0xf]
    %v401 = vld [vmem:[%s1 + $0x5ec] sm:$0xf]
    %v402 = vld [vmem:[%s1 + $0x5f0] sm:$0xf]
    %v403 = vld [vmem:[%s1 + $0x5f4] sm:$0xf]
    %v404 = vld [vmem:[%s1 + $0x5f8] sm:$0xf]
    %v405 = vld [vmem:[%s1 + $0x5fc] sm:$0xf]
    %v406 = vld [vmem:[%s1 + $0x600] sm:$0xf]
    %v407 = vld [vmem:[%s1 + $0x604] sm:$0xf]
    %v408 = vld [vmem:[%s1 + $0x608] sm:$0xf]
    %v409 = vld [vmem:[%s1 + $0x60c] sm:$0xf]
    %v410 = vld [vmem:[%s1 + $0x610] sm:$0xf]
    %v411 = vld [vmem:[%s1 + $0x614] sm:$0xf]
    %v412 = vld [vmem:[%s1 + $0x618] sm:$0xf]
    %v413 = vld [vmem:[%s1 + $0x61c] sm:$0xf]
    %v414 = vld [vmem:[%s1 + $0x620] sm:$0xf]
    %v415 = vld [vmem:[%s1 + $0x624] sm:$0xf]
    %v416 = vld [vmem:[%s1 + $0x628] sm:$0xf]
    %v417 = vld [vmem:[%s1 + $0x62c] sm:$0xf]
    %v418 = vld [vmem:[%s1 + $0x630] sm:$0xf]
    %v419 = vld [vmem:[%s1 + $0x634] sm:$0xf]
    %v420 = vld [vmem:[%s1 + $0x638] sm:$0xf]
    %v421 = vld [vmem:[%s1 + $0x63c] sm:$0xf]
    %v422 = vld [vmem:[%s1 + $0x640] sm:$0xf]
    %v423 = vld [vmem:[%s1 + $0x644] sm:$0xf]
    %v424 = vld [vmem:[%s1 + $0x648] sm:$0xf]
    %v425 = vld [vmem:[%s1 + $0x64c] sm:$0xf]
    %v426 = vld [vmem:[%s1 + $0x650] sm:$0xf]
    %v427 = vld [vmem:[%s1 + $0x654] sm:$0xf]
    %v428 = vld [vmem:[%s1 + $0x658] sm:$0xf]
    %v429 = vld [vmem:[%s1 + $0x65c] sm:$0xf]
    %v430 = vld [vmem:[%s1 + $0x660] sm:$0xf]
    %v431 = vld [vmem:[%s1 + $0x664] sm:$0xf]
    %v432 = vld [vmem:[%s1 + $0x668] sm:$0xf]
    %v433 = vld [vmem:[%s1 + $0x66c] sm:$0xf]
    %v434 = vld [vmem:[%s1 + $0x670] sm:$0xf]
    %v435 = vld [vmem:[%s1 + $0x674] sm:$0xf]
    %v436 = vld [vmem:[%s1 + $0x678] sm:$0xf]
    %v437 = vld [vmem:[%s1 + $0x67c] sm:$0xf]
    %v438 = vld [vmem:[%s1 + $0x680] sm:$0xf]
    %v439 = vld [vmem:[%s1 + $0x684] sm:$0xf]
    %v440 = vld [vmem:[%s1 + $0x688] sm:$0xf]
    %v441 = vld [vmem:[%s1 + $0x68c] sm:$0xf]
    %v442 = vld [vmem:[%s1 + $0x690] sm:$0xf]
    %v443 = vld [vmem:[%s1 + $0x694] sm:$0xf]
    %v444 = vld [vmem:[%s1 + $0x698] sm:$0xf]
    %v445 = vld [vmem:[%s1 + $0x69c] sm:$0xf]
    %v446 = vld [vmem:[%s1 + $0x6a0] sm:$0xf]
    %v447 = vld [vmem:[%s1 + $0x6a4] sm:$0xf]
    %v448 = vld [vmem:[%s1 + $0x6a8] sm:$0xf]
    %v449 = vld [vmem:[%s1 + $0x6ac] sm:$0xf]
    %v450 = vld [vmem:[%s1 + $0x6b0] sm:$0xf]
    %v451 = vld [vmem:[%s1 + $0x6b4] sm:$0xf]
    %v452 = vld [vmem:[%s1 + $0x6b8] sm:$0xf]
    %v453 = vld [vmem:[%s1 + $0x6bc] sm:$0xf]
    %v454 = vld [vmem:[%s1 + $0x6c0] sm:$0xf]
    %v455 = vld [vmem:[%s1 + $0x6c4] sm:$0xf]
    %v456 = vld [vmem:[%s1 + $0x6c8] sm:$0xf]
    %v457 = vld [vmem:[%s1 + $0x6cc] sm:$0xf]
    %v458 = vld [vmem:[%s1 + $0x6d0] sm:$0xf]
    %v459 = vld [vmem:[%s1 + $0x6d4] sm:$0xf]
    %v460 = vld [vmem:[%s1 + $0x6d8] sm:$0xf]
    %v461 = vld [vmem:[%s1 + $0x6dc] sm:$0xf]
    %v462 = vld [vmem:[%s1 + $0x6e0] sm:$0xf]
    %v463 = vld [vmem:[%s1 + $0x6e4] sm:$0xf]
    %v464 = vld [vmem:[%s1 + $0x6e8] sm:$0xf]
    %v465 = vld [vmem:[%s1 + $0x6ec] sm:$0xf]
    %v466 = vld [vmem:[%s1 + $0x6f0] sm:$0xf]
    %v467 = vld [vmem:[%s1 + $0x6f4] sm:$0xf]
    %v468 = vld [vmem:[%s1 + $0x6f8] sm:$0xf]
    %v469 = vld [vmem:[%s1 + $0x6fc] sm:$0xf]
    %v470 = vld [vmem:[%s1 + $0x700] sm:$0xf]
    %v471 = vld [vmem:[%s1 + $0x704] sm:$0xf]
    %v472 = vld [vmem:[%s1 + $0x708] sm:$0xf]
    %v473 = vld [vmem:[%s1 + $0x70c] sm:$0xf]
    %v474 = vld [vmem:[%s1 + $0x710] sm:$0xf]
    %v475 = vld [vmem:[%s1 + $0x714] sm:$0xf]
    %v476 = vld [vmem:[%s1 + $0x718] sm:$0xf]
    %v477 = vld [vmem:[%s1 + $0x71c] sm:$0xf]
    %v478 = vld [vmem:[%s1 + $0x720] sm:$0xf]
    %v479 = vld [vmem:[%s1 + $0x724] sm:$0xf]
    %v480 = vld [vmem:[%s1 + $0x728] sm:$0xf]
    %v481 = vld [vmem:[%s1 + $0x72c] sm:$0xf]
    %v482 = vld [vmem:[%s1 + $0x730] sm:$0xf]
    %v483 = vld [vmem:[%s1 + $0x734] sm:$0xf]
    %v484 = vld [vmem:[%s1 + $0x738] sm:$0xf]
    %v485 = vld [vmem:[%s1 + $0x73c] sm:$0xf]
    %v486 = vld [vmem:[%s1 + $0x740] sm:$0xf]
    %v487 = vld [vmem:[%s1 + $0x744] sm:$0xf]
    %v488 = vld [vmem:[%s1 + $0x748] sm:$0xf]
    %v489 = vld [vmem:[%s1 + $0x74c] sm:$0xf]
    %v490 = vld [vmem:[%s1 + $0x750] sm:$0xf]
    %v491 = vld [vmem:[%s1 + $0x754] sm:$0xf]
    %v492 = vld [vmem:[%s1 + $0x758] sm:$0xf]
    %v493 = vld [vmem:[%s1 + $0x75c] sm:$0xf]
    %v494 = vld [vmem:[%s1 + $0x760] sm:$0xf]
    %v495 = vld [vmem:[%s1 + $0x764] sm:$0xf]
    %v496 = vld [vmem:[%s1 + $0x768] sm:$0xf]
    %v497 = vld [vmem:[%s1 + $0x76c] sm:$0xf]
    %v498 = vld [vmem:[%s1 + $0x770] sm:$0xf]
    %v499 = vld [vmem:[%s1 + $0x774] sm:$0xf]
    %v500 = vld [vmem:[%s1 + $0x778] sm:$0xf]
    %v501 = vld [vmem:[%s1 + $0x77c] sm:$0xf]
    %v502 = vld [vmem:[%s1 + $0x780] sm:$0xf]
    %v503 = vld [vmem:[%s1 + $0x784] sm:$0xf]
    %v504 = vld [vmem:[%s1 + $0x788] sm:$0xf]
    %v505 = vld [vmem:[%s1 + $0x78c] sm:$0xf]
    %v506 = vld [vmem:[%s1 + $0x790] sm:$0xf]
    %v507 = vld [vmem:[%s1 + $0x794] sm:$0xf]
    %v508 = vld [vmem:[%s1 + $0x798] sm:$0xf]
    %v509 = vld [vmem:[%s1 + $0x79c] sm:$0xf]
    %v510 = vld [vmem:[%s1 + $0x7a0] sm:$0xf]
    %v511 = vld [vmem:[%s1 + $0x7a4] sm:$0xf]
    %v512 = vld [vmem:[%s1 + $0x7a8] sm:$0xf]
    %v513 = vld [vmem:[%s1 + $0x7ac] sm:$0xf]
    %v514 = vld [vmem:[%s1 + $0x7b0] sm:$0xf]
    %v515 = vld [vmem:[%s1 + $0x7b4] sm:$0xf]
    %v516 = vld [vmem:[%s1 + $0x7b8] sm:$0xf]
    %v517 = vld [vmem:[%s1 + $0x7bc] sm:$0xf]
    %v518 = vld [vmem:[%s1 + $0x7c0] sm:$0xf]
    %v519 = vld [vmem:[%s1 + $0x7c4] sm:$0xf]
    %v520 = vld [vmem:[%s1 + $0x7c8] sm:$0xf]
    %v521 = vld [vmem:[%s1 + $0x7cc] sm:$0xf]
    %v522 = vld [vmem:[%s1 + $0x7d0] sm:$0xf]
    %v523 = vld [vmem:[%s1 + $0x7d4] sm:$0xf]
    %v524 = vld [vmem:[%s1 + $0x7d8] sm:$0xf]
    %v525 = vld [vmem:[%s1 + $0x7dc] sm:$0xf]
    %v526 = vld [vmem:[%s1 + $0x7e0] sm:$0xf]
    %v527 = vld [vmem:[%s1 + $0x7e4] sm:$0xf]
    %v528 = vld [vmem:[%s1 + $0x7e8] sm:$0xf]
    %v529 = vld [vmem:[%s1 + $0x7ec] sm:$0xf]
    %v530 = vld [vmem:[%s1 + $0x7f0] sm:$0xf]
    %v531 = vld [vmem:[%s1 + $0x7f4] sm:$0xf]
    %v532 = vld [vmem:[%s1 + $0x7f8] sm:$0xf]
    %v533 = vld [vmem:[%s1 + $0x7fc] sm:$0xf]
    %v534 = vld [vmem:[%s1 + $0x800] sm:$0xf]
    %v535 = vld [vmem:[%s1 + $0x804] sm:$0xf]
    %v536 = vld [vmem:[%s1 + $0x808] sm:$0xf]
    %v537 = vld [vmem:[%s1 + $0x80c] sm:$0xf]
    %v538 = vld [vmem:[%s1 + $0x810] sm:$0xf]
    %v539 = vld [vmem:[%s1 + $0x814] sm:$0xf]
    %v540 = vld [vmem:[%s1 + $0x818] sm:$0xf]
    %v541 = vld [vmem:[%s1 + $0x81c] sm:$0xf]
    %v542 = vld [vmem:[%s1 + $0x820] sm:$0xf]
    %v543 = vld [vmem:[%s1 + $0x824] sm:$0xf]
    %v544 = vld [vmem:[%s1 + $0x828] sm:$0xf]
    %v545 = vld [vmem:[%s1 + $0x82c] sm:$0xf]
    %v546 = vld [vmem:[%s1 + $0x830] sm:$0xf]
    %v547 = vld [vmem:[%s1 + $0x834] sm:$0xf]
    %v548 = vld [vmem:[%s1 + $0x838] sm:$0xf]
    %v549 = vld [vmem:[%s1 + $0x83c] sm:$0xf]
    %v550 = vld [vmem:[%s1 + $0x840] sm:$0xf]
    %v551 = vld [vmem:[%s1 + $0x844] sm:$0xf]
    %v552 = vld [vmem:[%s1 + $0x848] sm:$0xf]
    %v553 = vld [vmem:[%s1 + $0x84c] sm:$0xf]
    %v554 = vld [vmem:[%s1 + $0x850] sm:$0xf]
    %v555 = vld [vmem:[%s1 + $0x854] sm:$0xf]
    %v556 = vld [vmem:[%s1 + $0x858] sm:$0xf]
    %v557 = vld [vmem:[%s1 + $0x85c] sm:$0xf]
    %v558 = vld [vmem:[%s1 + $0x860] sm:$0xf]
    %v559 = vld [vmem:[%s1 + $0x864] sm:$0xf]
    %v560 = vld [vmem:[%s1 + $0x868] sm:$0xf]
    %v561 = vld [vmem:[%s1 + $0x86c] sm:$0xf]
    %v562 = vld [vmem:[%s1 + $0x870] sm:$0xf]
    %v563 = vld [vmem:[%s1 + $0x874] sm:$0xf]
    %v564 = vld [vmem:[%s1 + $0x878] sm:$0xf]
    %v565 = vld [vmem:[%s1 + $0x87c] sm:$0xf]
    %v566 = vld [vmem:[%s1 + $0x880] sm:$0xf]
    %v567 = vld [vmem:[%s1 + $0x884] sm:$0xf]
    %v568 = vld [vmem:[%s1 + $0x888] sm:$0xf]
    %v569 = vld [vmem:[%s1 + $0x88c] sm:$0xf]
    %v570 = vld [vmem:[%s1 + $0x890] sm:$0xf]
    %v571 = vld [vmem:[%s1 + $0x894] sm:$0xf]
    %v572 = vld [vmem:[%s1 + $0x898] sm:$0xf]
    %v573 = vld [vmem:[%s1 + $0x89c] sm:$0xf]
    %v574 = vld [vmem:[%s1 + $0x8a0] sm:$0xf]
    %v575 = vld [vmem:[%s1 + $0x8a4] sm:$0xf]
    %v576 = vld [vmem:[%s1 + $0x8a8] sm:$0xf]
    %v577 = vld [vmem:[%s1 + $0x8ac] sm:$0xf]
    %v578 = vld [vmem:[%s1 + $0x8b0] sm:$0xf]
    %v579 = vld [vmem:[%s1 + $0x8b4] sm:$0xf]
    %v580 = vld [vmem:[%s1 + $0x8b8] sm:$0xf]
    %v581 = vld [vmem:[%s1 + $0x8bc] sm:$0xf]
    %v582 = vld [vmem:[%s1 + $0x8c0] sm:$0xf]
    %v583 = vld [vmem:[%s1 + $0x8c4] sm:$0xf]
    %v584 = vld [vmem:[%s1 + $0x8c8] sm:$0xf]
    %v585 = vld [vmem:[%s1 + $0x8cc] sm:$0xf]
    %v586 = vld [vmem:[%s1 + $0x8d0] sm:$0xf]
    %v587 = vld [vmem:[%s1 + $0x8d4] sm:$0xf]
    %v588 = vld [vmem:[%s1 + $0x8d8] sm:$0xf]
    %v589 = vld [vmem:[%s1 + $0x8dc] sm:$0xf]
    %v590 = vld [vmem:[%s1 + $0x8e0] sm:$0xf]
    %v591 = vld [vmem:[%s1 + $0x8e4] sm:$0xf]
    %v592 = vld [vmem:[%s1 + $0x8e8] sm:$0xf]
    %v593 = vld [vmem:[%s1 + $0x8ec] sm:$0xf]
    %v594 = vld [vmem:[%s1 + $0x8f0] sm:$0xf]
    %v595 = vld [vmem:[%s1 + $0x8f4] sm:$0xf]
    %v596 = vld [vmem:[%s1 + $0x8f8] sm:$0xf]
    %v597 = vld [vmem:[%s1 + $0x8fc] sm:$0xf]
    %v598 = vld [vmem:[%s1 + $0x900] sm:$0xf]
    %v599 = vld [vmem:[%s1 + $0x904] sm:$0xf]
    %v600 = vld [vmem:[%s1 + $0x908] sm:$0xf]
    %v601 = vld [vmem:[%s1 + $0x90c] sm:$0xf]
    %v602 = vld [vmem:[%s1 + $0x910] sm:$0xf]
    %v603 = vld [vmem:[%s1 + $0x914] sm:$0xf]
    %v604 = vld [vmem:[%s1 + $0x918] sm:$0xf]
    %v605 = vld [vmem:[%s1 + $0x91c] sm:$0xf]
    %v606 = vld [vmem:[%s1 + $0x920] sm:$0xf]
    %v607 = vld [vmem:[%s1 + $0x924] sm:$0xf]
    %v608 = vld [vmem:[%s1 + $0x928] sm:$0xf]
    %v609 = vld [vmem:[%s1 + $0x92c] sm:$0xf]
    %v610 = vld [vmem:[%s1 + $0x930] sm:$0xf]
    %v611 = vld [vmem:[%s1 + $0x934] sm:$0xf]
    %v612 = vld [vmem:[%s1 + $0x938] sm:$0xf]
    %v613 = vld [vmem:[%s1 + $0x93c] sm:$0xf]
    %v614 = vld [vmem:[%s1 + $0x940] sm:$0xf]
    %v615 = vld [vmem:[%s1 + $0x944] sm:$0xf]
    %v616 = vld [vmem:[%s1 + $0x948] sm:$0xf]
    %v617 = vld [vmem:[%s1 + $0x94c] sm:$0xf]
    %v618 = vld [vmem:[%s1 + $0x950] sm:$0xf]
    %v619 = vld [vmem:[%s1 + $0x954] sm:$0xf]
    %v620 = vld [vmem:[%s1 + $0x958] sm:$0xf]
    %v621 = vld [vmem:[%s1 + $0x95c] sm:$0xf]
    %v622 = vld [vmem:[%s1 + $0x960] sm:$0xf]
    %v623 = vld [vmem:[%s1 + $0x964] sm:$0xf]
    %v624 = vld [vmem:[%s1 + $0x968] sm:$0xf]
    %v625 = vld [vmem:[%s1 + $0x96c] sm:$0xf]
    %v626 = vld [vmem:[%s1 + $0x970] sm:$0xf]
    %v627 = vld [vmem:[%s1 + $0x974] sm:$0xf]
    %v628 = vld [vmem:[%s1 + $0x978] sm:$0xf]
    %v629 = vld [vmem:[%s1 + $0x97c] sm:$0xf]
    %v630 = vld [vmem:[%s1 + $0x980] sm:$0xf]
    %v631 = vld [vmem:[%s1 + $0x984] sm:$0xf]
    %v632 = vld [vmem:[%s1 + $0x988] sm:$0xf]
    %v633 = vld [vmem:[%s1 + $0x98c] sm:$0xf]
    %v634 = vld [vmem:[%s1 + $0x990] sm:$0xf]
    %v635 = vld [vmem:[%s1 + $0x994] sm:$0xf]
    %v636 = vld [vmem:[%s1 + $0x998] sm:$0xf]
    %v637 = vld [vmem:[%s1 + $0x99c] sm:$0xf]
    %v638 = vld [vmem:[%s1 + $0x9a0] sm:$0xf]
    %v639 = vld [vmem:[%s1 + $0x9a4] sm:$0xf]
    %v640 = vld [vmem:[%s1 + $0x9a8] sm:$0xf]
    %v641 = vld [vmem:[%s1 + $0x9ac] sm:$0xf]
    %v642 = vld [vmem:[%s1 + $0x9b0] sm:$0xf]
    %v643 = vld [vmem:[%s1 + $0x9b4] sm:$0xf]
    %v644 = vld [vmem:[%s1 + $0x9b8] sm:$0xf]
    %v645 = vld [vmem:[%s1 + $0x9bc] sm:$0xf]
    %v646 = vld [vmem:[%s1 + $0x9c0] sm:$0xf]
    %v647 = vld [vmem:[%s1 + $0x9c4] sm:$0xf]
    %v648 = vld [vmem:[%s1 + $0x9c8] sm:$0xf]
    %v649 = vld [vmem:[%s1 + $0x9cc] sm:$0xf]
    %v650 = vld [vmem:[%s1 + $0x9d0] sm:$0xf]
    %v651 = vld [vmem:[%s1 + $0x9d4] sm:$0xf]
    %v652 = vld [vmem:[%s1 + $0x9d8] sm:$0xf]
    %v653 = vld [vmem:[%s1 + $0x9dc] sm:$0xf]
    %v654 = vld [vmem:[%s1 + $0x9e0] sm:$0xf]
    %v655 = vld [vmem:[%s1 + $0x9e4] sm:$0xf]
    %v656 = vld [vmem:[%s1 + $0x9e8] sm:$0xf]
    %v657 = vld [vmem:[%s1 + $0x9ec] sm:$0xf]
    %v658 = vld [vmem:[%s1 + $0x9f0] sm:$0xf]
    %v659 = vld [vmem:[%s1 + $0x9f4] sm:$0xf]
    %v660 = vld [vmem:[%s1 + $0x9f8] sm:$0xf]
    %v661 = vld [vmem:[%s1 + $0x9fc] sm:$0xf]
    %v662 = vld [vmem:[%s1 + $0xa00] sm:$0xf]
    %v663 = vld [vmem:[%s1 + $0xa04] sm:$0xf]
    %v664 = vld [vmem:[%s1 + $0xa08] sm:$0xf]
    %v665 = vld [vmem:[%s1 + $0xa0c] sm:$0xf]
    %v666 = vld [vmem:[%s1 + $0xa10] sm:$0xf]
    %v667 = vld [vmem:[%s1 + $0xa14] sm:$0xf]
    %v668 = vld [vmem:[%s1 + $0xa18] sm:$0xf]
    %v669 = vld [vmem:[%s1 + $0xa1c] sm:$0xf]
    %v670 = vld [vmem:[%s1 + $0xa20] sm:$0xf]
    %v671 = vld [vmem:[%s1 + $0xa24] sm:$0xf]
    %v672 = vld [vmem:[%s1 + $0xa28] sm:$0xf]
    %v673 = vld [vmem:[%s1 + $0xa2c] sm:$0xf]
    %v674 = vld [vmem:[%s1 + $0xa30] sm:$0xf]
    %v675 = vld [vmem:[%s1 + $0xa34] sm:$0xf]
    %v676 = vld [vmem:[%s1 + $0xa38] sm:$0xf]
    %v677 = vld [vmem:[%s1 + $0xa3c] sm:$0xf]
    %v678 = vld [vmem:[%s1 + $0xa40] sm:$0xf]
    %v679 = vld [vmem:[%s1 + $0xa44] sm:$0xf]
    %v680 = vld [vmem:[%s1 + $0xa48] sm:$0xf]
    %v681 = vld [vmem:[%s1 + $0xa4c] sm:$0xf]
    %v682 = vld [vmem:[%s1 + $0xa50] sm:$0xf]
    %v683 = vld [vmem:[%s1 + $0xa54] sm:$0xf]
    %v684 = vld [vmem:[%s1 + $0xa58] sm:$0xf]
    %v685 = vld [vmem:[%s1 + $0xa5c] sm:$0xf]
    %v686 = vld [vmem:[%s1 + $0xa60] sm:$0xf]
    %v687 = vld [vmem:[%s1 + $0xa64] sm:$0xf]
    %v688 = vld [vmem:[%s1 + $0xa68] sm:$0xf]
    %v689 = vld [vmem:[%s1 + $0xa6c] sm:$0xf]
    %v690 = vld [vmem:[%s1 + $0xa70] sm:$0xf]
    %v691 = vld [vmem:[%s1 + $0xa74] sm:$0xf]
    %v692 = vld [vmem:[%s1 + $0xa78] sm:$0xf]
    %v693 = vld [vmem:[%s1 + $0xa7c] sm:$0xf]
    %v694 = vld [vmem:[%s1 + $0xa80] sm:$0xf]
    %v695 = vld [vmem:[%s1 + $0xa84] sm:$0xf]
    %v696 = vld [vmem:[%s1 + $0xa88] sm:$0xf]
    %v697 = vld [vmem:[%s1 + $0xa8c] sm:$0xf]
    %v698 = vld [vmem:[%s1 + $0xa90] sm:$0xf]
    %v699 = vld [vmem:[%s1 + $0xa94] sm:$0xf]
    %v700 = vld [vmem:[%s1 + $0xa98] sm:$0xf]
    %v701 = vld [vmem:[%s1 + $0xa9c] sm:$0xf]
    %v702 = vld [vmem:[%s1 + $0xaa0] sm:$0xf]
    %v703 = vld [vmem:[%s1 + $0xaa4] sm:$0xf]
    %v704 = vld [vmem:[%s1 + $0xaa8] sm:$0xf]
    %v705 = vld [vmem:[%s1 + $0xaac] sm:$0xf]
    %v706 = vld [vmem:[%s1 + $0xab0] sm:$0xf]
    %v707 = vld [vmem:[%s1 + $0xab4] sm:$0xf]
    %v708 = vld [vmem:[%s1 + $0xab8] sm:$0xf]
    %v709 = vld [vmem:[%s1 + $0xabc] sm:$0xf]
    %v710 = vld [vmem:[%s1 + $0xac0] sm:$0xf]
    %v711 = vld [vmem:[%s1 + $0xac4] sm:$0xf]
    %v712 = vld [vmem:[%s1 + $0xac8] sm:$0xf]
    %v713 = vld [vmem:[%s1 + $0xacc] sm:$0xf]
    %v714 = vld [vmem:[%s1 + $0xad0] sm:$0xf]
    %v715 = vld [vmem:[%s1 + $0xad4] sm:$0xf]
    %v716 = vld [vmem:[%s1 + $0xad8] sm:$0xf]
    %v717 = vld [vmem:[%s1 + $0xadc] sm:$0xf]
    %v718 = vld [vmem:[%s1 + $0xae0] sm:$0xf]
    %v719 = vld [vmem:[%s1 + $0xae4] sm:$0xf]
    %v720 = vld [vmem:[%s1 + $0xae8] sm:$0xf]
    %v721 = vld [vmem:[%s1 + $0xaec] sm:$0xf]
    %v722 = vld [vmem:[%s1 + $0xaf0] sm:$0xf]
    %v723 = vld [vmem:[%s1 + $0xaf4] sm:$0xf]
    %v724 = vld [vmem:[%s1 + $0xaf8] sm:$0xf]
    %v725 = vld [vmem:[%s1 + $0xafc] sm:$0xf]
    %v726 = vld [vmem:[%s1 + $0xb00] sm:$0xf]
    %v727 = vld [vmem:[%s1 + $0xb04] sm:$0xf]
    %v728 = vld [vmem:[%s1 + $0xb08] sm:$0xf]
    %v729 = vld [vmem:[%s1 + $0xb0c] sm:$0xf]
    %v730 = vld [vmem:[%s1 + $0xb10] sm:$0xf]
    %v731 = vld [vmem:[%s1 + $0xb14] sm:$0xf]
    %v732 = vld [vmem:[%s1 + $0xb18] sm:$0xf]
    %v733 = vld [vmem:[%s1 + $0xb1c] sm:$0xf]
    %v734 = vld [vmem:[%s1 + $0xb20] sm:$0xf]
    %v735 = vld [vmem:[%s1 + $0xb24] sm:$0xf]
    %v736 = vld [vmem:[%s1 + $0xb28] sm:$0xf]
    %v737 = vld [vmem:[%s1 + $0xb2c] sm:$0xf]
    %v738 = vld [vmem:[%s1 + $0xb30] sm:$0xf]
    %v739 = vld [vmem:[%s1 + $0xb34] sm:$0xf]
    %v740 = vld [vmem:[%s1 + $0xb38] sm:$0xf]
    %v741 = vld [vmem:[%s1 + $0xb3c] sm:$0xf]
    %v742 = vld [vmem:[%s1 + $0xb40] sm:$0xf]
    %v743 = vld [vmem:[%s1 + $0xb44] sm:$0xf]
    %v744 = vld [vmem:[%s1 + $0xb48] sm:$0xf]
    %v745 = vld [vmem:[%s1 + $0xb4c] sm:$0xf]
    %v746 = vld [vmem:[%s1 + $0xb50] sm:$0xf]
    %v747 = vld [vmem:[%s1 + $0xb54] sm:$0xf]
    %v748 = vld [vmem:[%s1 + $0xb58] sm:$0xf]
    %v749 = vld [vmem:[%s1 + $0xb5c] sm:$0xf]
    %v750 = vld [vmem:[%s1 + $0xb60] sm:$0xf]
    %v751 = vld [vmem:[%s1 + $0xb64] sm:$0xf]
    %v752 = vld [vmem:[%s1 + $0xb68] sm:$0xf]
    %v753 = vld [vmem:[%s1 + $0xb6c] sm:$0xf]
    %v754 = vld [vmem:[%s1 + $0xb70] sm:$0xf]
    %v755 = vld [vmem:[%s1 + $0xb74] sm:$0xf]
    %v756 = vld [vmem:[%s1 + $0xb78] sm:$0xf]
    %v757 = vld [vmem:[%s1 + $0xb7c] sm:$0xf]
    %v758 = vld [vmem:[%s1 + $0xb80] sm:$0xf]
    %v759 = vld [vmem:[%s1 + $0xb84] sm:$0xf]
    %v760 = vld [vmem:[%s1 + $0xb88] sm:$0xf]
    %v761 = vld [vmem:[%s1 + $0xb8c] sm:$0xf]
    %v762 = vld [vmem:[%s1 + $0xb90] sm:$0xf]
    %v763 = vld [vmem:[%s1 + $0xb94] sm:$0xf]
    %v764 = vld [vmem:[%s1 + $0xb98] sm:$0xf]
    %v765 = vld [vmem:[%s1 + $0xb9c] sm:$0xf]
    %v766 = vld [vmem:[%s1 + $0xba0] sm:$0xf]
    %v767 = vld [vmem:[%s1 + $0xba4] sm:$0xf]
    %v768 = vld [vmem:[%s1 + $0xba8] sm:$0xf]
    %v769 = vld [vmem:[%s1 + $0xbac] sm:$0xf]
    %v770 = vld [vmem:[%s1 + $0xbb0] sm:$0xf]
    %v771 = vld [vmem:[%s1 + $0xbb4] sm:$0xf]
    %v772 = vld [vmem:[%s1 + $0xbb8] sm:$0xf]
    %v773 = vld [vmem:[%s1 + $0xbbc] sm:$0xf]
    %v774 = vld [vmem:[%s1 + $0xbc0] sm:$0xf]
    %v775 = vld [vmem:[%s1 + $0xbc4] sm:$0xf]
    %v776 = vld [vmem:[%s1 + $0xbc8] sm:$0xf]
    %v777 = vld [vmem:[%s1 + $0xbcc] sm:$0xf]
    %v778 = vld [vmem:[%s1 + $0xbd0] sm:$0xf]
    %v779 = vld [vmem:[%s1 + $0xbd4] sm:$0xf]
    %v780 = vld [vmem:[%s1 + $0xbd8] sm:$0xf]
    %v781 = vld [vmem:[%s1 + $0xbdc] sm:$0xf]
    %v782 = vld [vmem:[%s1 + $0xbe0] sm:$0xf]
    %v783 = vld [vmem:[%s1 + $0xbe4] sm:$0xf]
    %v784 = vld [vmem:[%s1 + $0xbe8] sm:$0xf]
    %v785 = vld [vmem:[%s1 + $0xbec] sm:$0xf]
    %v786 = vld [vmem:[%s1 + $0xbf0] sm:$0xf]
    %v787 = vld [vmem:[%s1 + $0xbf4] sm:$0xf]
    %v788 = vld [vmem:[%s1 + $0xbf8] sm:$0xf]
    %v789 = vld [vmem:[%s1 + $0xbfc] sm:$0xf]
    %v790 = vld [vmem:[%s2] sm:$0x1]
    %v792 = vlaneseq
    %v793 = vshrl.u32 %v792, 7
    %v794 = vsub.s32 0, %v793
    %v795 = vrot.slane %v790, %v794
    %v803 = vcombine.high %v16, %v16
    %v805 = vunpack.c.l.s4 1966171168
    %v806 = vunpack.c.0.s8 %v805
    %v807 = vlaneseq
    %v808 = vshrl.u32 %v807, 7
    %v809 = vsub.s32 %v806, %v808
    %v810 = vrot.slane %v16, %v809
    %v812 = vunpack.c.l.s4 1966171168
    %v813 = vunpack.c.0.s8 %v812
    %v814 = vlaneseq
    %v815 = vshrl.u32 %v814, 7
    %v816 = vsub.s32 %v813, %v815
    %v817 = vrot.slane %v803, %v816
    %v818 = vcombine.high %v810, %v810
    %v819 = vcombine.high %v817, %v817
    %v821 = vunpack.c.l.s4 1966171168
    %v822 = vunpack.c.0.s8 %v821
    %v823 = vlaneseq
    %v824 = vshrl.u32 %v823, 7
    %v825 = vsub.s32 %v822, %v824
    %v826 = vrot.slane %v810, %v825
    %v828 = vunpack.c.l.s4 1966171168
    %v829 = vunpack.c.0.s8 %v828
    %v830 = vlaneseq
    %v831 = vshrl.u32 %v830, 7
    %v832 = vsub.s32 %v829, %v831
    %v833 = vrot.slane %v817, %v832
    %v835 = vunpack.c.l.s4 1966171168
    %v836 = vunpack.c.0.s8 %v835
    %v837 = vlaneseq
    %v838 = vshrl.u32 %v837, 7
    %v839 = vsub.s32 %v836, %v838
    %v840 = vrot.slane %v818, %v839
    %v842 = vunpack.c.l.s4 1966171168
    %v843 = vunpack.c.0.s8 %v842
    %v844 = vlaneseq
    %v845 = vshrl.u32 %v844, 7
    %v846 = vsub.s32 %v843, %v845
    %v847 = vrot.slane %v819, %v846
    %v848 = vcombine.high %v826, %v826
    %v849 = vcombine.high %v833, %v833
    %v850 = vcombine.high %v840, %v840
    %v851 = vcombine.high %v847, %v847
    %v852 = vcombine.high %v17, %v17
    %v854 = vunpack.c.l.s4 1966171168
    %v855 = vunpack.c.0.s8 %v854
    %v856 = vlaneseq
    %v857 = vshrl.u32 %v856, 7
    %v858 = vsub.s32 %v855, %v857
    %v859 = vrot.slane %v17, %v858
    %v861 = vunpack.c.l.s4 1966171168
    %v862 = vunpack.c.0.s8 %v861
    %v863 = vlaneseq
    %v864 = vshrl.u32 %v863, 7
    %v865 = vsub.s32 %v862, %v864
    %v866 = vrot.slane %v852, %v865
    %v867 = vcombine.high %v859, %v859
    %v868 = vcombine.high %v866, %v866
    %v870 = vunpack.c.l.s4 1966171168
    %v871 = vunpack.c.0.s8 %v870
    %v872 = vlaneseq
    %v873 = vshrl.u32 %v872, 7
    %v874 = vsub.s32 %v871, %v873
    %v875 = vrot.slane %v859, %v874
    %v877 = vunpack.c.l.s4 1966171168
    %v878 = vunpack.c.0.s8 %v877
    %v879 = vlaneseq
    %v880 = vshrl.u32 %v879, 7
    %v881 = vsub.s32 %v878, %v880
    %v882 = vrot.slane %v866, %v881
    %v884 = vunpack.c.l.s4 1966171168
    %v885 = vunpack.c.0.s8 %v884
    %v886 = vlaneseq
    %v887 = vshrl.u32 %v886, 7
    %v888 = vsub.s32 %v885, %v887
    %v889 = vrot.slane %v867, %v888
    %v891 = vunpack.c.l.s4 1966171168
    %v892 = vunpack.c.0.s8 %v891
    %v893 = vlaneseq
    %v894 = vshrl.u32 %v893, 7
    %v895 = vsub.s32 %v892, %v894
    %v896 = vrot.slane %v868, %v895
    %v897 = vcombine.high %v875, %v875
    %v898 = vcombine.high %v882, %v882
    %v899 = vcombine.high %v889, %v889
    %v900 = vcombine.high %v896, %v896
    %v901 = vcombine.high %v18, %v18
    %v903 = vunpack.c.l.s4 1966171168
    %v904 = vunpack.c.0.s8 %v903
    %v905 = vlaneseq
    %v906 = vshrl.u32 %v905, 7
    %v907 = vsub.s32 %v904, %v906
    %v908 = vrot.slane %v18, %v907
    %v910 = vunpack.c.l.s4 1966171168
    %v911 = vunpack.c.0.s8 %v910
    %v912 = vlaneseq
    %v913 = vshrl.u32 %v912, 7
    %v914 = vsub.s32 %v911, %v913
    %v915 = vrot.slane %v901, %v914
    %v916 = vcombine.high %v908, %v908
    %v917 = vcombine.high %v915, %v915
    %v919 = vunpack.c.l.s4 1966171168
    %v920 = vunpack.c.0.s8 %v919
    %v921 = vlaneseq
    %v922 = vshrl.u32 %v921, 7
    %v923 = vsub.s32 %v920, %v922
    %v924 = vrot.slane %v908, %v923
    %v926 = vunpack.c.l.s4 1966171168
    %v927 = vunpack.c.0.s8 %v926
    %v928 = vlaneseq
    %v929 = vshrl.u32 %v928, 7
    %v930 = vsub.s32 %v927, %v929
    %v931 = vrot.slane %v915, %v930
    %v933 = vunpack.c.l.s4 1966171168
    %v934 = vunpack.c.0.s8 %v933
    %v935 = vlaneseq
    %v936 = vshrl.u32 %v935, 7
    %v937 = vsub.s32 %v934, %v936
    %v938 = vrot.slane %v916, %v937
    %v940 = vunpack.c.l.s4 1966171168
    %v941 = vunpack.c.0.s8 %v940
    %v942 = vlaneseq
    %v943 = vshrl.u32 %v942, 7
    %v944 = vsub.s32 %v941, %v943
    %v945 = vrot.slane %v917, %v944
    %v946 = vcombine.high %v924, %v924
    %v947 = vcombine.high %v931, %v931
    %v948 = vcombine.high %v938, %v938
    %v949 = vcombine.high %v945, %v945
    %v950 = vcombine.high %v19, %v19
    %v952 = vunpack.c.l.s4 1966171168
    %v953 = vunpack.c.0.s8 %v952
    %v954 = vlaneseq
    %v955 = vshrl.u32 %v954, 7
    %v956 = vsub.s32 %v953, %v955
    %v957 = vrot.slane %v19, %v956
    %v959 = vunpack.c.l.s4 1966171168
    %v960 = vunpack.c.0.s8 %v959
    %v961 = vlaneseq
    %v962 = vshrl.u32 %v961, 7
    %v963 = vsub.s32 %v960, %v962
    %v964 = vrot.slane %v950, %v963
    %v965 = vcombine.high %v957, %v957
    %v966 = vcombine.high %v964, %v964
    %v968 = vunpack.c.l.s4 1966171168
    %v969 = vunpack.c.0.s8 %v968
    %v970 = vlaneseq
    %v971 = vshrl.u32 %v970, 7
    %v972 = vsub.s32 %v969, %v971
    %v973 = vrot.slane %v957, %v972
    %v975 = vunpack.c.l.s4 1966171168
    %v976 = vunpack.c.0.s8 %v975
    %v977 = vlaneseq
    %v978 = vshrl.u32 %v977, 7
    %v979 = vsub.s32 %v976, %v978
    %v980 = vrot.slane %v964, %v979
    %v982 = vunpack.c.l.s4 1966171168
    %v983 = vunpack.c.0.s8 %v982
    %v984 = vlaneseq
    %v985 = vshrl.u32 %v984, 7
    %v986 = vsub.s32 %v983, %v985
    %v987 = vrot.slane %v965, %v986
    %v989 = vunpack.c.l.s4 1966171168
    %v990 = vunpack.c.0.s8 %v989
    %v991 = vlaneseq
    %v992 = vshrl.u32 %v991, 7
    %v993 = vsub.s32 %v990, %v992
    %v994 = vrot.slane %v966, %v993
    %v995 = vcombine.high %v973, %v973
    %v996 = vcombine.high %v980, %v980
    %v997 = vcombine.high %v987, %v987
    %v998 = vcombine.high %v994, %v994
    %v999 = vcombine.high %v20, %v20
    %v1001 = vunpack.c.l.s4 1966171168
    %v1002 = vunpack.c.0.s8 %v1001
    %v1003 = vlaneseq
    %v1004 = vshrl.u32 %v1003, 7
    %v1005 = vsub.s32 %v1002, %v1004
    %v1006 = vrot.slane %v20, %v1005
    %v1008 = vunpack.c.l.s4 1966171168
    %v1009 = vunpack.c.0.s8 %v1008
    %v1010 = vlaneseq
    %v1011 = vshrl.u32 %v1010, 7
    %v1012 = vsub.s32 %v1009, %v1011
    %v1013 = vrot.slane %v999, %v1012
    %v1014 = vcombine.high %v1006, %v1006
    %v1015 = vcombine.high %v1013, %v1013
    %v1017 = vunpack.c.l.s4 1966171168
    %v1018 = vunpack.c.0.s8 %v1017
    %v1019 = vlaneseq
    %v1020 = vshrl.u32 %v1019, 7
    %v1021 = vsub.s32 %v1018, %v1020
    %v1022 = vrot.slane %v1006, %v1021
    %v1024 = vunpack.c.l.s4 1966171168
    %v1025 = vunpack.c.0.s8 %v1024
    %v1026 = vlaneseq
    %v1027 = vshrl.u32 %v1026, 7
    %v1028 = vsub.s32 %v1025, %v1027
    %v1029 = vrot.slane %v1013, %v1028
    %v1031 = vunpack.c.l.s4 1966171168
    %v1032 = vunpack.c.0.s8 %v1031
    %v1033 = vlaneseq
    %v1034 = vshrl.u32 %v1033, 7
    %v1035 = vsub.s32 %v1032, %v1034
    %v1036 = vrot.slane %v1014, %v1035
    %v1038 = vunpack.c.l.s4 1966171168
    %v1039 = vunpack.c.0.s8 %v1038
    %v1040 = vlaneseq
    %v1041 = vshrl.u32 %v1040, 7
    %v1042 = vsub.s32 %v1039, %v1041
    %v1043 = vrot.slane %v1015, %v1042
    %v1044 = vcombine.high %v1022, %v1022
    %v1045 = vcombine.high %v1029, %v1029
    %v1046 = vcombine.high %v1036, %v1036
    %v1047 = vcombine.high %v1043, %v1043
    %v1048 = vcombine.high %v21, %v21
    %v1050 = vunpack.c.l.s4 1966171168
    %v1051 = vunpack.c.0.s8 %v1050
    %v1052 = vlaneseq
    %v1053 = vshrl.u32 %v1052, 7
    %v1054 = vsub.s32 %v1051, %v1053
    %v1055 = vrot.slane %v21, %v1054
    %v1057 = vunpack.c.l.s4 1966171168
    %v1058 = vunpack.c.0.s8 %v1057
    %v1059 = vlaneseq
    %v1060 = vshrl.u32 %v1059, 7
    %v1061 = vsub.s32 %v1058, %v1060
    %v1062 = vrot.slane %v1048, %v1061
    %v1063 = vcombine.high %v1055, %v1055
    %v1064 = vcombine.high %v1062, %v1062
    %v1066 = vunpack.c.l.s4 1966171168
    %v1067 = vunpack.c.0.s8 %v1066
    %v1068 = vlaneseq
    %v1069 = vshrl.u32 %v1068, 7
    %v1070 = vsub.s32 %v1067, %v1069
    %v1071 = vrot.slane %v1055, %v1070
    %v1073 = vunpack.c.l.s4 1966171168
    %v1074 = vunpack.c.0.s8 %v1073
    %v1075 = vlaneseq
    %v1076 = vshrl.u32 %v1075, 7
    %v1077 = vsub.s32 %v1074, %v1076
    %v1078 = vrot.slane %v1062, %v1077
    %v1080 = vunpack.c.l.s4 1966171168
    %v1081 = vunpack.c.0.s8 %v1080
    %v1082 = vlaneseq
    %v1083 = vshrl.u32 %v1082, 7
    %v1084 = vsub.s32 %v1081, %v1083
    %v1085 = vrot.slane %v1063, %v1084
    %v1087 = vunpack.c.l.s4 1966171168
    %v1088 = vunpack.c.0.s8 %v1087
    %v1089 = vlaneseq
    %v1090 = vshrl.u32 %v1089, 7
    %v1091 = vsub.s32 %v1088, %v1090
    %v1092 = vrot.slane %v1064, %v1091
    %v1093 = vcombine.high %v1071, %v1071
    %v1094 = vcombine.high %v1078, %v1078
    %v1095 = vcombine.high %v1085, %v1085
    %v1096 = vcombine.high %v1092, %v1092
    %v1913 = vunpack.c.l.b16 %v22
    %v1914 = vunpack.c.l.b16 %v23
    %v1915 = vunpack.c.l.b16 %v24
    %v1916 = vunpack.c.l.b16 %v25
    %v1917 = vunpack.c.l.b16 %v26
    %v1918 = vunpack.c.l.b16 %v27
    %v1919 = vunpack.c.l.b16 %v28
    %v1920 = vunpack.c.l.b16 %v29
    %v1921 = vunpack.c.l.b16 %v30
    %v1922 = vunpack.c.l.b16 %v31
    %v1923 = vunpack.c.l.b16 %v32
    %v1924 = vunpack.c.l.b16 %v33
    %v1925 = vunpack.c.l.b16 %v34
    %v1926 = vunpack.c.l.b16 %v35
    %v1927 = vunpack.c.l.b16 %v36
    %v1928 = vunpack.c.l.b16 %v37
    %v1929 = vunpack.c.l.b16 %v38
    %v1930 = vunpack.c.l.b16 %v39
    %v1931 = vunpack.c.l.b16 %v40
    %v1932 = vunpack.c.l.b16 %v41
    %v1933 = vunpack.c.l.b16 %v42
    %v1934 = vunpack.c.l.b16 %v43
    %v1935 = vunpack.c.l.b16 %v44
    %v1936 = vunpack.c.l.b16 %v45
    %v1937 = vunpack.c.l.b16 %v46
    %v1938 = vunpack.c.l.b16 %v47
    %v1939 = vunpack.c.l.b16 %v48
    %v1940 = vunpack.c.l.b16 %v49
    %v1941 = vunpack.c.l.b16 %v50
    %v1942 = vunpack.c.l.b16 %v51
    %v1943 = vunpack.c.l.b16 %v52
    %v1944 = vunpack.c.l.b16 %v53
    %v1945 = vunpack.c.l.b16 %v54
    %v1946 = vunpack.c.l.b16 %v55
    %v1947 = vunpack.c.l.b16 %v56
    %v1948 = vunpack.c.l.b16 %v57
    %v1949 = vunpack.c.l.b16 %v58
    %v1950 = vunpack.c.l.b16 %v59
    %v1951 = vunpack.c.l.b16 %v60
    %v1952 = vunpack.c.l.b16 %v61
    %v1953 = vunpack.c.l.b16 %v62
    %v1954 = vunpack.c.l.b16 %v63
    %v1955 = vunpack.c.l.b16 %v64
    %v1956 = vunpack.c.l.b16 %v65
    %v1957 = vunpack.c.l.b16 %v66
    %v1958 = vunpack.c.l.b16 %v67
    %v1959 = vunpack.c.l.b16 %v68
    %v1960 = vunpack.c.l.b16 %v69
    %v1961 = vunpack.c.l.b16 %v70
    %v1962 = vunpack.c.l.b16 %v71
    %v1963 = vunpack.c.l.b16 %v72
    %v1964 = vunpack.c.l.b16 %v73
    %v1965 = vunpack.c.l.b16 %v74
    %v1966 = vunpack.c.l.b16 %v75
    %v1967 = vunpack.c.l.b16 %v76
    %v1968 = vunpack.c.l.b16 %v77
    %v1969 = vunpack.c.l.b16 %v78
    %v1970 = vunpack.c.l.b16 %v79
    %v1971 = vunpack.c.l.b16 %v80
    %v1972 = vunpack.c.l.b16 %v81
    %v1973 = vunpack.c.l.b16 %v82
    %v1974 = vunpack.c.l.b16 %v83
    %v1975 = vunpack.c.l.b16 %v84
    %v1976 = vunpack.c.l.b16 %v85
    %v1977 = vunpack.c.l.b16 %v86
    %v1978 = vunpack.c.l.b16 %v87
    %v1979 = vunpack.c.l.b16 %v88
    %v1980 = vunpack.c.l.b16 %v89
    %v1981 = vunpack.c.l.b16 %v90
    %v1982 = vunpack.c.l.b16 %v91
    %v1983 = vunpack.c.l.b16 %v92
    %v1984 = vunpack.c.l.b16 %v93
    %v1985 = vunpack.c.l.b16 %v94
    %v1986 = vunpack.c.l.b16 %v95
    %v1987 = vunpack.c.l.b16 %v96
    %v1988 = vunpack.c.l.b16 %v97
    %v1989 = vunpack.c.l.b16 %v98
    %v1990 = vunpack.c.l.b16 %v99
    %v1991 = vunpack.c.l.b16 %v100
    %v1992 = vunpack.c.l.b16 %v101
    %v1993 = vunpack.c.l.b16 %v102
    %v1994 = vunpack.c.l.b16 %v103
    %v1995 = vunpack.c.l.b16 %v104
    %v1996 = vunpack.c.l.b16 %v105
    %v1997 = vunpack.c.l.b16 %v106
    %v1998 = vunpack.c.l.b16 %v107
    %v1999 = vunpack.c.l.b16 %v108
    %v2000 = vunpack.c.l.b16 %v109
    %v2001 = vunpack.c.l.b16 %v110
    %v2002 = vunpack.c.l.b16 %v111
    %v2003 = vunpack.c.l.b16 %v112
    %v2004 = vunpack.c.l.b16 %v113
    %v2005 = vunpack.c.l.b16 %v114
    %v2006 = vunpack.c.l.b16 %v115
    %v2007 = vunpack.c.l.b16 %v116
    %v2008 = vunpack.c.l.b16 %v117
    %v2009 = vunpack.c.l.b16 %v118
    %v2010 = vunpack.c.l.b16 %v119
    %v2011 = vunpack.c.l.b16 %v120
    %v2012 = vunpack.c.l.b16 %v121
    %v2013 = vunpack.c.l.b16 %v122
    %v2014 = vunpack.c.l.b16 %v123
    %v2015 = vunpack.c.l.b16 %v124
    %v2016 = vunpack.c.l.b16 %v125
    %v2017 = vunpack.c.l.b16 %v126
    %v2018 = vunpack.c.l.b16 %v127
    %v2019 = vunpack.c.l.b16 %v128
    %v2020 = vunpack.c.l.b16 %v129
    %v2021 = vunpack.c.l.b16 %v130
    %v2022 = vunpack.c.l.b16 %v131
    %v2023 = vunpack.c.l.b16 %v132
    %v2024 = vunpack.c.l.b16 %v133
    %v2025 = vunpack.c.l.b16 %v134
    %v2026 = vunpack.c.l.b16 %v135
    %v2027 = vunpack.c.l.b16 %v136
    %v2028 = vunpack.c.l.b16 %v137
    %v2029 = vunpack.c.l.b16 %v138
    %v2030 = vunpack.c.l.b16 %v139
    %v2031 = vunpack.c.l.b16 %v140
    %v2032 = vunpack.c.l.b16 %v141
    %v2033 = vunpack.c.l.b16 %v142
    %v2034 = vunpack.c.l.b16 %v143
    %v2035 = vunpack.c.l.b16 %v144
    %v2036 = vunpack.c.l.b16 %v145
    %v2037 = vunpack.c.l.b16 %v146
    %v2038 = vunpack.c.l.b16 %v147
    %v2039 = vunpack.c.l.b16 %v148
    %v2040 = vunpack.c.l.b16 %v149
    %v2041 = vunpack.c.l.b16 %v150
    %v2042 = vunpack.c.l.b16 %v151
    %v2043 = vunpack.c.l.b16 %v152
    %v2044 = vunpack.c.l.b16 %v153
    %v2045 = vunpack.c.l.b16 %v154
    %v2046 = vunpack.c.l.b16 %v155
    %v2047 = vunpack.c.l.b16 %v156
    %v2048 = vunpack.c.l.b16 %v157
    %v2049 = vunpack.c.l.b16 %v158
    %v2050 = vunpack.c.l.b16 %v159
    %v2051 = vunpack.c.l.b16 %v160
    %v2052 = vunpack.c.l.b16 %v161
    %v2053 = vunpack.c.l.b16 %v162
    %v2054 = vunpack.c.l.b16 %v163
    %v2055 = vunpack.c.l.b16 %v164
    %v2056 = vunpack.c.l.b16 %v165
    %v2057 = vunpack.c.l.b16 %v166
    %v2058 = vunpack.c.l.b16 %v167
    %v2059 = vunpack.c.l.b16 %v168
    %v2060 = vunpack.c.l.b16 %v169
    %v2061 = vunpack.c.l.b16 %v170
    %v2062 = vunpack.c.l.b16 %v171
    %v2063 = vunpack.c.l.b16 %v172
    %v2064 = vunpack.c.l.b16 %v173
    %v2065 = vunpack.c.l.b16 %v174
    %v2066 = vunpack.c.l.b16 %v175
    %v2067 = vunpack.c.l.b16 %v176
    %v2068 = vunpack.c.l.b16 %v177
    %v2069 = vunpack.c.l.b16 %v178
    %v2070 = vunpack.c.l.b16 %v179
    %v2071 = vunpack.c.l.b16 %v180
    %v2072 = vunpack.c.l.b16 %v181
    %v2073 = vunpack.c.l.b16 %v182
    %v2074 = vunpack.c.l.b16 %v183
    %v2075 = vunpack.c.l.b16 %v184
    %v2076 = vunpack.c.l.b16 %v185
    %v2077 = vunpack.c.l.b16 %v186
    %v2078 = vunpack.c.l.b16 %v187
    %v2079 = vunpack.c.l.b16 %v188
    %v2080 = vunpack.c.l.b16 %v189
    %v2081 = vunpack.c.l.b16 %v190
    %v2082 = vunpack.c.l.b16 %v191
    %v2083 = vunpack.c.l.b16 %v192
    %v2084 = vunpack.c.l.b16 %v193
    %v2085 = vunpack.c.l.b16 %v194
    %v2086 = vunpack.c.l.b16 %v195
    %v2087 = vunpack.c.l.b16 %v196
    %v2088 = vunpack.c.l.b16 %v197
    %v2089 = vunpack.c.l.b16 %v198
    %v2090 = vunpack.c.l.b16 %v199
    %v2091 = vunpack.c.l.b16 %v200
    %v2092 = vunpack.c.l.b16 %v201
    %v2093 = vunpack.c.l.b16 %v202
    %v2094 = vunpack.c.l.b16 %v203
    %v2095 = vunpack.c.l.b16 %v204
    %v2096 = vunpack.c.l.b16 %v205
    %v2097 = vunpack.c.l.b16 %v206
    %v2098 = vunpack.c.l.b16 %v207
    %v2099 = vunpack.c.l.b16 %v208
    %v2100 = vunpack.c.l.b16 %v209
    %v2101 = vunpack.c.l.b16 %v210
    %v2102 = vunpack.c.l.b16 %v211
    %v2103 = vunpack.c.l.b16 %v212
    %v2104 = vunpack.c.l.b16 %v213
    %v2105 = vunpack.c.l.b16 %v214
    %v2106 = vunpack.c.l.b16 %v215
    %v2107 = vunpack.c.l.b16 %v216
    %v2108 = vunpack.c.l.b16 %v217
    %v2109 = vunpack.c.l.b16 %v218
    %v2110 = vunpack.c.l.b16 %v219
    %v2111 = vunpack.c.l.b16 %v220
    %v2112 = vunpack.c.l.b16 %v221
    %v2113 = vunpack.c.l.b16 %v222
    %v2114 = vunpack.c.l.b16 %v223
    %v2115 = vunpack.c.l.b16 %v224
    %v2116 = vunpack.c.l.b16 %v225
    %v2117 = vunpack.c.l.b16 %v226
    %v2118 = vunpack.c.l.b16 %v227
    %v2119 = vunpack.c.l.b16 %v228
    %v2120 = vunpack.c.l.b16 %v229
    %v2121 = vunpack.c.l.b16 %v230
    %v2122 = vunpack.c.l.b16 %v231
    %v2123 = vunpack.c.l.b16 %v232
    %v2124 = vunpack.c.l.b16 %v233
    %v2125 = vunpack.c.l.b16 %v234
    %v2126 = vunpack.c.l.b16 %v235
    %v2127 = vunpack.c.l.b16 %v236
    %v2128 = vunpack.c.l.b16 %v237
    %v2129 = vunpack.c.l.b16 %v238
    %v2130 = vunpack.c.l.b16 %v239
    %v2131 = vunpack.c.l.b16 %v240
    %v2132 = vunpack.c.l.b16 %v241
    %v2133 = vunpack.c.l.b16 %v242
    %v2134 = vunpack.c.l.b16 %v243
    %v2135 = vunpack.c.l.b16 %v244
    %v2136 = vunpack.c.l.b16 %v245
    %v2137 = vunpack.c.l.b16 %v246
    %v2138 = vunpack.c.l.b16 %v247
    %v2139 = vunpack.c.l.b16 %v248
    %v2140 = vunpack.c.l.b16 %v249
    %v2141 = vunpack.c.l.b16 %v250
    %v2142 = vunpack.c.l.b16 %v251
    %v2143 = vunpack.c.l.b16 %v252
    %v2144 = vunpack.c.l.b16 %v253
    %v2145 = vunpack.c.l.b16 %v254
    %v2146 = vunpack.c.l.b16 %v255
    %v2147 = vunpack.c.l.b16 %v256
    %v2148 = vunpack.c.l.b16 %v257
    %v2149 = vunpack.c.l.b16 %v258
    %v2150 = vunpack.c.l.b16 %v259
    %v2151 = vunpack.c.l.b16 %v260
    %v2152 = vunpack.c.l.b16 %v261
    %v2153 = vunpack.c.l.b16 %v262
    %v2154 = vunpack.c.l.b16 %v263
    %v2155 = vunpack.c.l.b16 %v264
    %v2156 = vunpack.c.l.b16 %v265
    %v2157 = vunpack.c.l.b16 %v266
    %v2158 = vunpack.c.l.b16 %v267
    %v2159 = vunpack.c.l.b16 %v268
    %v2160 = vunpack.c.l.b16 %v269
    %v2161 = vunpack.c.l.b16 %v270
    %v2162 = vunpack.c.l.b16 %v271
    %v2163 = vunpack.c.l.b16 %v272
    %v2164 = vunpack.c.l.b16 %v273
    %v2165 = vunpack.c.l.b16 %v274
    %v2166 = vunpack.c.l.b16 %v275
    %v2167 = vunpack.c.l.b16 %v276
    %v2168 = vunpack.c.l.b16 %v277
    %v2169 = vunpack.c.l.b16 %v278
    %v2170 = vunpack.c.l.b16 %v279
    %v2171 = vunpack.c.l.b16 %v280
    %v2172 = vunpack.c.l.b16 %v281
    %v2173 = vunpack.c.l.b16 %v282
    %v2174 = vunpack.c.l.b16 %v283
    %v2175 = vunpack.c.l.b16 %v284
    %v2176 = vunpack.c.l.b16 %v285
    %v2177 = vunpack.c.l.b16 %v286
    %v2178 = vunpack.c.l.b16 %v287
    %v2179 = vunpack.c.l.b16 %v288
    %v2180 = vunpack.c.l.b16 %v289
    %v2181 = vunpack.c.l.b16 %v290
    %v2182 = vunpack.c.l.b16 %v291
    %v2183 = vunpack.c.l.b16 %v292
    %v2184 = vunpack.c.l.b16 %v293
    %v2185 = vunpack.c.l.b16 %v294
    %v2186 = vunpack.c.l.b16 %v295
    %v2187 = vunpack.c.l.b16 %v296
    %v2188 = vunpack.c.l.b16 %v297
    %v2189 = vunpack.c.l.b16 %v298
    %v2190 = vunpack.c.l.b16 %v299
    %v2191 = vunpack.c.l.b16 %v300
    %v2192 = vunpack.c.l.b16 %v301
    %v2193 = vunpack.c.l.b16 %v302
    %v2194 = vunpack.c.l.b16 %v303
    %v2195 = vunpack.c.l.b16 %v304
    %v2196 = vunpack.c.l.b16 %v305
    %v2197 = vunpack.c.l.b16 %v306
    %v2198 = vunpack.c.l.b16 %v307
    %v2199 = vunpack.c.l.b16 %v308
    %v2200 = vunpack.c.l.b16 %v309
    %v2201 = vunpack.c.l.b16 %v310
    %v2202 = vunpack.c.l.b16 %v311
    %v2203 = vunpack.c.l.b16 %v312
    %v2204 = vunpack.c.l.b16 %v313
    %v2205 = vunpack.c.l.b16 %v314
    %v2206 = vunpack.c.l.b16 %v315
    %v2207 = vunpack.c.l.b16 %v316
    %v2208 = vunpack.c.l.b16 %v317
    %v2209 = vunpack.c.l.b16 %v318
    %v2210 = vunpack.c.l.b16 %v319
    %v2211 = vunpack.c.l.b16 %v320
    %v2212 = vunpack.c.l.b16 %v321
    %v2213 = vunpack.c.l.b16 %v322
    %v2214 = vunpack.c.l.b16 %v323
    %v2215 = vunpack.c.l.b16 %v324
    %v2216 = vunpack.c.l.b16 %v325
    %v2217 = vunpack.c.l.b16 %v326
    %v2218 = vunpack.c.l.b16 %v327
    %v2219 = vunpack.c.l.b16 %v328
    %v2220 = vunpack.c.l.b16 %v329
    %v2221 = vunpack.c.l.b16 %v330
    %v2222 = vunpack.c.l.b16 %v331
    %v2223 = vunpack.c.l.b16 %v332
    %v2224 = vunpack.c.l.b16 %v333
    %v2225 = vunpack.c.l.b16 %v334
    %v2226 = vunpack.c.l.b16 %v335
    %v2227 = vunpack.c.l.b16 %v336
    %v2228 = vunpack.c.l.b16 %v337
    %v2229 = vunpack.c.l.b16 %v338
    %v2230 = vunpack.c.l.b16 %v339
    %v2231 = vunpack.c.l.b16 %v340
    %v2232 = vunpack.c.l.b16 %v341
    %v2233 = vunpack.c.l.b16 %v342
    %v2234 = vunpack.c.l.b16 %v343
    %v2235 = vunpack.c.l.b16 %v344
    %v2236 = vunpack.c.l.b16 %v345
    %v2237 = vunpack.c.l.b16 %v346
    %v2238 = vunpack.c.l.b16 %v347
    %v2239 = vunpack.c.l.b16 %v348
    %v2240 = vunpack.c.l.b16 %v349
    %v2241 = vunpack.c.l.b16 %v350
    %v2242 = vunpack.c.l.b16 %v351
    %v2243 = vunpack.c.l.b16 %v352
    %v2244 = vunpack.c.l.b16 %v353
    %v2245 = vunpack.c.l.b16 %v354
    %v2246 = vunpack.c.l.b16 %v355
    %v2247 = vunpack.c.l.b16 %v356
    %v2248 = vunpack.c.l.b16 %v357
    %v2249 = vunpack.c.l.b16 %v358
    %v2250 = vunpack.c.l.b16 %v359
    %v2251 = vunpack.c.l.b16 %v360
    %v2252 = vunpack.c.l.b16 %v361
    %v2253 = vunpack.c.l.b16 %v362
    %v2254 = vunpack.c.l.b16 %v363
    %v2255 = vunpack.c.l.b16 %v364
    %v2256 = vunpack.c.l.b16 %v365
    %v2257 = vunpack.c.l.b16 %v366
    %v2258 = vunpack.c.l.b16 %v367
    %v2259 = vunpack.c.l.b16 %v368
    %v2260 = vunpack.c.l.b16 %v369
    %v2261 = vunpack.c.l.b16 %v370
    %v2262 = vunpack.c.l.b16 %v371
    %v2263 = vunpack.c.l.b16 %v372
    %v2264 = vunpack.c.l.b16 %v373
    %v2265 = vunpack.c.l.b16 %v374
    %v2266 = vunpack.c.l.b16 %v375
    %v2267 = vunpack.c.l.b16 %v376
    %v2268 = vunpack.c.l.b16 %v377
    %v2269 = vunpack.c.l.b16 %v378
    %v2270 = vunpack.c.l.b16 %v379
    %v2271 = vunpack.c.l.b16 %v380
    %v2272 = vunpack.c.l.b16 %v381
    %v2273 = vunpack.c.l.b16 %v382
    %v2274 = vunpack.c.l.b16 %v383
    %v2275 = vunpack.c.l.b16 %v384
    %v2276 = vunpack.c.l.b16 %v385
    %v2277 = vunpack.c.l.b16 %v386
    %v2278 = vunpack.c.l.b16 %v387
    %v2279 = vunpack.c.l.b16 %v388
    %v2280 = vunpack.c.l.b16 %v389
    %v2281 = vunpack.c.l.b16 %v390
    %v2282 = vunpack.c.l.b16 %v391
    %v2283 = vunpack.c.l.b16 %v392
    %v2284 = vunpack.c.l.b16 %v393
    %v2285 = vunpack.c.l.b16 %v394
    %v2286 = vunpack.c.l.b16 %v395
    %v2287 = vunpack.c.l.b16 %v396
    %v2288 = vunpack.c.l.b16 %v397
    %v2289 = vunpack.c.l.b16 %v398
    %v2290 = vunpack.c.l.b16 %v399
    %v2291 = vunpack.c.l.b16 %v400
    %v2292 = vunpack.c.l.b16 %v401
    %v2293 = vunpack.c.l.b16 %v402
    %v2294 = vunpack.c.l.b16 %v403
    %v2295 = vunpack.c.l.b16 %v404
    %v2296 = vunpack.c.l.b16 %v405
    %v2297 = vunpack.c.l.b16 %v406
    %v2298 = vunpack.c.l.b16 %v407
    %v2299 = vunpack.c.l.b16 %v408
    %v2300 = vunpack.c.l.b16 %v409
    %v2301 = vunpack.c.l.b16 %v410
    %v2302 = vunpack.c.l.b16 %v411
    %v2303 = vunpack.c.l.b16 %v412
    %v2304 = vunpack.c.l.b16 %v413
    %v2305 = vunpack.c.l.b16 %v414
    %v2306 = vunpack.c.l.b16 %v415
    %v2307 = vunpack.c.l.b16 %v416
    %v2308 = vunpack.c.l.b16 %v417
    %v2309 = vunpack.c.l.b16 %v418
    %v2310 = vunpack.c.l.b16 %v419
    %v2311 = vunpack.c.l.b16 %v420
    %v2312 = vunpack.c.l.b16 %v421
    %v2313 = vunpack.c.l.b16 %v422
    %v2314 = vunpack.c.l.b16 %v423
    %v2315 = vunpack.c.l.b16 %v424
    %v2316 = vunpack.c.l.b16 %v425
    %v2317 = vunpack.c.l.b16 %v426
    %v2318 = vunpack.c.l.b16 %v427
    %v2319 = vunpack.c.l.b16 %v428
    %v2320 = vunpack.c.l.b16 %v429
    %v2321 = vunpack.c.l.b16 %v430
    %v2322 = vunpack.c.l.b16 %v431
    %v2323 = vunpack.c.l.b16 %v432
    %v2324 = vunpack.c.l.b16 %v433
    %v2325 = vunpack.c.l.b16 %v434
    %v2326 = vunpack.c.l.b16 %v435
    %v2327 = vunpack.c.l.b16 %v436
    %v2328 = vunpack.c.l.b16 %v437
    %v2329 = vunpack.c.l.b16 %v438
    %v2330 = vunpack.c.l.b16 %v439
    %v2331 = vunpack.c.l.b16 %v440
    %v2332 = vunpack.c.l.b16 %v441
    %v2333 = vunpack.c.l.b16 %v442
    %v2334 = vunpack.c.l.b16 %v443
    %v2335 = vunpack.c.l.b16 %v444
    %v2336 = vunpack.c.l.b16 %v445
    %v2337 = vunpack.c.l.b16 %v446
    %v2338 = vunpack.c.l.b16 %v447
    %v2339 = vunpack.c.l.b16 %v448
    %v2340 = vunpack.c.l.b16 %v449
    %v2341 = vunpack.c.l.b16 %v450
    %v2342 = vunpack.c.l.b16 %v451
    %v2343 = vunpack.c.l.b16 %v452
    %v2344 = vunpack.c.l.b16 %v453
    %v2345 = vunpack.c.l.b16 %v454
    %v2346 = vunpack.c.l.b16 %v455
    %v2347 = vunpack.c.l.b16 %v456
    %v2348 = vunpack.c.l.b16 %v457
    %v2349 = vunpack.c.l.b16 %v458
    %v2350 = vunpack.c.l.b16 %v459
    %v2351 = vunpack.c.l.b16 %v460
    %v2352 = vunpack.c.l.b16 %v461
    %v2353 = vunpack.c.l.b16 %v462
    %v2354 = vunpack.c.l.b16 %v463
    %v2355 = vunpack.c.l.b16 %v464
    %v2356 = vunpack.c.l.b16 %v465
    %v2357 = vunpack.c.l.b16 %v466
    %v2358 = vunpack.c.l.b16 %v467
    %v2359 = vunpack.c.l.b16 %v468
    %v2360 = vunpack.c.l.b16 %v469
    %v2361 = vunpack.c.l.b16 %v470
    %v2362 = vunpack.c.l.b16 %v471
    %v2363 = vunpack.c.l.b16 %v472
    %v2364 = vunpack.c.l.b16 %v473
    %v2365 = vunpack.c.l.b16 %v474
    %v2366 = vunpack.c.l.b16 %v475
    %v2367 = vunpack.c.l.b16 %v476
    %v2368 = vunpack.c.l.b16 %v477
    %v2369 = vunpack.c.l.b16 %v478
    %v2370 = vunpack.c.l.b16 %v479
    %v2371 = vunpack.c.l.b16 %v480
    %v2372 = vunpack.c.l.b16 %v481
    %v2373 = vunpack.c.l.b16 %v482
    %v2374 = vunpack.c.l.b16 %v483
    %v2375 = vunpack.c.l.b16 %v484
    %v2376 = vunpack.c.l.b16 %v485
    %v2377 = vunpack.c.l.b16 %v486
    %v2378 = vunpack.c.l.b16 %v487
    %v2379 = vunpack.c.l.b16 %v488
    %v2380 = vunpack.c.l.b16 %v489
    %v2381 = vunpack.c.l.b16 %v490
    %v2382 = vunpack.c.l.b16 %v491
    %v2383 = vunpack.c.l.b16 %v492
    %v2384 = vunpack.c.l.b16 %v493
    %v2385 = vunpack.c.l.b16 %v494
    %v2386 = vunpack.c.l.b16 %v495
    %v2387 = vunpack.c.l.b16 %v496
    %v2388 = vunpack.c.l.b16 %v497
    %v2389 = vunpack.c.l.b16 %v498
    %v2390 = vunpack.c.l.b16 %v499
    %v2391 = vunpack.c.l.b16 %v500
    %v2392 = vunpack.c.l.b16 %v501
    %v2393 = vunpack.c.l.b16 %v502
    %v2394 = vunpack.c.l.b16 %v503
    %v2395 = vunpack.c.l.b16 %v504
    %v2396 = vunpack.c.l.b16 %v505
    %v2397 = vunpack.c.l.b16 %v506
    %v2398 = vunpack.c.l.b16 %v507
    %v2399 = vunpack.c.l.b16 %v508
    %v2400 = vunpack.c.l.b16 %v509
    %v2401 = vunpack.c.l.b16 %v510
    %v2402 = vunpack.c.l.b16 %v511
    %v2403 = vunpack.c.l.b16 %v512
    %v2404 = vunpack.c.l.b16 %v513
    %v2405 = vunpack.c.l.b16 %v514
    %v2406 = vunpack.c.l.b16 %v515
    %v2407 = vunpack.c.l.b16 %v516
    %v2408 = vunpack.c.l.b16 %v517
    %v2409 = vunpack.c.l.b16 %v518
    %v2410 = vunpack.c.l.b16 %v519
    %v2411 = vunpack.c.l.b16 %v520
    %v2412 = vunpack.c.l.b16 %v521
    %v2413 = vunpack.c.l.b16 %v522
    %v2414 = vunpack.c.l.b16 %v523
    %v2415 = vunpack.c.l.b16 %v524
    %v2416 = vunpack.c.l.b16 %v525
    %v2417 = vunpack.c.l.b16 %v526
    %v2418 = vunpack.c.l.b16 %v527
    %v2419 = vunpack.c.l.b16 %v528
    %v2420 = vunpack.c.l.b16 %v529
    %v2421 = vunpack.c.l.b16 %v530
    %v2422 = vunpack.c.l.b16 %v531
    %v2423 = vunpack.c.l.b16 %v532
    %v2424 = vunpack.c.l.b16 %v533
    %v2425 = vunpack.c.l.b16 %v534
    %v2426 = vunpack.c.l.b16 %v535
    %v2427 = vunpack.c.l.b16 %v536
    %v2428 = vunpack.c.l.b16 %v537
    %v2429 = vunpack.c.l.b16 %v538
    %v2430 = vunpack.c.l.b16 %v539
    %v2431 = vunpack.c.l.b16 %v540
    %v2432 = vunpack.c.l.b16 %v541
    %v2433 = vunpack.c.l.b16 %v542
    %v2434 = vunpack.c.l.b16 %v543
    %v2435 = vunpack.c.l.b16 %v544
    %v2436 = vunpack.c.l.b16 %v545
    %v2437 = vunpack.c.l.b16 %v546
    %v2438 = vunpack.c.l.b16 %v547
    %v2439 = vunpack.c.l.b16 %v548
    %v2440 = vunpack.c.l.b16 %v549
    %v2441 = vunpack.c.l.b16 %v550
    %v2442 = vunpack.c.l.b16 %v551
    %v2443 = vunpack.c.l.b16 %v552
    %v2444 = vunpack.c.l.b16 %v553
    %v2445 = vunpack.c.l.b16 %v554
    %v2446 = vunpack.c.l.b16 %v555
    %v2447 = vunpack.c.l.b16 %v556
    %v2448 = vunpack.c.l.b16 %v557
    %v2449 = vunpack.c.l.b16 %v558
    %v2450 = vunpack.c.l.b16 %v559
    %v2451 = vunpack.c.l.b16 %v560
    %v2452 = vunpack.c.l.b16 %v561
    %v2453 = vunpack.c.l.b16 %v562
    %v2454 = vunpack.c.l.b16 %v563
    %v2455 = vunpack.c.l.b16 %v564
    %v2456 = vunpack.c.l.b16 %v565
    %v2457 = vunpack.c.l.b16 %v566
    %v2458 = vunpack.c.l.b16 %v567
    %v2459 = vunpack.c.l.b16 %v568
    %v2460 = vunpack.c.l.b16 %v569
    %v2461 = vunpack.c.l.b16 %v570
    %v2462 = vunpack.c.l.b16 %v571
    %v2463 = vunpack.c.l.b16 %v572
    %v2464 = vunpack.c.l.b16 %v573
    %v2465 = vunpack.c.l.b16 %v574
    %v2466 = vunpack.c.l.b16 %v575
    %v2467 = vunpack.c.l.b16 %v576
    %v2468 = vunpack.c.l.b16 %v577
    %v2469 = vunpack.c.l.b16 %v578
    %v2470 = vunpack.c.l.b16 %v579
    %v2471 = vunpack.c.l.b16 %v580
    %v2472 = vunpack.c.l.b16 %v581
    %v2473 = vunpack.c.l.b16 %v582
    %v2474 = vunpack.c.l.b16 %v583
    %v2475 = vunpack.c.l.b16 %v584
    %v2476 = vunpack.c.l.b16 %v585
    %v2477 = vunpack.c.l.b16 %v586
    %v2478 = vunpack.c.l.b16 %v587
    %v2479 = vunpack.c.l.b16 %v588
    %v2480 = vunpack.c.l.b16 %v589
    %v2481 = vunpack.c.l.b16 %v590
    %v2482 = vunpack.c.l.b16 %v591
    %v2483 = vunpack.c.l.b16 %v592
    %v2484 = vunpack.c.l.b16 %v593
    %v2485 = vunpack.c.l.b16 %v594
    %v2486 = vunpack.c.l.b16 %v595
    %v2487 = vunpack.c.l.b16 %v596
    %v2488 = vunpack.c.l.b16 %v597
    %v2489 = vunpack.c.l.b16 %v598
    %v2490 = vunpack.c.l.b16 %v599
    %v2491 = vunpack.c.l.b16 %v600
    %v2492 = vunpack.c.l.b16 %v601
    %v2493 = vunpack.c.l.b16 %v602
    %v2494 = vunpack.c.l.b16 %v603
    %v2495 = vunpack.c.l.b16 %v604
    %v2496 = vunpack.c.l.b16 %v605
    %v2497 = vunpack.c.l.b16 %v606
    %v2498 = vunpack.c.l.b16 %v607
    %v2499 = vunpack.c.l.b16 %v608
    %v2500 = vunpack.c.l.b16 %v609
    %v2501 = vunpack.c.l.b16 %v610
    %v2502 = vunpack.c.l.b16 %v611
    %v2503 = vunpack.c.l.b16 %v612
    %v2504 = vunpack.c.l.b16 %v613
    %v2505 = vunpack.c.l.b16 %v614
    %v2506 = vunpack.c.l.b16 %v615
    %v2507 = vunpack.c.l.b16 %v616
    %v2508 = vunpack.c.l.b16 %v617
    %v2509 = vunpack.c.l.b16 %v618
    %v2510 = vunpack.c.l.b16 %v619
    %v2511 = vunpack.c.l.b16 %v620
    %v2512 = vunpack.c.l.b16 %v621
    %v2513 = vunpack.c.l.b16 %v622
    %v2514 = vunpack.c.l.b16 %v623
    %v2515 = vunpack.c.l.b16 %v624
    %v2516 = vunpack.c.l.b16 %v625
    %v2517 = vunpack.c.l.b16 %v626
    %v2518 = vunpack.c.l.b16 %v627
    %v2519 = vunpack.c.l.b16 %v628
    %v2520 = vunpack.c.l.b16 %v629
    %v2521 = vunpack.c.l.b16 %v630
    %v2522 = vunpack.c.l.b16 %v631
    %v2523 = vunpack.c.l.b16 %v632
    %v2524 = vunpack.c.l.b16 %v633
    %v2525 = vunpack.c.l.b16 %v634
    %v2526 = vunpack.c.l.b16 %v635
    %v2527 = vunpack.c.l.b16 %v636
    %v2528 = vunpack.c.l.b16 %v637
    %v2529 = vunpack.c.l.b16 %v638
    %v2530 = vunpack.c.l.b16 %v639
    %v2531 = vunpack.c.l.b16 %v640
    %v2532 = vunpack.c.l.b16 %v641
    %v2533 = vunpack.c.l.b16 %v642
    %v2534 = vunpack.c.l.b16 %v643
    %v2535 = vunpack.c.l.b16 %v644
    %v2536 = vunpack.c.l.b16 %v645
    %v2537 = vunpack.c.l.b16 %v646
    %v2538 = vunpack.c.l.b16 %v647
    %v2539 = vunpack.c.l.b16 %v648
    %v2540 = vunpack.c.l.b16 %v649
    %v2541 = vunpack.c.l.b16 %v650
    %v2542 = vunpack.c.l.b16 %v651
    %v2543 = vunpack.c.l.b16 %v652
    %v2544 = vunpack.c.l.b16 %v653
    %v2545 = vunpack.c.l.b16 %v654
    %v2546 = vunpack.c.l.b16 %v655
    %v2547 = vunpack.c.l.b16 %v656
    %v2548 = vunpack.c.l.b16 %v657
    %v2549 = vunpack.c.l.b16 %v658
    %v2550 = vunpack.c.l.b16 %v659
    %v2551 = vunpack.c.l.b16 %v660
    %v2552 = vunpack.c.l.b16 %v661
    %v2553 = vunpack.c.l.b16 %v662
    %v2554 = vunpack.c.l.b16 %v663
    %v2555 = vunpack.c.l.b16 %v664
    %v2556 = vunpack.c.l.b16 %v665
    %v2557 = vunpack.c.l.b16 %v666
    %v2558 = vunpack.c.l.b16 %v667
    %v2559 = vunpack.c.l.b16 %v668
    %v2560 = vunpack.c.l.b16 %v669
    %v2561 = vunpack.c.l.b16 %v670
    %v2562 = vunpack.c.l.b16 %v671
    %v2563 = vunpack.c.l.b16 %v672
    %v2564 = vunpack.c.l.b16 %v673
    %v2565 = vunpack.c.l.b16 %v674
    %v2566 = vunpack.c.l.b16 %v675
    %v2567 = vunpack.c.l.b16 %v676
    %v2568 = vunpack.c.l.b16 %v677
    %v2569 = vunpack.c.l.b16 %v678
    %v2570 = vunpack.c.l.b16 %v679
    %v2571 = vunpack.c.l.b16 %v680
    %v2572 = vunpack.c.l.b16 %v681
    %v2573 = vunpack.c.l.b16 %v682
    %v2574 = vunpack.c.l.b16 %v683
    %v2575 = vunpack.c.l.b16 %v684
    %v2576 = vunpack.c.l.b16 %v685
    %v2577 = vunpack.c.l.b16 %v686
    %v2578 = vunpack.c.l.b16 %v687
    %v2579 = vunpack.c.l.b16 %v688
    %v2580 = vunpack.c.l.b16 %v689
    %v2581 = vunpack.c.l.b16 %v690
    %v2582 = vunpack.c.l.b16 %v691
    %v2583 = vunpack.c.l.b16 %v692
    %v2584 = vunpack.c.l.b16 %v693
    %v2585 = vunpack.c.l.b16 %v694
    %v2586 = vunpack.c.l.b16 %v695
    %v2587 = vunpack.c.l.b16 %v696
    %v2588 = vunpack.c.l.b16 %v697
    %v2589 = vunpack.c.l.b16 %v698
    %v2590 = vunpack.c.l.b16 %v699
    %v2591 = vunpack.c.l.b16 %v700
    %v2592 = vunpack.c.l.b16 %v701
    %v2593 = vunpack.c.l.b16 %v702
    %v2594 = vunpack.c.l.b16 %v703
    %v2595 = vunpack.c.l.b16 %v704
    %v2596 = vunpack.c.l.b16 %v705
    %v2597 = vunpack.c.l.b16 %v706
    %v2598 = vunpack.c.l.b16 %v707
    %v2599 = vunpack.c.l.b16 %v708
    %v2600 = vunpack.c.l.b16 %v709
    %v2601 = vunpack.c.l.b16 %v710
    %v2602 = vunpack.c.l.b16 %v711
    %v2603 = vunpack.c.l.b16 %v712
    %v2604 = vunpack.c.l.b16 %v713
    %v2605 = vunpack.c.l.b16 %v714
    %v2606 = vunpack.c.l.b16 %v715
    %v2607 = vunpack.c.l.b16 %v716
    %v2608 = vunpack.c.l.b16 %v717
    %v2609 = vunpack.c.l.b16 %v718
    %v2610 = vunpack.c.l.b16 %v719
    %v2611 = vunpack.c.l.b16 %v720
    %v2612 = vunpack.c.l.b16 %v721
    %v2613 = vunpack.c.l.b16 %v722
    %v2614 = vunpack.c.l.b16 %v723
    %v2615 = vunpack.c.l.b16 %v724
    %v2616 = vunpack.c.l.b16 %v725
    %v2617 = vunpack.c.l.b16 %v726
    %v2618 = vunpack.c.l.b16 %v727
    %v2619 = vunpack.c.l.b16 %v728
    %v2620 = vunpack.c.l.b16 %v729
    %v2621 = vunpack.c.l.b16 %v730
    %v2622 = vunpack.c.l.b16 %v731
    %v2623 = vunpack.c.l.b16 %v732
    %v2624 = vunpack.c.l.b16 %v733
    %v2625 = vunpack.c.l.b16 %v734
    %v2626 = vunpack.c.l.b16 %v735
    %v2627 = vunpack.c.l.b16 %v736
    %v2628 = vunpack.c.l.b16 %v737
    %v2629 = vunpack.c.l.b16 %v738
    %v2630 = vunpack.c.l.b16 %v739
    %v2631 = vunpack.c.l.b16 %v740
    %v2632 = vunpack.c.l.b16 %v741
    %v2633 = vunpack.c.l.b16 %v742
    %v2634 = vunpack.c.l.b16 %v743
    %v2635 = vunpack.c.l.b16 %v744
    %v2636 = vunpack.c.l.b16 %v745
    %v2637 = vunpack.c.l.b16 %v746
    %v2638 = vunpack.c.l.b16 %v747
    %v2639 = vunpack.c.l.b16 %v748
    %v2640 = vunpack.c.l.b16 %v749
    %v2641 = vunpack.c.l.b16 %v750
    %v2642 = vunpack.c.l.b16 %v751
    %v2643 = vunpack.c.l.b16 %v752
    %v2644 = vunpack.c.l.b16 %v753
    %v2645 = vunpack.c.l.b16 %v754
    %v2646 = vunpack.c.l.b16 %v755
    %v2647 = vunpack.c.l.b16 %v756
    %v2648 = vunpack.c.l.b16 %v757
    %v2649 = vunpack.c.l.b16 %v758
    %v2650 = vunpack.c.l.b16 %v759
    %v2651 = vunpack.c.l.b16 %v760
    %v2652 = vunpack.c.l.b16 %v761
    %v2653 = vunpack.c.l.b16 %v762
    %v2654 = vunpack.c.l.b16 %v763
    %v2655 = vunpack.c.l.b16 %v764
    %v2656 = vunpack.c.l.b16 %v765
    %v2657 = vunpack.c.l.b16 %v766
    %v2658 = vunpack.c.l.b16 %v767
    %v2659 = vunpack.c.l.b16 %v768
    %v2660 = vunpack.c.l.b16 %v769
    %v2661 = vunpack.c.l.b16 %v770
    %v2662 = vunpack.c.l.b16 %v771
    %v2663 = vunpack.c.l.b16 %v772
    %v2664 = vunpack.c.l.b16 %v773
    %v2665 = vunpack.c.l.b16 %v774
    %v2666 = vunpack.c.l.b16 %v775
    %v2667 = vunpack.c.l.b16 %v776
    %v2668 = vunpack.c.l.b16 %v777
    %v2669 = vunpack.c.l.b16 %v778
    %v2670 = vunpack.c.l.b16 %v779
    %v2671 = vunpack.c.l.b16 %v780
    %v2672 = vunpack.c.l.b16 %v781
    %v2673 = vunpack.c.l.b16 %v782
    %v2674 = vunpack.c.l.b16 %v783
    %v2675 = vunpack.c.l.b16 %v784
    %v2676 = vunpack.c.l.b16 %v785
    %v2677 = vunpack.c.l.b16 %v786
    %v2678 = vunpack.c.l.b16 %v787
    %v2679 = vunpack.c.l.b16 %v788
    %v2680 = vunpack.c.l.b16 %v789
    %v2681 = vpack.c.b16 %v1914, %v1913
    %v2682 = vpack.c.b16 %v1916, %v1915
    %v2683 = vpack.c.b16 %v1918, %v1917
    %v2684 = vpack.c.b16 %v1920, %v1919
    %v2685 = vpack.c.b16 %v1922, %v1921
    %v2686 = vpack.c.b16 %v1924, %v1923
    %v2687 = vpack.c.b16 %v1926, %v1925
    %v2688 = vpack.c.b16 %v1928, %v1927
    %v2689 = vpack.c.b16 %v1930, %v1929
    %v2690 = vpack.c.b16 %v1932, %v1931
    %v2691 = vpack.c.b16 %v1934, %v1933
    %v2692 = vpack.c.b16 %v1936, %v1935
    %v2693 = vpack.c.b16 %v1938, %v1937
    %v2694 = vpack.c.b16 %v1940, %v1939
    %v2695 = vpack.c.b16 %v1942, %v1941
    %v2696 = vpack.c.b16 %v1944, %v1943
    %v2697 = vpack.c.b16 %v1946, %v1945
    %v2698 = vpack.c.b16 %v1948, %v1947
    %v2699 = vpack.c.b16 %v1950, %v1949
    %v2700 = vpack.c.b16 %v1952, %v1951
    %v2701 = vpack.c.b16 %v1954, %v1953
    %v2702 = vpack.c.b16 %v1956, %v1955
    %v2703 = vpack.c.b16 %v1958, %v1957
    %v2704 = vpack.c.b16 %v1960, %v1959
    %v2705 = vpack.c.b16 %v1962, %v1961
    %v2706 = vpack.c.b16 %v1964, %v1963
    %v2707 = vpack.c.b16 %v1966, %v1965
    %v2708 = vpack.c.b16 %v1968, %v1967
    %v2709 = vpack.c.b16 %v1970, %v1969
    %v2710 = vpack.c.b16 %v1972, %v1971
    %v2711 = vpack.c.b16 %v1974, %v1973
    %v2712 = vpack.c.b16 %v1976, %v1975
    %v2713 = vpack.c.b16 %v1978, %v1977
    %v2714 = vpack.c.b16 %v1980, %v1979
    %v2715 = vpack.c.b16 %v1982, %v1981
    %v2716 = vpack.c.b16 %v1984, %v1983
    %v2717 = vpack.c.b16 %v1986, %v1985
    %v2718 = vpack.c.b16 %v1988, %v1987
    %v2719 = vpack.c.b16 %v1990, %v1989
    %v2720 = vpack.c.b16 %v1992, %v1991
    %v2721 = vpack.c.b16 %v1994, %v1993
    %v2722 = vpack.c.b16 %v1996, %v1995
    %v2723 = vpack.c.b16 %v1998, %v1997
    %v2724 = vpack.c.b16 %v2000, %v1999
    %v2725 = vpack.c.b16 %v2002, %v2001
    %v2726 = vpack.c.b16 %v2004, %v2003
    %v2727 = vpack.c.b16 %v2006, %v2005
    %v2728 = vpack.c.b16 %v2008, %v2007
    %v2729 = vpack.c.b16 %v2010, %v2009
    %v2730 = vpack.c.b16 %v2012, %v2011
    %v2731 = vpack.c.b16 %v2014, %v2013
    %v2732 = vpack.c.b16 %v2016, %v2015
    %v2733 = vpack.c.b16 %v2018, %v2017
    %v2734 = vpack.c.b16 %v2020, %v2019
    %v2735 = vpack.c.b16 %v2022, %v2021
    %v2736 = vpack.c.b16 %v2024, %v2023
    %v2737 = vpack.c.b16 %v2026, %v2025
    %v2738 = vpack.c.b16 %v2028, %v2027
    %v2739 = vpack.c.b16 %v2030, %v2029
    %v2740 = vpack.c.b16 %v2032, %v2031
    %v2741 = vpack.c.b16 %v2034, %v2033
    %v2742 = vpack.c.b16 %v2036, %v2035
    %v2743 = vpack.c.b16 %v2038, %v2037
    %v2744 = vpack.c.b16 %v2040, %v2039
    %v2745 = vpack.c.b16 %v2042, %v2041
    %v2746 = vpack.c.b16 %v2044, %v2043
    %v2747 = vpack.c.b16 %v2046, %v2045
    %v2748 = vpack.c.b16 %v2048, %v2047
    %v2749 = vpack.c.b16 %v2050, %v2049
    %v2750 = vpack.c.b16 %v2052, %v2051
    %v2751 = vpack.c.b16 %v2054, %v2053
    %v2752 = vpack.c.b16 %v2056, %v2055
    %v2753 = vpack.c.b16 %v2058, %v2057
    %v2754 = vpack.c.b16 %v2060, %v2059
    %v2755 = vpack.c.b16 %v2062, %v2061
    %v2756 = vpack.c.b16 %v2064, %v2063
    %v2757 = vpack.c.b16 %v2066, %v2065
    %v2758 = vpack.c.b16 %v2068, %v2067
    %v2759 = vpack.c.b16 %v2070, %v2069
    %v2760 = vpack.c.b16 %v2072, %v2071
    %v2761 = vpack.c.b16 %v2074, %v2073
    %v2762 = vpack.c.b16 %v2076, %v2075
    %v2763 = vpack.c.b16 %v2078, %v2077
    %v2764 = vpack.c.b16 %v2080, %v2079
    %v2765 = vpack.c.b16 %v2082, %v2081
    %v2766 = vpack.c.b16 %v2084, %v2083
    %v2767 = vpack.c.b16 %v2086, %v2085
    %v2768 = vpack.c.b16 %v2088, %v2087
    %v2769 = vpack.c.b16 %v2090, %v2089
    %v2770 = vpack.c.b16 %v2092, %v2091
    %v2771 = vpack.c.b16 %v2094, %v2093
    %v2772 = vpack.c.b16 %v2096, %v2095
    %v2773 = vpack.c.b16 %v2098, %v2097
    %v2774 = vpack.c.b16 %v2100, %v2099
    %v2775 = vpack.c.b16 %v2102, %v2101
    %v2776 = vpack.c.b16 %v2104, %v2103
    %v2777 = vpack.c.b16 %v2106, %v2105
    %v2778 = vpack.c.b16 %v2108, %v2107
    %v2779 = vpack.c.b16 %v2110, %v2109
    %v2780 = vpack.c.b16 %v2112, %v2111
    %v2781 = vpack.c.b16 %v2114, %v2113
    %v2782 = vpack.c.b16 %v2116, %v2115
    %v2783 = vpack.c.b16 %v2118, %v2117
    %v2784 = vpack.c.b16 %v2120, %v2119
    %v2785 = vpack.c.b16 %v2122, %v2121
    %v2786 = vpack.c.b16 %v2124, %v2123
    %v2787 = vpack.c.b16 %v2126, %v2125
    %v2788 = vpack.c.b16 %v2128, %v2127
    %v2789 = vpack.c.b16 %v2130, %v2129
    %v2790 = vpack.c.b16 %v2132, %v2131
    %v2791 = vpack.c.b16 %v2134, %v2133
    %v2792 = vpack.c.b16 %v2136, %v2135
    %v2793 = vpack.c.b16 %v2138, %v2137
    %v2794 = vpack.c.b16 %v2140, %v2139
    %v2795 = vpack.c.b16 %v2142, %v2141
    %v2796 = vpack.c.b16 %v2144, %v2143
    %v2797 = vpack.c.b16 %v2146, %v2145
    %v2798 = vpack.c.b16 %v2148, %v2147
    %v2799 = vpack.c.b16 %v2150, %v2149
    %v2800 = vpack.c.b16 %v2152, %v2151
    %v2801 = vpack.c.b16 %v2154, %v2153
    %v2802 = vpack.c.b16 %v2156, %v2155
    %v2803 = vpack.c.b16 %v2158, %v2157
    %v2804 = vpack.c.b16 %v2160, %v2159
    %v2805 = vpack.c.b16 %v2162, %v2161
    %v2806 = vpack.c.b16 %v2164, %v2163
    %v2807 = vpack.c.b16 %v2166, %v2165
    %v2808 = vpack.c.b16 %v2168, %v2167
    %v2809 = vpack.c.b16 %v2170, %v2169
    %v2810 = vpack.c.b16 %v2172, %v2171
    %v2811 = vpack.c.b16 %v2174, %v2173
    %v2812 = vpack.c.b16 %v2176, %v2175
    %v2813 = vpack.c.b16 %v2178, %v2177
    %v2814 = vpack.c.b16 %v2180, %v2179
    %v2815 = vpack.c.b16 %v2182, %v2181
    %v2816 = vpack.c.b16 %v2184, %v2183
    %v2817 = vpack.c.b16 %v2186, %v2185
    %v2818 = vpack.c.b16 %v2188, %v2187
    %v2819 = vpack.c.b16 %v2190, %v2189
    %v2820 = vpack.c.b16 %v2192, %v2191
    %v2821 = vpack.c.b16 %v2194, %v2193
    %v2822 = vpack.c.b16 %v2196, %v2195
    %v2823 = vpack.c.b16 %v2198, %v2197
    %v2824 = vpack.c.b16 %v2200, %v2199
    %v2825 = vpack.c.b16 %v2202, %v2201
    %v2826 = vpack.c.b16 %v2204, %v2203
    %v2827 = vpack.c.b16 %v2206, %v2205
    %v2828 = vpack.c.b16 %v2208, %v2207
    %v2829 = vpack.c.b16 %v2210, %v2209
    %v2830 = vpack.c.b16 %v2212, %v2211
    %v2831 = vpack.c.b16 %v2214, %v2213
    %v2832 = vpack.c.b16 %v2216, %v2215
    %v2833 = vpack.c.b16 %v2218, %v2217
    %v2834 = vpack.c.b16 %v2220, %v2219
    %v2835 = vpack.c.b16 %v2222, %v2221
    %v2836 = vpack.c.b16 %v2224, %v2223
    %v2837 = vpack.c.b16 %v2226, %v2225
    %v2838 = vpack.c.b16 %v2228, %v2227
    %v2839 = vpack.c.b16 %v2230, %v2229
    %v2840 = vpack.c.b16 %v2232, %v2231
    %v2841 = vpack.c.b16 %v2234, %v2233
    %v2842 = vpack.c.b16 %v2236, %v2235
    %v2843 = vpack.c.b16 %v2238, %v2237
    %v2844 = vpack.c.b16 %v2240, %v2239
    %v2845 = vpack.c.b16 %v2242, %v2241
    %v2846 = vpack.c.b16 %v2244, %v2243
    %v2847 = vpack.c.b16 %v2246, %v2245
    %v2848 = vpack.c.b16 %v2248, %v2247
    %v2849 = vpack.c.b16 %v2250, %v2249
    %v2850 = vpack.c.b16 %v2252, %v2251
    %v2851 = vpack.c.b16 %v2254, %v2253
    %v2852 = vpack.c.b16 %v2256, %v2255
    %v2853 = vpack.c.b16 %v2258, %v2257
    %v2854 = vpack.c.b16 %v2260, %v2259
    %v2855 = vpack.c.b16 %v2262, %v2261
    %v2856 = vpack.c.b16 %v2264, %v2263
    %v2857 = vpack.c.b16 %v2266, %v2265
    %v2858 = vpack.c.b16 %v2268, %v2267
    %v2859 = vpack.c.b16 %v2270, %v2269
    %v2860 = vpack.c.b16 %v2272, %v2271
    %v2861 = vpack.c.b16 %v2274, %v2273
    %v2862 = vpack.c.b16 %v2276, %v2275
    %v2863 = vpack.c.b16 %v2278, %v2277
    %v2864 = vpack.c.b16 %v2280, %v2279
    %v2865 = vpack.c.b16 %v2282, %v2281
    %v2866 = vpack.c.b16 %v2284, %v2283
    %v2867 = vpack.c.b16 %v2286, %v2285
    %v2868 = vpack.c.b16 %v2288, %v2287
    %v2869 = vpack.c.b16 %v2290, %v2289
    %v2870 = vpack.c.b16 %v2292, %v2291
    %v2871 = vpack.c.b16 %v2294, %v2293
    %v2872 = vpack.c.b16 %v2296, %v2295
    %v2873 = vpack.c.b16 %v2298, %v2297
    %v2874 = vpack.c.b16 %v2300, %v2299
    %v2875 = vpack.c.b16 %v2302, %v2301
    %v2876 = vpack.c.b16 %v2304, %v2303
    %v2877 = vpack.c.b16 %v2306, %v2305
    %v2878 = vpack.c.b16 %v2308, %v2307
    %v2879 = vpack.c.b16 %v2310, %v2309
    %v2880 = vpack.c.b16 %v2312, %v2311
    %v2881 = vpack.c.b16 %v2314, %v2313
    %v2882 = vpack.c.b16 %v2316, %v2315
    %v2883 = vpack.c.b16 %v2318, %v2317
    %v2884 = vpack.c.b16 %v2320, %v2319
    %v2885 = vpack.c.b16 %v2322, %v2321
    %v2886 = vpack.c.b16 %v2324, %v2323
    %v2887 = vpack.c.b16 %v2326, %v2325
    %v2888 = vpack.c.b16 %v2328, %v2327
    %v2889 = vpack.c.b16 %v2330, %v2329
    %v2890 = vpack.c.b16 %v2332, %v2331
    %v2891 = vpack.c.b16 %v2334, %v2333
    %v2892 = vpack.c.b16 %v2336, %v2335
    %v2893 = vpack.c.b16 %v2338, %v2337
    %v2894 = vpack.c.b16 %v2340, %v2339
    %v2895 = vpack.c.b16 %v2342, %v2341
    %v2896 = vpack.c.b16 %v2344, %v2343
    %v2897 = vpack.c.b16 %v2346, %v2345
    %v2898 = vpack.c.b16 %v2348, %v2347
    %v2899 = vpack.c.b16 %v2350, %v2349
    %v2900 = vpack.c.b16 %v2352, %v2351
    %v2901 = vpack.c.b16 %v2354, %v2353
    %v2902 = vpack.c.b16 %v2356, %v2355
    %v2903 = vpack.c.b16 %v2358, %v2357
    %v2904 = vpack.c.b16 %v2360, %v2359
    %v2905 = vpack.c.b16 %v2362, %v2361
    %v2906 = vpack.c.b16 %v2364, %v2363
    %v2907 = vpack.c.b16 %v2366, %v2365
    %v2908 = vpack.c.b16 %v2368, %v2367
    %v2909 = vpack.c.b16 %v2370, %v2369
    %v2910 = vpack.c.b16 %v2372, %v2371
    %v2911 = vpack.c.b16 %v2374, %v2373
    %v2912 = vpack.c.b16 %v2376, %v2375
    %v2913 = vpack.c.b16 %v2378, %v2377
    %v2914 = vpack.c.b16 %v2380, %v2379
    %v2915 = vpack.c.b16 %v2382, %v2381
    %v2916 = vpack.c.b16 %v2384, %v2383
    %v2917 = vpack.c.b16 %v2386, %v2385
    %v2918 = vpack.c.b16 %v2388, %v2387
    %v2919 = vpack.c.b16 %v2390, %v2389
    %v2920 = vpack.c.b16 %v2392, %v2391
    %v2921 = vpack.c.b16 %v2394, %v2393
    %v2922 = vpack.c.b16 %v2396, %v2395
    %v2923 = vpack.c.b16 %v2398, %v2397
    %v2924 = vpack.c.b16 %v2400, %v2399
    %v2925 = vpack.c.b16 %v2402, %v2401
    %v2926 = vpack.c.b16 %v2404, %v2403
    %v2927 = vpack.c.b16 %v2406, %v2405
    %v2928 = vpack.c.b16 %v2408, %v2407
    %v2929 = vpack.c.b16 %v2410, %v2409
    %v2930 = vpack.c.b16 %v2412, %v2411
    %v2931 = vpack.c.b16 %v2414, %v2413
    %v2932 = vpack.c.b16 %v2416, %v2415
    %v2933 = vpack.c.b16 %v2418, %v2417
    %v2934 = vpack.c.b16 %v2420, %v2419
    %v2935 = vpack.c.b16 %v2422, %v2421
    %v2936 = vpack.c.b16 %v2424, %v2423
    %v2937 = vpack.c.b16 %v2426, %v2425
    %v2938 = vpack.c.b16 %v2428, %v2427
    %v2939 = vpack.c.b16 %v2430, %v2429
    %v2940 = vpack.c.b16 %v2432, %v2431
    %v2941 = vpack.c.b16 %v2434, %v2433
    %v2942 = vpack.c.b16 %v2436, %v2435
    %v2943 = vpack.c.b16 %v2438, %v2437
    %v2944 = vpack.c.b16 %v2440, %v2439
    %v2945 = vpack.c.b16 %v2442, %v2441
    %v2946 = vpack.c.b16 %v2444, %v2443
    %v2947 = vpack.c.b16 %v2446, %v2445
    %v2948 = vpack.c.b16 %v2448, %v2447
    %v2949 = vpack.c.b16 %v2450, %v2449
    %v2950 = vpack.c.b16 %v2452, %v2451
    %v2951 = vpack.c.b16 %v2454, %v2453
    %v2952 = vpack.c.b16 %v2456, %v2455
    %v2953 = vpack.c.b16 %v2458, %v2457
    %v2954 = vpack.c.b16 %v2460, %v2459
    %v2955 = vpack.c.b16 %v2462, %v2461
    %v2956 = vpack.c.b16 %v2464, %v2463
    %v2957 = vpack.c.b16 %v2466, %v2465
    %v2958 = vpack.c.b16 %v2468, %v2467
    %v2959 = vpack.c.b16 %v2470, %v2469
    %v2960 = vpack.c.b16 %v2472, %v2471
    %v2961 = vpack.c.b16 %v2474, %v2473
    %v2962 = vpack.c.b16 %v2476, %v2475
    %v2963 = vpack.c.b16 %v2478, %v2477
    %v2964 = vpack.c.b16 %v2480, %v2479
    %v2965 = vpack.c.b16 %v2482, %v2481
    %v2966 = vpack.c.b16 %v2484, %v2483
    %v2967 = vpack.c.b16 %v2486, %v2485
    %v2968 = vpack.c.b16 %v2488, %v2487
    %v2969 = vpack.c.b16 %v2490, %v2489
    %v2970 = vpack.c.b16 %v2492, %v2491
    %v2971 = vpack.c.b16 %v2494, %v2493
    %v2972 = vpack.c.b16 %v2496, %v2495
    %v2973 = vpack.c.b16 %v2498, %v2497
    %v2974 = vpack.c.b16 %v2500, %v2499
    %v2975 = vpack.c.b16 %v2502, %v2501
    %v2976 = vpack.c.b16 %v2504, %v2503
    %v2977 = vpack.c.b16 %v2506, %v2505
    %v2978 = vpack.c.b16 %v2508, %v2507
    %v2979 = vpack.c.b16 %v2510, %v2509
    %v2980 = vpack.c.b16 %v2512, %v2511
    %v2981 = vpack.c.b16 %v2514, %v2513
    %v2982 = vpack.c.b16 %v2516, %v2515
    %v2983 = vpack.c.b16 %v2518, %v2517
    %v2984 = vpack.c.b16 %v2520, %v2519
    %v2985 = vpack.c.b16 %v2522, %v2521
    %v2986 = vpack.c.b16 %v2524, %v2523
    %v2987 = vpack.c.b16 %v2526, %v2525
    %v2988 = vpack.c.b16 %v2528, %v2527
    %v2989 = vpack.c.b16 %v2530, %v2529
    %v2990 = vpack.c.b16 %v2532, %v2531
    %v2991 = vpack.c.b16 %v2534, %v2533
    %v2992 = vpack.c.b16 %v2536, %v2535
    %v2993 = vpack.c.b16 %v2538, %v2537
    %v2994 = vpack.c.b16 %v2540, %v2539
    %v2995 = vpack.c.b16 %v2542, %v2541
    %v2996 = vpack.c.b16 %v2544, %v2543
    %v2997 = vpack.c.b16 %v2546, %v2545
    %v2998 = vpack.c.b16 %v2548, %v2547
    %v2999 = vpack.c.b16 %v2550, %v2549
    %v3000 = vpack.c.b16 %v2552, %v2551
    %v3001 = vpack.c.b16 %v2554, %v2553
    %v3002 = vpack.c.b16 %v2556, %v2555
    %v3003 = vpack.c.b16 %v2558, %v2557
    %v3004 = vpack.c.b16 %v2560, %v2559
    %v3005 = vpack.c.b16 %v2562, %v2561
    %v3006 = vpack.c.b16 %v2564, %v2563
    %v3007 = vpack.c.b16 %v2566, %v2565
    %v3008 = vpack.c.b16 %v2568, %v2567
    %v3009 = vpack.c.b16 %v2570, %v2569
    %v3010 = vpack.c.b16 %v2572, %v2571
    %v3011 = vpack.c.b16 %v2574, %v2573
    %v3012 = vpack.c.b16 %v2576, %v2575
    %v3013 = vpack.c.b16 %v2578, %v2577
    %v3014 = vpack.c.b16 %v2580, %v2579
    %v3015 = vpack.c.b16 %v2582, %v2581
    %v3016 = vpack.c.b16 %v2584, %v2583
    %v3017 = vpack.c.b16 %v2586, %v2585
    %v3018 = vpack.c.b16 %v2588, %v2587
    %v3019 = vpack.c.b16 %v2590, %v2589
    %v3020 = vpack.c.b16 %v2592, %v2591
    %v3021 = vpack.c.b16 %v2594, %v2593
    %v3022 = vpack.c.b16 %v2596, %v2595
    %v3023 = vpack.c.b16 %v2598, %v2597
    %v3024 = vpack.c.b16 %v2600, %v2599
    %v3025 = vpack.c.b16 %v2602, %v2601
    %v3026 = vpack.c.b16 %v2604, %v2603
    %v3027 = vpack.c.b16 %v2606, %v2605
    %v3028 = vpack.c.b16 %v2608, %v2607
    %v3029 = vpack.c.b16 %v2610, %v2609
    %v3030 = vpack.c.b16 %v2612, %v2611
    %v3031 = vpack.c.b16 %v2614, %v2613
    %v3032 = vpack.c.b16 %v2616, %v2615
    %v3033 = vpack.c.b16 %v2618, %v2617
    %v3034 = vpack.c.b16 %v2620, %v2619
    %v3035 = vpack.c.b16 %v2622, %v2621
    %v3036 = vpack.c.b16 %v2624, %v2623
    %v3037 = vpack.c.b16 %v2626, %v2625
    %v3038 = vpack.c.b16 %v2628, %v2627
    %v3039 = vpack.c.b16 %v2630, %v2629
    %v3040 = vpack.c.b16 %v2632, %v2631
    %v3041 = vpack.c.b16 %v2634, %v2633
    %v3042 = vpack.c.b16 %v2636, %v2635
    %v3043 = vpack.c.b16 %v2638, %v2637
    %v3044 = vpack.c.b16 %v2640, %v2639
    %v3045 = vpack.c.b16 %v2642, %v2641
    %v3046 = vpack.c.b16 %v2644, %v2643
    %v3047 = vpack.c.b16 %v2646, %v2645
    %v3048 = vpack.c.b16 %v2648, %v2647
    %v3049 = vpack.c.b16 %v2650, %v2649
    %v3050 = vpack.c.b16 %v2652, %v2651
    %v3051 = vpack.c.b16 %v2654, %v2653
    %v3052 = vpack.c.b16 %v2656, %v2655
    %v3053 = vpack.c.b16 %v2658, %v2657
    %v3054 = vpack.c.b16 %v2660, %v2659
    %v3055 = vpack.c.b16 %v2662, %v2661
    %v3056 = vpack.c.b16 %v2664, %v2663
    %v3057 = vpack.c.b16 %v2666, %v2665
    %v3058 = vpack.c.b16 %v2668, %v2667
    %v3059 = vpack.c.b16 %v2670, %v2669
    %v3060 = vpack.c.b16 %v2672, %v2671
    %v3061 = vpack.c.b16 %v2674, %v2673
    %v3062 = vpack.c.b16 %v2676, %v2675
    %v3063 = vpack.c.b16 %v2678, %v2677
    %v3064 = vpack.c.b16 %v2680, %v2679
    %3449 = vmatprep.subr.bf16.mxu0 0
    %3450 = vmatpush1.bf16.msra.mxu0 %v2681
    %3451 = vmatprep.subr.bf16.mxu0 0
    %3452 = vmatpush1.bf16.msra.mxu0 %v2682
    %3453 = vmatprep.subr.bf16.mxu0 0
    %3454 = vmatpush1.bf16.msra.mxu0 %v2683
    %3455 = vmatprep.subr.bf16.mxu0 0
    %3456 = vmatpush1.bf16.msra.mxu0 %v2684
    %3457 = vmatprep.subr.bf16.mxu0 0
    %3458 = vmatpush1.bf16.msra.mxu0 %v2685
    %3459 = vmatprep.subr.bf16.mxu0 0
    %3460 = vmatpush1.bf16.msra.mxu0 %v2686
    %3461 = vmatprep.subr.bf16.mxu0 0
    %3462 = vmatpush1.bf16.msra.mxu0 %v2687
    %3463 = vmatprep.subr.bf16.mxu0 0
    %3464 = vmatpush1.bf16.msra.mxu0 %v2688
    %3465 = vmatprep.subr.bf16.mxu0 0
    %3466 = vmatpush1.bf16.msra.mxu0 %v2689
    %3467 = vmatprep.subr.bf16.mxu0 0
    %3468 = vmatpush1.bf16.msra.mxu0 %v2690
    %3469 = vmatprep.subr.bf16.mxu0 0
    %3470 = vmatpush1.bf16.msra.mxu0 %v2691
    %3471 = vmatprep.subr.bf16.mxu0 0
    %3472 = vmatpush1.bf16.msra.mxu0 %v2692
    %3473 = vmatprep.subr.bf16.mxu0 0
    %3474 = vmatpush1.bf16.msra.mxu0 %v2693
    %3475 = vmatprep.subr.bf16.mxu0 0
    %3476 = vmatpush1.bf16.msra.mxu0 %v2694
    %3477 = vmatprep.subr.bf16.mxu0 0
    %3478 = vmatpush1.bf16.msra.mxu0 %v2695
    %3479 = vmatprep.subr.bf16.mxu0 0
    %3480 = vmatpush1.bf16.msra.mxu0 %v2696
    %3481 = vmatprep.mubr.bf16.mxu0 %v840
    %3482 = vmatmul.mubr.bf16.gmra.mrb[0].mxu0 %v826
    %v3483 = vpop.f32.mrb[0].mxu0
    %v3484 = vadd.f32 %v795, %v3483
    %v3485 = vpop.f32.mrb[0].mxu0
    %v3486 = vpop.f32.mrb[0].mxu0
    %v3487 = vpop.f32.mrb[0].mxu0
    %3488 = vdwg.mxu0
    %3489 = vmatprep.subr.bf16.mxu0 0
    %3490 = vmatpush1.bf16.msra.mxu0 %v2697
    %3491 = vmatprep.subr.bf16.mxu0 0
    %3492 = vmatpush1.bf16.msra.mxu0 %v2698
    %3493 = vmatprep.subr.bf16.mxu0 0
    %3494 = vmatpush1.bf16.msra.mxu0 %v2699
    %3495 = vmatprep.subr.bf16.mxu0 0
    %3496 = vmatpush1.bf16.msra.mxu0 %v2700
    %3497 = vmatprep.subr.bf16.mxu0 0
    %3498 = vmatpush1.bf16.msra.mxu0 %v2701
    %3499 = vmatprep.subr.bf16.mxu0 0
    %3500 = vmatpush1.bf16.msra.mxu0 %v2702
    %3501 = vmatprep.subr.bf16.mxu0 0
    %3502 = vmatpush1.bf16.msra.mxu0 %v2703
    %3503 = vmatprep.subr.bf16.mxu0 0
    %3504 = vmatpush1.bf16.msra.mxu0 %v2704
    %3505 = vmatprep.subr.bf16.mxu0 0
    %3506 = vmatpush1.bf16.msra.mxu0 %v2705
    %3507 = vmatprep.subr.bf16.mxu0 0
    %3508 = vmatpush1.bf16.msra.mxu0 %v2706
    %3509 = vmatprep.subr.bf16.mxu0 0
    %3510 = vmatpush1.bf16.msra.mxu0 %v2707
    %3511 = vmatprep.subr.bf16.mxu0 0
    %3512 = vmatpush1.bf16.msra.mxu0 %v2708
    %3513 = vmatprep.subr.bf16.mxu0 0
    %3514 = vmatpush1.bf16.msra.mxu0 %v2709
    %3515 = vmatprep.subr.bf16.mxu0 0
    %3516 = vmatpush1.bf16.msra.mxu0 %v2710
    %3517 = vmatprep.subr.bf16.mxu0 0
    %3518 = vmatpush1.bf16.msra.mxu0 %v2711
    %3519 = vmatprep.subr.bf16.mxu0 0
    %3520 = vmatpush1.bf16.msra.mxu0 %v2712
    %3521 = vmatprep.mubr.bf16.mxu0 %v850
    %3522 = vmatmul.mubr.bf16.gmra.mrb[0].mxu0 %v848
    %v3523 = vpop.f32.mrb[0].mxu0
    %v3524 = vadd.f32 %v3484, %v3523
    %v3525 = vpop.f32.mrb[0].mxu0
    %v3526 = vpop.f32.mrb[0].mxu0
    %v3527 = vpop.f32.mrb[0].mxu0
    %3528 = vdwg.mxu0
    %3529 = vmatprep.subr.bf16.mxu0 0
    %3530 = vmatpush1.bf16.msra.mxu0 %v2713
    %3531 = vmatprep.subr.bf16.mxu0 0
    %3532 = vmatpush1.bf16.msra.mxu0 %v2714
    %3533 = vmatprep.subr.bf16.mxu0 0
    %3534 = vmatpush1.bf16.msra.mxu0 %v2715
    %3535 = vmatprep.subr.bf16.mxu0 0
    %3536 = vmatpush1.bf16.msra.mxu0 %v2716
    %3537 = vmatprep.subr.bf16.mxu0 0
    %3538 = vmatpush1.bf16.msra.mxu0 %v2717
    %3539 = vmatprep.subr.bf16.mxu0 0
    %3540 = vmatpush1.bf16.msra.mxu0 %v2718
    %3541 = vmatprep.subr.bf16.mxu0 0
    %3542 = vmatpush1.bf16.msra.mxu0 %v2719
    %3543 = vmatprep.subr.bf16.mxu0 0
    %3544 = vmatpush1.bf16.msra.mxu0 %v2720
    %3545 = vmatprep.subr.bf16.mxu0 0
    %3546 = vmatpush1.bf16.msra.mxu0 %v2721
    %3547 = vmatprep.subr.bf16.mxu0 0
    %3548 = vmatpush1.bf16.msra.mxu0 %v2722
    %3549 = vmatprep.subr.bf16.mxu0 0
    %3550 = vmatpush1.bf16.msra.mxu0 %v2723
    %3551 = vmatprep.subr.bf16.mxu0 0
    %3552 = vmatpush1.bf16.msra.mxu0 %v2724
    %3553 = vmatprep.subr.bf16.mxu0 0
    %3554 = vmatpush1.bf16.msra.mxu0 %v2725
    %3555 = vmatprep.subr.bf16.mxu0 0
    %3556 = vmatpush1.bf16.msra.mxu0 %v2726
    %3557 = vmatprep.subr.bf16.mxu0 0
    %3558 = vmatpush1.bf16.msra.mxu0 %v2727
    %3559 = vmatprep.subr.bf16.mxu0 0
    %3560 = vmatpush1.bf16.msra.mxu0 %v2728
    %3561 = vmatprep.mubr.bf16.mxu0 %v847
    %3562 = vmatmul.mubr.bf16.gmra.mrb[0].mxu0 %v833
    %v3563 = vpop.f32.mrb[0].mxu0
    %v3564 = vadd.f32 %v3524, %v3563
    %v3565 = vpop.f32.mrb[0].mxu0
    %v3566 = vpop.f32.mrb[0].mxu0
    %v3567 = vpop.f32.mrb[0].mxu0
    %3568 = vdwg.mxu0
    %3569 = vmatprep.subr.bf16.mxu0 0
    %3570 = vmatpush1.bf16.msra.mxu0 %v2729
    %3571 = vmatprep.subr.bf16.mxu0 0
    %3572 = vmatpush1.bf16.msra.mxu0 %v2730
    %3573 = vmatprep.subr.bf16.mxu0 0
    %3574 = vmatpush1.bf16.msra.mxu0 %v2731
    %3575 = vmatprep.subr.bf16.mxu0 0
    %3576 = vmatpush1.bf16.msra.mxu0 %v2732
    %3577 = vmatprep.subr.bf16.mxu0 0
    %3578 = vmatpush1.bf16.msra.mxu0 %v2733
    %3579 = vmatprep.subr.bf16.mxu0 0
    %3580 = vmatpush1.bf16.msra.mxu0 %v2734
    %3581 = vmatprep.subr.bf16.mxu0 0
    %3582 = vmatpush1.bf16.msra.mxu0 %v2735
    %3583 = vmatprep.subr.bf16.mxu0 0
    %3584 = vmatpush1.bf16.msra.mxu0 %v2736
    %3585 = vmatprep.subr.bf16.mxu0 0
    %3586 = vmatpush1.bf16.msra.mxu0 %v2737
    %3587 = vmatprep.subr.bf16.mxu0 0
    %3588 = vmatpush1.bf16.msra.mxu0 %v2738
    %3589 = vmatprep.subr.bf16.mxu0 0
    %3590 = vmatpush1.bf16.msra.mxu0 %v2739
    %3591 = vmatprep.subr.bf16.mxu0 0
    %3592 = vmatpush1.bf16.msra.mxu0 %v2740
    %3593 = vmatprep.subr.bf16.mxu0 0
    %3594 = vmatpush1.bf16.msra.mxu0 %v2741
    %3595 = vmatprep.subr.bf16.mxu0 0
    %3596 = vmatpush1.bf16.msra.mxu0 %v2742
    %3597 = vmatprep.subr.bf16.mxu0 0
    %3598 = vmatpush1.bf16.msra.mxu0 %v2743
    %3599 = vmatprep.subr.bf16.mxu0 0
    %3600 = vmatpush1.bf16.msra.mxu0 %v2744
    %3601 = vmatprep.mubr.bf16.mxu0 %v851
    %3602 = vmatmul.mubr.bf16.gmra.mrb[0].mxu0 %v849
    %v3603 = vpop.f32.mrb[0].mxu0
    %v3604 = vadd.f32 %v3564, %v3603
    %v3605 = vpop.f32.mrb[0].mxu0
    %v3606 = vpop.f32.mrb[0].mxu0
    %v3607 = vpop.f32.mrb[0].mxu0
    %3608 = vdwg.mxu0
    %3609 = vmatprep.subr.bf16.mxu0 0
    %3610 = vmatpush1.bf16.msra.mxu0 %v2745
    %3611 = vmatprep.subr.bf16.mxu0 0
    %3612 = vmatpush1.bf16.msra.mxu0 %v2746
    %3613 = vmatprep.subr.bf16.mxu0 0
    %3614 = vmatpush1.bf16.msra.mxu0 %v2747
    %3615 = vmatprep.subr.bf16.mxu0 0
    %3616 = vmatpush1.bf16.msra.mxu0 %v2748
    %3617 = vmatprep.subr.bf16.mxu0 0
    %3618 = vmatpush1.bf16.msra.mxu0 %v2749
    %3619 = vmatprep.subr.bf16.mxu0 0
    %3620 = vmatpush1.bf16.msra.mxu0 %v2750
    %3621 = vmatprep.subr.bf16.mxu0 0
    %3622 = vmatpush1.bf16.msra.mxu0 %v2751
    %3623 = vmatprep.subr.bf16.mxu0 0
    %3624 = vmatpush1.bf16.msra.mxu0 %v2752
    %3625 = vmatprep.subr.bf16.mxu0 0
    %3626 = vmatpush1.bf16.msra.mxu0 %v2753
    %3627 = vmatprep.subr.bf16.mxu0 0
    %3628 = vmatpush1.bf16.msra.mxu0 %v2754
    %3629 = vmatprep.subr.bf16.mxu0 0
    %3630 = vmatpush1.bf16.msra.mxu0 %v2755
    %3631 = vmatprep.subr.bf16.mxu0 0
    %3632 = vmatpush1.bf16.msra.mxu0 %v2756
    %3633 = vmatprep.subr.bf16.mxu0 0
    %3634 = vmatpush1.bf16.msra.mxu0 %v2757
    %3635 = vmatprep.subr.bf16.mxu0 0
    %3636 = vmatpush1.bf16.msra.mxu0 %v2758
    %3637 = vmatprep.subr.bf16.mxu0 0
    %3638 = vmatpush1.bf16.msra.mxu0 %v2759
    %3639 = vmatprep.subr.bf16.mxu0 0
    %3640 = vmatpush1.bf16.msra.mxu0 %v2760
    %3641 = vmatprep.mubr.bf16.mxu0 %v889
    %3642 = vmatmul.mubr.bf16.gmra.mrb[0].mxu0 %v875
    %v3643 = vpop.f32.mrb[0].mxu0
    %v3644 = vadd.f32 %v3604, %v3643
    %v3645 = vpop.f32.mrb[0].mxu0
    %v3646 = vpop.f32.mrb[0].mxu0
    %v3647 = vpop.f32.mrb[0].mxu0
    %3648 = vdwg.mxu0
    %3649 = vmatprep.subr.bf16.mxu0 0
    %3650 = vmatpush1.bf16.msra.mxu0 %v2761
    %3651 = vmatprep.subr.bf16.mxu0 0
    %3652 = vmatpush1.bf16.msra.mxu0 %v2762
    %3653 = vmatprep.subr.bf16.mxu0 0
    %3654 = vmatpush1.bf16.msra.mxu0 %v2763
    %3655 = vmatprep.subr.bf16.mxu0 0
    %3656 = vmatpush1.bf16.msra.mxu0 %v2764
    %3657 = vmatprep.subr.bf16.mxu0 0
    %3658 = vmatpush1.bf16.msra.mxu0 %v2765
    %3659 = vmatprep.subr.bf16.mxu0 0
    %3660 = vmatpush1.bf16.msra.mxu0 %v2766
    %3661 = vmatprep.subr.bf16.mxu0 0
    %3662 = vmatpush1.bf16.msra.mxu0 %v2767
    %3663 = vmatprep.subr.bf16.mxu0 0
    %3664 = vmatpush1.bf16.msra.mxu0 %v2768
    %3665 = vmatprep.subr.bf16.mxu0 0
    %3666 = vmatpush1.bf16.msra.mxu0 %v2769
    %3667 = vmatprep.subr.bf16.mxu0 0
    %3668 = vmatpush1.bf16.msra.mxu0 %v2770
    %3669 = vmatprep.subr.bf16.mxu0 0
    %3670 = vmatpush1.bf16.msra.mxu0 %v2771
    %3671 = vmatprep.subr.bf16.mxu0 0
    %3672 = vmatpush1.bf16.msra.mxu0 %v2772
    %3673 = vmatprep.subr.bf16.mxu0 0
    %3674 = vmatpush1.bf16.msra.mxu0 %v2773
    %3675 = vmatprep.subr.bf16.mxu0 0
    %3676 = vmatpush1.bf16.msra.mxu0 %v2774
    %3677 = vmatprep.subr.bf16.mxu0 0
    %3678 = vmatpush1.bf16.msra.mxu0 %v2775
    %3679 = vmatprep.subr.bf16.mxu0 0
    %3680 = vmatpush1.bf16.msra.mxu0 %v2776
    %3681 = vmatprep.mubr.bf16.mxu0 %v899
    %3682 = vmatmul.mubr.bf16.gmra.mrb[0].mxu0 %v897
    %v3683 = vpop.f32.mrb[0].mxu0
    %v3684 = vadd.f32 %v3644, %v3683
    %v3685 = vpop.f32.mrb[0].mxu0
    %v3686 = vpop.f32.mrb[0].mxu0
    %v3687 = vpop.f32.mrb[0].mxu0
    %3688 = vdwg.mxu0
    %3689 = vmatprep.subr.bf16.mxu0 0
    %3690 = vmatpush1.bf16.msra.mxu0 %v2777
    %3691 = vmatprep.subr.bf16.mxu0 0
    %3692 = vmatpush1.bf16.msra.mxu0 %v2778
    %3693 = vmatprep.subr.bf16.mxu0 0
    %3694 = vmatpush1.bf16.msra.mxu0 %v2779
    %3695 = vmatprep.subr.bf16.mxu0 0
    %3696 = vmatpush1.bf16.msra.mxu0 %v2780
    %3697 = vmatprep.subr.bf16.mxu0 0
    %3698 = vmatpush1.bf16.msra.mxu0 %v2781
    %3699 = vmatprep.subr.bf16.mxu0 0
    %3700 = vmatpush1.bf16.msra.mxu0 %v2782
    %3701 = vmatprep.subr.bf16.mxu0 0
    %3702 = vmatpush1.bf16.msra.mxu0 %v2783
    %3703 = vmatprep.subr.bf16.mxu0 0
    %3704 = vmatpush1.bf16.msra.mxu0 %v2784
    %3705 = vmatprep.subr.bf16.mxu0 0
    %3706 = vmatpush1.bf16.msra.mxu0 %v2785
    %3707 = vmatprep.subr.bf16.mxu0 0
    %3708 = vmatpush1.bf16.msra.mxu0 %v2786
    %3709 = vmatprep.subr.bf16.mxu0 0
    %3710 = vmatpush1.bf16.msra.mxu0 %v2787
    %3711 = vmatprep.subr.bf16.mxu0 0
    %3712 = vmatpush1.bf16.msra.mxu0 %v2788
    %3713 = vmatprep.subr.bf16.mxu0 0
    %3714 = vmatpush1.bf16.msra.mxu0 %v2789
    %3715 = vmatprep.subr.bf16.mxu0 0
    %3716 = vmatpush1.bf16.msra.mxu0 %v2790
    %3717 = vmatprep.subr.bf16.mxu0 0
    %3718 = vmatpush1.bf16.msra.mxu0 %v2791
    %3719 = vmatprep.subr.bf16.mxu0 0
    %3720 = vmatpush1.bf16.msra.mxu0 %v2792
    %3721 = vmatprep.mubr.bf16.mxu0 %v896
    %3722 = vmatmul.mubr.bf16.gmra.mrb[0].mxu0 %v882
    %v3723 = vpop.f32.mrb[0].mxu0
    %v3724 = vadd.f32 %v3684, %v3723
    %v3725 = vpop.f32.mrb[0].mxu0
    %v3726 = vpop.f32.mrb[0].mxu0
    %v3727 = vpop.f32.mrb[0].mxu0
    %3728 = vdwg.mxu0
    %3729 = vmatprep.subr.bf16.mxu0 0
    %3730 = vmatpush1.bf16.msra.mxu0 %v2793
    %3731 = vmatprep.subr.bf16.mxu0 0
    %3732 = vmatpush1.bf16.msra.mxu0 %v2794
    %3733 = vmatprep.subr.bf16.mxu0 0
    %3734 = vmatpush1.bf16.msra.mxu0 %v2795
    %3735 = vmatprep.subr.bf16.mxu0 0
    %3736 = vmatpush1.bf16.msra.mxu0 %v2796
    %3737 = vmatprep.subr.bf16.mxu0 0
    %3738 = vmatpush1.bf16.msra.mxu0 %v2797
    %3739 = vmatprep.subr.bf16.mxu0 0
    %3740 = vmatpush1.bf16.msra.mxu0 %v2798
    %3741 = vmatprep.subr.bf16.mxu0 0
    %3742 = vmatpush1.bf16.msra.mxu0 %v2799
    %3743 = vmatprep.subr.bf16.mxu0 0
    %3744 = vmatpush1.bf16.msra.mxu0 %v2800
    %3745 = vmatprep.subr.bf16.mxu0 0
    %3746 = vmatpush1.bf16.msra.mxu0 %v2801
    %3747 = vmatprep.subr.bf16.mxu0 0
    %3748 = vmatpush1.bf16.msra.mxu0 %v2802
    %3749 = vmatprep.subr.bf16.mxu0 0
    %3750 = vmatpush1.bf16.msra.mxu0 %v2803
    %3751 = vmatprep.subr.bf16.mxu0 0
    %3752 = vmatpush1.bf16.msra.mxu0 %v2804
    %3753 = vmatprep.subr.bf16.mxu0 0
    %3754 = vmatpush1.bf16.msra.mxu0 %v2805
    %3755 = vmatprep.subr.bf16.mxu0 0
    %3756 = vmatpush1.bf16.msra.mxu0 %v2806
    %3757 = vmatprep.subr.bf16.mxu0 0
    %3758 = vmatpush1.bf16.msra.mxu0 %v2807
    %3759 = vmatprep.subr.bf16.mxu0 0
    %3760 = vmatpush1.bf16.msra.mxu0 %v2808
    %3761 = vmatprep.mubr.bf16.mxu0 %v900
    %3762 = vmatmul.mubr.bf16.gmra.mrb[0].mxu0 %v898
    %v3763 = vpop.f32.mrb[0].mxu0
    %v3764 = vadd.f32 %v3724, %v3763
    %v3765 = vpop.f32.mrb[0].mxu0
    %v3766 = vpop.f32.mrb[0].mxu0
    %v3767 = vpop.f32.mrb[0].mxu0
    %3768 = vdwg.mxu0
    %3769 = vmatprep.subr.bf16.mxu0 0
    %3770 = vmatpush1.bf16.msra.mxu0 %v2809
    %3771 = vmatprep.subr.bf16.mxu0 0
    %3772 = vmatpush1.bf16.msra.mxu0 %v2810
    %3773 = vmatprep.subr.bf16.mxu0 0
    %3774 = vmatpush1.bf16.msra.mxu0 %v2811
    %3775 = vmatprep.subr.bf16.mxu0 0
    %3776 = vmatpush1.bf16.msra.mxu0 %v2812
    %3777 = vmatprep.subr.bf16.mxu0 0
    %3778 = vmatpush1.bf16.msra.mxu0 %v2813
    %3779 = vmatprep.subr.bf16.mxu0 0
    %3780 = vmatpush1.bf16.msra.mxu0 %v2814
    %3781 = vmatprep.subr.bf16.mxu0 0
    %3782 = vmatpush1.bf16.msra.mxu0 %v2815
    %3783 = vmatprep.subr.bf16.mxu0 0
    %3784 = vmatpush1.bf16.msra.mxu0 %v2816
    %3785 = vmatprep.subr.bf16.mxu0 0
    %3786 = vmatpush1.bf16.msra.mxu0 %v2817
    %3787 = vmatprep.subr.bf16.mxu0 0
    %3788 = vmatpush1.bf16.msra.mxu0 %v2818
    %3789 = vmatprep.subr.bf16.mxu0 0
    %3790 = vmatpush1.bf16.msra.mxu0 %v2819
    %3791 = vmatprep.subr.bf16.mxu0 0
    %3792 = vmatpush1.bf16.msra.mxu0 %v2820
    %3793 = vmatprep.subr.bf16.mxu0 0
    %3794 = vmatpush1.bf16.msra.mxu0 %v2821
    %3795 = vmatprep.subr.bf16.mxu0 0
    %3796 = vmatpush1.bf16.msra.mxu0 %v2822
    %3797 = vmatprep.subr.bf16.mxu0 0
    %3798 = vmatpush1.bf16.msra.mxu0 %v2823
    %3799 = vmatprep.subr.bf16.mxu0 0
    %3800 = vmatpush1.bf16.msra.mxu0 %v2824
    %3801 = vmatprep.mubr.bf16.mxu0 %v938
    %3802 = vmatmul.mubr.bf16.gmra.mrb[0].mxu0 %v924
    %v3803 = vpop.f32.mrb[0].mxu0
    %v3804 = vadd.f32 %v3764, %v3803
    %v3805 = vpop.f32.mrb[0].mxu0
    %v3806 = vpop.f32.mrb[0].mxu0
    %v3807 = vpop.f32.mrb[0].mxu0
    %3808 = vdwg.mxu0
    %3809 = vmatprep.subr.bf16.mxu0 0
    %3810 = vmatpush1.bf16.msra.mxu0 %v2825
    %3811 = vmatprep.subr.bf16.mxu0 0
    %3812 = vmatpush1.bf16.msra.mxu0 %v2826
    %3813 = vmatprep.subr.bf16.mxu0 0
    %3814 = vmatpush1.bf16.msra.mxu0 %v2827
    %3815 = vmatprep.subr.bf16.mxu0 0
    %3816 = vmatpush1.bf16.msra.mxu0 %v2828
    %3817 = vmatprep.subr.bf16.mxu0 0
    %3818 = vmatpush1.bf16.msra.mxu0 %v2829
    %3819 = vmatprep.subr.bf16.mxu0 0
    %3820 = vmatpush1.bf16.msra.mxu0 %v2830
    %3821 = vmatprep.subr.bf16.mxu0 0
    %3822 = vmatpush1.bf16.msra.mxu0 %v2831
    %3823 = vmatprep.subr.bf16.mxu0 0
    %3824 = vmatpush1.bf16.msra.mxu0 %v2832
    %3825 = vmatprep.subr.bf16.mxu0 0
    %3826 = vmatpush1.bf16.msra.mxu0 %v2833
    %3827 = vmatprep.subr.bf16.mxu0 0
    %3828 = vmatpush1.bf16.msra.mxu0 %v2834
    %3829 = vmatprep.subr.bf16.mxu0 0
    %3830 = vmatpush1.bf16.msra.mxu0 %v2835
    %3831 = vmatprep.subr.bf16.mxu0 0
    %3832 = vmatpush1.bf16.msra.mxu0 %v2836
    %3833 = vmatprep.subr.bf16.mxu0 0
    %3834 = vmatpush1.bf16.msra.mxu0 %v2837
    %3835 = vmatprep.subr.bf16.mxu0 0
    %3836 = vmatpush1.bf16.msra.mxu0 %v2838
    %3837 = vmatprep.subr.bf16.mxu0 0
    %3838 = vmatpush1.bf16.msra.mxu0 %v2839
    %3839 = vmatprep.subr.bf16.mxu0 0
    %3840 = vmatpush1.bf16.msra.mxu0 %v2840
    %3841 = vmatprep.mubr.bf16.mxu0 %v948
    %3842 = vmatmul.mubr.bf16.gmra.mrb[0].mxu0 %v946
    %v3843 = vpop.f32.mrb[0].mxu0
    %v3844 = vadd.f32 %v3804, %v3843
    %v3845 = vpop.f32.mrb[0].mxu0
    %v3846 = vpop.f32.mrb[0].mxu0
    %v3847 = vpop.f32.mrb[0].mxu0
    %3848 = vdwg.mxu0
    %3849 = vmatprep.subr.bf16.mxu0 0
    %3850 = vmatpush1.bf16.msra.mxu0 %v2841
    %3851 = vmatprep.subr.bf16.mxu0 0
    %3852 = vmatpush1.bf16.msra.mxu0 %v2842
    %3853 = vmatprep.subr.bf16.mxu0 0
    %3854 = vmatpush1.bf16.msra.mxu0 %v2843
    %3855 = vmatprep.subr.bf16.mxu0 0
    %3856 = vmatpush1.bf16.msra.mxu0 %v2844
    %3857 = vmatprep.subr.bf16.mxu0 0
    %3858 = vmatpush1.bf16.msra.mxu0 %v2845
    %3859 = vmatprep.subr.bf16.mxu0 0
    %3860 = vmatpush1.bf16.msra.mxu0 %v2846
    %3861 = vmatprep.subr.bf16.mxu0 0
    %3862 = vmatpush1.bf16.msra.mxu0 %v2847
    %3863 = vmatprep.subr.bf16.mxu0 0
    %3864 = vmatpush1.bf16.msra.mxu0 %v2848
    %3865 = vmatprep.subr.bf16.mxu0 0
    %3866 = vmatpush1.bf16.msra.mxu0 %v2849
    %3867 = vmatprep.subr.bf16.mxu0 0
    %3868 = vmatpush1.bf16.msra.mxu0 %v2850
    %3869 = vmatprep.subr.bf16.mxu0 0
    %3870 = vmatpush1.bf16.msra.mxu0 %v2851
    %3871 = vmatprep.subr.bf16.mxu0 0
    %3872 = vmatpush1.bf16.msra.mxu0 %v2852
    %3873 = vmatprep.subr.bf16.mxu0 0
    %3874 = vmatpush1.bf16.msra.mxu0 %v2853
    %3875 = vmatprep.subr.bf16.mxu0 0
    %3876 = vmatpush1.bf16.msra.mxu0 %v2854
    %3877 = vmatprep.subr.bf16.mxu0 0
    %3878 = vmatpush1.bf16.msra.mxu0 %v2855
    %3879 = vmatprep.subr.bf16.mxu0 0
    %3880 = vmatpush1.bf16.msra.mxu0 %v2856
    %3881 = vmatprep.mubr.bf16.mxu0 %v945
    %3882 = vmatmul.mubr.bf16.gmra.mrb[0].mxu0 %v931
    %v3883 = vpop.f32.mrb[0].mxu0
    %v3884 = vadd.f32 %v3844, %v3883
    %v3885 = vpop.f32.mrb[0].mxu0
    %v3886 = vpop.f32.mrb[0].mxu0
    %v3887 = vpop.f32.mrb[0].mxu0
    %3888 = vdwg.mxu0
    %3889 = vmatprep.subr.bf16.mxu0 0
    %3890 = vmatpush1.bf16.msra.mxu0 %v2857
    %3891 = vmatprep.subr.bf16.mxu0 0
    %3892 = vmatpush1.bf16.msra.mxu0 %v2858
    %3893 = vmatprep.subr.bf16.mxu0 0
    %3894 = vmatpush1.bf16.msra.mxu0 %v2859
    %3895 = vmatprep.subr.bf16.mxu0 0
    %3896 = vmatpush1.bf16.msra.mxu0 %v2860
    %3897 = vmatprep.subr.bf16.mxu0 0
    %3898 = vmatpush1.bf16.msra.mxu0 %v2861
    %3899 = vmatprep.subr.bf16.mxu0 0
    %3900 = vmatpush1.bf16.msra.mxu0 %v2862
    %3901 = vmatprep.subr.bf16.mxu0 0
    %3902 = vmatpush1.bf16.msra.mxu0 %v2863
    %3903 = vmatprep.subr.bf16.mxu0 0
    %3904 = vmatpush1.bf16.msra.mxu0 %v2864
    %3905 = vmatprep.subr.bf16.mxu0 0
    %3906 = vmatpush1.bf16.msra.mxu0 %v2865
    %3907 = vmatprep.subr.bf16.mxu0 0
    %3908 = vmatpush1.bf16.msra.mxu0 %v2866
    %3909 = vmatprep.subr.bf16.mxu0 0
    %3910 = vmatpush1.bf16.msra.mxu0 %v2867
    %3911 = vmatprep.subr.bf16.mxu0 0
    %3912 = vmatpush1.bf16.msra.mxu0 %v2868
    %3913 = vmatprep.subr.bf16.mxu0 0
    %3914 = vmatpush1.bf16.msra.mxu0 %v2869
    %3915 = vmatprep.subr.bf16.mxu0 0
    %3916 = vmatpush1.bf16.msra.mxu0 %v2870
    %3917 = vmatprep.subr.bf16.mxu0 0
    %3918 = vmatpush1.bf16.msra.mxu0 %v2871
    %3919 = vmatprep.subr.bf16.mxu0 0
    %3920 = vmatpush1.bf16.msra.mxu0 %v2872
    %3921 = vmatprep.mubr.bf16.mxu0 %v949
    %3922 = vmatmul.mubr.bf16.gmra.mrb[0].mxu0 %v947
    %v3923 = vpop.f32.mrb[0].mxu0
    %v3924 = vadd.f32 %v3884, %v3923
    %v3925 = vpop.f32.mrb[0].mxu0
    %v3926 = vpop.f32.mrb[0].mxu0
    %v3927 = vpop.f32.mrb[0].mxu0
    %3928 = vdwg.mxu0
    %3929 = vmatprep.subr.bf16.mxu0 0
    %3930 = vmatpush1.bf16.msra.mxu0 %v2873
    %3931 = vmatprep.subr.bf16.mxu0 0
    %3932 = vmatpush1.bf16.msra.mxu0 %v2874
    %3933 = vmatprep.subr.bf16.mxu0 0
    %3934 = vmatpush1.bf16.msra.mxu0 %v2875
    %3935 = vmatprep.subr.bf16.mxu0 0
    %3936 = vmatpush1.bf16.msra.mxu0 %v2876
    %3937 = vmatprep.subr.bf16.mxu0 0
    %3938 = vmatpush1.bf16.msra.mxu0 %v2877
    %3939 = vmatprep.subr.bf16.mxu0 0
    %3940 = vmatpush1.bf16.msra.mxu0 %v2878
    %3941 = vmatprep.subr.bf16.mxu0 0
    %3942 = vmatpush1.bf16.msra.mxu0 %v2879
    %3943 = vmatprep.subr.bf16.mxu0 0
    %3944 = vmatpush1.bf16.msra.mxu0 %v2880
    %3945 = vmatprep.subr.bf16.mxu0 0
    %3946 = vmatpush1.bf16.msra.mxu0 %v2881
    %3947 = vmatprep.subr.bf16.mxu0 0
    %3948 = vmatpush1.bf16.msra.mxu0 %v2882
    %3949 = vmatprep.subr.bf16.mxu0 0
    %3950 = vmatpush1.bf16.msra.mxu0 %v2883
    %3951 = vmatprep.subr.bf16.mxu0 0
    %3952 = vmatpush1.bf16.msra.mxu0 %v2884
    %3953 = vmatprep.subr.bf16.mxu0 0
    %3954 = vmatpush1.bf16.msra.mxu0 %v2885
    %3955 = vmatprep.subr.bf16.mxu0 0
    %3956 = vmatpush1.bf16.msra.mxu0 %v2886
    %3957 = vmatprep.subr.bf16.mxu0 0
    %3958 = vmatpush1.bf16.msra.mxu0 %v2887
    %3959 = vmatprep.subr.bf16.mxu0 0
    %3960 = vmatpush1.bf16.msra.mxu0 %v2888
    %3961 = vmatprep.mubr.bf16.mxu0 %v987
    %3962 = vmatmul.mubr.bf16.gmra.mrb[0].mxu0 %v973
    %v3963 = vpop.f32.mrb[0].mxu0
    %v3964 = vadd.f32 %v3924, %v3963
    %v3965 = vpop.f32.mrb[0].mxu0
    %v3966 = vpop.f32.mrb[0].mxu0
    %v3967 = vpop.f32.mrb[0].mxu0
    %3968 = vdwg.mxu0
    %3969 = vmatprep.subr.bf16.mxu0 0
    %3970 = vmatpush1.bf16.msra.mxu0 %v2889
    %3971 = vmatprep.subr.bf16.mxu0 0
    %3972 = vmatpush1.bf16.msra.mxu0 %v2890
    %3973 = vmatprep.subr.bf16.mxu0 0
    %3974 = vmatpush1.bf16.msra.mxu0 %v2891
    %3975 = vmatprep.subr.bf16.mxu0 0
    %3976 = vmatpush1.bf16.msra.mxu0 %v2892
    %3977 = vmatprep.subr.bf16.mxu0 0
    %3978 = vmatpush1.bf16.msra.mxu0 %v2893
    %3979 = vmatprep.subr.bf16.mxu0 0
    %3980 = vmatpush1.bf16.msra.mxu0 %v2894
    %3981 = vmatprep.subr.bf16.mxu0 0
    %3982 = vmatpush1.bf16.msra.mxu0 %v2895
    %3983 = vmatprep.subr.bf16.mxu0 0
    %3984 = vmatpush1.bf16.msra.mxu0 %v2896
    %3985 = vmatprep.subr.bf16.mxu0 0
    %3986 = vmatpush1.bf16.msra.mxu0 %v2897
    %3987 = vmatprep.subr.bf16.mxu0 0
    %3988 = vmatpush1.bf16.msra.mxu0 %v2898
    %3989 = vmatprep.subr.bf16.mxu0 0
    %3990 = vmatpush1.bf16.msra.mxu0 %v2899
    %3991 = vmatprep.subr.bf16.mxu0 0
    %3992 = vmatpush1.bf16.msra.mxu0 %v2900
    %3993 = vmatprep.subr.bf16.mxu0 0
    %3994 = vmatpush1.bf16.msra.mxu0 %v2901
    %3995 = vmatprep.subr.bf16.mxu0 0
    %3996 = vmatpush1.bf16.msra.mxu0 %v2902
    %3997 = vmatprep.subr.bf16.mxu0 0
    %3998 = vmatpush1.bf16.msra.mxu0 %v2903
    %3999 = vmatprep.subr.bf16.mxu0 0
    %4000 = vmatpush1.bf16.msra.mxu0 %v2904
    %4001 = vmatprep.mubr.bf16.mxu0 %v997
    %4002 = vmatmul.mubr.bf16.gmra.mrb[0].mxu0 %v995
    %v4003 = vpop.f32.mrb[0].mxu0
    %v4004 = vadd.f32 %v3964, %v4003
    %v4005 = vpop.f32.mrb[0].mxu0
    %v4006 = vpop.f32.mrb[0].mxu0
    %v4007 = vpop.f32.mrb[0].mxu0
    %4008 = vdwg.mxu0
    %4009 = vmatprep.subr.bf16.mxu0 0
    %4010 = vmatpush1.bf16.msra.mxu0 %v2905
    %4011 = vmatprep.subr.bf16.mxu0 0
    %4012 = vmatpush1.bf16.msra.mxu0 %v2906
    %4013 = vmatprep.subr.bf16.mxu0 0
    %4014 = vmatpush1.bf16.msra.mxu0 %v2907
    %4015 = vmatprep.subr.bf16.mxu0 0
    %4016 = vmatpush1.bf16.msra.mxu0 %v2908
    %4017 = vmatprep.subr.bf16.mxu0 0
    %4018 = vmatpush1.bf16.msra.mxu0 %v2909
    %4019 = vmatprep.subr.bf16.mxu0 0
    %4020 = vmatpush1.bf16.msra.mxu0 %v2910
    %4021 = vmatprep.subr.bf16.mxu0 0
    %4022 = vmatpush1.bf16.msra.mxu0 %v2911
    %4023 = vmatprep.subr.bf16.mxu0 0
    %4024 = vmatpush1.bf16.msra.mxu0 %v2912
    %4025 = vmatprep.subr.bf16.mxu0 0
    %4026 = vmatpush1.bf16.msra.mxu0 %v2913
    %4027 = vmatprep.subr.bf16.mxu0 0
    %4028 = vmatpush1.bf16.msra.mxu0 %v2914
    %4029 = vmatprep.subr.bf16.mxu0 0
    %4030 = vmatpush1.bf16.msra.mxu0 %v2915
    %4031 = vmatprep.subr.bf16.mxu0 0
    %4032 = vmatpush1.bf16.msra.mxu0 %v2916
    %4033 = vmatprep.subr.bf16.mxu0 0
    %4034 = vmatpush1.bf16.msra.mxu0 %v2917
    %4035 = vmatprep.subr.bf16.mxu0 0
    %4036 = vmatpush1.bf16.msra.mxu0 %v2918
    %4037 = vmatprep.subr.bf16.mxu0 0
    %4038 = vmatpush1.bf16.msra.mxu0 %v2919
    %4039 = vmatprep.subr.bf16.mxu0 0
    %4040 = vmatpush1.bf16.msra.mxu0 %v2920
    %4041 = vmatprep.mubr.bf16.mxu0 %v994
    %4042 = vmatmul.mubr.bf16.gmra.mrb[0].mxu0 %v980
    %v4043 = vpop.f32.mrb[0].mxu0
    %v4044 = vadd.f32 %v4004, %v4043
    %v4045 = vpop.f32.mrb[0].mxu0
    %v4046 = vpop.f32.mrb[0].mxu0
    %v4047 = vpop.f32.mrb[0].mxu0
    %4048 = vdwg.mxu0
    %4049 = vmatprep.subr.bf16.mxu0 0
    %4050 = vmatpush1.bf16.msra.mxu0 %v2921
    %4051 = vmatprep.subr.bf16.mxu0 0
    %4052 = vmatpush1.bf16.msra.mxu0 %v2922
    %4053 = vmatprep.subr.bf16.mxu0 0
    %4054 = vmatpush1.bf16.msra.mxu0 %v2923
    %4055 = vmatprep.subr.bf16.mxu0 0
    %4056 = vmatpush1.bf16.msra.mxu0 %v2924
    %4057 = vmatprep.subr.bf16.mxu0 0
    %4058 = vmatpush1.bf16.msra.mxu0 %v2925
    %4059 = vmatprep.subr.bf16.mxu0 0
    %4060 = vmatpush1.bf16.msra.mxu0 %v2926
    %4061 = vmatprep.subr.bf16.mxu0 0
    %4062 = vmatpush1.bf16.msra.mxu0 %v2927
    %4063 = vmatprep.subr.bf16.mxu0 0
    %4064 = vmatpush1.bf16.msra.mxu0 %v2928
    %4065 = vmatprep.subr.bf16.mxu0 0
    %4066 = vmatpush1.bf16.msra.mxu0 %v2929
    %4067 = vmatprep.subr.bf16.mxu0 0
    %4068 = vmatpush1.bf16.msra.mxu0 %v2930
    %4069 = vmatprep.subr.bf16.mxu0 0
    %4070 = vmatpush1.bf16.msra.mxu0 %v2931
    %4071 = vmatprep.subr.bf16.mxu0 0
    %4072 = vmatpush1.bf16.msra.mxu0 %v2932
    %4073 = vmatprep.subr.bf16.mxu0 0
    %4074 = vmatpush1.bf16.msra.mxu0 %v2933
    %4075 = vmatprep.subr.bf16.mxu0 0
    %4076 = vmatpush1.bf16.msra.mxu0 %v2934
    %4077 = vmatprep.subr.bf16.mxu0 0
    %4078 = vmatpush1.bf16.msra.mxu0 %v2935
    %4079 = vmatprep.subr.bf16.mxu0 0
    %4080 = vmatpush1.bf16.msra.mxu0 %v2936
    %4081 = vmatprep.mubr.bf16.mxu0 %v998
    %4082 = vmatmul.mubr.bf16.gmra.mrb[0].mxu0 %v996
    %v4083 = vpop.f32.mrb[0].mxu0
    %v4084 = vadd.f32 %v4044, %v4083
    %v4085 = vpop.f32.mrb[0].mxu0
    %v4086 = vpop.f32.mrb[0].mxu0
    %v4087 = vpop.f32.mrb[0].mxu0
    %4088 = vdwg.mxu0
    %4089 = vmatprep.subr.bf16.mxu0 0
    %4090 = vmatpush1.bf16.msra.mxu0 %v2937
    %4091 = vmatprep.subr.bf16.mxu0 0
    %4092 = vmatpush1.bf16.msra.mxu0 %v2938
    %4093 = vmatprep.subr.bf16.mxu0 0
    %4094 = vmatpush1.bf16.msra.mxu0 %v2939
    %4095 = vmatprep.subr.bf16.mxu0 0
    %4096 = vmatpush1.bf16.msra.mxu0 %v2940
    %4097 = vmatprep.subr.bf16.mxu0 0
    %4098 = vmatpush1.bf16.msra.mxu0 %v2941
    %4099 = vmatprep.subr.bf16.mxu0 0
    %4100 = vmatpush1.bf16.msra.mxu0 %v2942
    %4101 = vmatprep.subr.bf16.mxu0 0
    %4102 = vmatpush1.bf16.msra.mxu0 %v2943
    %4103 = vmatprep.subr.bf16.mxu0 0
    %4104 = vmatpush1.bf16.msra.mxu0 %v2944
    %4105 = vmatprep.subr.bf16.mxu0 0
    %4106 = vmatpush1.bf16.msra.mxu0 %v2945
    %4107 = vmatprep.subr.bf16.mxu0 0
    %4108 = vmatpush1.bf16.msra.mxu0 %v2946
    %4109 = vmatprep.subr.bf16.mxu0 0
    %4110 = vmatpush1.bf16.msra.mxu0 %v2947
    %4111 = vmatprep.subr.bf16.mxu0 0
    %4112 = vmatpush1.bf16.msra.mxu0 %v2948
    %4113 = vmatprep.subr.bf16.mxu0 0
    %4114 = vmatpush1.bf16.msra.mxu0 %v2949
    %4115 = vmatprep.subr.bf16.mxu0 0
    %4116 = vmatpush1.bf16.msra.mxu0 %v2950
    %4117 = vmatprep.subr.bf16.mxu0 0
    %4118 = vmatpush1.bf16.msra.mxu0 %v2951
    %4119 = vmatprep.subr.bf16.mxu0 0
    %4120 = vmatpush1.bf16.msra.mxu0 %v2952
    %4121 = vmatprep.mubr.bf16.mxu0 %v1036
    %4122 = vmatmul.mubr.bf16.gmra.mrb[0].mxu0 %v1022
    %v4123 = vpop.f32.mrb[0].mxu0
    %v4124 = vadd.f32 %v4084, %v4123
    %v4125 = vpop.f32.mrb[0].mxu0
    %v4126 = vpop.f32.mrb[0].mxu0
    %v4127 = vpop.f32.mrb[0].mxu0
    %4128 = vdwg.mxu0
    %4129 = vmatprep.subr.bf16.mxu0 0
    %4130 = vmatpush1.bf16.msra.mxu0 %v2953
    %4131 = vmatprep.subr.bf16.mxu0 0
    %4132 = vmatpush1.bf16.msra.mxu0 %v2954
    %4133 = vmatprep.subr.bf16.mxu0 0
    %4134 = vmatpush1.bf16.msra.mxu0 %v2955
    %4135 = vmatprep.subr.bf16.mxu0 0
    %4136 = vmatpush1.bf16.msra.mxu0 %v2956
    %4137 = vmatprep.subr.bf16.mxu0 0
    %4138 = vmatpush1.bf16.msra.mxu0 %v2957
    %4139 = vmatprep.subr.bf16.mxu0 0
    %4140 = vmatpush1.bf16.msra.mxu0 %v2958
    %4141 = vmatprep.subr.bf16.mxu0 0
    %4142 = vmatpush1.bf16.msra.mxu0 %v2959
    %4143 = vmatprep.subr.bf16.mxu0 0
    %4144 = vmatpush1.bf16.msra.mxu0 %v2960
    %4145 = vmatprep.subr.bf16.mxu0 0
    %4146 = vmatpush1.bf16.msra.mxu0 %v2961
    %4147 = vmatprep.subr.bf16.mxu0 0
    %4148 = vmatpush1.bf16.msra.mxu0 %v2962
    %4149 = vmatprep.subr.bf16.mxu0 0
    %4150 = vmatpush1.bf16.msra.mxu0 %v2963
    %4151 = vmatprep.subr.bf16.mxu0 0
    %4152 = vmatpush1.bf16.msra.mxu0 %v2964
    %4153 = vmatprep.subr.bf16.mxu0 0
    %4154 = vmatpush1.bf16.msra.mxu0 %v2965
    %4155 = vmatprep.subr.bf16.mxu0 0
    %4156 = vmatpush1.bf16.msra.mxu0 %v2966
    %4157 = vmatprep.subr.bf16.mxu0 0
    %4158 = vmatpush1.bf16.msra.mxu0 %v2967
    %4159 = vmatprep.subr.bf16.mxu0 0
    %4160 = vmatpush1.bf16.msra.mxu0 %v2968
    %4161 = vmatprep.mubr.bf16.mxu0 %v1046
    %4162 = vmatmul.mubr.bf16.gmra.mrb[0].mxu0 %v1044
    %v4163 = vpop.f32.mrb[0].mxu0
    %v4164 = vadd.f32 %v4124, %v4163
    %v4165 = vpop.f32.mrb[0].mxu0
    %v4166 = vpop.f32.mrb[0].mxu0
    %v4167 = vpop.f32.mrb[0].mxu0
    %4168 = vdwg.mxu0
    %4169 = vmatprep.subr.bf16.mxu0 0
    %4170 = vmatpush1.bf16.msra.mxu0 %v2969
    %4171 = vmatprep.subr.bf16.mxu0 0
    %4172 = vmatpush1.bf16.msra.mxu0 %v2970
    %4173 = vmatprep.subr.bf16.mxu0 0
    %4174 = vmatpush1.bf16.msra.mxu0 %v2971
    %4175 = vmatprep.subr.bf16.mxu0 0
    %4176 = vmatpush1.bf16.msra.mxu0 %v2972
    %4177 = vmatprep.subr.bf16.mxu0 0
    %4178 = vmatpush1.bf16.msra.mxu0 %v2973
    %4179 = vmatprep.subr.bf16.mxu0 0
    %4180 = vmatpush1.bf16.msra.mxu0 %v2974
    %4181 = vmatprep.subr.bf16.mxu0 0
    %4182 = vmatpush1.bf16.msra.mxu0 %v2975
    %4183 = vmatprep.subr.bf16.mxu0 0
    %4184 = vmatpush1.bf16.msra.mxu0 %v2976
    %4185 = vmatprep.subr.bf16.mxu0 0
    %4186 = vmatpush1.bf16.msra.mxu0 %v2977
    %4187 = vmatprep.subr.bf16.mxu0 0
    %4188 = vmatpush1.bf16.msra.mxu0 %v2978
    %4189 = vmatprep.subr.bf16.mxu0 0
    %4190 = vmatpush1.bf16.msra.mxu0 %v2979
    %4191 = vmatprep.subr.bf16.mxu0 0
    %4192 = vmatpush1.bf16.msra.mxu0 %v2980
    %4193 = vmatprep.subr.bf16.mxu0 0
    %4194 = vmatpush1.bf16.msra.mxu0 %v2981
    %4195 = vmatprep.subr.bf16.mxu0 0
    %4196 = vmatpush1.bf16.msra.mxu0 %v2982
    %4197 = vmatprep.subr.bf16.mxu0 0
    %4198 = vmatpush1.bf16.msra.mxu0 %v2983
    %4199 = vmatprep.subr.bf16.mxu0 0
    %4200 = vmatpush1.bf16.msra.mxu0 %v2984
    %4201 = vmatprep.mubr.bf16.mxu0 %v1043
    %4202 = vmatmul.mubr.bf16.gmra.mrb[0].mxu0 %v1029
    %v4203 = vpop.f32.mrb[0].mxu0
    %v4204 = vadd.f32 %v4164, %v4203
    %v4205 = vpop.f32.mrb[0].mxu0
    %v4206 = vpop.f32.mrb[0].mxu0
    %v4207 = vpop.f32.mrb[0].mxu0
    %4208 = vdwg.mxu0
    %4209 = vmatprep.subr.bf16.mxu0 0
    %4210 = vmatpush1.bf16.msra.mxu0 %v2985
    %4211 = vmatprep.subr.bf16.mxu0 0
    %4212 = vmatpush1.bf16.msra.mxu0 %v2986
    %4213 = vmatprep.subr.bf16.mxu0 0
    %4214 = vmatpush1.bf16.msra.mxu0 %v2987
    %4215 = vmatprep.subr.bf16.mxu0 0
    %4216 = vmatpush1.bf16.msra.mxu0 %v2988
    %4217 = vmatprep.subr.bf16.mxu0 0
    %4218 = vmatpush1.bf16.msra.mxu0 %v2989
    %4219 = vmatprep.subr.bf16.mxu0 0
    %4220 = vmatpush1.bf16.msra.mxu0 %v2990
    %4221 = vmatprep.subr.bf16.mxu0 0
    %4222 = vmatpush1.bf16.msra.mxu0 %v2991
    %4223 = vmatprep.subr.bf16.mxu0 0
    %4224 = vmatpush1.bf16.msra.mxu0 %v2992
    %4225 = vmatprep.subr.bf16.mxu0 0
    %4226 = vmatpush1.bf16.msra.mxu0 %v2993
    %4227 = vmatprep.subr.bf16.mxu0 0
    %4228 = vmatpush1.bf16.msra.mxu0 %v2994
    %4229 = vmatprep.subr.bf16.mxu0 0
    %4230 = vmatpush1.bf16.msra.mxu0 %v2995
    %4231 = vmatprep.subr.bf16.mxu0 0
    %4232 = vmatpush1.bf16.msra.mxu0 %v2996
    %4233 = vmatprep.subr.bf16.mxu0 0
    %4234 = vmatpush1.bf16.msra.mxu0 %v2997
    %4235 = vmatprep.subr.bf16.mxu0 0
    %4236 = vmatpush1.bf16.msra.mxu0 %v2998
    %4237 = vmatprep.subr.bf16.mxu0 0
    %4238 = vmatpush1.bf16.msra.mxu0 %v2999
    %4239 = vmatprep.subr.bf16.mxu0 0
    %4240 = vmatpush1.bf16.msra.mxu0 %v3000
    %4241 = vmatprep.mubr.bf16.mxu0 %v1047
    %4242 = vmatmul.mubr.bf16.gmra.mrb[0].mxu0 %v1045
    %v4243 = vpop.f32.mrb[0].mxu0
    %v4244 = vadd.f32 %v4204, %v4243
    %v4245 = vpop.f32.mrb[0].mxu0
    %v4246 = vpop.f32.mrb[0].mxu0
    %v4247 = vpop.f32.mrb[0].mxu0
    %4248 = vdwg.mxu0
    %4249 = vmatprep.subr.bf16.mxu0 0
    %4250 = vmatpush1.bf16.msra.mxu0 %v3001
    %4251 = vmatprep.subr.bf16.mxu0 0
    %4252 = vmatpush1.bf16.msra.mxu0 %v3002
    %4253 = vmatprep.subr.bf16.mxu0 0
    %4254 = vmatpush1.bf16.msra.mxu0 %v3003
    %4255 = vmatprep.subr.bf16.mxu0 0
    %4256 = vmatpush1.bf16.msra.mxu0 %v3004
    %4257 = vmatprep.subr.bf16.mxu0 0
    %4258 = vmatpush1.bf16.msra.mxu0 %v3005
    %4259 = vmatprep.subr.bf16.mxu0 0
    %4260 = vmatpush1.bf16.msra.mxu0 %v3006
    %4261 = vmatprep.subr.bf16.mxu0 0
    %4262 = vmatpush1.bf16.msra.mxu0 %v3007
    %4263 = vmatprep.subr.bf16.mxu0 0
    %4264 = vmatpush1.bf16.msra.mxu0 %v3008
    %4265 = vmatprep.subr.bf16.mxu0 0
    %4266 = vmatpush1.bf16.msra.mxu0 %v3009
    %4267 = vmatprep.subr.bf16.mxu0 0
    %4268 = vmatpush1.bf16.msra.mxu0 %v3010
    %4269 = vmatprep.subr.bf16.mxu0 0
    %4270 = vmatpush1.bf16.msra.mxu0 %v3011
    %4271 = vmatprep.subr.bf16.mxu0 0
    %4272 = vmatpush1.bf16.msra.mxu0 %v3012
    %4273 = vmatprep.subr.bf16.mxu0 0
    %4274 = vmatpush1.bf16.msra.mxu0 %v3013
    %4275 = vmatprep.subr.bf16.mxu0 0
    %4276 = vmatpush1.bf16.msra.mxu0 %v3014
    %4277 = vmatprep.subr.bf16.mxu0 0
    %4278 = vmatpush1.bf16.msra.mxu0 %v3015
    %4279 = vmatprep.subr.bf16.mxu0 0
    %4280 = vmatpush1.bf16.msra.mxu0 %v3016
    %4281 = vmatprep.mubr.bf16.mxu0 %v1085
    %4282 = vmatmul.mubr.bf16.gmra.mrb[0].mxu0 %v1071
    %v4283 = vpop.f32.mrb[0].mxu0
    %v4284 = vadd.f32 %v4244, %v4283
    %v4285 = vpop.f32.mrb[0].mxu0
    %v4286 = vpop.f32.mrb[0].mxu0
    %v4287 = vpop.f32.mrb[0].mxu0
    %4288 = vdwg.mxu0
    %4289 = vmatprep.subr.bf16.mxu0 0
    %4290 = vmatpush1.bf16.msra.mxu0 %v3017
    %4291 = vmatprep.subr.bf16.mxu0 0
    %4292 = vmatpush1.bf16.msra.mxu0 %v3018
    %4293 = vmatprep.subr.bf16.mxu0 0
    %4294 = vmatpush1.bf16.msra.mxu0 %v3019
    %4295 = vmatprep.subr.bf16.mxu0 0
    %4296 = vmatpush1.bf16.msra.mxu0 %v3020
    %4297 = vmatprep.subr.bf16.mxu0 0
    %4298 = vmatpush1.bf16.msra.mxu0 %v3021
    %4299 = vmatprep.subr.bf16.mxu0 0
    %4300 = vmatpush1.bf16.msra.mxu0 %v3022
    %4301 = vmatprep.subr.bf16.mxu0 0
    %4302 = vmatpush1.bf16.msra.mxu0 %v3023
    %4303 = vmatprep.subr.bf16.mxu0 0
    %4304 = vmatpush1.bf16.msra.mxu0 %v3024
    %4305 = vmatprep.subr.bf16.mxu0 0
    %4306 = vmatpush1.bf16.msra.mxu0 %v3025
    %4307 = vmatprep.subr.bf16.mxu0 0
    %4308 = vmatpush1.bf16.msra.mxu0 %v3026
    %4309 = vmatprep.subr.bf16.mxu0 0
    %4310 = vmatpush1.bf16.msra.mxu0 %v3027
    %4311 = vmatprep.subr.bf16.mxu0 0
    %4312 = vmatpush1.bf16.msra.mxu0 %v3028
    %4313 = vmatprep.subr.bf16.mxu0 0
    %4314 = vmatpush1.bf16.msra.mxu0 %v3029
    %4315 = vmatprep.subr.bf16.mxu0 0
    %4316 = vmatpush1.bf16.msra.mxu0 %v3030
    %4317 = vmatprep.subr.bf16.mxu0 0
    %4318 = vmatpush1.bf16.msra.mxu0 %v3031
    %4319 = vmatprep.subr.bf16.mxu0 0
    %4320 = vmatpush1.bf16.msra.mxu0 %v3032
    %4321 = vmatprep.mubr.bf16.mxu0 %v1095
    %4322 = vmatmul.mubr.bf16.gmra.mrb[0].mxu0 %v1093
    %v4323 = vpop.f32.mrb[0].mxu0
    %v4324 = vadd.f32 %v4284, %v4323
    %v4325 = vpop.f32.mrb[0].mxu0
    %v4326 = vpop.f32.mrb[0].mxu0
    %v4327 = vpop.f32.mrb[0].mxu0
    %4328 = vdwg.mxu0
    %4329 = vmatprep.subr.bf16.mxu0 0
    %4330 = vmatpush1.bf16.msra.mxu0 %v3033
    %4331 = vmatprep.subr.bf16.mxu0 0
    %4332 = vmatpush1.bf16.msra.mxu0 %v3034
    %4333 = vmatprep.subr.bf16.mxu0 0
    %4334 = vmatpush1.bf16.msra.mxu0 %v3035
    %4335 = vmatprep.subr.bf16.mxu0 0
    %4336 = vmatpush1.bf16.msra.mxu0 %v3036
    %4337 = vmatprep.subr.bf16.mxu0 0
    %4338 = vmatpush1.bf16.msra.mxu0 %v3037
    %4339 = vmatprep.subr.bf16.mxu0 0
    %4340 = vmatpush1.bf16.msra.mxu0 %v3038
    %4341 = vmatprep.subr.bf16.mxu0 0
    %4342 = vmatpush1.bf16.msra.mxu0 %v3039
    %4343 = vmatprep.subr.bf16.mxu0 0
    %4344 = vmatpush1.bf16.msra.mxu0 %v3040
    %4345 = vmatprep.subr.bf16.mxu0 0
    %4346 = vmatpush1.bf16.msra.mxu0 %v3041
    %4347 = vmatprep.subr.bf16.mxu0 0
    %4348 = vmatpush1.bf16.msra.mxu0 %v3042
    %4349 = vmatprep.subr.bf16.mxu0 0
    %4350 = vmatpush1.bf16.msra.mxu0 %v3043
    %4351 = vmatprep.subr.bf16.mxu0 0
    %4352 = vmatpush1.bf16.msra.mxu0 %v3044
    %4353 = vmatprep.subr.bf16.mxu0 0
    %4354 = vmatpush1.bf16.msra.mxu0 %v3045
    %4355 = vmatprep.subr.bf16.mxu0 0
    %4356 = vmatpush1.bf16.msra.mxu0 %v3046
    %4357 = vmatprep.subr.bf16.mxu0 0
    %4358 = vmatpush1.bf16.msra.mxu0 %v3047
    %4359 = vmatprep.subr.bf16.mxu0 0
    %4360 = vmatpush1.bf16.msra.mxu0 %v3048
    %4361 = vmatprep.mubr.bf16.mxu0 %v1092
    %4362 = vmatmul.mubr.bf16.gmra.mrb[0].mxu0 %v1078
    %v4363 = vpop.f32.mrb[0].mxu0
    %v4364 = vadd.f32 %v4324, %v4363
    %v4365 = vpop.f32.mrb[0].mxu0
    %v4366 = vpop.f32.mrb[0].mxu0
    %v4367 = vpop.f32.mrb[0].mxu0
    %4368 = vdwg.mxu0
    %4369 = vmatprep.subr.bf16.mxu0 0
    %4370 = vmatpush1.bf16.msra.mxu0 %v3049
    %4371 = vmatprep.subr.bf16.mxu0 0
    %4372 = vmatpush1.bf16.msra.mxu0 %v3050
    %4373 = vmatprep.subr.bf16.mxu0 0
    %4374 = vmatpush1.bf16.msra.mxu0 %v3051
    %4375 = vmatprep.subr.bf16.mxu0 0
    %4376 = vmatpush1.bf16.msra.mxu0 %v3052
    %4377 = vmatprep.subr.bf16.mxu0 0
    %4378 = vmatpush1.bf16.msra.mxu0 %v3053
    %4379 = vmatprep.subr.bf16.mxu0 0
    %4380 = vmatpush1.bf16.msra.mxu0 %v3054
    %4381 = vmatprep.subr.bf16.mxu0 0
    %4382 = vmatpush1.bf16.msra.mxu0 %v3055
    %4383 = vmatprep.subr.bf16.mxu0 0
    %4384 = vmatpush1.bf16.msra.mxu0 %v3056
    %4385 = vmatprep.subr.bf16.mxu0 0
    %4386 = vmatpush1.bf16.msra.mxu0 %v3057
    %4387 = vmatprep.subr.bf16.mxu0 0
    %4388 = vmatpush1.bf16.msra.mxu0 %v3058
    %4389 = vmatprep.subr.bf16.mxu0 0
    %4390 = vmatpush1.bf16.msra.mxu0 %v3059
    %4391 = vmatprep.subr.bf16.mxu0 0
    %4392 = vmatpush1.bf16.msra.mxu0 %v3060
    %4393 = vmatprep.subr.bf16.mxu0 0
    %4394 = vmatpush1.bf16.msra.mxu0 %v3061
    %4395 = vmatprep.subr.bf16.mxu0 0
    %4396 = vmatpush1.bf16.msra.mxu0 %v3062
    %4397 = vmatprep.subr.bf16.mxu0 0
    %4398 = vmatpush1.bf16.msra.mxu0 %v3063
    %4399 = vmatprep.subr.bf16.mxu0 0
    %4400 = vmatpush1.bf16.msra.mxu0 %v3064
    %4401 = vmatprep.mubr.bf16.mxu0 %v1096
    %4402 = vmatmul.mubr.bf16.gmra.mrb[0].mxu0 %v1094
    %v4403 = vpop.f32.mrb[0].mxu0
    %v4404 = vadd.f32 %v4364, %v4403
    %v4405 = vpop.f32.mrb[0].mxu0
    %v4406 = vpop.f32.mrb[0].mxu0
    %v4407 = vpop.f32.mrb[0].mxu0
    %4408 = vdwg.mxu0
    %4409 = vst [vmem:[#allocation2] sm:$0x3] %v4404
    // Predicated region
    $region14: #{cnn_forward.3} parent=1 // pred_check
      _
    $region15: #{cnn_forward.3} parent=1 // pred_check_branch
      %4411 = sbr.rel (0) target = $region17
    $region16: #{cnn_forward.3} parent=1 // pred_region
      %s4413 = ssub.s32 32, 32
      %4414 = vsyncadd [#allocation3], %s4413
      %s4416 = sshll.u32 [#allocation2], 4
      %s4417 = int_to_ptr.vmem [resolvable:$true] %s4416
      %4419 = dma.vmem_to_hbm [thread:$0]  %s4417, 32, %s3, [#allocation3]
    $region17: #{cnn_forward.3} parent=1 // pred_fallthru
      _
    // Predicated region
    $region18: #{cnn_forward.3} parent=1 // pred_check
      _
    $region19: #{cnn_forward.3} parent=1 // pred_check_branch
      %4421 = sbr.rel (0) target = $region21
    $region20: #{cnn_forward.3} parent=1 // pred_region
      %4422 = dma.done [#allocation3], 32
    $region21: #{cnn_forward.3} parent=1 // pred_fallthru
      _
    %4423 = vsyncpa [#allocation3], 1

// kernel: cnn_forward.2
$region0: #{cnn_forward.2}
  #allocation0 [shape = 'u32[]', space=smem, size = 0x4, offset = 0x4, fixed_abs, tag = 'smem constant byte address 0x4 - core index']
  #allocation1 [shape = 'u32[144,128]{1,0:T(1,128)}', space=vmem, size = 0x12000, scoped, tag = 'internal scratch']
  #allocation2 [shape = 'bf16[2,18,9,128]{3,2,1,0:T(8,128)(2,1)}', space=vmem, size = 0x24000, scoped, tag = 'scratch operand']
  #allocation3 [shape = 'bf16[2,18,9,128]{3,2,1,0:T(8,128)(2,1)}', space=vmem, size = 0x24000, scoped, tag = 'scratch operand']
  %s0 = inlined_call_operand.vmem [shape: bf16[2,1024,128], index: 0, kind: input, shape index: {}]
  %s1 = inlined_call_operand.vmem [shape: bf16[128,128], index: 1, kind: input, shape index: {}]
  %s2 = inlined_call_operand.vmem [shape: f32[1,128], index: 2, kind: input, shape index: {}]
  %s3 = inlined_call_operand.vmem [shape: bf16[1152,128], index: 3, kind: input, shape index: {}]
  %s4 = inlined_call_operand.vmem [shape: f32[1,128], index: 4, kind: input, shape index: {}]
  %s5 = inlined_call_operand.vmem [shape: bf16[2,8,8,128], index: 5, kind: output, shape index: {}]
  %s6 = sld [smem:[#allocation0]]
  $region30: #{cnn_forward.2} parent=0
    _
  %s8 = ssub.s32 1, %s6
  %s9 = scalar_select 0, %s8, %s6
  // Predicated region
  $region2: #{cnn_forward.2} parent=0 // pred_check
    _
  $region3: #{cnn_forward.2} parent=0 // pred_check_branch
    %11 = sbr.rel (0) target = $region5
  $region4: #{cnn_forward.2} parent=0 // pred_region
    _
  $region5: #{cnn_forward.2} parent=0 // pred_fallthru
    _
  // Predicated region
  $region6: #{cnn_forward.2} parent=0 // pred_check
    _
  $region7: #{cnn_forward.2} parent=0 // pred_check_branch
    %13 = sbr.rel (0) target = $region9
  $region8: #{cnn_forward.2} parent=0 // pred_region
    _
  $region9: #{cnn_forward.2} parent=0 // pred_fallthru
    _
  // Predicated region
  $region10: #{cnn_forward.2} parent=0 // pred_check
    _
  $region11: #{cnn_forward.2} parent=0 // pred_check_branch
    %15 = sbr.rel (0) target = $region13
  $region12: #{cnn_forward.2} parent=0 // pred_region
    _
  $region13: #{cnn_forward.2} parent=0 // pred_fallthru
    _
  // Predicated region
  $region14: #{cnn_forward.2} parent=0 // pred_check
    _
  $region15: #{cnn_forward.2} parent=0 // pred_check_branch
    %17 = sbr.rel (0) target = $region17
  $region16: #{cnn_forward.2} parent=0 // pred_region
    _
  $region17: #{cnn_forward.2} parent=0 // pred_fallthru
    _
  // Predicated region
  $region18: #{cnn_forward.2} parent=0 // pred_check
    _
  $region19: #{cnn_forward.2} parent=0 // pred_check_branch
    %19 = sbr.rel (0) target = $region21
  $region20: #{cnn_forward.2} parent=0 // pred_region
    _
  $region21: #{cnn_forward.2} parent=0 // pred_fallthru
    _
  %v21 = vld [vmem:[%s0] sm:$0xf]
  %v22 = vld [vmem:[%s0 + $0x4] sm:$0xf]
  %v23 = vld [vmem:[%s0 + $0x8] sm:$0xf]
  %v24 = vld [vmem:[%s0 + $0xc] sm:$0xf]
  %v25 = vld [vmem:[%s0 + $0x10] sm:$0xf]
  %v26 = vld [vmem:[%s0 + $0x14] sm:$0xf]
  %v27 = vld [vmem:[%s0 + $0x18] sm:$0xf]
  %v28 = vld [vmem:[%s0 + $0x1c] sm:$0xf]
  %v29 = vld [vmem:[%s0 + $0x20] sm:$0xf]
  %v30 = vld [vmem:[%s0 + $0x24] sm:$0xf]
  %v31 = vld [vmem:[%s0 + $0x28] sm:$0xf]
  %v32 = vld [vmem:[%s0 + $0x2c] sm:$0xf]
  %v33 = vld [vmem:[%s0 + $0x30] sm:$0xf]
  %v34 = vld [vmem:[%s0 + $0x34] sm:$0xf]
  %v35 = vld [vmem:[%s0 + $0x38] sm:$0xf]
  %v36 = vld [vmem:[%s0 + $0x3c] sm:$0xf]
  %v37 = vld [vmem:[%s0 + $0x40] sm:$0xf]
  %v38 = vld [vmem:[%s0 + $0x44] sm:$0xf]
  %v39 = vld [vmem:[%s0 + $0x48] sm:$0xf]
  %v40 = vld [vmem:[%s0 + $0x4c] sm:$0xf]
  %v41 = vld [vmem:[%s0 + $0x50] sm:$0xf]
  %v42 = vld [vmem:[%s0 + $0x54] sm:$0xf]
  %v43 = vld [vmem:[%s0 + $0x58] sm:$0xf]
  %v44 = vld [vmem:[%s0 + $0x5c] sm:$0xf]
  %v45 = vld [vmem:[%s0 + $0x60] sm:$0xf]
  %v46 = vld [vmem:[%s0 + $0x64] sm:$0xf]
  %v47 = vld [vmem:[%s0 + $0x68] sm:$0xf]
  %v48 = vld [vmem:[%s0 + $0x6c] sm:$0xf]
  %v49 = vld [vmem:[%s0 + $0x70] sm:$0xf]
  %v50 = vld [vmem:[%s0 + $0x74] sm:$0xf]
  %v51 = vld [vmem:[%s0 + $0x78] sm:$0xf]
  %v52 = vld [vmem:[%s0 + $0x7c] sm:$0xf]
  %v53 = vld [vmem:[%s0 + $0x80] sm:$0xf]
  %v54 = vld [vmem:[%s0 + $0x84] sm:$0xf]
  %v55 = vld [vmem:[%s0 + $0x88] sm:$0xf]
  %v56 = vld [vmem:[%s0 + $0x8c] sm:$0xf]
  %v57 = vld [vmem:[%s0 + $0x90] sm:$0xf]
  %v58 = vld [vmem:[%s0 + $0x94] sm:$0xf]
  %v59 = vld [vmem:[%s0 + $0x98] sm:$0xf]
  %v60 = vld [vmem:[%s0 + $0x9c] sm:$0xf]
  %v61 = vld [vmem:[%s0 + $0xa0] sm:$0xf]
  %v62 = vld [vmem:[%s0 + $0xa4] sm:$0xf]
  %v63 = vld [vmem:[%s0 + $0xa8] sm:$0xf]
  %v64 = vld [vmem:[%s0 + $0xac] sm:$0xf]
  %v65 = vld [vmem:[%s0 + $0xb0] sm:$0xf]
  %v66 = vld [vmem:[%s0 + $0xb4] sm:$0xf]
  %v67 = vld [vmem:[%s0 + $0xb8] sm:$0xf]
  %v68 = vld [vmem:[%s0 + $0xbc] sm:$0xf]
  %v69 = vld [vmem:[%s0 + $0xc0] sm:$0xf]
  %v70 = vld [vmem:[%s0 + $0xc4] sm:$0xf]
  %v71 = vld [vmem:[%s0 + $0xc8] sm:$0xf]
  %v72 = vld [vmem:[%s0 + $0xcc] sm:$0xf]
  %v73 = vld [vmem:[%s0 + $0xd0] sm:$0xf]
  %v74 = vld [vmem:[%s0 + $0xd4] sm:$0xf]
  %v75 = vld [vmem:[%s0 + $0xd8] sm:$0xf]
  %v76 = vld [vmem:[%s0 + $0xdc] sm:$0xf]
  %v77 = vld [vmem:[%s0 + $0xe0] sm:$0xf]
  %v78 = vld [vmem:[%s0 + $0xe4] sm:$0xf]
  %v79 = vld [vmem:[%s0 + $0xe8] sm:$0xf]
  %v80 = vld [vmem:[%s0 + $0xec] sm:$0xf]
  %v81 = vld [vmem:[%s0 + $0xf0] sm:$0xf]
  %v82 = vld [vmem:[%s0 + $0xf4] sm:$0xf]
  %v83 = vld [vmem:[%s0 + $0xf8] sm:$0xf]
  %v84 = vld [vmem:[%s0 + $0xfc] sm:$0xf]
  %v85 = vld [vmem:[%s0 + $0x100] sm:$0xf]
  %v86 = vld [vmem:[%s0 + $0x104] sm:$0xf]
  %v87 = vld [vmem:[%s0 + $0x108] sm:$0xf]
  %v88 = vld [vmem:[%s0 + $0x10c] sm:$0xf]
  %v89 = vld [vmem:[%s0 + $0x110] sm:$0xf]
  %v90 = vld [vmem:[%s0 + $0x114] sm:$0xf]
  %v91 = vld [vmem:[%s0 + $0x118] sm:$0xf]
  %v92 = vld [vmem:[%s0 + $0x11c] sm:$0xf]
  %v93 = vld [vmem:[%s0 + $0x120] sm:$0xf]
  %v94 = vld [vmem:[%s0 + $0x124] sm:$0xf]
  %v95 = vld [vmem:[%s0 + $0x128] sm:$0xf]
  %v96 = vld [vmem:[%s0 + $0x12c] sm:$0xf]
  %v97 = vld [vmem:[%s0 + $0x130] sm:$0xf]
  %v98 = vld [vmem:[%s0 + $0x134] sm:$0xf]
  %v99 = vld [vmem:[%s0 + $0x138] sm:$0xf]
  %v100 = vld [vmem:[%s0 + $0x13c] sm:$0xf]
  %v101 = vld [vmem:[%s0 + $0x140] sm:$0xf]
  %v102 = vld [vmem:[%s0 + $0x144] sm:$0xf]
  %v103 = vld [vmem:[%s0 + $0x148] sm:$0xf]
  %v104 = vld [vmem:[%s0 + $0x14c] sm:$0xf]
  %v105 = vld [vmem:[%s0 + $0x150] sm:$0xf]
  %v106 = vld [vmem:[%s0 + $0x154] sm:$0xf]
  %v107 = vld [vmem:[%s0 + $0x158] sm:$0xf]
  %v108 = vld [vmem:[%s0 + $0x15c] sm:$0xf]
  %v109 = vld [vmem:[%s0 + $0x160] sm:$0xf]
  %v110 = vld [vmem:[%s0 + $0x164] sm:$0xf]
  %v111 = vld [vmem:[%s0 + $0x168] sm:$0xf]
  %v112 = vld [vmem:[%s0 + $0x16c] sm:$0xf]
  %v113 = vld [vmem:[%s0 + $0x170] sm:$0xf]
  %v114 = vld [vmem:[%s0 + $0x174] sm:$0xf]
  %v115 = vld [vmem:[%s0 + $0x178] sm:$0xf]
  %v116 = vld [vmem:[%s0 + $0x17c] sm:$0xf]
  %v117 = vld [vmem:[%s0 + $0x180] sm:$0xf]
  %v118 = vld [vmem:[%s0 + $0x184] sm:$0xf]
  %v119 = vld [vmem:[%s0 + $0x188] sm:$0xf]
  %v120 = vld [vmem:[%s0 + $0x18c] sm:$0xf]
  %v121 = vld [vmem:[%s0 + $0x190] sm:$0xf]
  %v122 = vld [vmem:[%s0 + $0x194] sm:$0xf]
  %v123 = vld [vmem:[%s0 + $0x198] sm:$0xf]
  %v124 = vld [vmem:[%s0 + $0x19c] sm:$0xf]
  %v125 = vld [vmem:[%s0 + $0x1a0] sm:$0xf]
  %v126 = vld [vmem:[%s0 + $0x1a4] sm:$0xf]
  %v127 = vld [vmem:[%s0 + $0x1a8] sm:$0xf]
  %v128 = vld [vmem:[%s0 + $0x1ac] sm:$0xf]
  %v129 = vld [vmem:[%s0 + $0x1b0] sm:$0xf]
  %v130 = vld [vmem:[%s0 + $0x1b4] sm:$0xf]
  %v131 = vld [vmem:[%s0 + $0x1b8] sm:$0xf]
  %v132 = vld [vmem:[%s0 + $0x1bc] sm:$0xf]
  %v133 = vld [vmem:[%s0 + $0x1c0] sm:$0xf]
  %v134 = vld [vmem:[%s0 + $0x1c4] sm:$0xf]
  %v135 = vld [vmem:[%s0 + $0x1c8] sm:$0xf]
  %v136 = vld [vmem:[%s0 + $0x1cc] sm:$0xf]
  %v137 = vld [vmem:[%s0 + $0x1d0] sm:$0xf]
  %v138 = vld [vmem:[%s0 + $0x1d4] sm:$0xf]
  %v139 = vld [vmem:[%s0 + $0x1d8] sm:$0xf]
  %v140 = vld [vmem:[%s0 + $0x1dc] sm:$0xf]
  %v141 = vld [vmem:[%s0 + $0x1e0] sm:$0xf]
  %v142 = vld [vmem:[%s0 + $0x1e4] sm:$0xf]
  %v143 = vld [vmem:[%s0 + $0x1e8] sm:$0xf]
  %v144 = vld [vmem:[%s0 + $0x1ec] sm:$0xf]
  %v145 = vld [vmem:[%s0 + $0x1f0] sm:$0xf]
  %v146 = vld [vmem:[%s0 + $0x1f4] sm:$0xf]
  %v147 = vld [vmem:[%s0 + $0x1f8] sm:$0xf]
  %v148 = vld [vmem:[%s0 + $0x1fc] sm:$0xf]
  %v149 = vld [vmem:[%s0 + $0x200] sm:$0xf]
  %v150 = vld [vmem:[%s0 + $0x204] sm:$0xf]
  %v151 = vld [vmem:[%s0 + $0x208] sm:$0xf]
  %v152 = vld [vmem:[%s0 + $0x20c] sm:$0xf]
  %v153 = vld [vmem:[%s0 + $0x210] sm:$0xf]
  %v154 = vld [vmem:[%s0 + $0x214] sm:$0xf]
  %v155 = vld [vmem:[%s0 + $0x218] sm:$0xf]
  %v156 = vld [vmem:[%s0 + $0x21c] sm:$0xf]
  %v157 = vld [vmem:[%s0 + $0x220] sm:$0xf]
  %v158 = vld [vmem:[%s0 + $0x224] sm:$0xf]
  %v159 = vld [vmem:[%s0 + $0x228] sm:$0xf]
  %v160 = vld [vmem:[%s0 + $0x22c] sm:$0xf]
  %v161 = vld [vmem:[%s0 + $0x230] sm:$0xf]
  %v162 = vld [vmem:[%s0 + $0x234] sm:$0xf]
  %v163 = vld [vmem:[%s0 + $0x238] sm:$0xf]
  %v164 = vld [vmem:[%s0 + $0x23c] sm:$0xf]
  %v165 = vld [vmem:[%s0 + $0x240] sm:$0xf]
  %v166 = vld [vmem:[%s0 + $0x244] sm:$0xf]
  %v167 = vld [vmem:[%s0 + $0x248] sm:$0xf]
  %v168 = vld [vmem:[%s0 + $0x24c] sm:$0xf]
  %v169 = vld [vmem:[%s0 + $0x250] sm:$0xf]
  %v170 = vld [vmem:[%s0 + $0x254] sm:$0xf]
  %v171 = vld [vmem:[%s0 + $0x258] sm:$0xf]
  %v172 = vld [vmem:[%s0 + $0x25c] sm:$0xf]
  %v173 = vld [vmem:[%s0 + $0x260] sm:$0xf]
  %v174 = vld [vmem:[%s0 + $0x264] sm:$0xf]
  %v175 = vld [vmem:[%s0 + $0x268] sm:$0xf]
  %v176 = vld [vmem:[%s0 + $0x26c] sm:$0xf]
  %v177 = vld [vmem:[%s0 + $0x270] sm:$0xf]
  %v178 = vld [vmem:[%s0 + $0x274] sm:$0xf]
  %v179 = vld [vmem:[%s0 + $0x278] sm:$0xf]
  %v180 = vld [vmem:[%s0 + $0x27c] sm:$0xf]
  %v181 = vld [vmem:[%s0 + $0x280] sm:$0xf]
  %v182 = vld [vmem:[%s0 + $0x284] sm:$0xf]
  %v183 = vld [vmem:[%s0 + $0x288] sm:$0xf]
  %v184 = vld [vmem:[%s0 + $0x28c] sm:$0xf]
  %v185 = vld [vmem:[%s0 + $0x290] sm:$0xf]
  %v186 = vld [vmem:[%s0 + $0x294] sm:$0xf]
  %v187 = vld [vmem:[%s0 + $0x298] sm:$0xf]
  %v188 = vld [vmem:[%s0 + $0x29c] sm:$0xf]
  %v189 = vld [vmem:[%s0 + $0x2a0] sm:$0xf]
  %v190 = vld [vmem:[%s0 + $0x2a4] sm:$0xf]
  %v191 = vld [vmem:[%s0 + $0x2a8] sm:$0xf]
  %v192 = vld [vmem:[%s0 + $0x2ac] sm:$0xf]
  %v193 = vld [vmem:[%s0 + $0x2b0] sm:$0xf]
  %v194 = vld [vmem:[%s0 + $0x2b4] sm:$0xf]
  %v195 = vld [vmem:[%s0 + $0x2b8] sm:$0xf]
  %v196 = vld [vmem:[%s0 + $0x2bc] sm:$0xf]
  %v197 = vld [vmem:[%s0 + $0x2c0] sm:$0xf]
  %v198 = vld [vmem:[%s0 + $0x2c4] sm:$0xf]
  %v199 = vld [vmem:[%s0 + $0x2c8] sm:$0xf]
  %v200 = vld [vmem:[%s0 + $0x2cc] sm:$0xf]
  %v201 = vld [vmem:[%s0 + $0x2d0] sm:$0xf]
  %v202 = vld [vmem:[%s0 + $0x2d4] sm:$0xf]
  %v203 = vld [vmem:[%s0 + $0x2d8] sm:$0xf]
  %v204 = vld [vmem:[%s0 + $0x2dc] sm:$0xf]
  %v205 = vld [vmem:[%s0 + $0x2e0] sm:$0xf]
  %v206 = vld [vmem:[%s0 + $0x2e4] sm:$0xf]
  %v207 = vld [vmem:[%s0 + $0x2e8] sm:$0xf]
  %v208 = vld [vmem:[%s0 + $0x2ec] sm:$0xf]
  %v209 = vld [vmem:[%s0 + $0x2f0] sm:$0xf]
  %v210 = vld [vmem:[%s0 + $0x2f4] sm:$0xf]
  %v211 = vld [vmem:[%s0 + $0x2f8] sm:$0xf]
  %v212 = vld [vmem:[%s0 + $0x2fc] sm:$0xf]
  %v213 = vld [vmem:[%s0 + $0x300] sm:$0xf]
  %v214 = vld [vmem:[%s0 + $0x304] sm:$0xf]
  %v215 = vld [vmem:[%s0 + $0x308] sm:$0xf]
  %v216 = vld [vmem:[%s0 + $0x30c] sm:$0xf]
  %v217 = vld [vmem:[%s0 + $0x310] sm:$0xf]
  %v218 = vld [vmem:[%s0 + $0x314] sm:$0xf]
  %v219 = vld [vmem:[%s0 + $0x318] sm:$0xf]
  %v220 = vld [vmem:[%s0 + $0x31c] sm:$0xf]
  %v221 = vld [vmem:[%s0 + $0x320] sm:$0xf]
  %v222 = vld [vmem:[%s0 + $0x324] sm:$0xf]
  %v223 = vld [vmem:[%s0 + $0x328] sm:$0xf]
  %v224 = vld [vmem:[%s0 + $0x32c] sm:$0xf]
  %v225 = vld [vmem:[%s0 + $0x330] sm:$0xf]
  %v226 = vld [vmem:[%s0 + $0x334] sm:$0xf]
  %v227 = vld [vmem:[%s0 + $0x338] sm:$0xf]
  %v228 = vld [vmem:[%s0 + $0x33c] sm:$0xf]
  %v229 = vld [vmem:[%s0 + $0x340] sm:$0xf]
  %v230 = vld [vmem:[%s0 + $0x344] sm:$0xf]
  %v231 = vld [vmem:[%s0 + $0x348] sm:$0xf]
  %v232 = vld [vmem:[%s0 + $0x34c] sm:$0xf]
  %v233 = vld [vmem:[%s0 + $0x350] sm:$0xf]
  %v234 = vld [vmem:[%s0 + $0x354] sm:$0xf]
  %v235 = vld [vmem:[%s0 + $0x358] sm:$0xf]
  %v236 = vld [vmem:[%s0 + $0x35c] sm:$0xf]
  %v237 = vld [vmem:[%s0 + $0x360] sm:$0xf]
  %v238 = vld [vmem:[%s0 + $0x364] sm:$0xf]
  %v239 = vld [vmem:[%s0 + $0x368] sm:$0xf]
  %v240 = vld [vmem:[%s0 + $0x36c] sm:$0xf]
  %v241 = vld [vmem:[%s0 + $0x370] sm:$0xf]
  %v242 = vld [vmem:[%s0 + $0x374] sm:$0xf]
  %v243 = vld [vmem:[%s0 + $0x378] sm:$0xf]
  %v244 = vld [vmem:[%s0 + $0x37c] sm:$0xf]
  %v245 = vld [vmem:[%s0 + $0x380] sm:$0xf]
  %v246 = vld [vmem:[%s0 + $0x384] sm:$0xf]
  %v247 = vld [vmem:[%s0 + $0x388] sm:$0xf]
  %v248 = vld [vmem:[%s0 + $0x38c] sm:$0xf]
  %v249 = vld [vmem:[%s0 + $0x390] sm:$0xf]
  %v250 = vld [vmem:[%s0 + $0x394] sm:$0xf]
  %v251 = vld [vmem:[%s0 + $0x398] sm:$0xf]
  %v252 = vld [vmem:[%s0 + $0x39c] sm:$0xf]
  %v253 = vld [vmem:[%s0 + $0x3a0] sm:$0xf]
  %v254 = vld [vmem:[%s0 + $0x3a4] sm:$0xf]
  %v255 = vld [vmem:[%s0 + $0x3a8] sm:$0xf]
  %v256 = vld [vmem:[%s0 + $0x3ac] sm:$0xf]
  %v257 = vld [vmem:[%s0 + $0x3b0] sm:$0xf]
  %v258 = vld [vmem:[%s0 + $0x3b4] sm:$0xf]
  %v259 = vld [vmem:[%s0 + $0x3b8] sm:$0xf]
  %v260 = vld [vmem:[%s0 + $0x3bc] sm:$0xf]
  %v261 = vld [vmem:[%s0 + $0x3c0] sm:$0xf]
  %v262 = vld [vmem:[%s0 + $0x3c4] sm:$0xf]
  %v263 = vld [vmem:[%s0 + $0x3c8] sm:$0xf]
  %v264 = vld [vmem:[%s0 + $0x3cc] sm:$0xf]
  %v265 = vld [vmem:[%s0 + $0x3d0] sm:$0xf]
  %v266 = vld [vmem:[%s0 + $0x3d4] sm:$0xf]
  %v267 = vld [vmem:[%s0 + $0x3d8] sm:$0xf]
  %v268 = vld [vmem:[%s0 + $0x3dc] sm:$0xf]
  %v269 = vld [vmem:[%s0 + $0x3e0] sm:$0xf]
  %v270 = vld [vmem:[%s0 + $0x3e4] sm:$0xf]
  %v271 = vld [vmem:[%s0 + $0x3e8] sm:$0xf]
  %v272 = vld [vmem:[%s0 + $0x3ec] sm:$0xf]
  %v273 = vld [vmem:[%s0 + $0x3f0] sm:$0xf]
  %v274 = vld [vmem:[%s0 + $0x3f4] sm:$0xf]
  %v275 = vld [vmem:[%s0 + $0x3f8] sm:$0xf]
  %v276 = vld [vmem:[%s0 + $0x3fc] sm:$0xf]
  %v277 = vld [vmem:[%s1] sm:$0xf]
  %v278 = vld [vmem:[%s1 + $0x4] sm:$0xf]
  %v279 = vld [vmem:[%s1 + $0x8] sm:$0xf]
  %v280 = vld [vmem:[%s1 + $0xc] sm:$0xf]
  %v281 = vld [vmem:[%s1 + $0x10] sm:$0xf]
  %v282 = vld [vmem:[%s1 + $0x14] sm:$0xf]
  %v283 = vld [vmem:[%s1 + $0x18] sm:$0xf]
  %v284 = vld [vmem:[%s1 + $0x1c] sm:$0xf]
  %v285 = vld [vmem:[%s1 + $0x20] sm:$0xf]
  %v286 = vld [vmem:[%s1 + $0x24] sm:$0xf]
  %v287 = vld [vmem:[%s1 + $0x28] sm:$0xf]
  %v288 = vld [vmem:[%s1 + $0x2c] sm:$0xf]
  %v289 = vld [vmem:[%s1 + $0x30] sm:$0xf]
  %v290 = vld [vmem:[%s1 + $0x34] sm:$0xf]
  %v291 = vld [vmem:[%s1 + $0x38] sm:$0xf]
  %v292 = vld [vmem:[%s1 + $0x3c] sm:$0xf]
  %v549 = vunpack.c.l.b16 %v21
  %v550 = vunpack.c.l.b16 %v22
  %v551 = vunpack.c.l.b16 %v23
  %v552 = vunpack.c.l.b16 %v24
  %v553 = vunpack.c.l.b16 %v25
  %v554 = vunpack.c.l.b16 %v26
  %v555 = vunpack.c.l.b16 %v27
  %v556 = vunpack.c.l.b16 %v28
  %v557 = vunpack.c.l.b16 %v29
  %v558 = vunpack.c.l.b16 %v30
  %v559 = vunpack.c.l.b16 %v31
  %v560 = vunpack.c.l.b16 %v32
  %v561 = vunpack.c.l.b16 %v33
  %v562 = vunpack.c.l.b16 %v34
  %v563 = vunpack.c.l.b16 %v35
  %v564 = vunpack.c.l.b16 %v36
  %v565 = vunpack.c.l.b16 %v37
  %v566 = vunpack.c.l.b16 %v38
  %v567 = vunpack.c.l.b16 %v39
  %v568 = vunpack.c.l.b16 %v40
  %v569 = vunpack.c.l.b16 %v41
  %v570 = vunpack.c.l.b16 %v42
  %v571 = vunpack.c.l.b16 %v43
  %v572 = vunpack.c.l.b16 %v44
  %v573 = vunpack.c.l.b16 %v45
  %v574 = vunpack.c.l.b16 %v46
  %v575 = vunpack.c.l.b16 %v47
  %v576 = vunpack.c.l.b16 %v48
  %v577 = vunpack.c.l.b16 %v49
  %v578 = vunpack.c.l.b16 %v50
  %v579 = vunpack.c.l.b16 %v51
  %v580 = vunpack.c.l.b16 %v52
  %v581 = vunpack.c.l.b16 %v53
  %v582 = vunpack.c.l.b16 %v54
  %v583 = vunpack.c.l.b16 %v55
  %v584 = vunpack.c.l.b16 %v56
  %v585 = vunpack.c.l.b16 %v57
  %v586 = vunpack.c.l.b16 %v58
  %v587 = vunpack.c.l.b16 %v59
  %v588 = vunpack.c.l.b16 %v60
  %v589 = vunpack.c.l.b16 %v61
  %v590 = vunpack.c.l.b16 %v62
  %v591 = vunpack.c.l.b16 %v63
  %v592 = vunpack.c.l.b16 %v64
  %v593 = vunpack.c.l.b16 %v65
  %v594 = vunpack.c.l.b16 %v66
  %v595 = vunpack.c.l.b16 %v67
  %v596 = vunpack.c.l.b16 %v68
  %v597 = vunpack.c.l.b16 %v69
  %v598 = vunpack.c.l.b16 %v70
  %v599 = vunpack.c.l.b16 %v71
  %v600 = vunpack.c.l.b16 %v72
  %v601 = vunpack.c.l.b16 %v73
  %v602 = vunpack.c.l.b16 %v74
  %v603 = vunpack.c.l.b16 %v75
  %v604 = vunpack.c.l.b16 %v76
  %v605 = vunpack.c.l.b16 %v77
  %v606 = vunpack.c.l.b16 %v78
  %v607 = vunpack.c.l.b16 %v79
  %v608 = vunpack.c.l.b16 %v80
  %v609 = vunpack.c.l.b16 %v81
  %v610 = vunpack.c.l.b16 %v82
  %v611 = vunpack.c.l.b16 %v83
  %v612 = vunpack.c.l.b16 %v84
  %v613 = vunpack.c.l.b16 %v85
  %v614 = vunpack.c.l.b16 %v86
  %v615 = vunpack.c.l.b16 %v87
  %v616 = vunpack.c.l.b16 %v88
  %v617 = vunpack.c.l.b16 %v89
  %v618 = vunpack.c.l.b16 %v90
  %v619 = vunpack.c.l.b16 %v91
  %v620 = vunpack.c.l.b16 %v92
  %v621 = vunpack.c.l.b16 %v93
  %v622 = vunpack.c.l.b16 %v94
  %v623 = vunpack.c.l.b16 %v95
  %v624 = vunpack.c.l.b16 %v96
  %v625 = vunpack.c.l.b16 %v97
  %v626 = vunpack.c.l.b16 %v98
  %v627 = vunpack.c.l.b16 %v99
  %v628 = vunpack.c.l.b16 %v100
  %v629 = vunpack.c.l.b16 %v101
  %v630 = vunpack.c.l.b16 %v102
  %v631 = vunpack.c.l.b16 %v103
  %v632 = vunpack.c.l.b16 %v104
  %v633 = vunpack.c.l.b16 %v105
  %v634 = vunpack.c.l.b16 %v106
  %v635 = vunpack.c.l.b16 %v107
  %v636 = vunpack.c.l.b16 %v108
  %v637 = vunpack.c.l.b16 %v109
  %v638 = vunpack.c.l.b16 %v110
  %v639 = vunpack.c.l.b16 %v111
  %v640 = vunpack.c.l.b16 %v112
  %v641 = vunpack.c.l.b16 %v113
  %v642 = vunpack.c.l.b16 %v114
  %v643 = vunpack.c.l.b16 %v115
  %v644 = vunpack.c.l.b16 %v116
  %v645 = vunpack.c.l.b16 %v117
  %v646 = vunpack.c.l.b16 %v118
  %v647 = vunpack.c.l.b16 %v119
  %v648 = vunpack.c.l.b16 %v120
  %v649 = vunpack.c.l.b16 %v121
  %v650 = vunpack.c.l.b16 %v122
  %v651 = vunpack.c.l.b16 %v123
  %v652 = vunpack.c.l.b16 %v124
  %v653 = vunpack.c.l.b16 %v125
  %v654 = vunpack.c.l.b16 %v126
  %v655 = vunpack.c.l.b16 %v127
  %v656 = vunpack.c.l.b16 %v128
  %v657 = vunpack.c.l.b16 %v129
  %v658 = vunpack.c.l.b16 %v130
  %v659 = vunpack.c.l.b16 %v131
  %v660 = vunpack.c.l.b16 %v132
  %v661 = vunpack.c.l.b16 %v133
  %v662 = vunpack.c.l.b16 %v134
  %v663 = vunpack.c.l.b16 %v135
  %v664 = vunpack.c.l.b16 %v136
  %v665 = vunpack.c.l.b16 %v137
  %v666 = vunpack.c.l.b16 %v138
  %v667 = vunpack.c.l.b16 %v139
  %v668 = vunpack.c.l.b16 %v140
  %v669 = vunpack.c.l.b16 %v141
  %v670 = vunpack.c.l.b16 %v142
  %v671 = vunpack.c.l.b16 %v143
  %v672 = vunpack.c.l.b16 %v144
  %v673 = vunpack.c.l.b16 %v145
  %v674 = vunpack.c.l.b16 %v146
  %v675 = vunpack.c.l.b16 %v147
  %v676 = vunpack.c.l.b16 %v148
  %v677 = vunpack.c.l.b16 %v149
  %v678 = vunpack.c.l.b16 %v150
  %v679 = vunpack.c.l.b16 %v151
  %v680 = vunpack.c.l.b16 %v152
  %v681 = vunpack.c.l.b16 %v153
  %v682 = vunpack.c.l.b16 %v154
  %v683 = vunpack.c.l.b16 %v155
  %v684 = vunpack.c.l.b16 %v156
  %v685 = vunpack.c.l.b16 %v157
  %v686 = vunpack.c.l.b16 %v158
  %v687 = vunpack.c.l.b16 %v159
  %v688 = vunpack.c.l.b16 %v160
  %v689 = vunpack.c.l.b16 %v161
  %v690 = vunpack.c.l.b16 %v162
  %v691 = vunpack.c.l.b16 %v163
  %v692 = vunpack.c.l.b16 %v164
  %v693 = vunpack.c.l.b16 %v165
  %v694 = vunpack.c.l.b16 %v166
  %v695 = vunpack.c.l.b16 %v167
  %v696 = vunpack.c.l.b16 %v168
  %v697 = vunpack.c.l.b16 %v169
  %v698 = vunpack.c.l.b16 %v170
  %v699 = vunpack.c.l.b16 %v171
  %v700 = vunpack.c.l.b16 %v172
  %v701 = vunpack.c.l.b16 %v173
  %v702 = vunpack.c.l.b16 %v174
  %v703 = vunpack.c.l.b16 %v175
  %v704 = vunpack.c.l.b16 %v176
  %v705 = vunpack.c.l.b16 %v177
  %v706 = vunpack.c.l.b16 %v178
  %v707 = vunpack.c.l.b16 %v179
  %v708 = vunpack.c.l.b16 %v180
  %v709 = vunpack.c.l.b16 %v181
  %v710 = vunpack.c.l.b16 %v182
  %v711 = vunpack.c.l.b16 %v183
  %v712 = vunpack.c.l.b16 %v184
  %v713 = vunpack.c.l.b16 %v185
  %v714 = vunpack.c.l.b16 %v186
  %v715 = vunpack.c.l.b16 %v187
  %v716 = vunpack.c.l.b16 %v188
  %v717 = vunpack.c.l.b16 %v189
  %v718 = vunpack.c.l.b16 %v190
  %v719 = vunpack.c.l.b16 %v191
  %v720 = vunpack.c.l.b16 %v192
  %v721 = vunpack.c.l.b16 %v193
  %v722 = vunpack.c.l.b16 %v194
  %v723 = vunpack.c.l.b16 %v195
  %v724 = vunpack.c.l.b16 %v196
  %v725 = vunpack.c.l.b16 %v197
  %v726 = vunpack.c.l.b16 %v198
  %v727 = vunpack.c.l.b16 %v199
  %v728 = vunpack.c.l.b16 %v200
  %v729 = vunpack.c.l.b16 %v201
  %v730 = vunpack.c.l.b16 %v202
  %v731 = vunpack.c.l.b16 %v203
  %v732 = vunpack.c.l.b16 %v204
  %v733 = vunpack.c.l.b16 %v205
  %v734 = vunpack.c.l.b16 %v206
  %v735 = vunpack.c.l.b16 %v207
  %v736 = vunpack.c.l.b16 %v208
  %v737 = vunpack.c.l.b16 %v209
  %v738 = vunpack.c.l.b16 %v210
  %v739 = vunpack.c.l.b16 %v211
  %v740 = vunpack.c.l.b16 %v212
  %v741 = vunpack.c.l.b16 %v213
  %v742 = vunpack.c.l.b16 %v214
  %v743 = vunpack.c.l.b16 %v215
  %v744 = vunpack.c.l.b16 %v216
  %v745 = vunpack.c.l.b16 %v217
  %v746 = vunpack.c.l.b16 %v218
  %v747 = vunpack.c.l.b16 %v219
  %v748 = vunpack.c.l.b16 %v220
  %v749 = vunpack.c.l.b16 %v221
  %v750 = vunpack.c.l.b16 %v222
  %v751 = vunpack.c.l.b16 %v223
  %v752 = vunpack.c.l.b16 %v224
  %v753 = vunpack.c.l.b16 %v225
  %v754 = vunpack.c.l.b16 %v226
  %v755 = vunpack.c.l.b16 %v227
  %v756 = vunpack.c.l.b16 %v228
  %v757 = vunpack.c.l.b16 %v229
  %v758 = vunpack.c.l.b16 %v230
  %v759 = vunpack.c.l.b16 %v231
  %v760 = vunpack.c.l.b16 %v232
  %v761 = vunpack.c.l.b16 %v233
  %v762 = vunpack.c.l.b16 %v234
  %v763 = vunpack.c.l.b16 %v235
  %v764 = vunpack.c.l.b16 %v236
  %v765 = vunpack.c.l.b16 %v237
  %v766 = vunpack.c.l.b16 %v238
  %v767 = vunpack.c.l.b16 %v239
  %v768 = vunpack.c.l.b16 %v240
  %v769 = vunpack.c.l.b16 %v241
  %v770 = vunpack.c.l.b16 %v242
  %v771 = vunpack.c.l.b16 %v243
  %v772 = vunpack.c.l.b16 %v244
  %v773 = vunpack.c.l.b16 %v245
  %v774 = vunpack.c.l.b16 %v246
  %v775 = vunpack.c.l.b16 %v247
  %v776 = vunpack.c.l.b16 %v248
  %v777 = vunpack.c.l.b16 %v249
  %v778 = vunpack.c.l.b16 %v250
  %v779 = vunpack.c.l.b16 %v251
  %v780 = vunpack.c.l.b16 %v252
  %v781 = vunpack.c.l.b16 %v253
  %v782 = vunpack.c.l.b16 %v254
  %v783 = vunpack.c.l.b16 %v255
  %v784 = vunpack.c.l.b16 %v256
  %v785 = vunpack.c.l.b16 %v257
  %v786 = vunpack.c.l.b16 %v258
  %v787 = vunpack.c.l.b16 %v259
  %v788 = vunpack.c.l.b16 %v260
  %v789 = vunpack.c.l.b16 %v261
  %v790 = vunpack.c.l.b16 %v262
  %v791 = vunpack.c.l.b16 %v263
  %v792 = vunpack.c.l.b16 %v264
  %v793 = vunpack.c.l.b16 %v265
  %v794 = vunpack.c.l.b16 %v266
  %v795 = vunpack.c.l.b16 %v267
  %v796 = vunpack.c.l.b16 %v268
  %v797 = vunpack.c.l.b16 %v269
  %v798 = vunpack.c.l.b16 %v270
  %v799 = vunpack.c.l.b16 %v271
  %v800 = vunpack.c.l.b16 %v272
  %v801 = vunpack.c.l.b16 %v273
  %v802 = vunpack.c.l.b16 %v274
  %v803 = vunpack.c.l.b16 %v275
  %v804 = vunpack.c.l.b16 %v276
  %v805 = vpack.c.b16 %v550, %v549
  %v806 = vpack.c.b16 %v552, %v551
  %v807 = vpack.c.b16 %v554, %v553
  %v808 = vpack.c.b16 %v556, %v555
  %v809 = vpack.c.b16 %v558, %v557
  %v810 = vpack.c.b16 %v560, %v559
  %v811 = vpack.c.b16 %v562, %v561
  %v812 = vpack.c.b16 %v564, %v563
  %v813 = vpack.c.b16 %v566, %v565
  %v814 = vpack.c.b16 %v568, %v567
  %v815 = vpack.c.b16 %v570, %v569
  %v816 = vpack.c.b16 %v572, %v571
  %v817 = vpack.c.b16 %v574, %v573
  %v818 = vpack.c.b16 %v576, %v575
  %v819 = vpack.c.b16 %v578, %v577
  %v820 = vpack.c.b16 %v580, %v579
  %v821 = vpack.c.b16 %v582, %v581
  %v822 = vpack.c.b16 %v584, %v583
  %v823 = vpack.c.b16 %v586, %v585
  %v824 = vpack.c.b16 %v588, %v587
  %v825 = vpack.c.b16 %v590, %v589
  %v826 = vpack.c.b16 %v592, %v591
  %v827 = vpack.c.b16 %v594, %v593
  %v828 = vpack.c.b16 %v596, %v595
  %v829 = vpack.c.b16 %v598, %v597
  %v830 = vpack.c.b16 %v600, %v599
  %v831 = vpack.c.b16 %v602, %v601
  %v832 = vpack.c.b16 %v604, %v603
  %v833 = vpack.c.b16 %v606, %v605
  %v834 = vpack.c.b16 %v608, %v607
  %v835 = vpack.c.b16 %v610, %v609
  %v836 = vpack.c.b16 %v612, %v611
  %v837 = vpack.c.b16 %v614, %v613
  %v838 = vpack.c.b16 %v616, %v615
  %v839 = vpack.c.b16 %v618, %v617
  %v840 = vpack.c.b16 %v620, %v619
  %v841 = vpack.c.b16 %v622, %v621
  %v842 = vpack.c.b16 %v624, %v623
  %v843 = vpack.c.b16 %v626, %v625
  %v844 = vpack.c.b16 %v628, %v627
  %v845 = vpack.c.b16 %v630, %v629
  %v846 = vpack.c.b16 %v632, %v631
  %v847 = vpack.c.b16 %v634, %v633
  %v848 = vpack.c.b16 %v636, %v635
  %v849 = vpack.c.b16 %v638, %v637
  %v850 = vpack.c.b16 %v640, %v639
  %v851 = vpack.c.b16 %v642, %v641
  %v852 = vpack.c.b16 %v644, %v643
  %v853 = vpack.c.b16 %v646, %v645
  %v854 = vpack.c.b16 %v648, %v647
  %v855 = vpack.c.b16 %v650, %v649
  %v856 = vpack.c.b16 %v652, %v651
  %v857 = vpack.c.b16 %v654, %v653
  %v858 = vpack.c.b16 %v656, %v655
  %v859 = vpack.c.b16 %v658, %v657
  %v860 = vpack.c.b16 %v660, %v659
  %v861 = vpack.c.b16 %v662, %v661
  %v862 = vpack.c.b16 %v664, %v663
  %v863 = vpack.c.b16 %v666, %v665
  %v864 = vpack.c.b16 %v668, %v667
  %v865 = vpack.c.b16 %v670, %v669
  %v866 = vpack.c.b16 %v672, %v671
  %v867 = vpack.c.b16 %v674, %v673
  %v868 = vpack.c.b16 %v676, %v675
  %v869 = vpack.c.b16 %v678, %v677
  %v870 = vpack.c.b16 %v680, %v679
  %v871 = vpack.c.b16 %v682, %v681
  %v872 = vpack.c.b16 %v684, %v683
  %v873 = vpack.c.b16 %v686, %v685
  %v874 = vpack.c.b16 %v688, %v687
  %v875 = vpack.c.b16 %v690, %v689
  %v876 = vpack.c.b16 %v692, %v691
  %v877 = vpack.c.b16 %v694, %v693
  %v878 = vpack.c.b16 %v696, %v695
  %v879 = vpack.c.b16 %v698, %v697
  %v880 = vpack.c.b16 %v700, %v699
  %v881 = vpack.c.b16 %v702, %v701
  %v882 = vpack.c.b16 %v704, %v703
  %v883 = vpack.c.b16 %v706, %v705
  %v884 = vpack.c.b16 %v708, %v707
  %v885 = vpack.c.b16 %v710, %v709
  %v886 = vpack.c.b16 %v712, %v711
  %v887 = vpack.c.b16 %v714, %v713
  %v888 = vpack.c.b16 %v716, %v715
  %v889 = vpack.c.b16 %v718, %v717
  %v890 = vpack.c.b16 %v720, %v719
  %v891 = vpack.c.b16 %v722, %v721
  %v892 = vpack.c.b16 %v724, %v723
  %v893 = vpack.c.b16 %v726, %v725
  %v894 = vpack.c.b16 %v728, %v727
  %v895 = vpack.c.b16 %v730, %v729
  %v896 = vpack.c.b16 %v732, %v731
  %v897 = vpack.c.b16 %v734, %v733
  %v898 = vpack.c.b16 %v736, %v735
  %v899 = vpack.c.b16 %v738, %v737
  %v900 = vpack.c.b16 %v740, %v739
  %v901 = vpack.c.b16 %v742, %v741
  %v902 = vpack.c.b16 %v744, %v743
  %v903 = vpack.c.b16 %v746, %v745
  %v904 = vpack.c.b16 %v748, %v747
  %v905 = vpack.c.b16 %v750, %v749
  %v906 = vpack.c.b16 %v752, %v751
  %v907 = vpack.c.b16 %v754, %v753
  %v908 = vpack.c.b16 %v756, %v755
  %v909 = vpack.c.b16 %v758, %v757
  %v910 = vpack.c.b16 %v760, %v759
  %v911 = vpack.c.b16 %v762, %v761
  %v912 = vpack.c.b16 %v764, %v763
  %v913 = vpack.c.b16 %v766, %v765
  %v914 = vpack.c.b16 %v768, %v767
  %v915 = vpack.c.b16 %v770, %v769
  %v916 = vpack.c.b16 %v772, %v771
  %v917 = vpack.c.b16 %v774, %v773
  %v918 = vpack.c.b16 %v776, %v775
  %v919 = vpack.c.b16 %v778, %v777
  %v920 = vpack.c.b16 %v780, %v779
  %v921 = vpack.c.b16 %v782, %v781
  %v922 = vpack.c.b16 %v784, %v783
  %v923 = vpack.c.b16 %v786, %v785
  %v924 = vpack.c.b16 %v788, %v787
  %v925 = vpack.c.b16 %v790, %v789
  %v926 = vpack.c.b16 %v792, %v791
  %v927 = vpack.c.b16 %v794, %v793
  %v928 = vpack.c.b16 %v796, %v795
  %v929 = vpack.c.b16 %v798, %v797
  %v930 = vpack.c.b16 %v800, %v799
  %v931 = vpack.c.b16 %v802, %v801
  %v932 = vpack.c.b16 %v804, %v803
  %v1077 = vunpack.c.l.b16 %v277
  %v1078 = vunpack.c.l.b16 %v278
  %v1079 = vunpack.c.l.b16 %v279
  %v1080 = vunpack.c.l.b16 %v280
  %v1081 = vunpack.c.l.b16 %v281
  %v1082 = vunpack.c.l.b16 %v282
  %v1083 = vunpack.c.l.b16 %v283
  %v1084 = vunpack.c.l.b16 %v284
  %v1085 = vunpack.c.l.b16 %v285
  %v1086 = vunpack.c.l.b16 %v286
  %v1087 = vunpack.c.l.b16 %v287
  %v1088 = vunpack.c.l.b16 %v288
  %v1089 = vunpack.c.l.b16 %v289
  %v1090 = vunpack.c.l.b16 %v290
  %v1091 = vunpack.c.l.b16 %v291
  %v1092 = vunpack.c.l.b16 %v292
  %v1093 = vpack.c.b16 %v1078, %v1077
  %v1094 = vpack.c.b16 %v1080, %v1079
  %v1095 = vpack.c.b16 %v1082, %v1081
  %v1096 = vpack.c.b16 %v1084, %v1083
  %v1097 = vpack.c.b16 %v1086, %v1085
  %v1098 = vpack.c.b16 %v1088, %v1087
  %v1099 = vpack.c.b16 %v1090, %v1089
  %v1100 = vpack.c.b16 %v1092, %v1091
  %1109 = vmatprep.subr.bf16.mxu0 0
  %1110 = vmatpush1.bf16.msra.mxu0 %v1093
  %1111 = vmatprep.subr.bf16.mxu0 0
  %1112 = vmatpush1.bf16.msra.mxu0 %v1094
  %1113 = vmatprep.subr.bf16.mxu0 0
  %1114 = vmatpush1.bf16.msra.mxu0 %v1095
  %1115 = vmatprep.subr.bf16.mxu0 0
  %1116 = vmatpush1.bf16.msra.mxu0 %v1096
  %1117 = vmatprep.subr.bf16.mxu0 0
  %1118 = vmatpush1.bf16.msra.mxu0 %v1097
  %1119 = vmatprep.subr.bf16.mxu0 0
  %1120 = vmatpush1.bf16.msra.mxu0 %v1098
  %1121 = vmatprep.subr.bf16.mxu0 0
  %1122 = vmatpush1.bf16.msra.mxu0 %v1099
  %1123 = vmatprep.subr.bf16.mxu0 0
  %1124 = vmatpush1.bf16.msra.mxu0 %v1100
  %1125 = vmatprep.subr.bf16.mxu0 0
  %1126 = vmatpush1.bf16.msra.mxu0 0
  %1127 = vmatprep.subr.bf16.mxu0 0
  %1128 = vmatpush1.bf16.msra.mxu0 0
  %1129 = vmatprep.subr.bf16.mxu0 0
  %1130 = vmatpush1.bf16.msra.mxu0 0
  %1131 = vmatprep.subr.bf16.mxu0 0
  %1132 = vmatpush1.bf16.msra.mxu0 0
  %1133 = vmatprep.subr.bf16.mxu0 0
  %1134 = vmatpush1.bf16.msra.mxu0 0
  %1135 = vmatprep.subr.bf16.mxu0 0
  %1136 = vmatpush1.bf16.msra.mxu0 0
  %1137 = vmatprep.subr.bf16.mxu0 0
  %1138 = vmatpush1.bf16.msra.mxu0 0
  %1139 = vmatprep.subr.bf16.mxu0 0
  %1140 = vmatpush1.bf16.msra.mxu0 0
  %1141 = vmatprep.mubr.bf16.mxu0 0
  %1142 = vmatmul.mubr.bf16.gmra.mrb[0].mxu0 %v805
  %v1143 = vpop.f32.mrb[0].mxu0
  %v1144 = vadd.f32 0.0, %v1143
  %v1145 = vpop.f32.mrb[0].mxu0
  %v1146 = vpop.f32.mrb[0].mxu0
  %v1147 = vadd.f32 0.0, %v1146
  %v1148 = vpop.f32.mrb[0].mxu0
  %1149 = vmatprep.mubr.bf16.mxu0 0
  %1150 = vmatmul.mubr.bf16.gmra.mrb[0].mxu0 %v806
  %v1151 = vpop.f32.mrb[0].mxu0
  %v1152 = vadd.f32 0.0, %v1151
  %v1153 = vpop.f32.mrb[0].mxu0
  %v1154 = vpop.f32.mrb[0].mxu0
  %v1155 = vadd.f32 0.0, %v1154
  %v1156 = vpop.f32.mrb[0].mxu0
  %1157 = vmatprep.mubr.bf16.mxu0 0
  %1158 = vmatmul.mubr.bf16.gmra.mrb[0].mxu0 %v807
  %v1159 = vpop.f32.mrb[0].mxu0
  %v1160 = vadd.f32 0.0, %v1159
  %v1161 = vpop.f32.mrb[0].mxu0
  %v1162 = vpop.f32.mrb[0].mxu0
  %v1163 = vadd.f32 0.0, %v1162
  %v1164 = vpop.f32.mrb[0].mxu0
  %1165 = vmatprep.mubr.bf16.mxu0 0
  %1166 = vmatmul.mubr.bf16.gmra.mrb[0].mxu0 %v808
  %v1167 = vpop.f32.mrb[0].mxu0
  %v1168 = vadd.f32 0.0, %v1167
  %v1169 = vpop.f32.mrb[0].mxu0
  %v1170 = vpop.f32.mrb[0].mxu0
  %v1171 = vadd.f32 0.0, %v1170
  %v1172 = vpop.f32.mrb[0].mxu0
  %1173 = vmatprep.mubr.bf16.mxu0 0
  %1174 = vmatmul.mubr.bf16.gmra.mrb[0].mxu0 %v809
  %v1175 = vpop.f32.mrb[0].mxu0
  %v1176 = vadd.f32 0.0, %v1175
  %v1177 = vpop.f32.mrb[0].mxu0
  %v1178 = vpop.f32.mrb[0].mxu0
  %v1179 = vadd.f32 0.0, %v1178
  %v1180 = vpop.f32.mrb[0].mxu0
  %1181 = vmatprep.mubr.bf16.mxu0 0
  %1182 = vmatmul.mubr.bf16.gmra.mrb[0].mxu0 %v810
  %v1183 = vpop.f32.mrb[0].mxu0
  %v1184 = vadd.f32 0.0, %v1183
  %v1185 = vpop.f32.mrb[0].mxu0
  %v1186 = vpop.f32.mrb[0].mxu0
  %v1187 = vadd.f32 0.0, %v1186
  %v1188 = vpop.f32.mrb[0].mxu0
  %1189 = vmatprep.mubr.bf16.mxu0 0
  %1190 = vmatmul.mubr.bf16.gmra.mrb[0].mxu0 %v811
  %v1191 = vpop.f32.mrb[0].mxu0
  %v1192 = vadd.f32 0.0, %v1191
  %v1193 = vpop.f32.mrb[0].mxu0
  %v1194 = vpop.f32.mrb[0].mxu0
  %v1195 = vadd.f32 0.0, %v1194
  %v1196 = vpop.f32.mrb[0].mxu0
  %1197 = vmatprep.mubr.bf16.mxu0 0
  %1198 = vmatmul.mubr.bf16.gmra.mrb[0].mxu0 %v812
  %v1199 = vpop.f32.mrb[0].mxu0
  %v1200 = vadd.f32 0.0, %v1199
  %v1201 = vpop.f32.mrb[0].mxu0
  %v1202 = vpop.f32.mrb[0].mxu0
  %v1203 = vadd.f32 0.0, %v1202
  %v1204 = vpop.f32.mrb[0].mxu0
  %1205 = vmatprep.mubr.bf16.mxu0 0
  %1206 = vmatmul.mubr.bf16.gmra.mrb[0].mxu0 %v813
  %v1207 = vpop.f32.mrb[0].mxu0
  %v1208 = vadd.f32 0.0, %v1207
  %v1209 = vpop.f32.mrb[0].mxu0
  %v1210 = vpop.f32.mrb[0].mxu0
  %v1211 = vadd.f32 0.0, %v1210
  %v1212 = vpop.f32.mrb[0].mxu0
  %1213 = vmatprep.mubr.bf16.mxu0 0
  %1214 = vmatmul.mubr.bf16.gmra.mrb[0].mxu0 %v814
  %v1215 = vpop.f32.mrb[0].mxu0
  %v1216 = vadd.f32 0.0, %v1215
  %v1217 = vpop.f32.mrb[0].mxu0
  %v1218 = vpop.f32.mrb[0].mxu0
  %v1219 = vadd.f32 0.0, %v1218
  %v1220 = vpop.f32.mrb[0].mxu0
  %1221 = vmatprep.mubr.bf16.mxu0 0
  %1222 = vmatmul.mubr.bf16.gmra.mrb[0].mxu0 %v815
  %v1223 = vpop.f32.mrb[0].mxu0
  %v1224 = vadd.f32 0.0, %v1223
  %v1225 = vpop.f32.mrb[0].mxu0
  %v1226 = vpop.f32.mrb[0].mxu0
  %v1227 = vadd.f32 0.0, %v1226
  %v1228 = vpop.f32.mrb[0].mxu0
  %1229 = vmatprep.mubr.bf16.mxu0 0
  %1230 = vmatmul.mubr.bf16.gmra.mrb[0].mxu0 %v816
  %v1231 = vpop.f32.mrb[0].mxu0
  %v1232 = vadd.f32 0.0, %v1231
  %v1233 = vpop.f32.mrb[0].mxu0
  %v1234 = vpop.f32.mrb[0].mxu0
  %v1235 = vadd.f32 0.0, %v1234
  %v1236 = vpop.f32.mrb[0].mxu0
  %1237 = vmatprep.mubr.bf16.mxu0 0
  %1238 = vmatmul.mubr.bf16.gmra.mrb[0].mxu0 %v817
  %v1239 = vpop.f32.mrb[0].mxu0
  %v1240 = vadd.f32 0.0, %v1239
  %v1241 = vpop.f32.mrb[0].mxu0
  %v1242 = vpop.f32.mrb[0].mxu0
  %v1243 = vadd.f32 0.0, %v1242
  %v1244 = vpop.f32.mrb[0].mxu0
  %1245 = vmatprep.mubr.bf16.mxu0 0
  %1246 = vmatmul.mubr.bf16.gmra.mrb[0].mxu0 %v818
  %v1247 = vpop.f32.mrb[0].mxu0
  %v1248 = vadd.f32 0.0, %v1247
  %v1249 = vpop.f32.mrb[0].mxu0
  %v1250 = vpop.f32.mrb[0].mxu0
  %v1251 = vadd.f32 0.0, %v1250
  %v1252 = vpop.f32.mrb[0].mxu0
  %1253 = vmatprep.mubr.bf16.mxu0 0
  %1254 = vmatmul.mubr.bf16.gmra.mrb[0].mxu0 %v819
  %v1255 = vpop.f32.mrb[0].mxu0
  %v1256 = vadd.f32 0.0, %v1255
  %v1257 = vpop.f32.mrb[0].mxu0
  %v1258 = vpop.f32.mrb[0].mxu0
  %v1259 = vadd.f32 0.0, %v1258
  %v1260 = vpop.f32.mrb[0].mxu0
  %1261 = vmatprep.mubr.bf16.mxu0 0
  %1262 = vmatmul.mubr.bf16.gmra.mrb[0].mxu0 %v820
  %v1263 = vpop.f32.mrb[0].mxu0
  %v1264 = vadd.f32 0.0, %v1263
  %v1265 = vpop.f32.mrb[0].mxu0
  %v1266 = vpop.f32.mrb[0].mxu0
  %v1267 = vadd.f32 0.0, %v1266
  %v1268 = vpop.f32.mrb[0].mxu0
  %1269 = vmatprep.mubr.bf16.mxu0 0
  %1270 = vmatmul.mubr.bf16.gmra.mrb[0].mxu0 %v821
  %v1271 = vpop.f32.mrb[0].mxu0
  %v1272 = vadd.f32 0.0, %v1271
  %v1273 = vpop.f32.mrb[0].mxu0
  %v1274 = vpop.f32.mrb[0].mxu0
  %v1275 = vadd.f32 0.0, %v1274
  %v1276 = vpop.f32.mrb[0].mxu0
  %1277 = vmatprep.mubr.bf16.mxu0 0
  %1278 = vmatmul.mubr.bf16.gmra.mrb[0].mxu0 %v822
  %v1279 = vpop.f32.mrb[0].mxu0
  %v1280 = vadd.f32 0.0, %v1279
  %v1281 = vpop.f32.mrb[0].mxu0
  %v1282 = vpop.f32.mrb[0].mxu0
  %v1283 = vadd.f32 0.0, %v1282
  %v1284 = vpop.f32.mrb[0].mxu0
  %1285 = vmatprep.mubr.bf16.mxu0 0
  %1286 = vmatmul.mubr.bf16.gmra.mrb[0].mxu0 %v823
  %v1287 = vpop.f32.mrb[0].mxu0
  %v1288 = vadd.f32 0.0, %v1287
  %v1289 = vpop.f32.mrb[0].mxu0
  %v1290 = vpop.f32.mrb[0].mxu0
  %v1291 = vadd.f32 0.0, %v1290
  %v1292 = vpop.f32.mrb[0].mxu0
  %1293 = vmatprep.mubr.bf16.mxu0 0
  %1294 = vmatmul.mubr.bf16.gmra.mrb[0].mxu0 %v824
  %v1295 = vpop.f32.mrb[0].mxu0
  %v1296 = vadd.f32 0.0, %v1295
  %v1297 = vpop.f32.mrb[0].mxu0
  %v1298 = vpop.f32.mrb[0].mxu0
  %v1299 = vadd.f32 0.0, %v1298
  %v1300 = vpop.f32.mrb[0].mxu0
  %1301 = vmatprep.mubr.bf16.mxu0 0
  %1302 = vmatmul.mubr.bf16.gmra.mrb[0].mxu0 %v825
  %v1303 = vpop.f32.mrb[0].mxu0
  %v1304 = vadd.f32 0.0, %v1303
  %v1305 = vpop.f32.mrb[0].mxu0
  %v1306 = vpop.f32.mrb[0].mxu0
  %v1307 = vadd.f32 0.0, %v1306
  %v1308 = vpop.f32.mrb[0].mxu0
  %1309 = vmatprep.mubr.bf16.mxu0 0
  %1310 = vmatmul.mubr.bf16.gmra.mrb[0].mxu0 %v826
  %v1311 = vpop.f32.mrb[0].mxu0
  %v1312 = vadd.f32 0.0, %v1311
  %v1313 = vpop.f32.mrb[0].mxu0
  %v1314 = vpop.f32.mrb[0].mxu0
  %v1315 = vadd.f32 0.0, %v1314
  %v1316 = vpop.f32.mrb[0].mxu0
  %1317 = vmatprep.mubr.bf16.mxu0 0
  %1318 = vmatmul.mubr.bf16.gmra.mrb[0].mxu0 %v827
  %v1319 = vpop.f32.mrb[0].mxu0
  %v1320 = vadd.f32 0.0, %v1319
  %v1321 = vpop.f32.mrb[0].mxu0
  %v1322 = vpop.f32.mrb[0].mxu0
  %v1323 = vadd.f32 0.0, %v1322
  %v1324 = vpop.f32.mrb[0].mxu0
  %1325 = vmatprep.mubr.bf16.mxu0 0
  %1326 = vmatmul.mubr.bf16.gmra.mrb[0].mxu0 %v828
  %v1327 = vpop.f32.mrb[0].mxu0
  %v1328 = vadd.f32 0.0, %v1327
  %v1329 = vpop.f32.mrb[0].mxu0
  %v1330 = vpop.f32.mrb[0].mxu0
  %v1331 = vadd.f32 0.0, %v1330
  %v1332 = vpop.f32.mrb[0].mxu0
  %1333 = vmatprep.mubr.bf16.mxu0 0
  %1334 = vmatmul.mubr.bf16.gmra.mrb[0].mxu0 %v829
  %v1335 = vpop.f32.mrb[0].mxu0
  %v1336 = vadd.f32 0.0, %v1335
  %v1337 = vpop.f32.mrb[0].mxu0
  %v1338 = vpop.f32.mrb[0].mxu0
  %v1339 = vadd.f32 0.0, %v1338
  %v1340 = vpop.f32.mrb[0].mxu0
  %1341 = vmatprep.mubr.bf16.mxu0 0
  %1342 = vmatmul.mubr.bf16.gmra.mrb[0].mxu0 %v830
  %v1343 = vpop.f32.mrb[0].mxu0
  %v1344 = vadd.f32 0.0, %v1343
  %v1345 = vpop.f32.mrb[0].mxu0
  %v1346 = vpop.f32.mrb[0].mxu0
  %v1347 = vadd.f32 0.0, %v1346
  %v1348 = vpop.f32.mrb[0].mxu0
  %1349 = vmatprep.mubr.bf16.mxu0 0
  %1350 = vmatmul.mubr.bf16.gmra.mrb[0].mxu0 %v831
  %v1351 = vpop.f32.mrb[0].mxu0
  %v1352 = vadd.f32 0.0, %v1351
  %v1353 = vpop.f32.mrb[0].mxu0
  %v1354 = vpop.f32.mrb[0].mxu0
  %v1355 = vadd.f32 0.0, %v1354
  %v1356 = vpop.f32.mrb[0].mxu0
  %1357 = vmatprep.mubr.bf16.mxu0 0
  %1358 = vmatmul.mubr.bf16.gmra.mrb[0].mxu0 %v832
  %v1359 = vpop.f32.mrb[0].mxu0
  %v1360 = vadd.f32 0.0, %v1359
  %v1361 = vpop.f32.mrb[0].mxu0
  %v1362 = vpop.f32.mrb[0].mxu0
  %v1363 = vadd.f32 0.0, %v1362
  %v1364 = vpop.f32.mrb[0].mxu0
  %1365 = vmatprep.mubr.bf16.mxu0 0
  %1366 = vmatmul.mubr.bf16.gmra.mrb[0].mxu0 %v833
  %v1367 = vpop.f32.mrb[0].mxu0
  %v1368 = vadd.f32 0.0, %v1367
  %v1369 = vpop.f32.mrb[0].mxu0
  %v1370 = vpop.f32.mrb[0].mxu0
  %v1371 = vadd.f32 0.0, %v1370
  %v1372 = vpop.f32.mrb[0].mxu0
  %1373 = vmatprep.mubr.bf16.mxu0 0
  %1374 = vmatmul.mubr.bf16.gmra.mrb[0].mxu0 %v834
  %v1375 = vpop.f32.mrb[0].mxu0
  %v1376 = vadd.f32 0.0, %v1375
  %v1377 = vpop.f32.mrb[0].mxu0
  %v1378 = vpop.f32.mrb[0].mxu0
  %v1379 = vadd.f32 0.0, %v1378
  %v1380 = vpop.f32.mrb[0].mxu0
  %1381 = vmatprep.mubr.bf16.mxu0 0
  %1382 = vmatmul.mubr.bf16.gmra.mrb[0].mxu0 %v835
  %v1383 = vpop.f32.mrb[0].mxu0
  %v1384 = vadd.f32 0.0, %v1383
  %v1385 = vpop.f32.mrb[0].mxu0
  %v1386 = vpop.f32.mrb[0].mxu0
  %v1387 = vadd.f32 0.0, %v1386
  %v1388 = vpop.f32.mrb[0].mxu0
  %1389 = vmatprep.mubr.bf16.mxu0 0
  %1390 = vmatmul.mubr.bf16.gmra.mrb[0].mxu0 %v836
  %v1391 = vpop.f32.mrb[0].mxu0
  %v1392 = vadd.f32 0.0, %v1391
  %v1393 = vpop.f32.mrb[0].mxu0
  %v1394 = vpop.f32.mrb[0].mxu0
  %v1395 = vadd.f32 0.0, %v1394
  %v1396 = vpop.f32.mrb[0].mxu0
  %1397 = vmatprep.mubr.bf16.mxu0 0
  %1398 = vmatmul.mubr.bf16.gmra.mrb[0].mxu0 %v837
  %v1399 = vpop.f32.mrb[0].mxu0
  %v1400 = vadd.f32 0.0, %v1399
  %v1401 = vpop.f32.mrb[0].mxu0
  %v1402 = vpop.f32.mrb[0].mxu0
  %v1403 = vadd.f32 0.0, %v1402
  %v1404 = vpop.f32.mrb[0].mxu0
  %1405 = vmatprep.mubr.bf16.mxu0 0
  %1406 = vmatmul.mubr.bf16.gmra.mrb[0].mxu0 %v838
  %v1407 = vpop.f32.mrb[0].mxu0
  %v1408 = vadd.f32 0.0, %v1407
  %v1409 = vpop.f32.mrb[0].mxu0
  %v1410 = vpop.f32.mrb[0].mxu0
  %v1411 = vadd.f32 0.0, %v1410
  %v1412 = vpop.f32.mrb[0].mxu0
  %1413 = vmatprep.mubr.bf16.mxu0 0
  %1414 = vmatmul.mubr.bf16.gmra.mrb[0].mxu0 %v839
  %v1415 = vpop.f32.mrb[0].mxu0
  %v1416 = vadd.f32 0.0, %v1415
  %v1417 = vpop.f32.mrb[0].mxu0
  %v1418 = vpop.f32.mrb[0].mxu0
  %v1419 = vadd.f32 0.0, %v1418
  %v1420 = vpop.f32.mrb[0].mxu0
  %1421 = vmatprep.mubr.bf16.mxu0 0
  %1422 = vmatmul.mubr.bf16.gmra.mrb[0].mxu0 %v840
  %v1423 = vpop.f32.mrb[0].mxu0
  %v1424 = vadd.f32 0.0, %v1423
  %v1425 = vpop.f32.mrb[0].mxu0
  %v1426 = vpop.f32.mrb[0].mxu0
  %v1427 = vadd.f32 0.0, %v1426
  %v1428 = vpop.f32.mrb[0].mxu0
  %1429 = vmatprep.mubr.bf16.mxu0 0
  %1430 = vmatmul.mubr.bf16.gmra.mrb[0].mxu0 %v841
  %v1431 = vpop.f32.mrb[0].mxu0
  %v1432 = vadd.f32 0.0, %v1431
  %v1433 = vpop.f32.mrb[0].mxu0
  %v1434 = vpop.f32.mrb[0].mxu0
  %v1435 = vadd.f32 0.0, %v1434
  %v1436 = vpop.f32.mrb[0].mxu0
  %1437 = vmatprep.mubr.bf16.mxu0 0
  %1438 = vmatmul.mubr.bf16.gmra.mrb[0].mxu0 %v842
  %v1439 = vpop.f32.mrb[0].mxu0
  %v1440 = vadd.f32 0.0, %v1439
  %v1441 = vpop.f32.mrb[0].mxu0
  %v1442 = vpop.f32.mrb[0].mxu0
  %v1443 = vadd.f32 0.0, %v1442
  %v1444 = vpop.f32.mrb[0].mxu0
  %1445 = vmatprep.mubr.bf16.mxu0 0
  %1446 = vmatmul.mubr.bf16.gmra.mrb[0].mxu0 %v843
  %v1447 = vpop.f32.mrb[0].mxu0
  %v1448 = vadd.f32 0.0, %v1447
  %v1449 = vpop.f32.mrb[0].mxu0
  %v1450 = vpop.f32.mrb[0].mxu0
  %v1451 = vadd.f32 0.0, %v1450
  %v1452 = vpop.f32.mrb[0].mxu0
  %1453 = vmatprep.mubr.bf16.mxu0 0
  %1454 = vmatmul.mubr.bf16.gmra.mrb[0].mxu0 %v844
  %v1455 = vpop.f32.mrb[0].mxu0
  %v1456 = vadd.f32 0.0, %v1455
  %v1457 = vpop.f32.mrb[0].mxu0
  %v1458 = vpop.f32.mrb[0].mxu0
  %v1459 = vadd.f32 0.0, %v1458
  %v1460 = vpop.f32.mrb[0].mxu0
  %1461 = vmatprep.mubr.bf16.mxu0 0
  %1462 = vmatmul.mubr.bf16.gmra.mrb[0].mxu0 %v845
  %v1463 = vpop.f32.mrb[0].mxu0
  %v1464 = vadd.f32 0.0, %v1463
  %v1465 = vpop.f32.mrb[0].mxu0
  %v1466 = vpop.f32.mrb[0].mxu0
  %v1467 = vadd.f32 0.0, %v1466
  %v1468 = vpop.f32.mrb[0].mxu0
  %1469 = vmatprep.mubr.bf16.mxu0 0
  %1470 = vmatmul.mubr.bf16.gmra.mrb[0].mxu0 %v846
  %v1471 = vpop.f32.mrb[0].mxu0
  %v1472 = vadd.f32 0.0, %v1471
  %v1473 = vpop.f32.mrb[0].mxu0
  %v1474 = vpop.f32.mrb[0].mxu0
  %v1475 = vadd.f32 0.0, %v1474
  %v1476 = vpop.f32.mrb[0].mxu0
  %1477 = vmatprep.mubr.bf16.mxu0 0
  %1478 = vmatmul.mubr.bf16.gmra.mrb[0].mxu0 %v847
  %v1479 = vpop.f32.mrb[0].mxu0
  %v1480 = vadd.f32 0.0, %v1479
  %v1481 = vpop.f32.mrb[0].mxu0
  %v1482 = vpop.f32.mrb[0].mxu0
  %v1483 = vadd.f32 0.0, %v1482
  %v1484 = vpop.f32.mrb[0].mxu0
  %1485 = vmatprep.mubr.bf16.mxu0 0
  %1486 = vmatmul.mubr.bf16.gmra.mrb[0].mxu0 %v848
  %v1487 = vpop.f32.mrb[0].mxu0
  %v1488 = vadd.f32 0.0, %v1487
  %v1489 = vpop.f32.mrb[0].mxu0
  %v1490 = vpop.f32.mrb[0].mxu0
  %v1491 = vadd.f32 0.0, %v1490
  %v1492 = vpop.f32.mrb[0].mxu0
  %1493 = vmatprep.mubr.bf16.mxu0 0
  %1494 = vmatmul.mubr.bf16.gmra.mrb[0].mxu0 %v849
  %v1495 = vpop.f32.mrb[0].mxu0
  %v1496 = vadd.f32 0.0, %v1495
  %v1497 = vpop.f32.mrb[0].mxu0
  %v1498 = vpop.f32.mrb[0].mxu0
  %v1499 = vadd.f32 0.0, %v1498
  %v1500 = vpop.f32.mrb[0].mxu0
  %1501 = vmatprep.mubr.bf16.mxu0 0
  %1502 = vmatmul.mubr.bf16.gmra.mrb[0].mxu0 %v850
  %v1503 = vpop.f32.mrb[0].mxu0
  %v1504 = vadd.f32 0.0, %v1503
  %v1505 = vpop.f32.mrb[0].mxu0
  %v1506 = vpop.f32.mrb[0].mxu0
  %v1507 = vadd.f32 0.0, %v1506
  %v1508 = vpop.f32.mrb[0].mxu0
  %1509 = vmatprep.mubr.bf16.mxu0 0
  %1510 = vmatmul.mubr.bf16.gmra.mrb[0].mxu0 %v851
  %v1511 = vpop.f32.mrb[0].mxu0
  %v1512 = vadd.f32 0.0, %v1511
  %v1513 = vpop.f32.mrb[0].mxu0
  %v1514 = vpop.f32.mrb[0].mxu0
  %v1515 = vadd.f32 0.0, %v1514
  %v1516 = vpop.f32.mrb[0].mxu0
  %1517 = vmatprep.mubr.bf16.mxu0 0
  %1518 = vmatmul.mubr.bf16.gmra.mrb[0].mxu0 %v852
  %v1519 = vpop.f32.mrb[0].mxu0
  %v1520 = vadd.f32 0.0, %v1519
  %v1521 = vpop.f32.mrb[0].mxu0
  %v1522 = vpop.f32.mrb[0].mxu0
  %v1523 = vadd.f32 0.0, %v1522
  %v1524 = vpop.f32.mrb[0].mxu0
  %1525 = vmatprep.mubr.bf16.mxu0 0
  %1526 = vmatmul.mubr.bf16.gmra.mrb[0].mxu0 %v853
  %v1527 = vpop.f32.mrb[0].mxu0
  %v1528 = vadd.f32 0.0, %v1527
  %v1529 = vpop.f32.mrb[0].mxu0
  %v1530 = vpop.f32.mrb[0].mxu0
  %v1531 = vadd.f32 0.0, %v1530
  %v1532 = vpop.f32.mrb[0].mxu0
  %1533 = vmatprep.mubr.bf16.mxu0 0
  %1534 = vmatmul.mubr.bf16.gmra.mrb[0].mxu0 %v854
  %v1535 = vpop.f32.mrb[0].mxu0
  %v1536 = vadd.f32 0.0, %v1535
  %v1537 = vpop.f32.mrb[0].mxu0
  %v1538 = vpop.f32.mrb[0].mxu0
  %v1539 = vadd.f32 0.0, %v1538
  %v1540 = vpop.f32.mrb[0].mxu0
  %1541 = vmatprep.mubr.bf16.mxu0 0
  %1542 = vmatmul.mubr.bf16.gmra.mrb[0].mxu0 %v855
  %v1543 = vpop.f32.mrb[0].mxu0
  %v1544 = vadd.f32 0.0, %v1543
  %v1545 = vpop.f32.mrb[0].mxu0
  %v1546 = vpop.f32.mrb[0].mxu0
  %v1547 = vadd.f32 0.0, %v1546
  %v1548 = vpop.f32.mrb[0].mxu0
  %1549 = vmatprep.mubr.bf16.mxu0 0
  %1550 = vmatmul.mubr.bf16.gmra.mrb[0].mxu0 %v856
  %v1551 = vpop.f32.mrb[0].mxu0
  %v1552 = vadd.f32 0.0, %v1551
  %v1553 = vpop.f32.mrb[0].mxu0
  %v1554 = vpop.f32.mrb[0].mxu0
  %v1555 = vadd.f32 0.0, %v1554
  %v1556 = vpop.f32.mrb[0].mxu0
  %1557 = vmatprep.mubr.bf16.mxu0 0
  %1558 = vmatmul.mubr.bf16.gmra.mrb[0].mxu0 %v857
  %v1559 = vpop.f32.mrb[0].mxu0
  %v1560 = vadd.f32 0.0, %v1559
  %v1561 = vpop.f32.mrb[0].mxu0
  %v1562 = vpop.f32.mrb[0].mxu0
  %v1563 = vadd.f32 0.0, %v1562
  %v1564 = vpop.f32.mrb[0].mxu0
  %1565 = vmatprep.mubr.bf16.mxu0 0
  %1566 = vmatmul.mubr.bf16.gmra.mrb[0].mxu0 %v858
  %v1567 = vpop.f32.mrb[0].mxu0
  %v1568 = vadd.f32 0.0, %v1567
  %v1569 = vpop.f32.mrb[0].mxu0
  %v1570 = vpop.f32.mrb[0].mxu0
  %v1571 = vadd.f32 0.0, %v1570
  %v1572 = vpop.f32.mrb[0].mxu0
  %1573 = vmatprep.mubr.bf16.mxu0 0
  %1574 = vmatmul.mubr.bf16.gmra.mrb[0].mxu0 %v859
  %v1575 = vpop.f32.mrb[0].mxu0
  %v1576 = vadd.f32 0.0, %v1575
  %v1577 = vpop.f32.mrb[0].mxu0
  %v1578 = vpop.f32.mrb[0].mxu0
  %v1579 = vadd.f32 0.0, %v1578
  %v1580 = vpop.f32.mrb[0].mxu0
  %1581 = vmatprep.mubr.bf16.mxu0 0
  %1582 = vmatmul.mubr.bf16.gmra.mrb[0].mxu0 %v860
  %v1583 = vpop.f32.mrb[0].mxu0
  %v1584 = vadd.f32 0.0, %v1583
  %v1585 = vpop.f32.mrb[0].mxu0
  %v1586 = vpop.f32.mrb[0].mxu0
  %v1587 = vadd.f32 0.0, %v1586
  %v1588 = vpop.f32.mrb[0].mxu0
  %1589 = vmatprep.mubr.bf16.mxu0 0
  %1590 = vmatmul.mubr.bf16.gmra.mrb[0].mxu0 %v861
  %v1591 = vpop.f32.mrb[0].mxu0
  %v1592 = vadd.f32 0.0, %v1591
  %v1593 = vpop.f32.mrb[0].mxu0
  %v1594 = vpop.f32.mrb[0].mxu0
  %v1595 = vadd.f32 0.0, %v1594
  %v1596 = vpop.f32.mrb[0].mxu0
  %1597 = vmatprep.mubr.bf16.mxu0 0
  %1598 = vmatmul.mubr.bf16.gmra.mrb[0].mxu0 %v862
  %v1599 = vpop.f32.mrb[0].mxu0
  %v1600 = vadd.f32 0.0, %v1599
  %v1601 = vpop.f32.mrb[0].mxu0
  %v1602 = vpop.f32.mrb[0].mxu0
  %v1603 = vadd.f32 0.0, %v1602
  %v1604 = vpop.f32.mrb[0].mxu0
  %1605 = vmatprep.mubr.bf16.mxu0 0
  %1606 = vmatmul.mubr.bf16.gmra.mrb[0].mxu0 %v863
  %v1607 = vpop.f32.mrb[0].mxu0
  %v1608 = vadd.f32 0.0, %v1607
  %v1609 = vpop.f32.mrb[0].mxu0
  %v1610 = vpop.f32.mrb[0].mxu0
  %v1611 = vadd.f32 0.0, %v1610
  %v1612 = vpop.f32.mrb[0].mxu0
  %1613 = vmatprep.mubr.bf16.mxu0 0
  %1614 = vmatmul.mubr.bf16.gmra.mrb[0].mxu0 %v864
  %v1615 = vpop.f32.mrb[0].mxu0
  %v1616 = vadd.f32 0.0, %v1615
  %v1617 = vpop.f32.mrb[0].mxu0
  %v1618 = vpop.f32.mrb[0].mxu0
  %v1619 = vadd.f32 0.0, %v1618
  %v1620 = vpop.f32.mrb[0].mxu0
  %1621 = vmatprep.mubr.bf16.mxu0 0
  %1622 = vmatmul.mubr.bf16.gmra.mrb[0].mxu0 %v865
  %v1623 = vpop.f32.mrb[0].mxu0
  %v1624 = vadd.f32 0.0, %v1623
  %v1625 = vpop.f32.mrb[0].mxu0
  %v1626 = vpop.f32.mrb[0].mxu0
  %v1627 = vadd.f32 0.0, %v1626
  %v1628 = vpop.f32.mrb[0].mxu0
  %1629 = vmatprep.mubr.bf16.mxu0 0
  %1630 = vmatmul.mubr.bf16.gmra.mrb[0].mxu0 %v866
  %v1631 = vpop.f32.mrb[0].mxu0
  %v1632 = vadd.f32 0.0, %v1631
  %v1633 = vpop.f32.mrb[0].mxu0
  %v1634 = vpop.f32.mrb[0].mxu0
  %v1635 = vadd.f32 0.0, %v1634
  %v1636 = vpop.f32.mrb[0].mxu0
  %1637 = vmatprep.mubr.bf16.mxu0 0
  %1638 = vmatmul.mubr.bf16.gmra.mrb[0].mxu0 %v867
  %v1639 = vpop.f32.mrb[0].mxu0
  %v1640 = vadd.f32 0.0, %v1639
  %v1641 = vpop.f32.mrb[0].mxu0
  %v1642 = vpop.f32.mrb[0].mxu0
  %v1643 = vadd.f32 0.0, %v1642
  %v1644 = vpop.f32.mrb[0].mxu0
  %1645 = vmatprep.mubr.bf16.mxu0 0
  %1646 = vmatmul.mubr.bf16.gmra.mrb[0].mxu0 %v868
  %v1647 = vpop.f32.mrb[0].mxu0
  %v1648 = vadd.f32 0.0, %v1647
  %v1649 = vpop.f32.mrb[0].mxu0
  %v1650 = vpop.f32.mrb[0].mxu0
  %v1651 = vadd.f32 0.0, %v1650
  %v1652 = vpop.f32.mrb[0].mxu0
  %1653 = vmatprep.mubr.bf16.mxu0 0
  %1654 = vmatmul.mubr.bf16.gmra.mrb[0].mxu0 %v869
  %v1655 = vpop.f32.mrb[0].mxu0
  %v1656 = vadd.f32 0.0, %v1655
  %v1657 = vpop.f32.mrb[0].mxu0
  %v1658 = vpop.f32.mrb[0].mxu0
  %v1659 = vadd.f32 0.0, %v1658
  %v1660 = vpop.f32.mrb[0].mxu0
  %1661 = vmatprep.mubr.bf16.mxu0 0
  %1662 = vmatmul.mubr.bf16.gmra.mrb[0].mxu0 %v870
  %v1663 = vpop.f32.mrb[0].mxu0
  %v1664 = vadd.f32 0.0, %v1663
  %v1665 = vpop.f32.mrb[0].mxu0
  %v1666 = vpop.f32.mrb[0].mxu0
  %v1667 = vadd.f32 0.0, %v1666
  %v1668 = vpop.f32.mrb[0].mxu0
  %1669 = vmatprep.mubr.bf16.mxu0 0
  %1670 = vmatmul.mubr.bf16.gmra.mrb[0].mxu0 %v871
  %v1671 = vpop.f32.mrb[0].mxu0
  %v1672 = vadd.f32 0.0, %v1671
  %v1673 = vpop.f32.mrb[0].mxu0
  %v1674 = vpop.f32.mrb[0].mxu0
  %v1675 = vadd.f32 0.0, %v1674
  %v1676 = vpop.f32.mrb[0].mxu0
  %1677 = vmatprep.mubr.bf16.mxu0 0
  %1678 = vmatmul.mubr.bf16.gmra.mrb[0].mxu0 %v872
  %v1679 = vpop.f32.mrb[0].mxu0
  %v1680 = vadd.f32 0.0, %v1679
  %v1681 = vpop.f32.mrb[0].mxu0
  %v1682 = vpop.f32.mrb[0].mxu0
  %v1683 = vadd.f32 0.0, %v1682
  %v1684 = vpop.f32.mrb[0].mxu0
  %1685 = vmatprep.mubr.bf16.mxu0 0
  %1686 = vmatmul.mubr.bf16.gmra.mrb[0].mxu0 %v873
  %v1687 = vpop.f32.mrb[0].mxu0
  %v1688 = vadd.f32 0.0, %v1687
  %v1689 = vpop.f32.mrb[0].mxu0
  %v1690 = vpop.f32.mrb[0].mxu0
  %v1691 = vadd.f32 0.0, %v1690
  %v1692 = vpop.f32.mrb[0].mxu0
  %1693 = vmatprep.mubr.bf16.mxu0 0
  %1694 = vmatmul.mubr.bf16.gmra.mrb[0].mxu0 %v874
  %v1695 = vpop.f32.mrb[0].mxu0
  %v1696 = vadd.f32 0.0, %v1695
  %v1697 = vpop.f32.mrb[0].mxu0
  %v1698 = vpop.f32.mrb[0].mxu0
  %v1699 = vadd.f32 0.0, %v1698
  %v1700 = vpop.f32.mrb[0].mxu0
  %1701 = vmatprep.mubr.bf16.mxu0 0
  %1702 = vmatmul.mubr.bf16.gmra.mrb[0].mxu0 %v875
  %v1703 = vpop.f32.mrb[0].mxu0
  %v1704 = vadd.f32 0.0, %v1703
  %v1705 = vpop.f32.mrb[0].mxu0
  %v1706 = vpop.f32.mrb[0].mxu0
  %v1707 = vadd.f32 0.0, %v1706
  %v1708 = vpop.f32.mrb[0].mxu0
  %1709 = vmatprep.mubr.bf16.mxu0 0
  %1710 = vmatmul.mubr.bf16.gmra.mrb[0].mxu0 %v876
  %v1711 = vpop.f32.mrb[0].mxu0
  %v1712 = vadd.f32 0.0, %v1711
  %v1713 = vpop.f32.mrb[0].mxu0
  %v1714 = vpop.f32.mrb[0].mxu0
  %v1715 = vadd.f32 0.0, %v1714
  %v1716 = vpop.f32.mrb[0].mxu0
  %1717 = vmatprep.mubr.bf16.mxu0 0
  %1718 = vmatmul.mubr.bf16.gmra.mrb[0].mxu0 %v877
  %v1719 = vpop.f32.mrb[0].mxu0
  %v1720 = vadd.f32 0.0, %v1719
  %v1721 = vpop.f32.mrb[0].mxu0
  %v1722 = vpop.f32.mrb[0].mxu0
  %v1723 = vadd.f32 0.0, %v1722
  %v1724 = vpop.f32.mrb[0].mxu0
  %1725 = vmatprep.mubr.bf16.mxu0 0
  %1726 = vmatmul.mubr.bf16.gmra.mrb[0].mxu0 %v878
  %v1727 = vpop.f32.mrb[0].mxu0
  %v1728 = vadd.f32 0.0, %v1727
  %v1729 = vpop.f32.mrb[0].mxu0
  %v1730 = vpop.f32.mrb[0].mxu0
  %v1731 = vadd.f32 0.0, %v1730
  %v1732 = vpop.f32.mrb[0].mxu0
  %1733 = vmatprep.mubr.bf16.mxu0 0
  %1734 = vmatmul.mubr.bf16.gmra.mrb[0].mxu0 %v879
  %v1735 = vpop.f32.mrb[0].mxu0
  %v1736 = vadd.f32 0.0, %v1735
  %v1737 = vpop.f32.mrb[0].mxu0
  %v1738 = vpop.f32.mrb[0].mxu0
  %v1739 = vadd.f32 0.0, %v1738
  %v1740 = vpop.f32.mrb[0].mxu0
  %1741 = vmatprep.mubr.bf16.mxu0 0
  %1742 = vmatmul.mubr.bf16.gmra.mrb[0].mxu0 %v880
  %v1743 = vpop.f32.mrb[0].mxu0
  %v1744 = vadd.f32 0.0, %v1743
  %v1745 = vpop.f32.mrb[0].mxu0
  %v1746 = vpop.f32.mrb[0].mxu0
  %v1747 = vadd.f32 0.0, %v1746
  %v1748 = vpop.f32.mrb[0].mxu0
  %1749 = vmatprep.mubr.bf16.mxu0 0
  %1750 = vmatmul.mubr.bf16.gmra.mrb[0].mxu0 %v881
  %v1751 = vpop.f32.mrb[0].mxu0
  %v1752 = vadd.f32 0.0, %v1751
  %v1753 = vpop.f32.mrb[0].mxu0
  %v1754 = vpop.f32.mrb[0].mxu0
  %v1755 = vadd.f32 0.0, %v1754
  %v1756 = vpop.f32.mrb[0].mxu0
  %1757 = vmatprep.mubr.bf16.mxu0 0
  %1758 = vmatmul.mubr.bf16.gmra.mrb[0].mxu0 %v882
  %v1759 = vpop.f32.mrb[0].mxu0
  %v1760 = vadd.f32 0.0, %v1759
  %v1761 = vpop.f32.mrb[0].mxu0
  %v1762 = vpop.f32.mrb[0].mxu0
  %v1763 = vadd.f32 0.0, %v1762
  %v1764 = vpop.f32.mrb[0].mxu0
  %1765 = vmatprep.mubr.bf16.mxu0 0
  %1766 = vmatmul.mubr.bf16.gmra.mrb[0].mxu0 %v883
  %v1767 = vpop.f32.mrb[0].mxu0
  %v1768 = vadd.f32 0.0, %v1767
  %v1769 = vpop.f32.mrb[0].mxu0
  %v1770 = vpop.f32.mrb[0].mxu0
  %v1771 = vadd.f32 0.0, %v1770
  %v1772 = vpop.f32.mrb[0].mxu0
  %1773 = vmatprep.mubr.bf16.mxu0 0
  %1774 = vmatmul.mubr.bf16.gmra.mrb[0].mxu0 %v884
  %v1775 = vpop.f32.mrb[0].mxu0
  %v1776 = vadd.f32 0.0, %v1775
  %v1777 = vpop.f32.mrb[0].mxu0
  %v1778 = vpop.f32.mrb[0].mxu0
  %v1779 = vadd.f32 0.0, %v1778
  %v1780 = vpop.f32.mrb[0].mxu0
  %1781 = vmatprep.mubr.bf16.mxu0 0
  %1782 = vmatmul.mubr.bf16.gmra.mrb[0].mxu0 %v885
  %v1783 = vpop.f32.mrb[0].mxu0
  %v1784 = vadd.f32 0.0, %v1783
  %v1785 = vpop.f32.mrb[0].mxu0
  %v1786 = vpop.f32.mrb[0].mxu0
  %v1787 = vadd.f32 0.0, %v1786
  %v1788 = vpop.f32.mrb[0].mxu0
  %1789 = vmatprep.mubr.bf16.mxu0 0
  %1790 = vmatmul.mubr.bf16.gmra.mrb[0].mxu0 %v886
  %v1791 = vpop.f32.mrb[0].mxu0
  %v1792 = vadd.f32 0.0, %v1791
  %v1793 = vpop.f32.mrb[0].mxu0
  %v1794 = vpop.f32.mrb[0].mxu0
  %v1795 = vadd.f32 0.0, %v1794
  %v1796 = vpop.f32.mrb[0].mxu0
  %1797 = vmatprep.mubr.bf16.mxu0 0
  %1798 = vmatmul.mubr.bf16.gmra.mrb[0].mxu0 %v887
  %v1799 = vpop.f32.mrb[0].mxu0
  %v1800 = vadd.f32 0.0, %v1799
  %v1801 = vpop.f32.mrb[0].mxu0
  %v1802 = vpop.f32.mrb[0].mxu0
  %v1803 = vadd.f32 0.0, %v1802
  %v1804 = vpop.f32.mrb[0].mxu0
  %1805 = vmatprep.mubr.bf16.mxu0 0
  %1806 = vmatmul.mubr.bf16.gmra.mrb[0].mxu0 %v888
  %v1807 = vpop.f32.mrb[0].mxu0
  %v1808 = vadd.f32 0.0, %v1807
  %v1809 = vpop.f32.mrb[0].mxu0
  %v1810 = vpop.f32.mrb[0].mxu0
  %v1811 = vadd.f32 0.0, %v1810
  %v1812 = vpop.f32.mrb[0].mxu0
  %1813 = vmatprep.mubr.bf16.mxu0 0
  %1814 = vmatmul.mubr.bf16.gmra.mrb[0].mxu0 %v889
  %v1815 = vpop.f32.mrb[0].mxu0
  %v1816 = vadd.f32 0.0, %v1815
  %v1817 = vpop.f32.mrb[0].mxu0
  %v1818 = vpop.f32.mrb[0].mxu0
  %v1819 = vadd.f32 0.0, %v1818
  %v1820 = vpop.f32.mrb[0].mxu0
  %1821 = vmatprep.mubr.bf16.mxu0 0
  %1822 = vmatmul.mubr.bf16.gmra.mrb[0].mxu0 %v890
  %v1823 = vpop.f32.mrb[0].mxu0
  %v1824 = vadd.f32 0.0, %v1823
  %v1825 = vpop.f32.mrb[0].mxu0
  %v1826 = vpop.f32.mrb[0].mxu0
  %v1827 = vadd.f32 0.0, %v1826
  %v1828 = vpop.f32.mrb[0].mxu0
  %1829 = vmatprep.mubr.bf16.mxu0 0
  %1830 = vmatmul.mubr.bf16.gmra.mrb[0].mxu0 %v891
  %v1831 = vpop.f32.mrb[0].mxu0
  %v1832 = vadd.f32 0.0, %v1831
  %v1833 = vpop.f32.mrb[0].mxu0
  %v1834 = vpop.f32.mrb[0].mxu0
  %v1835 = vadd.f32 0.0, %v1834
  %v1836 = vpop.f32.mrb[0].mxu0
  %1837 = vmatprep.mubr.bf16.mxu0 0
  %1838 = vmatmul.mubr.bf16.gmra.mrb[0].mxu0 %v892
  %v1839 = vpop.f32.mrb[0].mxu0
  %v1840 = vadd.f32 0.0, %v1839
  %v1841 = vpop.f32.mrb[0].mxu0
  %v1842 = vpop.f32.mrb[0].mxu0
  %v1843 = vadd.f32 0.0, %v1842
  %v1844 = vpop.f32.mrb[0].mxu0
  %1845 = vmatprep.mubr.bf16.mxu0 0
  %1846 = vmatmul.mubr.bf16.gmra.mrb[0].mxu0 %v893
  %v1847 = vpop.f32.mrb[0].mxu0
  %v1848 = vadd.f32 0.0, %v1847
  %v1849 = vpop.f32.mrb[0].mxu0
  %v1850 = vpop.f32.mrb[0].mxu0
  %v1851 = vadd.f32 0.0, %v1850
  %v1852 = vpop.f32.mrb[0].mxu0
  %1853 = vmatprep.mubr.bf16.mxu0 0
  %1854 = vmatmul.mubr.bf16.gmra.mrb[0].mxu0 %v894
  %v1855 = vpop.f32.mrb[0].mxu0
  %v1856 = vadd.f32 0.0, %v1855
  %v1857 = vpop.f32.mrb[0].mxu0
  %v1858 = vpop.f32.mrb[0].mxu0
  %v1859 = vadd.f32 0.0, %v1858
  %v1860 = vpop.f32.mrb[0].mxu0
  %1861 = vmatprep.mubr.bf16.mxu0 0
  %1862 = vmatmul.mubr.bf16.gmra.mrb[0].mxu0 %v895
  %v1863 = vpop.f32.mrb[0].mxu0
  %v1864 = vadd.f32 0.0, %v1863
  %v1865 = vpop.f32.mrb[0].mxu0
  %v1866 = vpop.f32.mrb[0].mxu0
  %v1867 = vadd.f32 0.0, %v1866
  %v1868 = vpop.f32.mrb[0].mxu0
  %1869 = vmatprep.mubr.bf16.mxu0 0
  %1870 = vmatmul.mubr.bf16.gmra.mrb[0].mxu0 %v896
  %v1871 = vpop.f32.mrb[0].mxu0
  %v1872 = vadd.f32 0.0, %v1871
  %v1873 = vpop.f32.mrb[0].mxu0
  %v1874 = vpop.f32.mrb[0].mxu0
  %v1875 = vadd.f32 0.0, %v1874
  %v1876 = vpop.f32.mrb[0].mxu0
  %1877 = vmatprep.mubr.bf16.mxu0 0
  %1878 = vmatmul.mubr.bf16.gmra.mrb[0].mxu0 %v897
  %v1879 = vpop.f32.mrb[0].mxu0
  %v1880 = vadd.f32 0.0, %v1879
  %v1881 = vpop.f32.mrb[0].mxu0
  %v1882 = vpop.f32.mrb[0].mxu0
  %v1883 = vadd.f32 0.0, %v1882
  %v1884 = vpop.f32.mrb[0].mxu0
  %1885 = vmatprep.mubr.bf16.mxu0 0
  %1886 = vmatmul.mubr.bf16.gmra.mrb[0].mxu0 %v898
  %v1887 = vpop.f32.mrb[0].mxu0
  %v1888 = vadd.f32 0.0, %v1887
  %v1889 = vpop.f32.mrb[0].mxu0
  %v1890 = vpop.f32.mrb[0].mxu0
  %v1891 = vadd.f32 0.0, %v1890
  %v1892 = vpop.f32.mrb[0].mxu0
  %1893 = vmatprep.mubr.bf16.mxu0 0
  %1894 = vmatmul.mubr.bf16.gmra.mrb[0].mxu0 %v899
  %v1895 = vpop.f32.mrb[0].mxu0
  %v1896 = vadd.f32 0.0, %v1895
  %v1897 = vpop.f32.mrb[0].mxu0
  %v1898 = vpop.f32.mrb[0].mxu0
  %v1899 = vadd.f32 0.0, %v1898
  %v1900 = vpop.f32.mrb[0].mxu0
  %1901 = vmatprep.mubr.bf16.mxu0 0
  %1902 = vmatmul.mubr.bf16.gmra.mrb[0].mxu0 %v900
  %v1903 = vpop.f32.mrb[0].mxu0
  %v1904 = vadd.f32 0.0, %v1903
  %v1905 = vpop.f32.mrb[0].mxu0
  %v1906 = vpop.f32.mrb[0].mxu0
  %v1907 = vadd.f32 0.0, %v1906
  %v1908 = vpop.f32.mrb[0].mxu0
  %1909 = vmatprep.mubr.bf16.mxu0 0
  %1910 = vmatmul.mubr.bf16.gmra.mrb[0].mxu0 %v901
  %v1911 = vpop.f32.mrb[0].mxu0
  %v1912 = vadd.f32 0.0, %v1911
  %v1913 = vpop.f32.mrb[0].mxu0
  %v1914 = vpop.f32.mrb[0].mxu0
  %v1915 = vadd.f32 0.0, %v1914
  %v1916 = vpop.f32.mrb[0].mxu0
  %1917 = vmatprep.mubr.bf16.mxu0 0
  %1918 = vmatmul.mubr.bf16.gmra.mrb[0].mxu0 %v902
  %v1919 = vpop.f32.mrb[0].mxu0
  %v1920 = vadd.f32 0.0, %v1919
  %v1921 = vpop.f32.mrb[0].mxu0
  %v1922 = vpop.f32.mrb[0].mxu0
  %v1923 = vadd.f32 0.0, %v1922
  %v1924 = vpop.f32.mrb[0].mxu0
  %1925 = vmatprep.mubr.bf16.mxu0 0
  %1926 = vmatmul.mubr.bf16.gmra.mrb[0].mxu0 %v903
  %v1927 = vpop.f32.mrb[0].mxu0
  %v1928 = vadd.f32 0.0, %v1927
  %v1929 = vpop.f32.mrb[0].mxu0
  %v1930 = vpop.f32.mrb[0].mxu0
  %v1931 = vadd.f32 0.0, %v1930
  %v1932 = vpop.f32.mrb[0].mxu0
  %1933 = vmatprep.mubr.bf16.mxu0 0
  %1934 = vmatmul.mubr.bf16.gmra.mrb[0].mxu0 %v904
  %v1935 = vpop.f32.mrb[0].mxu0
  %v1936 = vadd.f32 0.0, %v1935
  %v1937 = vpop.f32.mrb[0].mxu0
  %v1938 = vpop.f32.mrb[0].mxu0
  %v1939 = vadd.f32 0.0, %v1938
  %v1940 = vpop.f32.mrb[0].mxu0
  %1941 = vmatprep.mubr.bf16.mxu0 0
  %1942 = vmatmul.mubr.bf16.gmra.mrb[0].mxu0 %v905
  %v1943 = vpop.f32.mrb[0].mxu0
  %v1944 = vadd.f32 0.0, %v1943
  %v1945 = vpop.f32.mrb[0].mxu0
  %v1946 = vpop.f32.mrb[0].mxu0
  %v1947 = vadd.f32 0.0, %v1946
  %v1948 = vpop.f32.mrb[0].mxu0
  %1949 = vmatprep.mubr.bf16.mxu0 0
  %1950 = vmatmul.mubr.bf16.gmra.mrb[0].mxu0 %v906
  %v1951 = vpop.f32.mrb[0].mxu0
  %v1952 = vadd.f32 0.0, %v1951
  %v1953 = vpop.f32.mrb[0].mxu0
  %v1954 = vpop.f32.mrb[0].mxu0
  %v1955 = vadd.f32 0.0, %v1954
  %v1956 = vpop.f32.mrb[0].mxu0
  %1957 = vmatprep.mubr.bf16.mxu0 0
  %1958 = vmatmul.mubr.bf16.gmra.mrb[0].mxu0 %v907
  %v1959 = vpop.f32.mrb[0].mxu0
  %v1960 = vadd.f32 0.0, %v1959
  %v1961 = vpop.f32.mrb[0].mxu0
  %v1962 = vpop.f32.mrb[0].mxu0
  %v1963 = vadd.f32 0.0, %v1962
  %v1964 = vpop.f32.mrb[0].mxu0
  %1965 = vmatprep.mubr.bf16.mxu0 0
  %1966 = vmatmul.mubr.bf16.gmra.mrb[0].mxu0 %v908
  %v1967 = vpop.f32.mrb[0].mxu0
  %v1968 = vadd.f32 0.0, %v1967
  %v1969 = vpop.f32.mrb[0].mxu0
  %v1970 = vpop.f32.mrb[0].mxu0
  %v1971 = vadd.f32 0.0, %v1970
  %v1972 = vpop.f32.mrb[0].mxu0
  %1973 = vmatprep.mubr.bf16.mxu0 0
  %1974 = vmatmul.mubr.bf16.gmra.mrb[0].mxu0 %v909
  %v1975 = vpop.f32.mrb[0].mxu0
  %v1976 = vadd.f32 0.0, %v1975
  %v1977 = vpop.f32.mrb[0].mxu0
  %v1978 = vpop.f32.mrb[0].mxu0
  %v1979 = vadd.f32 0.0, %v1978
  %v1980 = vpop.f32.mrb[0].mxu0
  %1981 = vmatprep.mubr.bf16.mxu0 0
  %1982 = vmatmul.mubr.bf16.gmra.mrb[0].mxu0 %v910
  %v1983 = vpop.f32.mrb[0].mxu0
  %v1984 = vadd.f32 0.0, %v1983
  %v1985 = vpop.f32.mrb[0].mxu0
  %v1986 = vpop.f32.mrb[0].mxu0
  %v1987 = vadd.f32 0.0, %v1986
  %v1988 = vpop.f32.mrb[0].mxu0
  %1989 = vmatprep.mubr.bf16.mxu0 0
  %1990 = vmatmul.mubr.bf16.gmra.mrb[0].mxu0 %v911
  %v1991 = vpop.f32.mrb[0].mxu0
  %v1992 = vadd.f32 0.0, %v1991
  %v1993 = vpop.f32.mrb[0].mxu0
  %v1994 = vpop.f32.mrb[0].mxu0
  %v1995 = vadd.f32 0.0, %v1994
  %v1996 = vpop.f32.mrb[0].mxu0
  %1997 = vmatprep.mubr.bf16.mxu0 0
  %1998 = vmatmul.mubr.bf16.gmra.mrb[0].mxu0 %v912
  %v1999 = vpop.f32.mrb[0].mxu0
  %v2000 = vadd.f32 0.0, %v1999
  %v2001 = vpop.f32.mrb[0].mxu0
  %v2002 = vpop.f32.mrb[0].mxu0
  %v2003 = vadd.f32 0.0, %v2002
  %v2004 = vpop.f32.mrb[0].mxu0
  %2005 = vmatprep.mubr.bf16.mxu0 0
  %2006 = vmatmul.mubr.bf16.gmra.mrb[0].mxu0 %v913
  %v2007 = vpop.f32.mrb[0].mxu0
  %v2008 = vadd.f32 0.0, %v2007
  %v2009 = vpop.f32.mrb[0].mxu0
  %v2010 = vpop.f32.mrb[0].mxu0
  %v2011 = vadd.f32 0.0, %v2010
  %v2012 = vpop.f32.mrb[0].mxu0
  %2013 = vmatprep.mubr.bf16.mxu0 0
  %2014 = vmatmul.mubr.bf16.gmra.mrb[0].mxu0 %v914
  %v2015 = vpop.f32.mrb[0].mxu0
  %v2016 = vadd.f32 0.0, %v2015
  %v2017 = vpop.f32.mrb[0].mxu0
  %v2018 = vpop.f32.mrb[0].mxu0
  %v2019 = vadd.f32 0.0, %v2018
  %v2020 = vpop.f32.mrb[0].mxu0
  %2021 = vmatprep.mubr.bf16.mxu0 0
  %2022 = vmatmul.mubr.bf16.gmra.mrb[0].mxu0 %v915
  %v2023 = vpop.f32.mrb[0].mxu0
  %v2024 = vadd.f32 0.0, %v2023
  %v2025 = vpop.f32.mrb[0].mxu0
  %v2026 = vpop.f32.mrb[0].mxu0
  %v2027 = vadd.f32 0.0, %v2026
  %v2028 = vpop.f32.mrb[0].mxu0
  %2029 = vmatprep.mubr.bf16.mxu0 0
  %2030 = vmatmul.mubr.bf16.gmra.mrb[0].mxu0 %v916
  %v2031 = vpop.f32.mrb[0].mxu0
  %v2032 = vadd.f32 0.0, %v2031
  %v2033 = vpop.f32.mrb[0].mxu0
  %v2034 = vpop.f32.mrb[0].mxu0
  %v2035 = vadd.f32 0.0, %v2034
  %v2036 = vpop.f32.mrb[0].mxu0
  %2037 = vmatprep.mubr.bf16.mxu0 0
  %2038 = vmatmul.mubr.bf16.gmra.mrb[0].mxu0 %v917
  %v2039 = vpop.f32.mrb[0].mxu0
  %v2040 = vadd.f32 0.0, %v2039
  %v2041 = vpop.f32.mrb[0].mxu0
  %v2042 = vpop.f32.mrb[0].mxu0
  %v2043 = vadd.f32 0.0, %v2042
  %v2044 = vpop.f32.mrb[0].mxu0
  %2045 = vmatprep.mubr.bf16.mxu0 0
  %2046 = vmatmul.mubr.bf16.gmra.mrb[0].mxu0 %v918
  %v2047 = vpop.f32.mrb[0].mxu0
  %v2048 = vadd.f32 0.0, %v2047
  %v2049 = vpop.f32.mrb[0].mxu0
  %v2050 = vpop.f32.mrb[0].mxu0
  %v2051 = vadd.f32 0.0, %v2050
  %v2052 = vpop.f32.mrb[0].mxu0
  %2053 = vmatprep.mubr.bf16.mxu0 0
  %2054 = vmatmul.mubr.bf16.gmra.mrb[0].mxu0 %v919
  %v2055 = vpop.f32.mrb[0].mxu0
  %v2056 = vadd.f32 0.0, %v2055
  %v2057 = vpop.f32.mrb[0].mxu0
  %v2058 = vpop.f32.mrb[0].mxu0
  %v2059 = vadd.f32 0.0, %v2058
  %v2060 = vpop.f32.mrb[0].mxu0
  %2061 = vmatprep.mubr.bf16.mxu0 0
  %2062 = vmatmul.mubr.bf16.gmra.mrb[0].mxu0 %v920
  %v2063 = vpop.f32.mrb[0].mxu0
  %v2064 = vadd.f32 0.0, %v2063
  %v2065 = vpop.f32.mrb[0].mxu0
  %v2066 = vpop.f32.mrb[0].mxu0
  %v2067 = vadd.f32 0.0, %v2066
  %v2068 = vpop.f32.mrb[0].mxu0
  %2069 = vmatprep.mubr.bf16.mxu0 0
  %2070 = vmatmul.mubr.bf16.gmra.mrb[0].mxu0 %v921
  %v2071 = vpop.f32.mrb[0].mxu0
  %v2072 = vadd.f32 0.0, %v2071
  %v2073 = vpop.f32.mrb[0].mxu0
  %v2074 = vpop.f32.mrb[0].mxu0
  %v2075 = vadd.f32 0.0, %v2074
  %v2076 = vpop.f32.mrb[0].mxu0
  %2077 = vmatprep.mubr.bf16.mxu0 0
  %2078 = vmatmul.mubr.bf16.gmra.mrb[0].mxu0 %v922
  %v2079 = vpop.f32.mrb[0].mxu0
  %v2080 = vadd.f32 0.0, %v2079
  %v2081 = vpop.f32.mrb[0].mxu0
  %v2082 = vpop.f32.mrb[0].mxu0
  %v2083 = vadd.f32 0.0, %v2082
  %v2084 = vpop.f32.mrb[0].mxu0
  %2085 = vmatprep.mubr.bf16.mxu0 0
  %2086 = vmatmul.mubr.bf16.gmra.mrb[0].mxu0 %v923
  %v2087 = vpop.f32.mrb[0].mxu0
  %v2088 = vadd.f32 0.0, %v2087
  %v2089 = vpop.f32.mrb[0].mxu0
  %v2090 = vpop.f32.mrb[0].mxu0
  %v2091 = vadd.f32 0.0, %v2090
  %v2092 = vpop.f32.mrb[0].mxu0
  %2093 = vmatprep.mubr.bf16.mxu0 0
  %2094 = vmatmul.mubr.bf16.gmra.mrb[0].mxu0 %v924
  %v2095 = vpop.f32.mrb[0].mxu0
  %v2096 = vadd.f32 0.0, %v2095
  %v2097 = vpop.f32.mrb[0].mxu0
  %v2098 = vpop.f32.mrb[0].mxu0
  %v2099 = vadd.f32 0.0, %v2098
  %v2100 = vpop.f32.mrb[0].mxu0
  %2101 = vmatprep.mubr.bf16.mxu0 0
  %2102 = vmatmul.mubr.bf16.gmra.mrb[0].mxu0 %v925
  %v2103 = vpop.f32.mrb[0].mxu0
  %v2104 = vadd.f32 0.0, %v2103
  %v2105 = vpop.f32.mrb[0].mxu0
  %v2106 = vpop.f32.mrb[0].mxu0
  %v2107 = vadd.f32 0.0, %v2106
  %v2108 = vpop.f32.mrb[0].mxu0
  %2109 = vmatprep.mubr.bf16.mxu0 0
  %2110 = vmatmul.mubr.bf16.gmra.mrb[0].mxu0 %v926
  %v2111 = vpop.f32.mrb[0].mxu0
  %v2112 = vadd.f32 0.0, %v2111
  %v2113 = vpop.f32.mrb[0].mxu0
  %v2114 = vpop.f32.mrb[0].mxu0
  %v2115 = vadd.f32 0.0, %v2114
  %v2116 = vpop.f32.mrb[0].mxu0
  %2117 = vmatprep.mubr.bf16.mxu0 0
  %2118 = vmatmul.mubr.bf16.gmra.mrb[0].mxu0 %v927
  %v2119 = vpop.f32.mrb[0].mxu0
  %v2120 = vadd.f32 0.0, %v2119
  %v2121 = vpop.f32.mrb[0].mxu0
  %v2122 = vpop.f32.mrb[0].mxu0
  %v2123 = vadd.f32 0.0, %v2122
  %v2124 = vpop.f32.mrb[0].mxu0
  %2125 = vmatprep.mubr.bf16.mxu0 0
  %2126 = vmatmul.mubr.bf16.gmra.mrb[0].mxu0 %v928
  %v2127 = vpop.f32.mrb[0].mxu0
  %v2128 = vadd.f32 0.0, %v2127
  %v2129 = vpop.f32.mrb[0].mxu0
  %v2130 = vpop.f32.mrb[0].mxu0
  %v2131 = vadd.f32 0.0, %v2130
  %v2132 = vpop.f32.mrb[0].mxu0
  %2133 = vmatprep.mubr.bf16.mxu0 0
  %2134 = vmatmul.mubr.bf16.gmra.mrb[0].mxu0 %v929
  %v2135 = vpop.f32.mrb[0].mxu0
  %v2136 = vadd.f32 0.0, %v2135
  %v2137 = vpop.f32.mrb[0].mxu0
  %v2138 = vpop.f32.mrb[0].mxu0
  %v2139 = vadd.f32 0.0, %v2138
  %v2140 = vpop.f32.mrb[0].mxu0
  %2141 = vmatprep.mubr.bf16.mxu0 0
  %2142 = vmatmul.mubr.bf16.gmra.mrb[0].mxu0 %v930
  %v2143 = vpop.f32.mrb[0].mxu0
  %v2144 = vadd.f32 0.0, %v2143
  %v2145 = vpop.f32.mrb[0].mxu0
  %v2146 = vpop.f32.mrb[0].mxu0
  %v2147 = vadd.f32 0.0, %v2146
  %v2148 = vpop.f32.mrb[0].mxu0
  %2149 = vmatprep.mubr.bf16.mxu0 0
  %2150 = vmatmul.mubr.bf16.gmra.mrb[0].mxu0 %v931
  %v2151 = vpop.f32.mrb[0].mxu0
  %v2152 = vadd.f32 0.0, %v2151
  %v2153 = vpop.f32.mrb[0].mxu0
  %v2154 = vpop.f32.mrb[0].mxu0
  %v2155 = vadd.f32 0.0, %v2154
  %v2156 = vpop.f32.mrb[0].mxu0
  %2157 = vmatprep.mubr.bf16.mxu0 0
  %2158 = vmatmul.mubr.bf16.gmra.mrb[0].mxu0 %v932
  %v2159 = vpop.f32.mrb[0].mxu0
  %v2160 = vadd.f32 0.0, %v2159
  %v2161 = vpop.f32.mrb[0].mxu0
  %v2162 = vpop.f32.mrb[0].mxu0
  %v2163 = vadd.f32 0.0, %v2162
  %v2164 = vpop.f32.mrb[0].mxu0
  %2165 = vdwg.mxu0
  %v2166 = vmax.f32 %v1144, %v1272
  %v2167 = vmax.f32 %v1147, %v1275
  %v2168 = vmax.f32 %v1152, %v1280
  %v2169 = vmax.f32 %v1155, %v1283
  %v2170 = vmax.f32 %v1160, %v1288
  %v2171 = vmax.f32 %v1163, %v1291
  %v2172 = vmax.f32 %v1168, %v1296
  %v2173 = vmax.f32 %v1171, %v1299
  %v2174 = vmax.f32 %v1176, %v1304
  %v2175 = vmax.f32 %v1179, %v1307
  %v2176 = vmax.f32 %v1184, %v1312
  %v2177 = vmax.f32 %v1187, %v1315
  %v2178 = vmax.f32 %v1192, %v1320
  %v2179 = vmax.f32 %v1195, %v1323
  %v2180 = vmax.f32 %v1200, %v1328
  %v2181 = vmax.f32 %v1203, %v1331
  %v2182 = vmax.f32 %v1208, %v1336
  %v2183 = vmax.f32 %v1211, %v1339
  %v2184 = vmax.f32 %v1216, %v1344
  %v2185 = vmax.f32 %v1219, %v1347
  %v2186 = vmax.f32 %v1224, %v1352
  %v2187 = vmax.f32 %v1227, %v1355
  %v2188 = vmax.f32 %v1232, %v1360
  %v2189 = vmax.f32 %v1235, %v1363
  %v2190 = vmax.f32 %v1240, %v1368
  %v2191 = vmax.f32 %v1243, %v1371
  %v2192 = vmax.f32 %v1248, %v1376
  %v2193 = vmax.f32 %v1251, %v1379
  %v2194 = vmax.f32 %v1256, %v1384
  %v2195 = vmax.f32 %v1259, %v1387
  %v2196 = vmax.f32 %v1264, %v1392
  %v2197 = vmax.f32 %v1267, %v1395
  %v2198 = vmax.f32 %v1656, %v1784
  %v2199 = vmax.f32 %v1659, %v1787
  %v2200 = vmax.f32 %v1664, %v1792
  %v2201 = vmax.f32 %v1667, %v1795
  %v2202 = vmax.f32 %v1672, %v1800
  %v2203 = vmax.f32 %v1675, %v1803
  %v2204 = vmax.f32 %v1680, %v1808
  %v2205 = vmax.f32 %v1683, %v1811
  %v2206 = vmax.f32 %v1688, %v1816
  %v2207 = vmax.f32 %v1691, %v1819
  %v2208 = vmax.f32 %v1696, %v1824
  %v2209 = vmax.f32 %v1699, %v1827
  %v2210 = vmax.f32 %v1704, %v1832
  %v2211 = vmax.f32 %v1707, %v1835
  %v2212 = vmax.f32 %v1712, %v1840
  %v2213 = vmax.f32 %v1715, %v1843
  %v2214 = vmax.f32 %v1720, %v1848
  %v2215 = vmax.f32 %v1723, %v1851
  %v2216 = vmax.f32 %v1728, %v1856
  %v2217 = vmax.f32 %v1731, %v1859
  %v2218 = vmax.f32 %v1736, %v1864
  %v2219 = vmax.f32 %v1739, %v1867
  %v2220 = vmax.f32 %v1744, %v1872
  %v2221 = vmax.f32 %v1747, %v1875
  %v2222 = vmax.f32 %v1752, %v1880
  %v2223 = vmax.f32 %v1755, %v1883
  %v2224 = vmax.f32 %v1760, %v1888
  %v2225 = vmax.f32 %v1763, %v1891
  %v2226 = vmax.f32 %v1768, %v1896
  %v2227 = vmax.f32 %v1771, %v1899
  %v2228 = vmax.f32 %v1776, %v1904
  %v2229 = vmax.f32 %v1779, %v1907
  %v2230 = vmax.f32 %v1400, %v1528
  %v2231 = vmax.f32 %v1403, %v1531
  %v2232 = vmax.f32 %v1408, %v1536
  %v2233 = vmax.f32 %v1411, %v1539
  %v2234 = vmax.f32 %v1416, %v1544
  %v2235 = vmax.f32 %v1419, %v1547
  %v2236 = vmax.f32 %v1424, %v1552
  %v2237 = vmax.f32 %v1427, %v1555
  %v2238 = vmax.f32 %v1432, %v1560
  %v2239 = vmax.f32 %v1435, %v1563
  %v2240 = vmax.f32 %v1440, %v1568
  %v2241 = vmax.f32 %v1443, %v1571
  %v2242 = vmax.f32 %v1448, %v1576
  %v2243 = vmax.f32 %v1451, %v1579
  %v2244 = vmax.f32 %v1456, %v1584
  %v2245 = vmax.f32 %v1459, %v1587
  %v2246 = vmax.f32 %v1464, %v1592
  %v2247 = vmax.f32 %v1467, %v1595
  %v2248 = vmax.f32 %v1472, %v1600
  %v2249 = vmax.f32 %v1475, %v1603
  %v2250 = vmax.f32 %v1480, %v1608
  %v2251 = vmax.f32 %v1483, %v1611
  %v2252 = vmax.f32 %v1488, %v1616
  %v2253 = vmax.f32 %v1491, %v1619
  %v2254 = vmax.f32 %v1496, %v1624
  %v2255 = vmax.f32 %v1499, %v1627
  %v2256 = vmax.f32 %v1504, %v1632
  %v2257 = vmax.f32 %v1507, %v1635
  %v2258 = vmax.f32 %v1512, %v1640
  %v2259 = vmax.f32 %v1515, %v1643
  %v2260 = vmax.f32 %v1520, %v1648
  %v2261 = vmax.f32 %v1523, %v1651
  %v2262 = vmax.f32 %v1912, %v2040
  %v2263 = vmax.f32 %v1915, %v2043
  %v2264 = vmax.f32 %v1920, %v2048
  %v2265 = vmax.f32 %v1923, %v2051
  %v2266 = vmax.f32 %v1928, %v2056
  %v2267 = vmax.f32 %v1931, %v2059
  %v2268 = vmax.f32 %v1936, %v2064
  %v2269 = vmax.f32 %v1939, %v2067
  %v2270 = vmax.f32 %v1944, %v2072
  %v2271 = vmax.f32 %v1947, %v2075
  %v2272 = vmax.f32 %v1952, %v2080
  %v2273 = vmax.f32 %v1955, %v2083
  %v2274 = vmax.f32 %v1960, %v2088
  %v2275 = vmax.f32 %v1963, %v2091
  %v2276 = vmax.f32 %v1968, %v2096
  %v2277 = vmax.f32 %v1971, %v2099
  %v2278 = vmax.f32 %v1976, %v2104
  %v2279 = vmax.f32 %v1979, %v2107
  %v2280 = vmax.f32 %v1984, %v2112
  %v2281 = vmax.f32 %v1987, %v2115
  %v2282 = vmax.f32 %v1992, %v2120
  %v2283 = vmax.f32 %v1995, %v2123
  %v2284 = vmax.f32 %v2000, %v2128
  %v2285 = vmax.f32 %v2003, %v2131
  %v2286 = vmax.f32 %v2008, %v2136
  %v2287 = vmax.f32 %v2011, %v2139
  %v2288 = vmax.f32 %v2016, %v2144
  %v2289 = vmax.f32 %v2019, %v2147
  %v2290 = vmax.f32 %v2024, %v2152
  %v2291 = vmax.f32 %v2027, %v2155
  %v2292 = vmax.f32 %v2032, %v2160
  %v2293 = vmax.f32 %v2035, %v2163
  %v2294 = vmax.f32 %v2166, %v2167
  %v2295 = vmax.f32 %v2168, %v2169
  %v2296 = vmax.f32 %v2170, %v2171
  %v2297 = vmax.f32 %v2172, %v2173
  %v2298 = vmax.f32 %v2174, %v2175
  %v2299 = vmax.f32 %v2176, %v2177
  %v2300 = vmax.f32 %v2178, %v2179
  %v2301 = vmax.f32 %v2180, %v2181
  %v2302 = vmax.f32 %v2182, %v2183
  %v2303 = vmax.f32 %v2184, %v2185
  %v2304 = vmax.f32 %v2186, %v2187
  %v2305 = vmax.f32 %v2188, %v2189
  %v2306 = vmax.f32 %v2190, %v2191
  %v2307 = vmax.f32 %v2192, %v2193
  %v2308 = vmax.f32 %v2194, %v2195
  %v2309 = vmax.f32 %v2196, %v2197
  %v2310 = vmax.f32 %v2198, %v2199
  %v2311 = vmax.f32 %v2200, %v2201
  %v2312 = vmax.f32 %v2202, %v2203
  %v2313 = vmax.f32 %v2204, %v2205
  %v2314 = vmax.f32 %v2206, %v2207
  %v2315 = vmax.f32 %v2208, %v2209
  %v2316 = vmax.f32 %v2210, %v2211
  %v2317 = vmax.f32 %v2212, %v2213
  %v2318 = vmax.f32 %v2214, %v2215
  %v2319 = vmax.f32 %v2216, %v2217
  %v2320 = vmax.f32 %v2218, %v2219
  %v2321 = vmax.f32 %v2220, %v2221
  %v2322 = vmax.f32 %v2222, %v2223
  %v2323 = vmax.f32 %v2224, %v2225
  %v2324 = vmax.f32 %v2226, %v2227
  %v2325 = vmax.f32 %v2228, %v2229
  %v2326 = vmax.f32 %v2230, %v2231
  %v2327 = vmax.f32 %v2232, %v2233
  %v2328 = vmax.f32 %v2234, %v2235
  %v2329 = vmax.f32 %v2236, %v2237
  %v2330 = vmax.f32 %v2238, %v2239
  %v2331 = vmax.f32 %v2240, %v2241
  %v2332 = vmax.f32 %v2242, %v2243
  %v2333 = vmax.f32 %v2244, %v2245
  %v2334 = vmax.f32 %v2246, %v2247
  %v2335 = vmax.f32 %v2248, %v2249
  %v2336 = vmax.f32 %v2250, %v2251
  %v2337 = vmax.f32 %v2252, %v2253
  %v2338 = vmax.f32 %v2254, %v2255
  %v2339 = vmax.f32 %v2256, %v2257
  %v2340 = vmax.f32 %v2258, %v2259
  %v2341 = vmax.f32 %v2260, %v2261
  %v2342 = vmax.f32 %v2262, %v2263
  %v2343 = vmax.f32 %v2264, %v2265
  %v2344 = vmax.f32 %v2266, %v2267
  %v2345 = vmax.f32 %v2268, %v2269
  %v2346 = vmax.f32 %v2270, %v2271
  %v2347 = vmax.f32 %v2272, %v2273
  %v2348 = vmax.f32 %v2274, %v2275
  %v2349 = vmax.f32 %v2276, %v2277
  %v2350 = vmax.f32 %v2278, %v2279
  %v2351 = vmax.f32 %v2280, %v2281
  %v2352 = vmax.f32 %v2282, %v2283
  %v2353 = vmax.f32 %v2284, %v2285
  %v2354 = vmax.f32 %v2286, %v2287
  %v2355 = vmax.f32 %v2288, %v2289
  %v2356 = vmax.f32 %v2290, %v2291
  %v2357 = vmax.f32 %v2292, %v2293
  %v2358 = vld [vmem:[%s2] sm:$0x1]
  %v2360 = vlaneseq
  %v2361 = vshrl.u32 %v2360, 7
  %v2362 = vsub.s32 0, %v2361
  %v2363 = vrot.slane %v2358, %v2362
  %v2365 = vadd.f32 %v2294, %v2363
  %v2366 = vadd.f32 %v2295, %v2363
  %v2367 = vadd.f32 %v2296, %v2363
  %v2368 = vadd.f32 %v2297, %v2363
  %v2369 = vadd.f32 %v2298, %v2363
  %v2370 = vadd.f32 %v2299, %v2363
  %v2371 = vadd.f32 %v2300, %v2363
  %v2372 = vadd.f32 %v2301, %v2363
  %v2373 = vadd.f32 %v2302, %v2363
  %v2374 = vadd.f32 %v2303, %v2363
  %v2375 = vadd.f32 %v2304, %v2363
  %v2376 = vadd.f32 %v2305, %v2363
  %v2377 = vadd.f32 %v2306, %v2363
  %v2378 = vadd.f32 %v2307, %v2363
  %v2379 = vadd.f32 %v2308, %v2363
  %v2380 = vadd.f32 %v2309, %v2363
  %v2381 = vadd.f32 %v2310, %v2363
  %v2382 = vadd.f32 %v2311, %v2363
  %v2383 = vadd.f32 %v2312, %v2363
  %v2384 = vadd.f32 %v2313, %v2363
  %v2385 = vadd.f32 %v2314, %v2363
  %v2386 = vadd.f32 %v2315, %v2363
  %v2387 = vadd.f32 %v2316, %v2363
  %v2388 = vadd.f32 %v2317, %v2363
  %v2389 = vadd.f32 %v2318, %v2363
  %v2390 = vadd.f32 %v2319, %v2363
  %v2391 = vadd.f32 %v2320, %v2363
  %v2392 = vadd.f32 %v2321, %v2363
  %v2393 = vadd.f32 %v2322, %v2363
  %v2394 = vadd.f32 %v2323, %v2363
  %v2395 = vadd.f32 %v2324, %v2363
  %v2396 = vadd.f32 %v2325, %v2363
  %v2397 = vmax.f32 %v2365, 0.0
  %v2398 = vmax.f32 %v2366, 0.0
  %v2399 = vmax.f32 %v2367, 0.0
  %v2400 = vmax.f32 %v2368, 0.0
  %v2401 = vmax.f32 %v2369, 0.0
  %v2402 = vmax.f32 %v2370, 0.0
  %v2403 = vmax.f32 %v2371, 0.0
  %v2404 = vmax.f32 %v2372, 0.0
  %v2405 = vmax.f32 %v2373, 0.0
  %v2406 = vmax.f32 %v2374, 0.0
  %v2407 = vmax.f32 %v2375, 0.0
  %v2408 = vmax.f32 %v2376, 0.0
  %v2409 = vmax.f32 %v2377, 0.0
  %v2410 = vmax.f32 %v2378, 0.0
  %v2411 = vmax.f32 %v2379, 0.0
  %v2412 = vmax.f32 %v2380, 0.0
  %v2413 = vmax.f32 %v2381, 0.0
  %v2414 = vmax.f32 %v2382, 0.0
  %v2415 = vmax.f32 %v2383, 0.0
  %v2416 = vmax.f32 %v2384, 0.0
  %v2417 = vmax.f32 %v2385, 0.0
  %v2418 = vmax.f32 %v2386, 0.0
  %v2419 = vmax.f32 %v2387, 0.0
  %v2420 = vmax.f32 %v2388, 0.0
  %v2421 = vmax.f32 %v2389, 0.0
  %v2422 = vmax.f32 %v2390, 0.0
  %v2423 = vmax.f32 %v2391, 0.0
  %v2424 = vmax.f32 %v2392, 0.0
  %v2425 = vmax.f32 %v2393, 0.0
  %v2426 = vmax.f32 %v2394, 0.0
  %v2427 = vmax.f32 %v2395, 0.0
  %v2428 = vmax.f32 %v2396, 0.0
  %v2429 = vpack.c.bf16 %v2397, %v2397
  %v2430 = vpack.c.bf16 %v2398, %v2398
  %v2431 = vpack.c.bf16 %v2399, %v2399
  %v2432 = vpack.c.bf16 %v2400, %v2400
  %v2433 = vpack.c.bf16 %v2401, %v2401
  %v2434 = vpack.c.bf16 %v2402, %v2402
  %v2435 = vpack.c.bf16 %v2403, %v2403
  %v2436 = vpack.c.bf16 %v2404, %v2404
  %v2437 = vpack.c.bf16 %v2405, %v2405
  %v2438 = vpack.c.bf16 %v2406, %v2406
  %v2439 = vpack.c.bf16 %v2407, %v2407
  %v2440 = vpack.c.bf16 %v2408, %v2408
  %v2441 = vpack.c.bf16 %v2409, %v2409
  %v2442 = vpack.c.bf16 %v2410, %v2410
  %v2443 = vpack.c.bf16 %v2411, %v2411
  %v2444 = vpack.c.bf16 %v2412, %v2412
  %v2445 = vpack.c.bf16 %v2413, %v2413
  %v2446 = vpack.c.bf16 %v2414, %v2414
  %v2447 = vpack.c.bf16 %v2415, %v2415
  %v2448 = vpack.c.bf16 %v2416, %v2416
  %v2449 = vpack.c.bf16 %v2417, %v2417
  %v2450 = vpack.c.bf16 %v2418, %v2418
  %v2451 = vpack.c.bf16 %v2419, %v2419
  %v2452 = vpack.c.bf16 %v2420, %v2420
  %v2453 = vpack.c.bf16 %v2421, %v2421
  %v2454 = vpack.c.bf16 %v2422, %v2422
  %v2455 = vpack.c.bf16 %v2423, %v2423
  %v2456 = vpack.c.bf16 %v2424, %v2424
  %v2457 = vpack.c.bf16 %v2425, %v2425
  %v2458 = vpack.c.bf16 %v2426, %v2426
  %v2459 = vpack.c.bf16 %v2427, %v2427
  %v2460 = vpack.c.bf16 %v2428, %v2428
  %v2461 = vadd.f32 %v2326, %v2363
  %v2462 = vadd.f32 %v2327, %v2363
  %v2463 = vadd.f32 %v2328, %v2363
  %v2464 = vadd.f32 %v2329, %v2363
  %v2465 = vadd.f32 %v2330, %v2363
  %v2466 = vadd.f32 %v2331, %v2363
  %v2467 = vadd.f32 %v2332, %v2363
  %v2468 = vadd.f32 %v2333, %v2363
  %v2469 = vadd.f32 %v2334, %v2363
  %v2470 = vadd.f32 %v2335, %v2363
  %v2471 = vadd.f32 %v2336, %v2363
  %v2472 = vadd.f32 %v2337, %v2363
  %v2473 = vadd.f32 %v2338, %v2363
  %v2474 = vadd.f32 %v2339, %v2363
  %v2475 = vadd.f32 %v2340, %v2363
  %v2476 = vadd.f32 %v2341, %v2363
  %v2477 = vadd.f32 %v2342, %v2363
  %v2478 = vadd.f32 %v2343, %v2363
  %v2479 = vadd.f32 %v2344, %v2363
  %v2480 = vadd.f32 %v2345, %v2363
  %v2481 = vadd.f32 %v2346, %v2363
  %v2482 = vadd.f32 %v2347, %v2363
  %v2483 = vadd.f32 %v2348, %v2363
  %v2484 = vadd.f32 %v2349, %v2363
  %v2485 = vadd.f32 %v2350, %v2363
  %v2486 = vadd.f32 %v2351, %v2363
  %v2487 = vadd.f32 %v2352, %v2363
  %v2488 = vadd.f32 %v2353, %v2363
  %v2489 = vadd.f32 %v2354, %v2363
  %v2490 = vadd.f32 %v2355, %v2363
  %v2491 = vadd.f32 %v2356, %v2363
  %v2492 = vadd.f32 %v2357, %v2363
  %v2493 = vmax.f32 %v2461, 0.0
  %v2494 = vmax.f32 %v2462, 0.0
  %v2495 = vmax.f32 %v2463, 0.0
  %v2496 = vmax.f32 %v2464, 0.0
  %v2497 = vmax.f32 %v2465, 0.0
  %v2498 = vmax.f32 %v2466, 0.0
  %v2499 = vmax.f32 %v2467, 0.0
  %v2500 = vmax.f32 %v2468, 0.0
  %v2501 = vmax.f32 %v2469, 0.0
  %v2502 = vmax.f32 %v2470, 0.0
  %v2503 = vmax.f32 %v2471, 0.0
  %v2504 = vmax.f32 %v2472, 0.0
  %v2505 = vmax.f32 %v2473, 0.0
  %v2506 = vmax.f32 %v2474, 0.0
  %v2507 = vmax.f32 %v2475, 0.0
  %v2508 = vmax.f32 %v2476, 0.0
  %v2509 = vmax.f32 %v2477, 0.0
  %v2510 = vmax.f32 %v2478, 0.0
  %v2511 = vmax.f32 %v2479, 0.0
  %v2512 = vmax.f32 %v2480, 0.0
  %v2513 = vmax.f32 %v2481, 0.0
  %v2514 = vmax.f32 %v2482, 0.0
  %v2515 = vmax.f32 %v2483, 0.0
  %v2516 = vmax.f32 %v2484, 0.0
  %v2517 = vmax.f32 %v2485, 0.0
  %v2518 = vmax.f32 %v2486, 0.0
  %v2519 = vmax.f32 %v2487, 0.0
  %v2520 = vmax.f32 %v2488, 0.0
  %v2521 = vmax.f32 %v2489, 0.0
  %v2522 = vmax.f32 %v2490, 0.0
  %v2523 = vmax.f32 %v2491, 0.0
  %v2524 = vmax.f32 %v2492, 0.0
  %v2525 = vpack.c.bf16 %v2493, %v2493
  %v2526 = vpack.c.bf16 %v2494, %v2494
  %v2527 = vpack.c.bf16 %v2495, %v2495
  %v2528 = vpack.c.bf16 %v2496, %v2496
  %v2529 = vpack.c.bf16 %v2497, %v2497
  %v2530 = vpack.c.bf16 %v2498, %v2498
  %v2531 = vpack.c.bf16 %v2499, %v2499
  %v2532 = vpack.c.bf16 %v2500, %v2500
  %v2533 = vpack.c.bf16 %v2501, %v2501
  %v2534 = vpack.c.bf16 %v2502, %v2502
  %v2535 = vpack.c.bf16 %v2503, %v2503
  %v2536 = vpack.c.bf16 %v2504, %v2504
  %v2537 = vpack.c.bf16 %v2505, %v2505
  %v2538 = vpack.c.bf16 %v2506, %v2506
  %v2539 = vpack.c.bf16 %v2507, %v2507
  %v2540 = vpack.c.bf16 %v2508, %v2508
  %v2541 = vpack.c.bf16 %v2509, %v2509
  %v2542 = vpack.c.bf16 %v2510, %v2510
  %v2543 = vpack.c.bf16 %v2511, %v2511
  %v2544 = vpack.c.bf16 %v2512, %v2512
  %v2545 = vpack.c.bf16 %v2513, %v2513
  %v2546 = vpack.c.bf16 %v2514, %v2514
  %v2547 = vpack.c.bf16 %v2515, %v2515
  %v2548 = vpack.c.bf16 %v2516, %v2516
  %v2549 = vpack.c.bf16 %v2517, %v2517
  %v2550 = vpack.c.bf16 %v2518, %v2518
  %v2551 = vpack.c.bf16 %v2519, %v2519
  %v2552 = vpack.c.bf16 %v2520, %v2520
  %v2553 = vpack.c.bf16 %v2521, %v2521
  %v2554 = vpack.c.bf16 %v2522, %v2522
  %v2555 = vpack.c.bf16 %v2523, %v2523
  %v2556 = vpack.c.bf16 %v2524, %v2524
  %2557 = vst [vmem:[#allocation2] sm:$0xf] 0
  %vm2558 = vcmask 1040384
  %vm2559 = vsmask.f32 256
  %vm2560 = vmand %vm2558, %vm2559
  %v2561 = vld [vmem:[#allocation2 + $0x4] sm:$0x1]
  %v2562 = vsel %vm2560, 0, %v2561
  %2563 = vst [vmem:[#allocation2 + $0x4] sm:$0x1] %v2562
  %2564 = vst [vmem:[#allocation2 + $0x8] sm:$0xf] 0
  %v2565 = vld [vmem:[#allocation2 + $0xc] sm:$0x1]
  %v2566 = vsel %vm2560, 0, %v2565
  %2567 = vst [vmem:[#allocation2 + $0xc] sm:$0x1] %v2566
  %2568 = vst [vmem:[#allocation2 + $0x10] sm:$0xf] 0
  %v2569 = vld [vmem:[#allocation2 + $0x14] sm:$0x1]
  %v2570 = vsel %vm2560, 0, %v2569
  %2571 = vst [vmem:[#allocation2 + $0x14] sm:$0x1] %v2570
  %2572 = vst [vmem:[#allocation2 + $0x18] sm:$0xf] 0
  %v2573 = vld [vmem:[#allocation2 + $0x1c] sm:$0x1]
  %v2574 = vsel %vm2560, 0, %v2573
  %2575 = vst [vmem:[#allocation2 + $0x1c] sm:$0x1] %v2574
  %2576 = vst [vmem:[#allocation2 + $0x20] sm:$0xf] 0
  %v2577 = vld [vmem:[#allocation2 + $0x24] sm:$0x1]
  %v2578 = vsel %vm2560, 0, %v2577
  %2579 = vst [vmem:[#allocation2 + $0x24] sm:$0x1] %v2578
  %2580 = vst [vmem:[#allocation2 + $0x28] sm:$0xf] 0
  %v2581 = vld [vmem:[#allocation2 + $0x2c] sm:$0x1]
  %v2582 = vsel %vm2560, 0, %v2581
  %2583 = vst [vmem:[#allocation2 + $0x2c] sm:$0x1] %v2582
  %2584 = vst [vmem:[#allocation2 + $0x30] sm:$0xf] 0
  %v2585 = vld [vmem:[#allocation2 + $0x34] sm:$0x1]
  %v2586 = vsel %vm2560, 0, %v2585
  %2587 = vst [vmem:[#allocation2 + $0x34] sm:$0x1] %v2586
  %2588 = vst [vmem:[#allocation2 + $0x38] sm:$0xf] 0
  %v2589 = vld [vmem:[#allocation2 + $0x3c] sm:$0x1]
  %v2590 = vsel %vm2560, 0, %v2589
  %2591 = vst [vmem:[#allocation2 + $0x3c] sm:$0x1] %v2590
  %2592 = vst [vmem:[#allocation2 + $0x40] sm:$0xf] 0
  %v2593 = vld [vmem:[#allocation2 + $0x44] sm:$0x1]
  %v2594 = vsel %vm2560, 0, %v2593
  %2595 = vst [vmem:[#allocation2 + $0x44] sm:$0x1] %v2594
  %2596 = vst [vmem:[#allocation2 + $0x48] sm:$0xf] 0
  %v2597 = vld [vmem:[#allocation2 + $0x4c] sm:$0x1]
  %v2598 = vsel %vm2560, 0, %v2597
  %2599 = vst [vmem:[#allocation2 + $0x4c] sm:$0x1] %v2598
  %2600 = vst [vmem:[#allocation2 + $0x50] sm:$0xf] 0
  %v2601 = vld [vmem:[#allocation2 + $0x54] sm:$0x1]
  %v2602 = vsel %vm2560, 0, %v2601
  %2603 = vst [vmem:[#allocation2 + $0x54] sm:$0x1] %v2602
  %2604 = vst [vmem:[#allocation2 + $0x58] sm:$0xf] 0
  %v2605 = vld [vmem:[#allocation2 + $0x5c] sm:$0x1]
  %v2606 = vsel %vm2560, 0, %v2605
  %2607 = vst [vmem:[#allocation2 + $0x5c] sm:$0x1] %v2606
  %2608 = vst [vmem:[#allocation2 + $0x60] sm:$0xf] 0
  %v2609 = vld [vmem:[#allocation2 + $0x64] sm:$0x1]
  %v2610 = vsel %vm2560, 0, %v2609
  %2611 = vst [vmem:[#allocation2 + $0x64] sm:$0x1] %v2610
  %2612 = vst [vmem:[#allocation2 + $0x68] sm:$0xf] 0
  %v2613 = vld [vmem:[#allocation2 + $0x6c] sm:$0x1]
  %v2614 = vsel %vm2560, 0, %v2613
  %2615 = vst [vmem:[#allocation2 + $0x6c] sm:$0x1] %v2614
  %2616 = vst [vmem:[#allocation2 + $0x70] sm:$0xf] 0
  %v2617 = vld [vmem:[#allocation2 + $0x74] sm:$0x1]
  %v2618 = vsel %vm2560, 0, %v2617
  %2619 = vst [vmem:[#allocation2 + $0x74] sm:$0x1] %v2618
  %2620 = vst [vmem:[#allocation2 + $0x78] sm:$0xf] 0
  %v2621 = vld [vmem:[#allocation2 + $0x7c] sm:$0x1]
  %v2622 = vsel %vm2560, 0, %v2621
  %2623 = vst [vmem:[#allocation2 + $0x7c] sm:$0x1] %v2622
  %2624 = vst [vmem:[#allocation2 + $0x80] sm:$0xf] 0
  %v2625 = vld [vmem:[#allocation2 + $0x84] sm:$0x1]
  %v2626 = vsel %vm2560, 0, %v2625
  %2627 = vst [vmem:[#allocation2 + $0x84] sm:$0x1] %v2626
  %2628 = vst [vmem:[#allocation2 + $0x88] sm:$0xf] 0
  %v2629 = vld [vmem:[#allocation2 + $0x8c] sm:$0x1]
  %v2630 = vsel %vm2560, 0, %v2629
  %2631 = vst [vmem:[#allocation2 + $0x8c] sm:$0x1] %v2630
  %2632 = vst [vmem:[#allocation2 + $0x90] sm:$0xf] 0
  %v2633 = vld [vmem:[#allocation2 + $0x94] sm:$0x1]
  %v2634 = vsel %vm2560, 0, %v2633
  %2635 = vst [vmem:[#allocation2 + $0x94] sm:$0x1] %v2634
  %2636 = vst [vmem:[#allocation2 + $0x98] sm:$0xf] 0
  %v2637 = vld [vmem:[#allocation2 + $0x9c] sm:$0x1]
  %v2638 = vsel %vm2560, 0, %v2637
  %2639 = vst [vmem:[#allocation2 + $0x9c] sm:$0x1] %v2638
  %2640 = vst [vmem:[#allocation2 + $0xa0] sm:$0xf] 0
  %v2641 = vld [vmem:[#allocation2 + $0xa4] sm:$0x1]
  %v2642 = vsel %vm2560, 0, %v2641
  %2643 = vst [vmem:[#allocation2 + $0xa4] sm:$0x1] %v2642
  %2644 = vst [vmem:[#allocation2 + $0xa8] sm:$0xf] 0
  %v2645 = vld [vmem:[#allocation2 + $0xac] sm:$0x1]
  %v2646 = vsel %vm2560, 0, %v2645
  %2647 = vst [vmem:[#allocation2 + $0xac] sm:$0x1] %v2646
  %2648 = vst [vmem:[#allocation2 + $0xb0] sm:$0xf] 0
  %v2649 = vld [vmem:[#allocation2 + $0xb4] sm:$0x1]
  %v2650 = vsel %vm2560, 0, %v2649
  %2651 = vst [vmem:[#allocation2 + $0xb4] sm:$0x1] %v2650
  %2652 = vst [vmem:[#allocation2 + $0xb8] sm:$0xf] 0
  %v2653 = vld [vmem:[#allocation2 + $0xbc] sm:$0x1]
  %v2654 = vsel %vm2560, 0, %v2653
  %2655 = vst [vmem:[#allocation2 + $0xbc] sm:$0x1] %v2654
  %2656 = vst [vmem:[#allocation2 + $0xc0] sm:$0xf] 0
  %v2657 = vld [vmem:[#allocation2 + $0xc4] sm:$0x1]
  %v2658 = vsel %vm2560, 0, %v2657
  %2659 = vst [vmem:[#allocation2 + $0xc4] sm:$0x1] %v2658
  %2660 = vst [vmem:[#allocation2 + $0xc8] sm:$0xf] 0
  %v2661 = vld [vmem:[#allocation2 + $0xcc] sm:$0x1]
  %v2662 = vsel %vm2560, 0, %v2661
  %2663 = vst [vmem:[#allocation2 + $0xcc] sm:$0x1] %v2662
  %2664 = vst [vmem:[#allocation2 + $0xd0] sm:$0xf] 0
  %v2665 = vld [vmem:[#allocation2 + $0xd4] sm:$0x1]
  %v2666 = vsel %vm2560, 0, %v2665
  %2667 = vst [vmem:[#allocation2 + $0xd4] sm:$0x1] %v2666
  %2668 = vst [vmem:[#allocation2 + $0xd8] sm:$0xf] 0
  %v2669 = vld [vmem:[#allocation2 + $0xdc] sm:$0x1]
  %v2670 = vsel %vm2560, 0, %v2669
  %2671 = vst [vmem:[#allocation2 + $0xdc] sm:$0x1] %v2670
  %2672 = vst [vmem:[#allocation2 + $0xe0] sm:$0xf] 0
  %v2673 = vld [vmem:[#allocation2 + $0xe4] sm:$0x1]
  %v2674 = vsel %vm2560, 0, %v2673
  %2675 = vst [vmem:[#allocation2 + $0xe4] sm:$0x1] %v2674
  %2676 = vst [vmem:[#allocation2 + $0xe8] sm:$0xf] 0
  %v2677 = vld [vmem:[#allocation2 + $0xec] sm:$0x1]
  %v2678 = vsel %vm2560, 0, %v2677
  %2679 = vst [vmem:[#allocation2 + $0xec] sm:$0x1] %v2678
  %2680 = vst [vmem:[#allocation2 + $0xf0] sm:$0xf] 0
  %v2681 = vld [vmem:[#allocation2 + $0xf4] sm:$0x1]
  %v2682 = vsel %vm2560, 0, %v2681
  %2683 = vst [vmem:[#allocation2 + $0xf4] sm:$0x1] %v2682
  %2684 = vst [vmem:[#allocation2 + $0xf8] sm:$0xf] 0
  %v2685 = vld [vmem:[#allocation2 + $0xfc] sm:$0x1]
  %v2686 = vsel %vm2560, 0, %v2685
  %2687 = vst [vmem:[#allocation2 + $0xfc] sm:$0x1] %v2686
  %2688 = vst [vmem:[#allocation2 + $0x100] sm:$0xf] 0
  %v2689 = vld [vmem:[#allocation2 + $0x104] sm:$0x1]
  %v2690 = vsel %vm2560, 0, %v2689
  %2691 = vst [vmem:[#allocation2 + $0x104] sm:$0x1] %v2690
  %2692 = vst [vmem:[#allocation2 + $0x108] sm:$0xf] 0
  %v2693 = vld [vmem:[#allocation2 + $0x10c] sm:$0x1]
  %v2694 = vsel %vm2560, 0, %v2693
  %2695 = vst [vmem:[#allocation2 + $0x10c] sm:$0x1] %v2694
  %2696 = vst [vmem:[#allocation2 + $0x110] sm:$0xf] 0
  %v2697 = vld [vmem:[#allocation2 + $0x114] sm:$0x1]
  %v2698 = vsel %vm2560, 0, %v2697
  %2699 = vst [vmem:[#allocation2 + $0x114] sm:$0x1] %v2698
  %2700 = vst [vmem:[#allocation2 + $0x118] sm:$0xf] 0
  %v2701 = vld [vmem:[#allocation2 + $0x11c] sm:$0x1]
  %v2702 = vsel %vm2560, 0, %v2701
  %2703 = vst [vmem:[#allocation2 + $0x11c] sm:$0x1] %v2702
  %2704 = vst [vmem:[#allocation3] sm:$0xf] 0
  %v2705 = vld [vmem:[#allocation3 + $0x4] sm:$0x1]
  %v2706 = vsel %vm2560, 0, %v2705
  %2707 = vst [vmem:[#allocation3 + $0x4] sm:$0x1] %v2706
  %2708 = vst [vmem:[#allocation3 + $0x8] sm:$0xf] 0
  %v2709 = vld [vmem:[#allocation3 + $0xc] sm:$0x1]
  %v2710 = vsel %vm2560, 0, %v2709
  %2711 = vst [vmem:[#allocation3 + $0xc] sm:$0x1] %v2710
  %2712 = vst [vmem:[#allocation3 + $0x10] sm:$0xf] 0
  %v2713 = vld [vmem:[#allocation3 + $0x14] sm:$0x1]
  %v2714 = vsel %vm2560, 0, %v2713
  %2715 = vst [vmem:[#allocation3 + $0x14] sm:$0x1] %v2714
  %2716 = vst [vmem:[#allocation3 + $0x18] sm:$0xf] 0
  %v2717 = vld [vmem:[#allocation3 + $0x1c] sm:$0x1]
  %v2718 = vsel %vm2560, 0, %v2717
  %2719 = vst [vmem:[#allocation3 + $0x1c] sm:$0x1] %v2718
  %2720 = vst [vmem:[#allocation3 + $0x20] sm:$0xf] 0
  %v2721 = vld [vmem:[#allocation3 + $0x24] sm:$0x1]
  %v2722 = vsel %vm2560, 0, %v2721
  %2723 = vst [vmem:[#allocation3 + $0x24] sm:$0x1] %v2722
  %2724 = vst [vmem:[#allocation3 + $0x28] sm:$0xf] 0
  %v2725 = vld [vmem:[#allocation3 + $0x2c] sm:$0x1]
  %v2726 = vsel %vm2560, 0, %v2725
  %2727 = vst [vmem:[#allocation3 + $0x2c] sm:$0x1] %v2726
  %2728 = vst [vmem:[#allocation3 + $0x30] sm:$0xf] 0
  %v2729 = vld [vmem:[#allocation3 + $0x34] sm:$0x1]
  %v2730 = vsel %vm2560, 0, %v2729
  %2731 = vst [vmem:[#allocation3 + $0x34] sm:$0x1] %v2730
  %2732 = vst [vmem:[#allocation3 + $0x38] sm:$0xf] 0
  %v2733 = vld [vmem:[#allocation3 + $0x3c] sm:$0x1]
  %v2734 = vsel %vm2560, 0, %v2733
  %2735 = vst [vmem:[#allocation3 + $0x3c] sm:$0x1] %v2734
  %2736 = vst [vmem:[#allocation3 + $0x40] sm:$0xf] 0
  %v2737 = vld [vmem:[#allocation3 + $0x44] sm:$0x1]
  %v2738 = vsel %vm2560, 0, %v2737
  %2739 = vst [vmem:[#allocation3 + $0x44] sm:$0x1] %v2738
  %2740 = vst [vmem:[#allocation3 + $0x48] sm:$0xf] 0
  %v2741 = vld [vmem:[#allocation3 + $0x4c] sm:$0x1]
  %v2742 = vsel %vm2560, 0, %v2741
  %2743 = vst [vmem:[#allocation3 + $0x4c] sm:$0x1] %v2742
  %2744 = vst [vmem:[#allocation3 + $0x50] sm:$0xf] 0
  %v2745 = vld [vmem:[#allocation3 + $0x54] sm:$0x1]
  %v2746 = vsel %vm2560, 0, %v2745
  %2747 = vst [vmem:[#allocation3 + $0x54] sm:$0x1] %v2746
  %2748 = vst [vmem:[#allocation3 + $0x58] sm:$0xf] 0
  %v2749 = vld [vmem:[#allocation3 + $0x5c] sm:$0x1]
  %v2750 = vsel %vm2560, 0, %v2749
  %2751 = vst [vmem:[#allocation3 + $0x5c] sm:$0x1] %v2750
  %2752 = vst [vmem:[#allocation3 + $0x60] sm:$0xf] 0
  %v2753 = vld [vmem:[#allocation3 + $0x64] sm:$0x1]
  %v2754 = vsel %vm2560, 0, %v2753
  %2755 = vst [vmem:[#allocation3 + $0x64] sm:$0x1] %v2754
  %2756 = vst [vmem:[#allocation3 + $0x68] sm:$0xf] 0
  %v2757 = vld [vmem:[#allocation3 + $0x6c] sm:$0x1]
  %v2758 = vsel %vm2560, 0, %v2757
  %2759 = vst [vmem:[#allocation3 + $0x6c] sm:$0x1] %v2758
  %2760 = vst [vmem:[#allocation3 + $0x70] sm:$0xf] 0
  %v2761 = vld [vmem:[#allocation3 + $0x74] sm:$0x1]
  %v2762 = vsel %vm2560, 0, %v2761
  %2763 = vst [vmem:[#allocation3 + $0x74] sm:$0x1] %v2762
  %2764 = vst [vmem:[#allocation3 + $0x78] sm:$0xf] 0
  %v2765 = vld [vmem:[#allocation3 + $0x7c] sm:$0x1]
  %v2766 = vsel %vm2560, 0, %v2765
  %2767 = vst [vmem:[#allocation3 + $0x7c] sm:$0x1] %v2766
  %2768 = vst [vmem:[#allocation3 + $0x80] sm:$0xf] 0
  %v2769 = vld [vmem:[#allocation3 + $0x84] sm:$0x1]
  %v2770 = vsel %vm2560, 0, %v2769
  %2771 = vst [vmem:[#allocation3 + $0x84] sm:$0x1] %v2770
  %2772 = vst [vmem:[#allocation3 + $0x88] sm:$0xf] 0
  %v2773 = vld [vmem:[#allocation3 + $0x8c] sm:$0x1]
  %v2774 = vsel %vm2560, 0, %v2773
  %2775 = vst [vmem:[#allocation3 + $0x8c] sm:$0x1] %v2774
  %2776 = vst [vmem:[#allocation3 + $0x90] sm:$0xf] 0
  %v2777 = vld [vmem:[#allocation3 + $0x94] sm:$0x1]
  %v2778 = vsel %vm2560, 0, %v2777
  %2779 = vst [vmem:[#allocation3 + $0x94] sm:$0x1] %v2778
  %2780 = vst [vmem:[#allocation3 + $0x98] sm:$0xf] 0
  %v2781 = vld [vmem:[#allocation3 + $0x9c] sm:$0x1]
  %v2782 = vsel %vm2560, 0, %v2781
  %2783 = vst [vmem:[#allocation3 + $0x9c] sm:$0x1] %v2782
  %2784 = vst [vmem:[#allocation3 + $0xa0] sm:$0xf] 0
  %v2785 = vld [vmem:[#allocation3 + $0xa4] sm:$0x1]
  %v2786 = vsel %vm2560, 0, %v2785
  %2787 = vst [vmem:[#allocation3 + $0xa4] sm:$0x1] %v2786
  %2788 = vst [vmem:[#allocation3 + $0xa8] sm:$0xf] 0
  %v2789 = vld [vmem:[#allocation3 + $0xac] sm:$0x1]
  %v2790 = vsel %vm2560, 0, %v2789
  %2791 = vst [vmem:[#allocation3 + $0xac] sm:$0x1] %v2790
  %2792 = vst [vmem:[#allocation3 + $0xb0] sm:$0xf] 0
  %v2793 = vld [vmem:[#allocation3 + $0xb4] sm:$0x1]
  %v2794 = vsel %vm2560, 0, %v2793
  %2795 = vst [vmem:[#allocation3 + $0xb4] sm:$0x1] %v2794
  %2796 = vst [vmem:[#allocation3 + $0xb8] sm:$0xf] 0
  %v2797 = vld [vmem:[#allocation3 + $0xbc] sm:$0x1]
  %v2798 = vsel %vm2560, 0, %v2797
  %2799 = vst [vmem:[#allocation3 + $0xbc] sm:$0x1] %v2798
  %2800 = vst [vmem:[#allocation3 + $0xc0] sm:$0xf] 0
  %v2801 = vld [vmem:[#allocation3 + $0xc4] sm:$0x1]
  %v2802 = vsel %vm2560, 0, %v2801
  %2803 = vst [vmem:[#allocation3 + $0xc4] sm:$0x1] %v2802
  %2804 = vst [vmem:[#allocation3 + $0xc8] sm:$0xf] 0
  %v2805 = vld [vmem:[#allocation3 + $0xcc] sm:$0x1]
  %v2806 = vsel %vm2560, 0, %v2805
  %2807 = vst [vmem:[#allocation3 + $0xcc] sm:$0x1] %v2806
  %2808 = vst [vmem:[#allocation3 + $0xd0] sm:$0xf] 0
  %v2809 = vld [vmem:[#allocation3 + $0xd4] sm:$0x1]
  %v2810 = vsel %vm2560, 0, %v2809
  %2811 = vst [vmem:[#allocation3 + $0xd4] sm:$0x1] %v2810
  %2812 = vst [vmem:[#allocation3 + $0xd8] sm:$0xf] 0
  %v2813 = vld [vmem:[#allocation3 + $0xdc] sm:$0x1]
  %v2814 = vsel %vm2560, 0, %v2813
  %2815 = vst [vmem:[#allocation3 + $0xdc] sm:$0x1] %v2814
  %2816 = vst [vmem:[#allocation3 + $0xe0] sm:$0xf] 0
  %v2817 = vld [vmem:[#allocation3 + $0xe4] sm:$0x1]
  %v2818 = vsel %vm2560, 0, %v2817
  %2819 = vst [vmem:[#allocation3 + $0xe4] sm:$0x1] %v2818
  %2820 = vst [vmem:[#allocation3 + $0xe8] sm:$0xf] 0
  %v2821 = vld [vmem:[#allocation3 + $0xec] sm:$0x1]
  %v2822 = vsel %vm2560, 0, %v2821
  %2823 = vst [vmem:[#allocation3 + $0xec] sm:$0x1] %v2822
  %2824 = vst [vmem:[#allocation3 + $0xf0] sm:$0xf] 0
  %v2825 = vld [vmem:[#allocation3 + $0xf4] sm:$0x1]
  %v2826 = vsel %vm2560, 0, %v2825
  %2827 = vst [vmem:[#allocation3 + $0xf4] sm:$0x1] %v2826
  %2828 = vst [vmem:[#allocation3 + $0xf8] sm:$0xf] 0
  %v2829 = vld [vmem:[#allocation3 + $0xfc] sm:$0x1]
  %v2830 = vsel %vm2560, 0, %v2829
  %2831 = vst [vmem:[#allocation3 + $0xfc] sm:$0x1] %v2830
  %2832 = vst [vmem:[#allocation3 + $0x100] sm:$0xf] 0
  %v2833 = vld [vmem:[#allocation3 + $0x104] sm:$0x1]
  %v2834 = vsel %vm2560, 0, %v2833
  %2835 = vst [vmem:[#allocation3 + $0x104] sm:$0x1] %v2834
  %2836 = vst [vmem:[#allocation3 + $0x108] sm:$0xf] 0
  %v2837 = vld [vmem:[#allocation3 + $0x10c] sm:$0x1]
  %v2838 = vsel %vm2560, 0, %v2837
  %2839 = vst [vmem:[#allocation3 + $0x10c] sm:$0x1] %v2838
  %2840 = vst [vmem:[#allocation3 + $0x110] sm:$0xf] 0
  %v2841 = vld [vmem:[#allocation3 + $0x114] sm:$0x1]
  %v2842 = vsel %vm2560, 0, %v2841
  %2843 = vst [vmem:[#allocation3 + $0x114] sm:$0x1] %v2842
  %2844 = vst [vmem:[#allocation3 + $0x118] sm:$0xf] 0
  %v2845 = vld [vmem:[#allocation3 + $0x11c] sm:$0x1]
  %v2846 = vsel %vm2560, 0, %v2845
  %2847 = vst [vmem:[#allocation3 + $0x11c] sm:$0x1] %v2846
  %v2880 = vunpack.c.l.b16 %v2525
  %v2881 = vunpack.c.l.b16 %v2526
  %v2882 = vunpack.c.l.b16 %v2527
  %v2883 = vunpack.c.l.b16 %v2528
  %v2884 = vunpack.c.l.b16 %v2529
  %v2885 = vunpack.c.l.b16 %v2530
  %v2886 = vunpack.c.l.b16 %v2531
  %v2887 = vunpack.c.l.b16 %v2532
  %v2888 = vunpack.c.l.b16 %v2533
  %v2889 = vunpack.c.l.b16 %v2534
  %v2890 = vunpack.c.l.b16 %v2535
  %v2891 = vunpack.c.l.b16 %v2536
  %v2892 = vunpack.c.l.b16 %v2537
  %v2893 = vunpack.c.l.b16 %v2538
  %v2894 = vunpack.c.l.b16 %v2539
  %v2895 = vunpack.c.l.b16 %v2540
  %v2896 = vunpack.c.l.b16 %v2541
  %v2897 = vunpack.c.l.b16 %v2542
  %v2898 = vunpack.c.l.b16 %v2543
  %v2899 = vunpack.c.l.b16 %v2544
  %v2900 = vunpack.c.l.b16 %v2545
  %v2901 = vunpack.c.l.b16 %v2546
  %v2902 = vunpack.c.l.b16 %v2547
  %v2903 = vunpack.c.l.b16 %v2548
  %v2904 = vunpack.c.l.b16 %v2549
  %v2905 = vunpack.c.l.b16 %v2550
  %v2906 = vunpack.c.l.b16 %v2551
  %v2907 = vunpack.c.l.b16 %v2552
  %v2908 = vunpack.c.l.b16 %v2553
  %v2909 = vunpack.c.l.b16 %v2554
  %v2910 = vunpack.c.l.b16 %v2555
  %v2911 = vunpack.c.l.b16 %v2556
  %v2912 = vpack.c.b16 %v2880, %v2880
  %v2913 = vpack.c.b16 %v2881, %v2881
  %v2914 = vpack.c.b16 %v2882, %v2882
  %v2915 = vpack.c.b16 %v2883, %v2883
  %v2916 = vpack.c.b16 %v2884, %v2884
  %v2917 = vpack.c.b16 %v2885, %v2885
  %v2918 = vpack.c.b16 %v2886, %v2886
  %v2919 = vpack.c.b16 %v2887, %v2887
  %v2920 = vpack.c.b16 %v2888, %v2888
  %v2921 = vpack.c.b16 %v2889, %v2889
  %v2922 = vpack.c.b16 %v2890, %v2890
  %v2923 = vpack.c.b16 %v2891, %v2891
  %v2924 = vpack.c.b16 %v2892, %v2892
  %v2925 = vpack.c.b16 %v2893, %v2893
  %v2926 = vpack.c.b16 %v2894, %v2894
  %v2927 = vpack.c.b16 %v2895, %v2895
  %v2928 = vpack.c.b16 %v2896, %v2896
  %v2929 = vpack.c.b16 %v2897, %v2897
  %v2930 = vpack.c.b16 %v2898, %v2898
  %v2931 = vpack.c.b16 %v2899, %v2899
  %v2932 = vpack.c.b16 %v2900, %v2900
  %v2933 = vpack.c.b16 %v2901, %v2901
  %v2934 = vpack.c.b16 %v2902, %v2902
  %v2935 = vpack.c.b16 %v2903, %v2903
  %v2936 = vpack.c.b16 %v2904, %v2904
  %v2937 = vpack.c.b16 %v2905, %v2905
  %v2938 = vpack.c.b16 %v2906, %v2906
  %v2939 = vpack.c.b16 %v2907, %v2907
  %v2940 = vpack.c.b16 %v2908, %v2908
  %v2941 = vpack.c.b16 %v2909, %v2909
  %v2942 = vpack.c.b16 %v2910, %v2910
  %v2943 = vpack.c.b16 %v2911, %v2911
  %v2945 = vshrl.u32 %v2912, 16
  %v2947 = vrot.slane %v2945, 7
  %v2948 = vshll.u32 %v2912, 16
  %v2950 = vor.u32 %v2947, %v2948
  %v2951 = vrot.slane %v2947, 4
  %v2953 = vshrl.u32 %v2913, 16
  %v2955 = vrot.slane %v2953, 7
  %v2956 = vshll.u32 %v2913, 16
  %v2958 = vor.u32 %v2955, %v2956
  %v2959 = vrot.slane %v2955, 4
  %v2961 = vshrl.u32 %v2914, 16
  %v2963 = vrot.slane %v2961, 7
  %v2964 = vshll.u32 %v2914, 16
  %v2966 = vor.u32 %v2963, %v2964
  %v2967 = vrot.slane %v2963, 4
  %v2969 = vshrl.u32 %v2915, 16
  %v2971 = vrot.slane %v2969, 7
  %v2972 = vshll.u32 %v2915, 16
  %v2974 = vor.u32 %v2971, %v2972
  %v2975 = vrot.slane %v2971, 4
  %v2977 = vshrl.u32 %v2916, 16
  %v2979 = vrot.slane %v2977, 7
  %v2980 = vshll.u32 %v2916, 16
  %v2982 = vor.u32 %v2979, %v2980
  %v2983 = vrot.slane %v2979, 4
  %v2985 = vshrl.u32 %v2917, 16
  %v2987 = vrot.slane %v2985, 7
  %v2988 = vshll.u32 %v2917, 16
  %v2990 = vor.u32 %v2987, %v2988
  %v2991 = vrot.slane %v2987, 4
  %v2993 = vshrl.u32 %v2918, 16
  %v2995 = vrot.slane %v2993, 7
  %v2996 = vshll.u32 %v2918, 16
  %v2998 = vor.u32 %v2995, %v2996
  %v2999 = vrot.slane %v2995, 4
  %v3001 = vshrl.u32 %v2919, 16
  %v3003 = vrot.slane %v3001, 7
  %v3004 = vshll.u32 %v2919, 16
  %v3006 = vor.u32 %v3003, %v3004
  %v3007 = vrot.slane %v3003, 4
  %v3009 = vshrl.u32 %v2920, 16
  %v3011 = vrot.slane %v3009, 7
  %v3012 = vshll.u32 %v2920, 16
  %v3014 = vor.u32 %v3011, %v3012
  %v3015 = vrot.slane %v3011, 4
  %v3017 = vshrl.u32 %v2921, 16
  %v3019 = vrot.slane %v3017, 7
  %v3020 = vshll.u32 %v2921, 16
  %v3022 = vor.u32 %v3019, %v3020
  %v3023 = vrot.slane %v3019, 4
  %v3025 = vshrl.u32 %v2922, 16
  %v3027 = vrot.slane %v3025, 7
  %v3028 = vshll.u32 %v2922, 16
  %v3030 = vor.u32 %v3027, %v3028
  %v3031 = vrot.slane %v3027, 4
  %v3033 = vshrl.u32 %v2923, 16
  %v3035 = vrot.slane %v3033, 7
  %v3036 = vshll.u32 %v2923, 16
  %v3038 = vor.u32 %v3035, %v3036
  %v3039 = vrot.slane %v3035, 4
  %v3041 = vshrl.u32 %v2924, 16
  %v3043 = vrot.slane %v3041, 7
  %v3044 = vshll.u32 %v2924, 16
  %v3046 = vor.u32 %v3043, %v3044
  %v3047 = vrot.slane %v3043, 4
  %v3049 = vshrl.u32 %v2925, 16
  %v3051 = vrot.slane %v3049, 7
  %v3052 = vshll.u32 %v2925, 16
  %v3054 = vor.u32 %v3051, %v3052
  %v3055 = vrot.slane %v3051, 4
  %v3057 = vshrl.u32 %v2926, 16
  %v3059 = vrot.slane %v3057, 7
  %v3060 = vshll.u32 %v2926, 16
  %v3062 = vor.u32 %v3059, %v3060
  %v3063 = vrot.slane %v3059, 4
  %v3065 = vshrl.u32 %v2927, 16
  %v3067 = vrot.slane %v3065, 7
  %v3068 = vshll.u32 %v2927, 16
  %v3070 = vor.u32 %v3067, %v3068
  %v3071 = vrot.slane %v3067, 4
  %v3073 = vshrl.u32 %v2928, 16
  %v3075 = vrot.slane %v3073, 7
  %v3076 = vshll.u32 %v2928, 16
  %v3078 = vor.u32 %v3075, %v3076
  %v3079 = vrot.slane %v3075, 4
  %v3081 = vshrl.u32 %v2929, 16
  %v3083 = vrot.slane %v3081, 7
  %v3084 = vshll.u32 %v2929, 16
  %v3086 = vor.u32 %v3083, %v3084
  %v3087 = vrot.slane %v3083, 4
  %v3089 = vshrl.u32 %v2930, 16
  %v3091 = vrot.slane %v3089, 7
  %v3092 = vshll.u32 %v2930, 16
  %v3094 = vor.u32 %v3091, %v3092
  %v3095 = vrot.slane %v3091, 4
  %v3097 = vshrl.u32 %v2931, 16
  %v3099 = vrot.slane %v3097, 7
  %v3100 = vshll.u32 %v2931, 16
  %v3102 = vor.u32 %v3099, %v3100
  %v3103 = vrot.slane %v3099, 4
  %v3105 = vshrl.u32 %v2932, 16
  %v3107 = vrot.slane %v3105, 7
  %v3108 = vshll.u32 %v2932, 16
  %v3110 = vor.u32 %v3107, %v3108
  %v3111 = vrot.slane %v3107, 4
  %v3113 = vshrl.u32 %v2933, 16
  %v3115 = vrot.slane %v3113, 7
  %v3116 = vshll.u32 %v2933, 16
  %v3118 = vor.u32 %v3115, %v3116
  %v3119 = vrot.slane %v3115, 4
  %v3121 = vshrl.u32 %v2934, 16
  %v3123 = vrot.slane %v3121, 7
  %v3124 = vshll.u32 %v2934, 16
  %v3126 = vor.u32 %v3123, %v3124
  %v3127 = vrot.slane %v3123, 4
  %v3129 = vshrl.u32 %v2935, 16
  %v3131 = vrot.slane %v3129, 7
  %v3132 = vshll.u32 %v2935, 16
  %v3134 = vor.u32 %v3131, %v3132
  %v3135 = vrot.slane %v3131, 4
  %v3137 = vshrl.u32 %v2936, 16
  %v3139 = vrot.slane %v3137, 7
  %v3140 = vshll.u32 %v2936, 16
  %v3142 = vor.u32 %v3139, %v3140
  %v3143 = vrot.slane %v3139, 4
  %v3145 = vshrl.u32 %v2937, 16
  %v3147 = vrot.slane %v3145, 7
  %v3148 = vshll.u32 %v2937, 16
  %v3150 = vor.u32 %v3147, %v3148
  %v3151 = vrot.slane %v3147, 4
  %v3153 = vshrl.u32 %v2938, 16
  %v3155 = vrot.slane %v3153, 7
  %v3156 = vshll.u32 %v2938, 16
  %v3158 = vor.u32 %v3155, %v3156
  %v3159 = vrot.slane %v3155, 4
  %v3161 = vshrl.u32 %v2939, 16
  %v3163 = vrot.slane %v3161, 7
  %v3164 = vshll.u32 %v2939, 16
  %v3166 = vor.u32 %v3163, %v3164
  %v3167 = vrot.slane %v3163, 4
  %v3169 = vshrl.u32 %v2940, 16
  %v3171 = vrot.slane %v3169, 7
  %v3172 = vshll.u32 %v2940, 16
  %v3174 = vor.u32 %v3171, %v3172
  %v3175 = vrot.slane %v3171, 4
  %v3177 = vshrl.u32 %v2941, 16
  %v3179 = vrot.slane %v3177, 7
  %v3180 = vshll.u32 %v2941, 16
  %v3182 = vor.u32 %v3179, %v3180
  %v3183 = vrot.slane %v3179, 4
  %v3185 = vshrl.u32 %v2942, 16
  %v3187 = vrot.slane %v3185, 7
  %v3188 = vshll.u32 %v2942, 16
  %v3190 = vor.u32 %v3187, %v3188
  %v3191 = vrot.slane %v3187, 4
  %v3193 = vshrl.u32 %v2943, 16
  %v3195 = vrot.slane %v3193, 7
  %v3196 = vshll.u32 %v2943, 16
  %v3198 = vor.u32 %v3195, %v3196
  %v3199 = vrot.slane %v3195, 4
  %s3264 = scalar_lea.vmem [#allocation2], 8
  %vm3265 = vcmask 1043456
  %vm3266 = vsmask.f32 7938
  %vm3267 = vmand %vm3265, %vm3266
  %v3268 = vld [vmem:[%s3264] sm:$0xf]
  %v3269 = vsel %vm3267, %v2950, %v3268
  %3270 = vst [vmem:[%s3264] sm:$0xf] %v3269
  %v3271 = vld [vmem:[%s3264 + $0x4] sm:$0x1]
  %v3272 = vsel %vm2560, %v2951, %v3271
  %3273 = vst [vmem:[%s3264 + $0x4] sm:$0x1] %v3272
  %v3274 = vld [vmem:[%s3264 + $0x8] sm:$0xf]
  %v3275 = vsel %vm3267, %v2958, %v3274
  %3276 = vst [vmem:[%s3264 + $0x8] sm:$0xf] %v3275
  %v3277 = vld [vmem:[%s3264 + $0xc] sm:$0x1]
  %v3278 = vsel %vm2560, %v2959, %v3277
  %3279 = vst [vmem:[%s3264 + $0xc] sm:$0x1] %v3278
  %v3280 = vld [vmem:[%s3264 + $0x10] sm:$0xf]
  %v3281 = vsel %vm3267, %v2966, %v3280
  %3282 = vst [vmem:[%s3264 + $0x10] sm:$0xf] %v3281
  %v3283 = vld [vmem:[%s3264 + $0x14] sm:$0x1]
  %v3284 = vsel %vm2560, %v2967, %v3283
  %3285 = vst [vmem:[%s3264 + $0x14] sm:$0x1] %v3284
  %v3286 = vld [vmem:[%s3264 + $0x18] sm:$0xf]
  %v3287 = vsel %vm3267, %v2974, %v3286
  %3288 = vst [vmem:[%s3264 + $0x18] sm:$0xf] %v3287
  %v3289 = vld [vmem:[%s3264 + $0x1c] sm:$0x1]
  %v3290 = vsel %vm2560, %v2975, %v3289
  %3291 = vst [vmem:[%s3264 + $0x1c] sm:$0x1] %v3290
  %v3292 = vld [vmem:[%s3264 + $0x20] sm:$0xf]
  %v3293 = vsel %vm3267, %v2982, %v3292
  %3294 = vst [vmem:[%s3264 + $0x20] sm:$0xf] %v3293
  %v3295 = vld [vmem:[%s3264 + $0x24] sm:$0x1]
  %v3296 = vsel %vm2560, %v2983, %v3295
  %3297 = vst [vmem:[%s3264 + $0x24] sm:$0x1] %v3296
  %v3298 = vld [vmem:[%s3264 + $0x28] sm:$0xf]
  %v3299 = vsel %vm3267, %v2990, %v3298
  %3300 = vst [vmem:[%s3264 + $0x28] sm:$0xf] %v3299
  %v3301 = vld [vmem:[%s3264 + $0x2c] sm:$0x1]
  %v3302 = vsel %vm2560, %v2991, %v3301
  %3303 = vst [vmem:[%s3264 + $0x2c] sm:$0x1] %v3302
  %v3304 = vld [vmem:[%s3264 + $0x30] sm:$0xf]
  %v3305 = vsel %vm3267, %v2998, %v3304
  %3306 = vst [vmem:[%s3264 + $0x30] sm:$0xf] %v3305
  %v3307 = vld [vmem:[%s3264 + $0x34] sm:$0x1]
  %v3308 = vsel %vm2560, %v2999, %v3307
  %3309 = vst [vmem:[%s3264 + $0x34] sm:$0x1] %v3308
  %v3310 = vld [vmem:[%s3264 + $0x38] sm:$0xf]
  %v3311 = vsel %vm3267, %v3006, %v3310
  %3312 = vst [vmem:[%s3264 + $0x38] sm:$0xf] %v3311
  %v3313 = vld [vmem:[%s3264 + $0x3c] sm:$0x1]
  %v3314 = vsel %vm2560, %v3007, %v3313
  %3315 = vst [vmem:[%s3264 + $0x3c] sm:$0x1] %v3314
  %v3316 = vld [vmem:[%s3264 + $0x40] sm:$0xf]
  %v3317 = vsel %vm3267, %v3014, %v3316
  %3318 = vst [vmem:[%s3264 + $0x40] sm:$0xf] %v3317
  %v3319 = vld [vmem:[%s3264 + $0x44] sm:$0x1]
  %v3320 = vsel %vm2560, %v3015, %v3319
  %3321 = vst [vmem:[%s3264 + $0x44] sm:$0x1] %v3320
  %v3322 = vld [vmem:[%s3264 + $0x48] sm:$0xf]
  %v3323 = vsel %vm3267, %v3022, %v3322
  %3324 = vst [vmem:[%s3264 + $0x48] sm:$0xf] %v3323
  %v3325 = vld [vmem:[%s3264 + $0x4c] sm:$0x1]
  %v3326 = vsel %vm2560, %v3023, %v3325
  %3327 = vst [vmem:[%s3264 + $0x4c] sm:$0x1] %v3326
  %v3328 = vld [vmem:[%s3264 + $0x50] sm:$0xf]
  %v3329 = vsel %vm3267, %v3030, %v3328
  %3330 = vst [vmem:[%s3264 + $0x50] sm:$0xf] %v3329
  %v3331 = vld [vmem:[%s3264 + $0x54] sm:$0x1]
  %v3332 = vsel %vm2560, %v3031, %v3331
  %3333 = vst [vmem:[%s3264 + $0x54] sm:$0x1] %v3332
  %v3334 = vld [vmem:[%s3264 + $0x58] sm:$0xf]
  %v3335 = vsel %vm3267, %v3038, %v3334
  %3336 = vst [vmem:[%s3264 + $0x58] sm:$0xf] %v3335
  %v3337 = vld [vmem:[%s3264 + $0x5c] sm:$0x1]
  %v3338 = vsel %vm2560, %v3039, %v3337
  %3339 = vst [vmem:[%s3264 + $0x5c] sm:$0x1] %v3338
  %v3340 = vld [vmem:[%s3264 + $0x60] sm:$0xf]
  %v3341 = vsel %vm3267, %v3046, %v3340
  %3342 = vst [vmem:[%s3264 + $0x60] sm:$0xf] %v3341
  %v3343 = vld [vmem:[%s3264 + $0x64] sm:$0x1]
  %v3344 = vsel %vm2560, %v3047, %v3343
  %3345 = vst [vmem:[%s3264 + $0x64] sm:$0x1] %v3344
  %v3346 = vld [vmem:[%s3264 + $0x68] sm:$0xf]
  %v3347 = vsel %vm3267, %v3054, %v3346
  %3348 = vst [vmem:[%s3264 + $0x68] sm:$0xf] %v3347
  %v3349 = vld [vmem:[%s3264 + $0x6c] sm:$0x1]
  %v3350 = vsel %vm2560, %v3055, %v3349
  %3351 = vst [vmem:[%s3264 + $0x6c] sm:$0x1] %v3350
  %v3352 = vld [vmem:[%s3264 + $0x70] sm:$0xf]
  %v3353 = vsel %vm3267, %v3062, %v3352
  %3354 = vst [vmem:[%s3264 + $0x70] sm:$0xf] %v3353
  %v3355 = vld [vmem:[%s3264 + $0x74] sm:$0x1]
  %v3356 = vsel %vm2560, %v3063, %v3355
  %3357 = vst [vmem:[%s3264 + $0x74] sm:$0x1] %v3356
  %v3358 = vld [vmem:[%s3264 + $0x78] sm:$0xf]
  %v3359 = vsel %vm3267, %v3070, %v3358
  %3360 = vst [vmem:[%s3264 + $0x78] sm:$0xf] %v3359
  %v3361 = vld [vmem:[%s3264 + $0x7c] sm:$0x1]
  %v3362 = vsel %vm2560, %v3071, %v3361
  %3363 = vst [vmem:[%s3264 + $0x7c] sm:$0x1] %v3362
  %v3364 = vld [vmem:[%s3264 + $0x90] sm:$0xf]
  %v3365 = vsel %vm3267, %v3078, %v3364
  %3366 = vst [vmem:[%s3264 + $0x90] sm:$0xf] %v3365
  %v3367 = vld [vmem:[%s3264 + $0x94] sm:$0x1]
  %v3368 = vsel %vm2560, %v3079, %v3367
  %3369 = vst [vmem:[%s3264 + $0x94] sm:$0x1] %v3368
  %v3370 = vld [vmem:[%s3264 + $0x98] sm:$0xf]
  %v3371 = vsel %vm3267, %v3086, %v3370
  %3372 = vst [vmem:[%s3264 + $0x98] sm:$0xf] %v3371
  %v3373 = vld [vmem:[%s3264 + $0x9c] sm:$0x1]
  %v3374 = vsel %vm2560, %v3087, %v3373
  %3375 = vst [vmem:[%s3264 + $0x9c] sm:$0x1] %v3374
  %v3376 = vld [vmem:[%s3264 + $0xa0] sm:$0xf]
  %v3377 = vsel %vm3267, %v3094, %v3376
  %3378 = vst [vmem:[%s3264 + $0xa0] sm:$0xf] %v3377
  %v3379 = vld [vmem:[%s3264 + $0xa4] sm:$0x1]
  %v3380 = vsel %vm2560, %v3095, %v3379
  %3381 = vst [vmem:[%s3264 + $0xa4] sm:$0x1] %v3380
  %v3382 = vld [vmem:[%s3264 + $0xa8] sm:$0xf]
  %v3383 = vsel %vm3267, %v3102, %v3382
  %3384 = vst [vmem:[%s3264 + $0xa8] sm:$0xf] %v3383
  %v3385 = vld [vmem:[%s3264 + $0xac] sm:$0x1]
  %v3386 = vsel %vm2560, %v3103, %v3385
  %3387 = vst [vmem:[%s3264 + $0xac] sm:$0x1] %v3386
  %v3388 = vld [vmem:[%s3264 + $0xb0] sm:$0xf]
  %v3389 = vsel %vm3267, %v3110, %v3388
  %3390 = vst [vmem:[%s3264 + $0xb0] sm:$0xf] %v3389
  %v3391 = vld [vmem:[%s3264 + $0xb4] sm:$0x1]
  %v3392 = vsel %vm2560, %v3111, %v3391
  %3393 = vst [vmem:[%s3264 + $0xb4] sm:$0x1] %v3392
  %v3394 = vld [vmem:[%s3264 + $0xb8] sm:$0xf]
  %v3395 = vsel %vm3267, %v3118, %v3394
  %3396 = vst [vmem:[%s3264 + $0xb8] sm:$0xf] %v3395
  %v3397 = vld [vmem:[%s3264 + $0xbc] sm:$0x1]
  %v3398 = vsel %vm2560, %v3119, %v3397
  %3399 = vst [vmem:[%s3264 + $0xbc] sm:$0x1] %v3398
  %v3400 = vld [vmem:[%s3264 + $0xc0] sm:$0xf]
  %v3401 = vsel %vm3267, %v3126, %v3400
  %3402 = vst [vmem:[%s3264 + $0xc0] sm:$0xf] %v3401
  %v3403 = vld [vmem:[%s3264 + $0xc4] sm:$0x1]
  %v3404 = vsel %vm2560, %v3127, %v3403
  %3405 = vst [vmem:[%s3264 + $0xc4] sm:$0x1] %v3404
  %v3406 = vld [vmem:[%s3264 + $0xc8] sm:$0xf]
  %v3407 = vsel %vm3267, %v3134, %v3406
  %3408 = vst [vmem:[%s3264 + $0xc8] sm:$0xf] %v3407
  %v3409 = vld [vmem:[%s3264 + $0xcc] sm:$0x1]
  %v3410 = vsel %vm2560, %v3135, %v3409
  %3411 = vst [vmem:[%s3264 + $0xcc] sm:$0x1] %v3410
  %v3412 = vld [vmem:[%s3264 + $0xd0] sm:$0xf]
  %v3413 = vsel %vm3267, %v3142, %v3412
  %3414 = vst [vmem:[%s3264 + $0xd0] sm:$0xf] %v3413
  %v3415 = vld [vmem:[%s3264 + $0xd4] sm:$0x1]
  %v3416 = vsel %vm2560, %v3143, %v3415
  %3417 = vst [vmem:[%s3264 + $0xd4] sm:$0x1] %v3416
  %v3418 = vld [vmem:[%s3264 + $0xd8] sm:$0xf]
  %v3419 = vsel %vm3267, %v3150, %v3418
  %3420 = vst [vmem:[%s3264 + $0xd8] sm:$0xf] %v3419
  %v3421 = vld [vmem:[%s3264 + $0xdc] sm:$0x1]
  %v3422 = vsel %vm2560, %v3151, %v3421
  %3423 = vst [vmem:[%s3264 + $0xdc] sm:$0x1] %v3422
  %v3424 = vld [vmem:[%s3264 + $0xe0] sm:$0xf]
  %v3425 = vsel %vm3267, %v3158, %v3424
  %3426 = vst [vmem:[%s3264 + $0xe0] sm:$0xf] %v3425
  %v3427 = vld [vmem:[%s3264 + $0xe4] sm:$0x1]
  %v3428 = vsel %vm2560, %v3159, %v3427
  %3429 = vst [vmem:[%s3264 + $0xe4] sm:$0x1] %v3428
  %v3430 = vld [vmem:[%s3264 + $0xe8] sm:$0xf]
  %v3431 = vsel %vm3267, %v3166, %v3430
  %3432 = vst [vmem:[%s3264 + $0xe8] sm:$0xf] %v3431
  %v3433 = vld [vmem:[%s3264 + $0xec] sm:$0x1]
  %v3434 = vsel %vm2560, %v3167, %v3433
  %3435 = vst [vmem:[%s3264 + $0xec] sm:$0x1] %v3434
  %v3436 = vld [vmem:[%s3264 + $0xf0] sm:$0xf]
  %v3437 = vsel %vm3267, %v3174, %v3436
  %3438 = vst [vmem:[%s3264 + $0xf0] sm:$0xf] %v3437
  %v3439 = vld [vmem:[%s3264 + $0xf4] sm:$0x1]
  %v3440 = vsel %vm2560, %v3175, %v3439
  %3441 = vst [vmem:[%s3264 + $0xf4] sm:$0x1] %v3440
  %v3442 = vld [vmem:[%s3264 + $0xf8] sm:$0xf]
  %v3443 = vsel %vm3267, %v3182, %v3442
  %3444 = vst [vmem:[%s3264 + $0xf8] sm:$0xf] %v3443
  %v3445 = vld [vmem:[%s3264 + $0xfc] sm:$0x1]
  %v3446 = vsel %vm2560, %v3183, %v3445
  %3447 = vst [vmem:[%s3264 + $0xfc] sm:$0x1] %v3446
  %v3448 = vld [vmem:[%s3264 + $0x100] sm:$0xf]
  %v3449 = vsel %vm3267, %v3190, %v3448
  %3450 = vst [vmem:[%s3264 + $0x100] sm:$0xf] %v3449
  %v3451 = vld [vmem:[%s3264 + $0x104] sm:$0x1]
  %v3452 = vsel %vm2560, %v3191, %v3451
  %3453 = vst [vmem:[%s3264 + $0x104] sm:$0x1] %v3452
  %v3454 = vld [vmem:[%s3264 + $0x108] sm:$0xf]
  %v3455 = vsel %vm3267, %v3198, %v3454
  %3456 = vst [vmem:[%s3264 + $0x108] sm:$0xf] %v3455
  %v3457 = vld [vmem:[%s3264 + $0x10c] sm:$0x1]
  %v3458 = vsel %vm2560, %v3199, %v3457
  %3459 = vst [vmem:[%s3264 + $0x10c] sm:$0x1] %v3458
  %s3460 = scalar_lea.vmem [#allocation3], 8
  %3461 = vst [vmem:[%s3460] sm:$0xf] %v2429
  %3462 = vst [vmem:[%s3460 + $0x8] sm:$0xf] %v2430
  %3463 = vst [vmem:[%s3460 + $0x10] sm:$0xf] %v2431
  %3464 = vst [vmem:[%s3460 + $0x18] sm:$0xf] %v2432
  %3465 = vst [vmem:[%s3460 + $0x20] sm:$0xf] %v2433
  %3466 = vst [vmem:[%s3460 + $0x28] sm:$0xf] %v2434
  %3467 = vst [vmem:[%s3460 + $0x30] sm:$0xf] %v2435
  %3468 = vst [vmem:[%s3460 + $0x38] sm:$0xf] %v2436
  %3469 = vst [vmem:[%s3460 + $0x40] sm:$0xf] %v2437
  %3470 = vst [vmem:[%s3460 + $0x48] sm:$0xf] %v2438
  %3471 = vst [vmem:[%s3460 + $0x50] sm:$0xf] %v2439
  %3472 = vst [vmem:[%s3460 + $0x58] sm:$0xf] %v2440
  %3473 = vst [vmem:[%s3460 + $0x60] sm:$0xf] %v2441
  %3474 = vst [vmem:[%s3460 + $0x68] sm:$0xf] %v2442
  %3475 = vst [vmem:[%s3460 + $0x70] sm:$0xf] %v2443
  %3476 = vst [vmem:[%s3460 + $0x78] sm:$0xf] %v2444
  %3477 = vst [vmem:[%s3460 + $0x90] sm:$0xf] %v2445
  %3478 = vst [vmem:[%s3460 + $0x98] sm:$0xf] %v2446
  %3479 = vst [vmem:[%s3460 + $0xa0] sm:$0xf] %v2447
  %3480 = vst [vmem:[%s3460 + $0xa8] sm:$0xf] %v2448
  %3481 = vst [vmem:[%s3460 + $0xb0] sm:$0xf] %v2449
  %3482 = vst [vmem:[%s3460 + $0xb8] sm:$0xf] %v2450
  %3483 = vst [vmem:[%s3460 + $0xc0] sm:$0xf] %v2451
  %3484 = vst [vmem:[%s3460 + $0xc8] sm:$0xf] %v2452
  %3485 = vst [vmem:[%s3460 + $0xd0] sm:$0xf] %v2453
  %3486 = vst [vmem:[%s3460 + $0xd8] sm:$0xf] %v2454
  %3487 = vst [vmem:[%s3460 + $0xe0] sm:$0xf] %v2455
  %3488 = vst [vmem:[%s3460 + $0xe8] sm:$0xf] %v2456
  %3489 = vst [vmem:[%s3460 + $0xf0] sm:$0xf] %v2457
  %3490 = vst [vmem:[%s3460 + $0xf8] sm:$0xf] %v2458
  %3491 = vst [vmem:[%s3460 + $0x100] sm:$0xf] %v2459
  %3492 = vst [vmem:[%s3460 + $0x108] sm:$0xf] %v2460
  %v3493 = vld [vmem:[#allocation2] sm:$0xf]
  %v3494 = vld [vmem:[#allocation2 + $0x8] sm:$0xf]
  %v3495 = vld [vmem:[#allocation2 + $0x10] sm:$0xf]
  %v3496 = vld [vmem:[#allocation2 + $0x18] sm:$0xf]
  %v3497 = vld [vmem:[#allocation2 + $0x20] sm:$0xf]
  %v3498 = vld [vmem:[#allocation2 + $0x28] sm:$0xf]
  %v3499 = vld [vmem:[#allocation2 + $0x30] sm:$0xf]
  %v3500 = vld [vmem:[#allocation2 + $0x38] sm:$0xf]
  %v3501 = vld [vmem:[#allocation2 + $0x40] sm:$0xf]
  %v3502 = vld [vmem:[#allocation2 + $0x48] sm:$0xf]
  %v3503 = vld [vmem:[#allocation2 + $0x50] sm:$0xf]
  %v3504 = vld [vmem:[#allocation2 + $0x58] sm:$0xf]
  %v3505 = vld [vmem:[#allocation2 + $0x60] sm:$0xf]
  %v3506 = vld [vmem:[#allocation2 + $0x68] sm:$0xf]
  %v3507 = vld [vmem:[#allocation2 + $0x70] sm:$0xf]
  %v3508 = vld [vmem:[#allocation2 + $0x78] sm:$0xf]
  %v3509 = vld [vmem:[#allocation2 + $0x90] sm:$0xf]
  %v3510 = vld [vmem:[#allocation2 + $0x98] sm:$0xf]
  %v3511 = vld [vmem:[#allocation2 + $0xa0] sm:$0xf]
  %v3512 = vld [vmem:[#allocation2 + $0xa8] sm:$0xf]
  %v3513 = vld [vmem:[#allocation2 + $0xb0] sm:$0xf]
  %v3514 = vld [vmem:[#allocation2 + $0xb8] sm:$0xf]
  %v3515 = vld [vmem:[#allocation2 + $0xc0] sm:$0xf]
  %v3516 = vld [vmem:[#allocation2 + $0xc8] sm:$0xf]
  %v3517 = vld [vmem:[#allocation2 + $0xd0] sm:$0xf]
  %v3518 = vld [vmem:[#allocation2 + $0xd8] sm:$0xf]
  %v3519 = vld [vmem:[#allocation2 + $0xe0] sm:$0xf]
  %v3520 = vld [vmem:[#allocation2 + $0xe8] sm:$0xf]
  %v3521 = vld [vmem:[#allocation2 + $0xf0] sm:$0xf]
  %v3522 = vld [vmem:[#allocation2 + $0xf8] sm:$0xf]
  %v3523 = vld [vmem:[#allocation2 + $0x100] sm:$0xf]
  %v3524 = vld [vmem:[#allocation2 + $0x108] sm:$0xf]
  %v3525 = vld [vmem:[#allocation3] sm:$0xf]
  %v3526 = vld [vmem:[#allocation3 + $0x8] sm:$0xf]
  %v3527 = vld [vmem:[#allocation3 + $0x10] sm:$0xf]
  %v3528 = vld [vmem:[#allocation3 + $0x18] sm:$0xf]
  %v3529 = vld [vmem:[#allocation3 + $0x20] sm:$0xf]
  %v3530 = vld [vmem:[#allocation3 + $0x28] sm:$0xf]
  %v3531 = vld [vmem:[#allocation3 + $0x30] sm:$0xf]
  %v3532 = vld [vmem:[#allocation3 + $0x38] sm:$0xf]
  %v3533 = vld [vmem:[#allocation3 + $0x40] sm:$0xf]
  %v3534 = vld [vmem:[#allocation3 + $0x48] sm:$0xf]
  %v3535 = vld [vmem:[#allocation3 + $0x50] sm:$0xf]
  %v3536 = vld [vmem:[#allocation3 + $0x58] sm:$0xf]
  %v3537 = vld [vmem:[#allocation3 + $0x60] sm:$0xf]
  %v3538 = vld [vmem:[#allocation3 + $0x68] sm:$0xf]
  %v3539 = vld [vmem:[#allocation3 + $0x70] sm:$0xf]
  %v3540 = vld [vmem:[#allocation3 + $0x78] sm:$0xf]
  %v3541 = vld [vmem:[#allocation3 + $0x90] sm:$0xf]
  %v3542 = vld [vmem:[#allocation3 + $0x98] sm:$0xf]
  %v3543 = vld [vmem:[#allocation3 + $0xa0] sm:$0xf]
  %v3544 = vld [vmem:[#allocation3 + $0xa8] sm:$0xf]
  %v3545 = vld [vmem:[#allocation3 + $0xb0] sm:$0xf]
  %v3546 = vld [vmem:[#allocation3 + $0xb8] sm:$0xf]
  %v3547 = vld [vmem:[#allocation3 + $0xc0] sm:$0xf]
  %v3548 = vld [vmem:[#allocation3 + $0xc8] sm:$0xf]
  %v3549 = vld [vmem:[#allocation3 + $0xd0] sm:$0xf]
  %v3550 = vld [vmem:[#allocation3 + $0xd8] sm:$0xf]
  %v3551 = vld [vmem:[#allocation3 + $0xe0] sm:$0xf]
  %v3552 = vld [vmem:[#allocation3 + $0xe8] sm:$0xf]
  %v3553 = vld [vmem:[#allocation3 + $0xf0] sm:$0xf]
  %v3554 = vld [vmem:[#allocation3 + $0xf8] sm:$0xf]
  %v3555 = vld [vmem:[#allocation3 + $0x100] sm:$0xf]
  %v3556 = vld [vmem:[#allocation3 + $0x108] sm:$0xf]
  %v3557 = vld [vmem:[#allocation2 + $0x4] sm:$0x1]
  %v3558 = vld [vmem:[#allocation2 + $0xc] sm:$0x1]
  %v3559 = vld [vmem:[#allocation2 + $0x14] sm:$0x1]
  %v3560 = vld [vmem:[#allocation2 + $0x1c] sm:$0x1]
  %v3561 = vld [vmem:[#allocation2 + $0x24] sm:$0x1]
  %v3562 = vld [vmem:[#allocation2 + $0x2c] sm:$0x1]
  %v3563 = vld [vmem:[#allocation2 + $0x34] sm:$0x1]
  %v3564 = vld [vmem:[#allocation2 + $0x3c] sm:$0x1]
  %v3565 = vld [vmem:[#allocation2 + $0x44] sm:$0x1]
  %v3566 = vld [vmem:[#allocation2 + $0x4c] sm:$0x1]
  %v3567 = vld [vmem:[#allocation2 + $0x54] sm:$0x1]
  %v3568 = vld [vmem:[#allocation2 + $0x5c] sm:$0x1]
  %v3569 = vld [vmem:[#allocation2 + $0x64] sm:$0x1]
  %v3570 = vld [vmem:[#allocation2 + $0x6c] sm:$0x1]
  %v3571 = vld [vmem:[#allocation2 + $0x74] sm:$0x1]
  %v3572 = vld [vmem:[#allocation2 + $0x7c] sm:$0x1]
  %v3573 = vld [vmem:[#allocation2 + $0x94] sm:$0x1]
  %v3574 = vld [vmem:[#allocation2 + $0x9c] sm:$0x1]
  %v3575 = vld [vmem:[#allocation2 + $0xa4] sm:$0x1]
  %v3576 = vld [vmem:[#allocation2 + $0xac] sm:$0x1]
  %v3577 = vld [vmem:[#allocation2 + $0xb4] sm:$0x1]
  %v3578 = vld [vmem:[#allocation2 + $0xbc] sm:$0x1]
  %v3579 = vld [vmem:[#allocation2 + $0xc4] sm:$0x1]
  %v3580 = vld [vmem:[#allocation2 + $0xcc] sm:$0x1]
  %v3581 = vld [vmem:[#allocation2 + $0xd4] sm:$0x1]
  %v3582 = vld [vmem:[#allocation2 + $0xdc] sm:$0x1]
  %v3583 = vld [vmem:[#allocation2 + $0xe4] sm:$0x1]
  %v3584 = vld [vmem:[#allocation2 + $0xec] sm:$0x1]
  %v3585 = vld [vmem:[#allocation2 + $0xf4] sm:$0x1]
  %v3586 = vld [vmem:[#allocation2 + $0xfc] sm:$0x1]
  %v3587 = vld [vmem:[#allocation2 + $0x104] sm:$0x1]
  %v3588 = vld [vmem:[#allocation2 + $0x10c] sm:$0x1]
  %v3589 = vld [vmem:[#allocation3 + $0x4] sm:$0x1]
  %v3590 = vld [vmem:[#allocation3 + $0xc] sm:$0x1]
  %v3591 = vld [vmem:[#allocation3 + $0x14] sm:$0x1]
  %v3592 = vld [vmem:[#allocation3 + $0x1c] sm:$0x1]
  %v3593 = vld [vmem:[#allocation3 + $0x24] sm:$0x1]
  %v3594 = vld [vmem:[#allocation3 + $0x2c] sm:$0x1]
  %v3595 = vld [vmem:[#allocation3 + $0x34] sm:$0x1]
  %v3596 = vld [vmem:[#allocation3 + $0x3c] sm:$0x1]
  %v3597 = vld [vmem:[#allocation3 + $0x44] sm:$0x1]
  %v3598 = vld [vmem:[#allocation3 + $0x4c] sm:$0x1]
  %v3599 = vld [vmem:[#allocation3 + $0x54] sm:$0x1]
  %v3600 = vld [vmem:[#allocation3 + $0x5c] sm:$0x1]
  %v3601 = vld [vmem:[#allocation3 + $0x64] sm:$0x1]
  %v3602 = vld [vmem:[#allocation3 + $0x6c] sm:$0x1]
  %v3603 = vld [vmem:[#allocation3 + $0x74] sm:$0x1]
  %v3604 = vld [vmem:[#allocation3 + $0x7c] sm:$0x1]
  %v3605 = vld [vmem:[#allocation3 + $0x94] sm:$0x1]
  %v3606 = vld [vmem:[#allocation3 + $0x9c] sm:$0x1]
  %v3607 = vld [vmem:[#allocation3 + $0xa4] sm:$0x1]
  %v3608 = vld [vmem:[#allocation3 + $0xac] sm:$0x1]
  %v3609 = vld [vmem:[#allocation3 + $0xb4] sm:$0x1]
  %v3610 = vld [vmem:[#allocation3 + $0xbc] sm:$0x1]
  %v3611 = vld [vmem:[#allocation3 + $0xc4] sm:$0x1]
  %v3612 = vld [vmem:[#allocation3 + $0xcc] sm:$0x1]
  %v3613 = vld [vmem:[#allocation3 + $0xd4] sm:$0x1]
  %v3614 = vld [vmem:[#allocation3 + $0xdc] sm:$0x1]
  %v3615 = vld [vmem:[#allocation3 + $0xe4] sm:$0x1]
  %v3616 = vld [vmem:[#allocation3 + $0xec] sm:$0x1]
  %v3617 = vld [vmem:[#allocation3 + $0xf4] sm:$0x1]
  %v3618 = vld [vmem:[#allocation3 + $0xfc] sm:$0x1]
  %v3619 = vld [vmem:[#allocation3 + $0x104] sm:$0x1]
  %v3620 = vld [vmem:[#allocation3 + $0x10c] sm:$0x1]
  %v3621 = vld [vmem:[%s3264] sm:$0xf]
  %v3622 = vld [vmem:[%s3264 + $0x8] sm:$0xf]
  %v3623 = vld [vmem:[%s3264 + $0x10] sm:$0xf]
  %v3624 = vld [vmem:[%s3264 + $0x18] sm:$0xf]
  %v3625 = vld [vmem:[%s3264 + $0x20] sm:$0xf]
  %v3626 = vld [vmem:[%s3264 + $0x28] sm:$0xf]
  %v3627 = vld [vmem:[%s3264 + $0x30] sm:$0xf]
  %v3628 = vld [vmem:[%s3264 + $0x38] sm:$0xf]
  %v3629 = vld [vmem:[%s3264 + $0x40] sm:$0xf]
  %v3630 = vld [vmem:[%s3264 + $0x48] sm:$0xf]
  %v3631 = vld [vmem:[%s3264 + $0x50] sm:$0xf]
  %v3632 = vld [vmem:[%s3264 + $0x58] sm:$0xf]
  %v3633 = vld [vmem:[%s3264 + $0x60] sm:$0xf]
  %v3634 = vld [vmem:[%s3264 + $0x68] sm:$0xf]
  %v3635 = vld [vmem:[%s3264 + $0x70] sm:$0xf]
  %v3636 = vld [vmem:[%s3264 + $0x78] sm:$0xf]
  %v3637 = vld [vmem:[%s3264 + $0x90] sm:$0xf]
  %v3638 = vld [vmem:[%s3264 + $0x98] sm:$0xf]
  %v3639 = vld [vmem:[%s3264 + $0xa0] sm:$0xf]
  %v3640 = vld [vmem:[%s3264 + $0xa8] sm:$0xf]
  %v3641 = vld [vmem:[%s3264 + $0xb0] sm:$0xf]
  %v3642 = vld [vmem:[%s3264 + $0xb8] sm:$0xf]
  %v3643 = vld [vmem:[%s3264 + $0xc0] sm:$0xf]
  %v3644 = vld [vmem:[%s3264 + $0xc8] sm:$0xf]
  %v3645 = vld [vmem:[%s3264 + $0xd0] sm:$0xf]
  %v3646 = vld [vmem:[%s3264 + $0xd8] sm:$0xf]
  %v3647 = vld [vmem:[%s3264 + $0xe0] sm:$0xf]
  %v3648 = vld [vmem:[%s3264 + $0xe8] sm:$0xf]
  %v3649 = vld [vmem:[%s3264 + $0xf0] sm:$0xf]
  %v3650 = vld [vmem:[%s3264 + $0xf8] sm:$0xf]
  %v3651 = vld [vmem:[%s3264 + $0x100] sm:$0xf]
  %v3652 = vld [vmem:[%s3264 + $0x108] sm:$0xf]
  %v3653 = vld [vmem:[%s3460] sm:$0xf]
  %v3654 = vld [vmem:[%s3460 + $0x8] sm:$0xf]
  %v3655 = vld [vmem:[%s3460 + $0x10] sm:$0xf]
  %v3656 = vld [vmem:[%s3460 + $0x18] sm:$0xf]
  %v3657 = vld [vmem:[%s3460 + $0x20] sm:$0xf]
  %v3658 = vld [vmem:[%s3460 + $0x28] sm:$0xf]
  %v3659 = vld [vmem:[%s3460 + $0x30] sm:$0xf]
  %v3660 = vld [vmem:[%s3460 + $0x38] sm:$0xf]
  %v3661 = vld [vmem:[%s3460 + $0x40] sm:$0xf]
  %v3662 = vld [vmem:[%s3460 + $0x48] sm:$0xf]
  %v3663 = vld [vmem:[%s3460 + $0x50] sm:$0xf]
  %v3664 = vld [vmem:[%s3460 + $0x58] sm:$0xf]
  %v3665 = vld [vmem:[%s3460 + $0x60] sm:$0xf]
  %v3666 = vld [vmem:[%s3460 + $0x68] sm:$0xf]
  %v3667 = vld [vmem:[%s3460 + $0x70] sm:$0xf]
  %v3668 = vld [vmem:[%s3460 + $0x78] sm:$0xf]
  %v3669 = vld [vmem:[%s3460 + $0x90] sm:$0xf]
  %v3670 = vld [vmem:[%s3460 + $0x98] sm:$0xf]
  %v3671 = vld [vmem:[%s3460 + $0xa0] sm:$0xf]
  %v3672 = vld [vmem:[%s3460 + $0xa8] sm:$0xf]
  %v3673 = vld [vmem:[%s3460 + $0xb0] sm:$0xf]
  %v3674 = vld [vmem:[%s3460 + $0xb8] sm:$0xf]
  %v3675 = vld [vmem:[%s3460 + $0xc0] sm:$0xf]
  %v3676 = vld [vmem:[%s3460 + $0xc8] sm:$0xf]
  %v3677 = vld [vmem:[%s3460 + $0xd0] sm:$0xf]
  %v3678 = vld [vmem:[%s3460 + $0xd8] sm:$0xf]
  %v3679 = vld [vmem:[%s3460 + $0xe0] sm:$0xf]
  %v3680 = vld [vmem:[%s3460 + $0xe8] sm:$0xf]
  %v3681 = vld [vmem:[%s3460 + $0xf0] sm:$0xf]
  %v3682 = vld [vmem:[%s3460 + $0xf8] sm:$0xf]
  %v3683 = vld [vmem:[%s3460 + $0x100] sm:$0xf]
  %v3684 = vld [vmem:[%s3460 + $0x108] sm:$0xf]
  %v3685 = vld [vmem:[%s3264 + $0x4] sm:$0x1]
  %v3686 = vld [vmem:[%s3264 + $0xc] sm:$0x1]
  %v3687 = vld [vmem:[%s3264 + $0x14] sm:$0x1]
  %v3688 = vld [vmem:[%s3264 + $0x1c] sm:$0x1]
  %v3689 = vld [vmem:[%s3264 + $0x24] sm:$0x1]
  %v3690 = vld [vmem:[%s3264 + $0x2c] sm:$0x1]
  %v3691 = vld [vmem:[%s3264 + $0x34] sm:$0x1]
  %v3692 = vld [vmem:[%s3264 + $0x3c] sm:$0x1]
  %v3693 = vld [vmem:[%s3264 + $0x44] sm:$0x1]
  %v3694 = vld [vmem:[%s3264 + $0x4c] sm:$0x1]
  %v3695 = vld [vmem:[%s3264 + $0x54] sm:$0x1]
  %v3696 = vld [vmem:[%s3264 + $0x5c] sm:$0x1]
  %v3697 = vld [vmem:[%s3264 + $0x64] sm:$0x1]
  %v3698 = vld [vmem:[%s3264 + $0x6c] sm:$0x1]
  %v3699 = vld [vmem:[%s3264 + $0x74] sm:$0x1]
  %v3700 = vld [vmem:[%s3264 + $0x7c] sm:$0x1]
  %v3701 = vld [vmem:[%s3264 + $0x94] sm:$0x1]
  %v3702 = vld [vmem:[%s3264 + $0x9c] sm:$0x1]
  %v3703 = vld [vmem:[%s3264 + $0xa4] sm:$0x1]
  %v3704 = vld [vmem:[%s3264 + $0xac] sm:$0x1]
  %v3705 = vld [vmem:[%s3264 + $0xb4] sm:$0x1]
  %v3706 = vld [vmem:[%s3264 + $0xbc] sm:$0x1]
  %v3707 = vld [vmem:[%s3264 + $0xc4] sm:$0x1]
  %v3708 = vld [vmem:[%s3264 + $0xcc] sm:$0x1]
  %v3709 = vld [vmem:[%s3264 + $0xd4] sm:$0x1]
  %v3710 = vld [vmem:[%s3264 + $0xdc] sm:$0x1]
  %v3711 = vld [vmem:[%s3264 + $0xe4] sm:$0x1]
  %v3712 = vld [vmem:[%s3264 + $0xec] sm:$0x1]
  %v3713 = vld [vmem:[%s3264 + $0xf4] sm:$0x1]
  %v3714 = vld [vmem:[%s3264 + $0xfc] sm:$0x1]
  %v3715 = vld [vmem:[%s3264 + $0x104] sm:$0x1]
  %v3716 = vld [vmem:[%s3264 + $0x10c] sm:$0x1]
  %v3717 = vld [vmem:[%s3460 + $0x4] sm:$0x1]
  %v3718 = vld [vmem:[%s3460 + $0xc] sm:$0x1]
  %v3719 = vld [vmem:[%s3460 + $0x14] sm:$0x1]
  %v3720 = vld [vmem:[%s3460 + $0x1c] sm:$0x1]
  %v3721 = vld [vmem:[%s3460 + $0x24] sm:$0x1]
  %v3722 = vld [vmem:[%s3460 + $0x2c] sm:$0x1]
  %v3723 = vld [vmem:[%s3460 + $0x34] sm:$0x1]
  %v3724 = vld [vmem:[%s3460 + $0x3c] sm:$0x1]
  %v3725 = vld [vmem:[%s3460 + $0x44] sm:$0x1]
  %v3726 = vld [vmem:[%s3460 + $0x4c] sm:$0x1]
  %v3727 = vld [vmem:[%s3460 + $0x54] sm:$0x1]
  %v3728 = vld [vmem:[%s3460 + $0x5c] sm:$0x1]
  %v3729 = vld [vmem:[%s3460 + $0x64] sm:$0x1]
  %v3730 = vld [vmem:[%s3460 + $0x6c] sm:$0x1]
  %v3731 = vld [vmem:[%s3460 + $0x74] sm:$0x1]
  %v3732 = vld [vmem:[%s3460 + $0x7c] sm:$0x1]
  %v3733 = vld [vmem:[%s3460 + $0x94] sm:$0x1]
  %v3734 = vld [vmem:[%s3460 + $0x9c] sm:$0x1]
  %v3735 = vld [vmem:[%s3460 + $0xa4] sm:$0x1]
  %v3736 = vld [vmem:[%s3460 + $0xac] sm:$0x1]
  %v3737 = vld [vmem:[%s3460 + $0xb4] sm:$0x1]
  %v3738 = vld [vmem:[%s3460 + $0xbc] sm:$0x1]
  %v3739 = vld [vmem:[%s3460 + $0xc4] sm:$0x1]
  %v3740 = vld [vmem:[%s3460 + $0xcc] sm:$0x1]
  %v3741 = vld [vmem:[%s3460 + $0xd4] sm:$0x1]
  %v3742 = vld [vmem:[%s3460 + $0xdc] sm:$0x1]
  %v3743 = vld [vmem:[%s3460 + $0xe4] sm:$0x1]
  %v3744 = vld [vmem:[%s3460 + $0xec] sm:$0x1]
  %v3745 = vld [vmem:[%s3460 + $0xf4] sm:$0x1]
  %v3746 = vld [vmem:[%s3460 + $0xfc] sm:$0x1]
  %v3747 = vld [vmem:[%s3460 + $0x104] sm:$0x1]
  %v3748 = vld [vmem:[%s3460 + $0x10c] sm:$0x1]
  %s3749 = scalar_lea.vmem [#allocation2], 16
  %v3750 = vld [vmem:[%s3749] sm:$0xf]
  %v3751 = vld [vmem:[%s3749 + $0x8] sm:$0xf]
  %v3752 = vld [vmem:[%s3749 + $0x10] sm:$0xf]
  %v3753 = vld [vmem:[%s3749 + $0x18] sm:$0xf]
  %v3754 = vld [vmem:[%s3749 + $0x20] sm:$0xf]
  %v3755 = vld [vmem:[%s3749 + $0x28] sm:$0xf]
  %v3756 = vld [vmem:[%s3749 + $0x30] sm:$0xf]
  %v3757 = vld [vmem:[%s3749 + $0x38] sm:$0xf]
  %v3758 = vld [vmem:[%s3749 + $0x40] sm:$0xf]
  %v3759 = vld [vmem:[%s3749 + $0x48] sm:$0xf]
  %v3760 = vld [vmem:[%s3749 + $0x50] sm:$0xf]
  %v3761 = vld [vmem:[%s3749 + $0x58] sm:$0xf]
  %v3762 = vld [vmem:[%s3749 + $0x60] sm:$0xf]
  %v3763 = vld [vmem:[%s3749 + $0x68] sm:$0xf]
  %v3764 = vld [vmem:[%s3749 + $0x70] sm:$0xf]
  %v3765 = vld [vmem:[%s3749 + $0x78] sm:$0xf]
  %v3766 = vld [vmem:[%s3749 + $0x90] sm:$0xf]
  %v3767 = vld [vmem:[%s3749 + $0x98] sm:$0xf]
  %v3768 = vld [vmem:[%s3749 + $0xa0] sm:$0xf]
  %v3769 = vld [vmem:[%s3749 + $0xa8] sm:$0xf]
  %v3770 = vld [vmem:[%s3749 + $0xb0] sm:$0xf]
  %v3771 = vld [vmem:[%s3749 + $0xb8] sm:$0xf]
  %v3772 = vld [vmem:[%s3749 + $0xc0] sm:$0xf]
  %v3773 = vld [vmem:[%s3749 + $0xc8] sm:$0xf]
  %v3774 = vld [vmem:[%s3749 + $0xd0] sm:$0xf]
  %v3775 = vld [vmem:[%s3749 + $0xd8] sm:$0xf]
  %v3776 = vld [vmem:[%s3749 + $0xe0] sm:$0xf]
  %v3777 = vld [vmem:[%s3749 + $0xe8] sm:$0xf]
  %v3778 = vld [vmem:[%s3749 + $0xf0] sm:$0xf]
  %v3779 = vld [vmem:[%s3749 + $0xf8] sm:$0xf]
  %v3780 = vld [vmem:[%s3749 + $0x100] sm:$0xf]
  %v3781 = vld [vmem:[%s3749 + $0x108] sm:$0xf]
  %s3782 = scalar_lea.vmem [#allocation3], 16
  %v3783 = vld [vmem:[%s3782] sm:$0xf]
  %v3784 = vld [vmem:[%s3782 + $0x8] sm:$0xf]
  %v3785 = vld [vmem:[%s3782 + $0x10] sm:$0xf]
  %v3786 = vld [vmem:[%s3782 + $0x18] sm:$0xf]
  %v3787 = vld [vmem:[%s3782 + $0x20] sm:$0xf]
  %v3788 = vld [vmem:[%s3782 + $0x28] sm:$0xf]
  %v3789 = vld [vmem:[%s3782 + $0x30] sm:$0xf]
  %v3790 = vld [vmem:[%s3782 + $0x38] sm:$0xf]
  %v3791 = vld [vmem:[%s3782 + $0x40] sm:$0xf]
  %v3792 = vld [vmem:[%s3782 + $0x48] sm:$0xf]
  %v3793 = vld [vmem:[%s3782 + $0x50] sm:$0xf]
  %v3794 = vld [vmem:[%s3782 + $0x58] sm:$0xf]
  %v3795 = vld [vmem:[%s3782 + $0x60] sm:$0xf]
  %v3796 = vld [vmem:[%s3782 + $0x68] sm:$0xf]
  %v3797 = vld [vmem:[%s3782 + $0x70] sm:$0xf]
  %v3798 = vld [vmem:[%s3782 + $0x78] sm:$0xf]
  %v3799 = vld [vmem:[%s3782 + $0x90] sm:$0xf]
  %v3800 = vld [vmem:[%s3782 + $0x98] sm:$0xf]
  %v3801 = vld [vmem:[%s3782 + $0xa0] sm:$0xf]
  %v3802 = vld [vmem:[%s3782 + $0xa8] sm:$0xf]
  %v3803 = vld [vmem:[%s3782 + $0xb0] sm:$0xf]
  %v3804 = vld [vmem:[%s3782 + $0xb8] sm:$0xf]
  %v3805 = vld [vmem:[%s3782 + $0xc0] sm:$0xf]
  %v3806 = vld [vmem:[%s3782 + $0xc8] sm:$0xf]
  %v3807 = vld [vmem:[%s3782 + $0xd0] sm:$0xf]
  %v3808 = vld [vmem:[%s3782 + $0xd8] sm:$0xf]
  %v3809 = vld [vmem:[%s3782 + $0xe0] sm:$0xf]
  %v3810 = vld [vmem:[%s3782 + $0xe8] sm:$0xf]
  %v3811 = vld [vmem:[%s3782 + $0xf0] sm:$0xf]
  %v3812 = vld [vmem:[%s3782 + $0xf8] sm:$0xf]
  %v3813 = vld [vmem:[%s3782 + $0x100] sm:$0xf]
  %v3814 = vld [vmem:[%s3782 + $0x108] sm:$0xf]
  %v3815 = vld [vmem:[%s3749 + $0x4] sm:$0x1]
  %v3816 = vld [vmem:[%s3749 + $0xc] sm:$0x1]
  %v3817 = vld [vmem:[%s3749 + $0x14] sm:$0x1]
  %v3818 = vld [vmem:[%s3749 + $0x1c] sm:$0x1]
  %v3819 = vld [vmem:[%s3749 + $0x24] sm:$0x1]
  %v3820 = vld [vmem:[%s3749 + $0x2c] sm:$0x1]
  %v3821 = vld [vmem:[%s3749 + $0x34] sm:$0x1]
  %v3822 = vld [vmem:[%s3749 + $0x3c] sm:$0x1]
  %v3823 = vld [vmem:[%s3749 + $0x44] sm:$0x1]
  %v3824 = vld [vmem:[%s3749 + $0x4c] sm:$0x1]
  %v3825 = vld [vmem:[%s3749 + $0x54] sm:$0x1]
  %v3826 = vld [vmem:[%s3749 + $0x5c] sm:$0x1]
  %v3827 = vld [vmem:[%s3749 + $0x64] sm:$0x1]
  %v3828 = vld [vmem:[%s3749 + $0x6c] sm:$0x1]
  %v3829 = vld [vmem:[%s3749 + $0x74] sm:$0x1]
  %v3830 = vld [vmem:[%s3749 + $0x7c] sm:$0x1]
  %v3831 = vld [vmem:[%s3749 + $0x94] sm:$0x1]
  %v3832 = vld [vmem:[%s3749 + $0x9c] sm:$0x1]
  %v3833 = vld [vmem:[%s3749 + $0xa4] sm:$0x1]
  %v3834 = vld [vmem:[%s3749 + $0xac] sm:$0x1]
  %v3835 = vld [vmem:[%s3749 + $0xb4] sm:$0x1]
  %v3836 = vld [vmem:[%s3749 + $0xbc] sm:$0x1]
  %v3837 = vld [vmem:[%s3749 + $0xc4] sm:$0x1]
  %v3838 = vld [vmem:[%s3749 + $0xcc] sm:$0x1]
  %v3839 = vld [vmem:[%s3749 + $0xd4] sm:$0x1]
  %v3840 = vld [vmem:[%s3749 + $0xdc] sm:$0x1]
  %v3841 = vld [vmem:[%s3749 + $0xe4] sm:$0x1]
  %v3842 = vld [vmem:[%s3749 + $0xec] sm:$0x1]
  %v3843 = vld [vmem:[%s3749 + $0xf4] sm:$0x1]
  %v3844 = vld [vmem:[%s3749 + $0xfc] sm:$0x1]
  %v3845 = vld [vmem:[%s3749 + $0x104] sm:$0x1]
  %v3846 = vld [vmem:[%s3749 + $0x10c] sm:$0x1]
  %v3847 = vld [vmem:[%s3782 + $0x4] sm:$0x1]
  %v3848 = vld [vmem:[%s3782 + $0xc] sm:$0x1]
  %v3849 = vld [vmem:[%s3782 + $0x14] sm:$0x1]
  %v3850 = vld [vmem:[%s3782 + $0x1c] sm:$0x1]
  %v3851 = vld [vmem:[%s3782 + $0x24] sm:$0x1]
  %v3852 = vld [vmem:[%s3782 + $0x2c] sm:$0x1]
  %v3853 = vld [vmem:[%s3782 + $0x34] sm:$0x1]
  %v3854 = vld [vmem:[%s3782 + $0x3c] sm:$0x1]
  %v3855 = vld [vmem:[%s3782 + $0x44] sm:$0x1]
  %v3856 = vld [vmem:[%s3782 + $0x4c] sm:$0x1]
  %v3857 = vld [vmem:[%s3782 + $0x54] sm:$0x1]
  %v3858 = vld [vmem:[%s3782 + $0x5c] sm:$0x1]
  %v3859 = vld [vmem:[%s3782 + $0x64] sm:$0x1]
  %v3860 = vld [vmem:[%s3782 + $0x6c] sm:$0x1]
  %v3861 = vld [vmem:[%s3782 + $0x74] sm:$0x1]
  %v3862 = vld [vmem:[%s3782 + $0x7c] sm:$0x1]
  %v3863 = vld [vmem:[%s3782 + $0x94] sm:$0x1]
  %v3864 = vld [vmem:[%s3782 + $0x9c] sm:$0x1]
  %v3865 = vld [vmem:[%s3782 + $0xa4] sm:$0x1]
  %v3866 = vld [vmem:[%s3782 + $0xac] sm:$0x1]
  %v3867 = vld [vmem:[%s3782 + $0xb4] sm:$0x1]
  %v3868 = vld [vmem:[%s3782 + $0xbc] sm:$0x1]
  %v3869 = vld [vmem:[%s3782 + $0xc4] sm:$0x1]
  %v3870 = vld [vmem:[%s3782 + $0xcc] sm:$0x1]
  %v3871 = vld [vmem:[%s3782 + $0xd4] sm:$0x1]
  %v3872 = vld [vmem:[%s3782 + $0xdc] sm:$0x1]
  %v3873 = vld [vmem:[%s3782 + $0xe4] sm:$0x1]
  %v3874 = vld [vmem:[%s3782 + $0xec] sm:$0x1]
  %v3875 = vld [vmem:[%s3782 + $0xf4] sm:$0x1]
  %v3876 = vld [vmem:[%s3782 + $0xfc] sm:$0x1]
  %v3877 = vld [vmem:[%s3782 + $0x104] sm:$0x1]
  %v3878 = vld [vmem:[%s3782 + $0x10c] sm:$0x1]
  %v3943 = vunpack.c.l.b16 %v3493
  %v3944 = vunpack.c.l.b16 %v3557
  %v3945 = vunpack.c.l.b16 %v3494
  %v3946 = vunpack.c.l.b16 %v3558
  %v3947 = vunpack.c.l.b16 %v3495
  %v3948 = vunpack.c.l.b16 %v3559
  %v3949 = vunpack.c.l.b16 %v3496
  %v3950 = vunpack.c.l.b16 %v3560
  %v3951 = vunpack.c.l.b16 %v3497
  %v3952 = vunpack.c.l.b16 %v3561
  %v3953 = vunpack.c.l.b16 %v3498
  %v3954 = vunpack.c.l.b16 %v3562
  %v3955 = vunpack.c.l.b16 %v3499
  %v3956 = vunpack.c.l.b16 %v3563
  %v3957 = vunpack.c.l.b16 %v3500
  %v3958 = vunpack.c.l.b16 %v3564
  %v3959 = vunpack.c.l.b16 %v3501
  %v3960 = vunpack.c.l.b16 %v3565
  %v3961 = vunpack.c.l.b16 %v3502
  %v3962 = vunpack.c.l.b16 %v3566
  %v3963 = vunpack.c.l.b16 %v3503
  %v3964 = vunpack.c.l.b16 %v3567
  %v3965 = vunpack.c.l.b16 %v3504
  %v3966 = vunpack.c.l.b16 %v3568
  %v3967 = vunpack.c.l.b16 %v3505
  %v3968 = vunpack.c.l.b16 %v3569
  %v3969 = vunpack.c.l.b16 %v3506
  %v3970 = vunpack.c.l.b16 %v3570
  %v3971 = vunpack.c.l.b16 %v3507
  %v3972 = vunpack.c.l.b16 %v3571
  %v3973 = vunpack.c.l.b16 %v3508
  %v3974 = vunpack.c.l.b16 %v3572
  %v3975 = vunpack.c.l.b16 %v3509
  %v3976 = vunpack.c.l.b16 %v3573
  %v3977 = vunpack.c.l.b16 %v3510
  %v3978 = vunpack.c.l.b16 %v3574
  %v3979 = vunpack.c.l.b16 %v3511
  %v3980 = vunpack.c.l.b16 %v3575
  %v3981 = vunpack.c.l.b16 %v3512
  %v3982 = vunpack.c.l.b16 %v3576
  %v3983 = vunpack.c.l.b16 %v3513
  %v3984 = vunpack.c.l.b16 %v3577
  %v3985 = vunpack.c.l.b16 %v3514
  %v3986 = vunpack.c.l.b16 %v3578
  %v3987 = vunpack.c.l.b16 %v3515
  %v3988 = vunpack.c.l.b16 %v3579
  %v3989 = vunpack.c.l.b16 %v3516
  %v3990 = vunpack.c.l.b16 %v3580
  %v3991 = vunpack.c.l.b16 %v3517
  %v3992 = vunpack.c.l.b16 %v3581
  %v3993 = vunpack.c.l.b16 %v3518
  %v3994 = vunpack.c.l.b16 %v3582
  %v3995 = vunpack.c.l.b16 %v3519
  %v3996 = vunpack.c.l.b16 %v3583
  %v3997 = vunpack.c.l.b16 %v3520
  %v3998 = vunpack.c.l.b16 %v3584
  %v3999 = vunpack.c.l.b16 %v3521
  %v4000 = vunpack.c.l.b16 %v3585
  %v4001 = vunpack.c.l.b16 %v3522
  %v4002 = vunpack.c.l.b16 %v3586
  %v4003 = vunpack.c.l.b16 %v3523
  %v4004 = vunpack.c.l.b16 %v3587
  %v4005 = vunpack.c.l.b16 %v3524
  %v4006 = vunpack.c.l.b16 %v3588
  %v4007 = vpack.c.b16 %v3944, %v3943
  %v4008 = vpack.c.b16 %v3946, %v3945
  %v4009 = vpack.c.b16 %v3948, %v3947
  %v4010 = vpack.c.b16 %v3950, %v3949
  %v4011 = vpack.c.b16 %v3952, %v3951
  %v4012 = vpack.c.b16 %v3954, %v3953
  %v4013 = vpack.c.b16 %v3956, %v3955
  %v4014 = vpack.c.b16 %v3958, %v3957
  %v4015 = vpack.c.b16 %v3960, %v3959
  %v4016 = vpack.c.b16 %v3962, %v3961
  %v4017 = vpack.c.b16 %v3964, %v3963
  %v4018 = vpack.c.b16 %v3966, %v3965
  %v4019 = vpack.c.b16 %v3968, %v3967
  %v4020 = vpack.c.b16 %v3970, %v3969
  %v4021 = vpack.c.b16 %v3972, %v3971
  %v4022 = vpack.c.b16 %v3974, %v3973
  %v4023 = vpack.c.b16 %v3976, %v3975
  %v4024 = vpack.c.b16 %v3978, %v3977
  %v4025 = vpack.c.b16 %v3980, %v3979
  %v4026 = vpack.c.b16 %v3982, %v3981
  %v4027 = vpack.c.b16 %v3984, %v3983
  %v4028 = vpack.c.b16 %v3986, %v3985
  %v4029 = vpack.c.b16 %v3988, %v3987
  %v4030 = vpack.c.b16 %v3990, %v3989
  %v4031 = vpack.c.b16 %v3992, %v3991
  %v4032 = vpack.c.b16 %v3994, %v3993
  %v4033 = vpack.c.b16 %v3996, %v3995
  %v4034 = vpack.c.b16 %v3998, %v3997
  %v4035 = vpack.c.b16 %v4000, %v3999
  %v4036 = vpack.c.b16 %v4002, %v4001
  %v4037 = vpack.c.b16 %v4004, %v4003
  %v4038 = vpack.c.b16 %v4006, %v4005
  %v4040 = vshrl.u32 %v4007, 16
  %v4042 = vshll.u32 %v4007, 16
  %v4044 = vrot.slane %v4042, 1
  %v4045 = vor.u32 %v4040, %v4044
  %v4047 = vshrl.u32 %v4008, 16
  %v4049 = vshll.u32 %v4008, 16
  %v4051 = vrot.slane %v4049, 1
  %v4052 = vor.u32 %v4047, %v4051
  %v4054 = vshrl.u32 %v4009, 16
  %v4056 = vshll.u32 %v4009, 16
  %v4058 = vrot.slane %v4056, 1
  %v4059 = vor.u32 %v4054, %v4058
  %v4061 = vshrl.u32 %v4010, 16
  %v4063 = vshll.u32 %v4010, 16
  %v4065 = vrot.slane %v4063, 1
  %v4066 = vor.u32 %v4061, %v4065
  %v4068 = vshrl.u32 %v4011, 16
  %v4070 = vshll.u32 %v4011, 16
  %v4072 = vrot.slane %v4070, 1
  %v4073 = vor.u32 %v4068, %v4072
  %v4075 = vshrl.u32 %v4012, 16
  %v4077 = vshll.u32 %v4012, 16
  %v4079 = vrot.slane %v4077, 1
  %v4080 = vor.u32 %v4075, %v4079
  %v4082 = vshrl.u32 %v4013, 16
  %v4084 = vshll.u32 %v4013, 16
  %v4086 = vrot.slane %v4084, 1
  %v4087 = vor.u32 %v4082, %v4086
  %v4089 = vshrl.u32 %v4014, 16
  %v4091 = vshll.u32 %v4014, 16
  %v4093 = vrot.slane %v4091, 1
  %v4094 = vor.u32 %v4089, %v4093
  %v4096 = vshrl.u32 %v4015, 16
  %v4098 = vshll.u32 %v4015, 16
  %v4100 = vrot.slane %v4098, 1
  %v4101 = vor.u32 %v4096, %v4100
  %v4103 = vshrl.u32 %v4016, 16
  %v4105 = vshll.u32 %v4016, 16
  %v4107 = vrot.slane %v4105, 1
  %v4108 = vor.u32 %v4103, %v4107
  %v4110 = vshrl.u32 %v4017, 16
  %v4112 = vshll.u32 %v4017, 16
  %v4114 = vrot.slane %v4112, 1
  %v4115 = vor.u32 %v4110, %v4114
  %v4117 = vshrl.u32 %v4018, 16
  %v4119 = vshll.u32 %v4018, 16
  %v4121 = vrot.slane %v4119, 1
  %v4122 = vor.u32 %v4117, %v4121
  %v4124 = vshrl.u32 %v4019, 16
  %v4126 = vshll.u32 %v4019, 16
  %v4128 = vrot.slane %v4126, 1
  %v4129 = vor.u32 %v4124, %v4128
  %v4131 = vshrl.u32 %v4020, 16
  %v4133 = vshll.u32 %v4020, 16
  %v4135 = vrot.slane %v4133, 1
  %v4136 = vor.u32 %v4131, %v4135
  %v4138 = vshrl.u32 %v4021, 16
  %v4140 = vshll.u32 %v4021, 16
  %v4142 = vrot.slane %v4140, 1
  %v4143 = vor.u32 %v4138, %v4142
  %v4145 = vshrl.u32 %v4022, 16
  %v4147 = vshll.u32 %v4022, 16
  %v4149 = vrot.slane %v4147, 1
  %v4150 = vor.u32 %v4145, %v4149
  %v4152 = vshrl.u32 %v4023, 16
  %v4154 = vshll.u32 %v4023, 16
  %v4156 = vrot.slane %v4154, 1
  %v4157 = vor.u32 %v4152, %v4156
  %v4159 = vshrl.u32 %v4024, 16
  %v4161 = vshll.u32 %v4024, 16
  %v4163 = vrot.slane %v4161, 1
  %v4164 = vor.u32 %v4159, %v4163
  %v4166 = vshrl.u32 %v4025, 16
  %v4168 = vshll.u32 %v4025, 16
  %v4170 = vrot.slane %v4168, 1
  %v4171 = vor.u32 %v4166, %v4170
  %v4173 = vshrl.u32 %v4026, 16
  %v4175 = vshll.u32 %v4026, 16
  %v4177 = vrot.slane %v4175, 1
  %v4178 = vor.u32 %v4173, %v4177
  %v4180 = vshrl.u32 %v4027, 16
  %v4182 = vshll.u32 %v4027, 16
  %v4184 = vrot.slane %v4182, 1
  %v4185 = vor.u32 %v4180, %v4184
  %v4187 = vshrl.u32 %v4028, 16
  %v4189 = vshll.u32 %v4028, 16
  %v4191 = vrot.slane %v4189, 1
  %v4192 = vor.u32 %v4187, %v4191
  %v4194 = vshrl.u32 %v4029, 16
  %v4196 = vshll.u32 %v4029, 16
  %v4198 = vrot.slane %v4196, 1
  %v4199 = vor.u32 %v4194, %v4198
  %v4201 = vshrl.u32 %v4030, 16
  %v4203 = vshll.u32 %v4030, 16
  %v4205 = vrot.slane %v4203, 1
  %v4206 = vor.u32 %v4201, %v4205
  %v4208 = vshrl.u32 %v4031, 16
  %v4210 = vshll.u32 %v4031, 16
  %v4212 = vrot.slane %v4210, 1
  %v4213 = vor.u32 %v4208, %v4212
  %v4215 = vshrl.u32 %v4032, 16
  %v4217 = vshll.u32 %v4032, 16
  %v4219 = vrot.slane %v4217, 1
  %v4220 = vor.u32 %v4215, %v4219
  %v4222 = vshrl.u32 %v4033, 16
  %v4224 = vshll.u32 %v4033, 16
  %v4226 = vrot.slane %v4224, 1
  %v4227 = vor.u32 %v4222, %v4226
  %v4229 = vshrl.u32 %v4034, 16
  %v4231 = vshll.u32 %v4034, 16
  %v4233 = vrot.slane %v4231, 1
  %v4234 = vor.u32 %v4229, %v4233
  %v4236 = vshrl.u32 %v4035, 16
  %v4238 = vshll.u32 %v4035, 16
  %v4240 = vrot.slane %v4238, 1
  %v4241 = vor.u32 %v4236, %v4240
  %v4243 = vshrl.u32 %v4036, 16
  %v4245 = vshll.u32 %v4036, 16
  %v4247 = vrot.slane %v4245, 1
  %v4248 = vor.u32 %v4243, %v4247
  %v4250 = vshrl.u32 %v4037, 16
  %v4252 = vshll.u32 %v4037, 16
  %v4254 = vrot.slane %v4252, 1
  %v4255 = vor.u32 %v4250, %v4254
  %v4257 = vshrl.u32 %v4038, 16
  %v4259 = vshll.u32 %v4038, 16
  %v4261 = vrot.slane %v4259, 1
  %v4262 = vor.u32 %v4257, %v4261
  %v4327 = vunpack.c.l.b16 %v3621
  %v4328 = vunpack.c.l.b16 %v3685
  %v4329 = vunpack.c.l.b16 %v3622
  %v4330 = vunpack.c.l.b16 %v3686
  %v4331 = vunpack.c.l.b16 %v3623
  %v4332 = vunpack.c.l.b16 %v3687
  %v4333 = vunpack.c.l.b16 %v3624
  %v4334 = vunpack.c.l.b16 %v3688
  %v4335 = vunpack.c.l.b16 %v3625
  %v4336 = vunpack.c.l.b16 %v3689
  %v4337 = vunpack.c.l.b16 %v3626
  %v4338 = vunpack.c.l.b16 %v3690
  %v4339 = vunpack.c.l.b16 %v3627
  %v4340 = vunpack.c.l.b16 %v3691
  %v4341 = vunpack.c.l.b16 %v3628
  %v4342 = vunpack.c.l.b16 %v3692
  %v4343 = vunpack.c.l.b16 %v3629
  %v4344 = vunpack.c.l.b16 %v3693
  %v4345 = vunpack.c.l.b16 %v3630
  %v4346 = vunpack.c.l.b16 %v3694
  %v4347 = vunpack.c.l.b16 %v3631
  %v4348 = vunpack.c.l.b16 %v3695
  %v4349 = vunpack.c.l.b16 %v3632
  %v4350 = vunpack.c.l.b16 %v3696
  %v4351 = vunpack.c.l.b16 %v3633
  %v4352 = vunpack.c.l.b16 %v3697
  %v4353 = vunpack.c.l.b16 %v3634
  %v4354 = vunpack.c.l.b16 %v3698
  %v4355 = vunpack.c.l.b16 %v3635
  %v4356 = vunpack.c.l.b16 %v3699
  %v4357 = vunpack.c.l.b16 %v3636
  %v4358 = vunpack.c.l.b16 %v3700
  %v4359 = vunpack.c.l.b16 %v3637
  %v4360 = vunpack.c.l.b16 %v3701
  %v4361 = vunpack.c.l.b16 %v3638
  %v4362 = vunpack.c.l.b16 %v3702
  %v4363 = vunpack.c.l.b16 %v3639
  %v4364 = vunpack.c.l.b16 %v3703
  %v4365 = vunpack.c.l.b16 %v3640
  %v4366 = vunpack.c.l.b16 %v3704
  %v4367 = vunpack.c.l.b16 %v3641
  %v4368 = vunpack.c.l.b16 %v3705
  %v4369 = vunpack.c.l.b16 %v3642
  %v4370 = vunpack.c.l.b16 %v3706
  %v4371 = vunpack.c.l.b16 %v3643
  %v4372 = vunpack.c.l.b16 %v3707
  %v4373 = vunpack.c.l.b16 %v3644
  %v4374 = vunpack.c.l.b16 %v3708
  %v4375 = vunpack.c.l.b16 %v3645
  %v4376 = vunpack.c.l.b16 %v3709
  %v4377 = vunpack.c.l.b16 %v3646
  %v4378 = vunpack.c.l.b16 %v3710
  %v4379 = vunpack.c.l.b16 %v3647
  %v4380 = vunpack.c.l.b16 %v3711
  %v4381 = vunpack.c.l.b16 %v3648
  %v4382 = vunpack.c.l.b16 %v3712
  %v4383 = vunpack.c.l.b16 %v3649
  %v4384 = vunpack.c.l.b16 %v3713
  %v4385 = vunpack.c.l.b16 %v3650
  %v4386 = vunpack.c.l.b16 %v3714
  %v4387 = vunpack.c.l.b16 %v3651
  %v4388 = vunpack.c.l.b16 %v3715
  %v4389 = vunpack.c.l.b16 %v3652
  %v4390 = vunpack.c.l.b16 %v3716
  %v4391 = vpack.c.b16 %v4328, %v4327
  %v4392 = vpack.c.b16 %v4330, %v4329
  %v4393 = vpack.c.b16 %v4332, %v4331
  %v4394 = vpack.c.b16 %v4334, %v4333
  %v4395 = vpack.c.b16 %v4336, %v4335
  %v4396 = vpack.c.b16 %v4338, %v4337
  %v4397 = vpack.c.b16 %v4340, %v4339
  %v4398 = vpack.c.b16 %v4342, %v4341
  %v4399 = vpack.c.b16 %v4344, %v4343
  %v4400 = vpack.c.b16 %v4346, %v4345
  %v4401 = vpack.c.b16 %v4348, %v4347
  %v4402 = vpack.c.b16 %v4350, %v4349
  %v4403 = vpack.c.b16 %v4352, %v4351
  %v4404 = vpack.c.b16 %v4354, %v4353
  %v4405 = vpack.c.b16 %v4356, %v4355
  %v4406 = vpack.c.b16 %v4358, %v4357
  %v4407 = vpack.c.b16 %v4360, %v4359
  %v4408 = vpack.c.b16 %v4362, %v4361
  %v4409 = vpack.c.b16 %v4364, %v4363
  %v4410 = vpack.c.b16 %v4366, %v4365
  %v4411 = vpack.c.b16 %v4368, %v4367
  %v4412 = vpack.c.b16 %v4370, %v4369
  %v4413 = vpack.c.b16 %v4372, %v4371
  %v4414 = vpack.c.b16 %v4374, %v4373
  %v4415 = vpack.c.b16 %v4376, %v4375
  %v4416 = vpack.c.b16 %v4378, %v4377
  %v4417 = vpack.c.b16 %v4380, %v4379
  %v4418 = vpack.c.b16 %v4382, %v4381
  %v4419 = vpack.c.b16 %v4384, %v4383
  %v4420 = vpack.c.b16 %v4386, %v4385
  %v4421 = vpack.c.b16 %v4388, %v4387
  %v4422 = vpack.c.b16 %v4390, %v4389
  %v4424 = vshrl.u32 %v4391, 16
  %v4426 = vshll.u32 %v4391, 16
  %v4428 = vrot.slane %v4426, 1
  %v4429 = vor.u32 %v4424, %v4428
  %v4431 = vshrl.u32 %v4392, 16
  %v4433 = vshll.u32 %v4392, 16
  %v4435 = vrot.slane %v4433, 1
  %v4436 = vor.u32 %v4431, %v4435
  %v4438 = vshrl.u32 %v4393, 16
  %v4440 = vshll.u32 %v4393, 16
  %v4442 = vrot.slane %v4440, 1
  %v4443 = vor.u32 %v4438, %v4442
  %v4445 = vshrl.u32 %v4394, 16
  %v4447 = vshll.u32 %v4394, 16
  %v4449 = vrot.slane %v4447, 1
  %v4450 = vor.u32 %v4445, %v4449
  %v4452 = vshrl.u32 %v4395, 16
  %v4454 = vshll.u32 %v4395, 16
  %v4456 = vrot.slane %v4454, 1
  %v4457 = vor.u32 %v4452, %v4456
  %v4459 = vshrl.u32 %v4396, 16
  %v4461 = vshll.u32 %v4396, 16
  %v4463 = vrot.slane %v4461, 1
  %v4464 = vor.u32 %v4459, %v4463
  %v4466 = vshrl.u32 %v4397, 16
  %v4468 = vshll.u32 %v4397, 16
  %v4470 = vrot.slane %v4468, 1
  %v4471 = vor.u32 %v4466, %v4470
  %v4473 = vshrl.u32 %v4398, 16
  %v4475 = vshll.u32 %v4398, 16
  %v4477 = vrot.slane %v4475, 1
  %v4478 = vor.u32 %v4473, %v4477
  %v4480 = vshrl.u32 %v4399, 16
  %v4482 = vshll.u32 %v4399, 16
  %v4484 = vrot.slane %v4482, 1
  %v4485 = vor.u32 %v4480, %v4484
  %v4487 = vshrl.u32 %v4400, 16
  %v4489 = vshll.u32 %v4400, 16
  %v4491 = vrot.slane %v4489, 1
  %v4492 = vor.u32 %v4487, %v4491
  %v4494 = vshrl.u32 %v4401, 16
  %v4496 = vshll.u32 %v4401, 16
  %v4498 = vrot.slane %v4496, 1
  %v4499 = vor.u32 %v4494, %v4498
  %v4501 = vshrl.u32 %v4402, 16
  %v4503 = vshll.u32 %v4402, 16
  %v4505 = vrot.slane %v4503, 1
  %v4506 = vor.u32 %v4501, %v4505
  %v4508 = vshrl.u32 %v4403, 16
  %v4510 = vshll.u32 %v4403, 16
  %v4512 = vrot.slane %v4510, 1
  %v4513 = vor.u32 %v4508, %v4512
  %v4515 = vshrl.u32 %v4404, 16
  %v4517 = vshll.u32 %v4404, 16
  %v4519 = vrot.slane %v4517, 1
  %v4520 = vor.u32 %v4515, %v4519
  %v4522 = vshrl.u32 %v4405, 16
  %v4524 = vshll.u32 %v4405, 16
  %v4526 = vrot.slane %v4524, 1
  %v4527 = vor.u32 %v4522, %v4526
  %v4529 = vshrl.u32 %v4406, 16
  %v4531 = vshll.u32 %v4406, 16
  %v4533 = vrot.slane %v4531, 1
  %v4534 = vor.u32 %v4529, %v4533
  %v4536 = vshrl.u32 %v4407, 16
  %v4538 = vshll.u32 %v4407, 16
  %v4540 = vrot.slane %v4538, 1
  %v4541 = vor.u32 %v4536, %v4540
  %v4543 = vshrl.u32 %v4408, 16
  %v4545 = vshll.u32 %v4408, 16
  %v4547 = vrot.slane %v4545, 1
  %v4548 = vor.u32 %v4543, %v4547
  %v4550 = vshrl.u32 %v4409, 16
  %v4552 = vshll.u32 %v4409, 16
  %v4554 = vrot.slane %v4552, 1
  %v4555 = vor.u32 %v4550, %v4554
  %v4557 = vshrl.u32 %v4410, 16
  %v4559 = vshll.u32 %v4410, 16
  %v4561 = vrot.slane %v4559, 1
  %v4562 = vor.u32 %v4557, %v4561
  %v4564 = vshrl.u32 %v4411, 16
  %v4566 = vshll.u32 %v4411, 16
  %v4568 = vrot.slane %v4566, 1
  %v4569 = vor.u32 %v4564, %v4568
  %v4571 = vshrl.u32 %v4412, 16
  %v4573 = vshll.u32 %v4412, 16
  %v4575 = vrot.slane %v4573, 1
  %v4576 = vor.u32 %v4571, %v4575
  %v4578 = vshrl.u32 %v4413, 16
  %v4580 = vshll.u32 %v4413, 16
  %v4582 = vrot.slane %v4580, 1
  %v4583 = vor.u32 %v4578, %v4582
  %v4585 = vshrl.u32 %v4414, 16
  %v4587 = vshll.u32 %v4414, 16
  %v4589 = vrot.slane %v4587, 1
  %v4590 = vor.u32 %v4585, %v4589
  %v4592 = vshrl.u32 %v4415, 16
  %v4594 = vshll.u32 %v4415, 16
  %v4596 = vrot.slane %v4594, 1
  %v4597 = vor.u32 %v4592, %v4596
  %v4599 = vshrl.u32 %v4416, 16
  %v4601 = vshll.u32 %v4416, 16
  %v4603 = vrot.slane %v4601, 1
  %v4604 = vor.u32 %v4599, %v4603
  %v4606 = vshrl.u32 %v4417, 16
  %v4608 = vshll.u32 %v4417, 16
  %v4610 = vrot.slane %v4608, 1
  %v4611 = vor.u32 %v4606, %v4610
  %v4613 = vshrl.u32 %v4418, 16
  %v4615 = vshll.u32 %v4418, 16
  %v4617 = vrot.slane %v4615, 1
  %v4618 = vor.u32 %v4613, %v4617
  %v4620 = vshrl.u32 %v4419, 16
  %v4622 = vshll.u32 %v4419, 16
  %v4624 = vrot.slane %v4622, 1
  %v4625 = vor.u32 %v4620, %v4624
  %v4627 = vshrl.u32 %v4420, 16
  %v4629 = vshll.u32 %v4420, 16
  %v4631 = vrot.slane %v4629, 1
  %v4632 = vor.u32 %v4627, %v4631
  %v4634 = vshrl.u32 %v4421, 16
  %v4636 = vshll.u32 %v4421, 16
  %v4638 = vrot.slane %v4636, 1
  %v4639 = vor.u32 %v4634, %v4638
  %v4641 = vshrl.u32 %v4422, 16
  %v4643 = vshll.u32 %v4422, 16
  %v4645 = vrot.slane %v4643, 1
  %v4646 = vor.u32 %v4641, %v4645
  %v4711 = vunpack.c.l.b16 %v3750
  %v4712 = vunpack.c.l.b16 %v3815
  %v4713 = vunpack.c.l.b16 %v3751
  %v4714 = vunpack.c.l.b16 %v3816
  %v4715 = vunpack.c.l.b16 %v3752
  %v4716 = vunpack.c.l.b16 %v3817
  %v4717 = vunpack.c.l.b16 %v3753
  %v4718 = vunpack.c.l.b16 %v3818
  %v4719 = vunpack.c.l.b16 %v3754
  %v4720 = vunpack.c.l.b16 %v3819
  %v4721 = vunpack.c.l.b16 %v3755
  %v4722 = vunpack.c.l.b16 %v3820
  %v4723 = vunpack.c.l.b16 %v3756
  %v4724 = vunpack.c.l.b16 %v3821
  %v4725 = vunpack.c.l.b16 %v3757
  %v4726 = vunpack.c.l.b16 %v3822
  %v4727 = vunpack.c.l.b16 %v3758
  %v4728 = vunpack.c.l.b16 %v3823
  %v4729 = vunpack.c.l.b16 %v3759
  %v4730 = vunpack.c.l.b16 %v3824
  %v4731 = vunpack.c.l.b16 %v3760
  %v4732 = vunpack.c.l.b16 %v3825
  %v4733 = vunpack.c.l.b16 %v3761
  %v4734 = vunpack.c.l.b16 %v3826
  %v4735 = vunpack.c.l.b16 %v3762
  %v4736 = vunpack.c.l.b16 %v3827
  %v4737 = vunpack.c.l.b16 %v3763
  %v4738 = vunpack.c.l.b16 %v3828
  %v4739 = vunpack.c.l.b16 %v3764
  %v4740 = vunpack.c.l.b16 %v3829
  %v4741 = vunpack.c.l.b16 %v3765
  %v4742 = vunpack.c.l.b16 %v3830
  %v4743 = vunpack.c.l.b16 %v3766
  %v4744 = vunpack.c.l.b16 %v3831
  %v4745 = vunpack.c.l.b16 %v3767
  %v4746 = vunpack.c.l.b16 %v3832
  %v4747 = vunpack.c.l.b16 %v3768
  %v4748 = vunpack.c.l.b16 %v3833
  %v4749 = vunpack.c.l.b16 %v3769
  %v4750 = vunpack.c.l.b16 %v3834
  %v4751 = vunpack.c.l.b16 %v3770
  %v4752 = vunpack.c.l.b16 %v3835
  %v4753 = vunpack.c.l.b16 %v3771
  %v4754 = vunpack.c.l.b16 %v3836
  %v4755 = vunpack.c.l.b16 %v3772
  %v4756 = vunpack.c.l.b16 %v3837
  %v4757 = vunpack.c.l.b16 %v3773
  %v4758 = vunpack.c.l.b16 %v3838
  %v4759 = vunpack.c.l.b16 %v3774
  %v4760 = vunpack.c.l.b16 %v3839
  %v4761 = vunpack.c.l.b16 %v3775
  %v4762 = vunpack.c.l.b16 %v3840
  %v4763 = vunpack.c.l.b16 %v3776
  %v4764 = vunpack.c.l.b16 %v3841
  %v4765 = vunpack.c.l.b16 %v3777
  %v4766 = vunpack.c.l.b16 %v3842
  %v4767 = vunpack.c.l.b16 %v3778
  %v4768 = vunpack.c.l.b16 %v3843
  %v4769 = vunpack.c.l.b16 %v3779
  %v4770 = vunpack.c.l.b16 %v3844
  %v4771 = vunpack.c.l.b16 %v3780
  %v4772 = vunpack.c.l.b16 %v3845
  %v4773 = vunpack.c.l.b16 %v3781
  %v4774 = vunpack.c.l.b16 %v3846
  %v4775 = vpack.c.b16 %v4712, %v4711
  %v4776 = vpack.c.b16 %v4714, %v4713
  %v4777 = vpack.c.b16 %v4716, %v4715
  %v4778 = vpack.c.b16 %v4718, %v4717
  %v4779 = vpack.c.b16 %v4720, %v4719
  %v4780 = vpack.c.b16 %v4722, %v4721
  %v4781 = vpack.c.b16 %v4724, %v4723
  %v4782 = vpack.c.b16 %v4726, %v4725
  %v4783 = vpack.c.b16 %v4728, %v4727
  %v4784 = vpack.c.b16 %v4730, %v4729
  %v4785 = vpack.c.b16 %v4732, %v4731
  %v4786 = vpack.c.b16 %v4734, %v4733
  %v4787 = vpack.c.b16 %v4736, %v4735
  %v4788 = vpack.c.b16 %v4738, %v4737
  %v4789 = vpack.c.b16 %v4740, %v4739
  %v4790 = vpack.c.b16 %v4742, %v4741
  %v4791 = vpack.c.b16 %v4744, %v4743
  %v4792 = vpack.c.b16 %v4746, %v4745
  %v4793 = vpack.c.b16 %v4748, %v4747
  %v4794 = vpack.c.b16 %v4750, %v4749
  %v4795 = vpack.c.b16 %v4752, %v4751
  %v4796 = vpack.c.b16 %v4754, %v4753
  %v4797 = vpack.c.b16 %v4756, %v4755
  %v4798 = vpack.c.b16 %v4758, %v4757
  %v4799 = vpack.c.b16 %v4760, %v4759
  %v4800 = vpack.c.b16 %v4762, %v4761
  %v4801 = vpack.c.b16 %v4764, %v4763
  %v4802 = vpack.c.b16 %v4766, %v4765
  %v4803 = vpack.c.b16 %v4768, %v4767
  %v4804 = vpack.c.b16 %v4770, %v4769
  %v4805 = vpack.c.b16 %v4772, %v4771
  %v4806 = vpack.c.b16 %v4774, %v4773
  %v4808 = vshrl.u32 %v4775, 16
  %v4810 = vshll.u32 %v4775, 16
  %v4812 = vrot.slane %v4810, 1
  %v4813 = vor.u32 %v4808, %v4812
  %v4815 = vshrl.u32 %v4776, 16
  %v4817 = vshll.u32 %v4776, 16
  %v4819 = vrot.slane %v4817, 1
  %v4820 = vor.u32 %v4815, %v4819
  %v4822 = vshrl.u32 %v4777, 16
  %v4824 = vshll.u32 %v4777, 16
  %v4826 = vrot.slane %v4824, 1
  %v4827 = vor.u32 %v4822, %v4826
  %v4829 = vshrl.u32 %v4778, 16
  %v4831 = vshll.u32 %v4778, 16
  %v4833 = vrot.slane %v4831, 1
  %v4834 = vor.u32 %v4829, %v4833
  %v4836 = vshrl.u32 %v4779, 16
  %v4838 = vshll.u32 %v4779, 16
  %v4840 = vrot.slane %v4838, 1
  %v4841 = vor.u32 %v4836, %v4840
  %v4843 = vshrl.u32 %v4780, 16
  %v4845 = vshll.u32 %v4780, 16
  %v4847 = vrot.slane %v4845, 1
  %v4848 = vor.u32 %v4843, %v4847
  %v4850 = vshrl.u32 %v4781, 16
  %v4852 = vshll.u32 %v4781, 16
  %v4854 = vrot.slane %v4852, 1
  %v4855 = vor.u32 %v4850, %v4854
  %v4857 = vshrl.u32 %v4782, 16
  %v4859 = vshll.u32 %v4782, 16
  %v4861 = vrot.slane %v4859, 1
  %v4862 = vor.u32 %v4857, %v4861
  %v4864 = vshrl.u32 %v4783, 16
  %v4866 = vshll.u32 %v4783, 16
  %v4868 = vrot.slane %v4866, 1
  %v4869 = vor.u32 %v4864, %v4868
  %v4871 = vshrl.u32 %v4784, 16
  %v4873 = vshll.u32 %v4784, 16
  %v4875 = vrot.slane %v4873, 1
  %v4876 = vor.u32 %v4871, %v4875
  %v4878 = vshrl.u32 %v4785, 16
  %v4880 = vshll.u32 %v4785, 16
  %v4882 = vrot.slane %v4880, 1
  %v4883 = vor.u32 %v4878, %v4882
  %v4885 = vshrl.u32 %v4786, 16
  %v4887 = vshll.u32 %v4786, 16
  %v4889 = vrot.slane %v4887, 1
  %v4890 = vor.u32 %v4885, %v4889
  %v4892 = vshrl.u32 %v4787, 16
  %v4894 = vshll.u32 %v4787, 16
  %v4896 = vrot.slane %v4894, 1
  %v4897 = vor.u32 %v4892, %v4896
  %v4899 = vshrl.u32 %v4788, 16
  %v4901 = vshll.u32 %v4788, 16
  %v4903 = vrot.slane %v4901, 1
  %v4904 = vor.u32 %v4899, %v4903
  %v4906 = vshrl.u32 %v4789, 16
  %v4908 = vshll.u32 %v4789, 16
  %v4910 = vrot.slane %v4908, 1
  %v4911 = vor.u32 %v4906, %v4910
  %v4913 = vshrl.u32 %v4790, 16
  %v4915 = vshll.u32 %v4790, 16
  %v4917 = vrot.slane %v4915, 1
  %v4918 = vor.u32 %v4913, %v4917
  %v4920 = vshrl.u32 %v4791, 16
  %v4922 = vshll.u32 %v4791, 16
  %v4924 = vrot.slane %v4922, 1
  %v4925 = vor.u32 %v4920, %v4924
  %v4927 = vshrl.u32 %v4792, 16
  %v4929 = vshll.u32 %v4792, 16
  %v4931 = vrot.slane %v4929, 1
  %v4932 = vor.u32 %v4927, %v4931
  %v4934 = vshrl.u32 %v4793, 16
  %v4936 = vshll.u32 %v4793, 16
  %v4938 = vrot.slane %v4936, 1
  %v4939 = vor.u32 %v4934, %v4938
  %v4941 = vshrl.u32 %v4794, 16
  %v4943 = vshll.u32 %v4794, 16
  %v4945 = vrot.slane %v4943, 1
  %v4946 = vor.u32 %v4941, %v4945
  %v4948 = vshrl.u32 %v4795, 16
  %v4950 = vshll.u32 %v4795, 16
  %v4952 = vrot.slane %v4950, 1
  %v4953 = vor.u32 %v4948, %v4952
  %v4955 = vshrl.u32 %v4796, 16
  %v4957 = vshll.u32 %v4796, 16
  %v4959 = vrot.slane %v4957, 1
  %v4960 = vor.u32 %v4955, %v4959
  %v4962 = vshrl.u32 %v4797, 16
  %v4964 = vshll.u32 %v4797, 16
  %v4966 = vrot.slane %v4964, 1
  %v4967 = vor.u32 %v4962, %v4966
  %v4969 = vshrl.u32 %v4798, 16
  %v4971 = vshll.u32 %v4798, 16
  %v4973 = vrot.slane %v4971, 1
  %v4974 = vor.u32 %v4969, %v4973
  %v4976 = vshrl.u32 %v4799, 16
  %v4978 = vshll.u32 %v4799, 16
  %v4980 = vrot.slane %v4978, 1
  %v4981 = vor.u32 %v4976, %v4980
  %v4983 = vshrl.u32 %v4800, 16
  %v4985 = vshll.u32 %v4800, 16
  %v4987 = vrot.slane %v4985, 1
  %v4988 = vor.u32 %v4983, %v4987
  %v4990 = vshrl.u32 %v4801, 16
  %v4992 = vshll.u32 %v4801, 16
  %v4994 = vrot.slane %v4992, 1
  %v4995 = vor.u32 %v4990, %v4994
  %v4997 = vshrl.u32 %v4802, 16
  %v4999 = vshll.u32 %v4802, 16
  %v5001 = vrot.slane %v4999, 1
  %v5002 = vor.u32 %v4997, %v5001
  %v5004 = vshrl.u32 %v4803, 16
  %v5006 = vshll.u32 %v4803, 16
  %v5008 = vrot.slane %v5006, 1
  %v5009 = vor.u32 %v5004, %v5008
  %v5011 = vshrl.u32 %v4804, 16
  %v5013 = vshll.u32 %v4804, 16
  %v5015 = vrot.slane %v5013, 1
  %v5016 = vor.u32 %v5011, %v5015
  %v5018 = vshrl.u32 %v4805, 16
  %v5020 = vshll.u32 %v4805, 16
  %v5022 = vrot.slane %v5020, 1
  %v5023 = vor.u32 %v5018, %v5022
  %v5025 = vshrl.u32 %v4806, 16
  %v5027 = vshll.u32 %v4806, 16
  %v5029 = vrot.slane %v5027, 1
  %v5030 = vor.u32 %v5025, %v5029
  %v5127 = vunpack.c.l.b16 %v3525
  %v5128 = vunpack.c.l.b16 %v4045
  %v5129 = vunpack.c.l.b16 %v3653
  %v5130 = vunpack.c.l.b16 %v4429
  %v5131 = vunpack.c.l.b16 %v3783
  %v5132 = vunpack.c.l.b16 %v4813
  %v5133 = vunpack.c.l.b16 %v3526
  %v5134 = vunpack.c.l.b16 %v4052
  %v5135 = vunpack.c.l.b16 %v3654
  %v5136 = vunpack.c.l.b16 %v4436
  %v5137 = vunpack.c.l.b16 %v3784
  %v5138 = vunpack.c.l.b16 %v4820
  %v5139 = vunpack.c.l.b16 %v3527
  %v5140 = vunpack.c.l.b16 %v4059
  %v5141 = vunpack.c.l.b16 %v3655
  %v5142 = vunpack.c.l.b16 %v4443
  %v5143 = vunpack.c.l.b16 %v3785
  %v5144 = vunpack.c.l.b16 %v4827
  %v5145 = vunpack.c.l.b16 %v3528
  %v5146 = vunpack.c.l.b16 %v4066
  %v5147 = vunpack.c.l.b16 %v3656
  %v5148 = vunpack.c.l.b16 %v4450
  %v5149 = vunpack.c.l.b16 %v3786
  %v5150 = vunpack.c.l.b16 %v4834
  %v5151 = vunpack.c.l.b16 %v3529
  %v5152 = vunpack.c.l.b16 %v4073
  %v5153 = vunpack.c.l.b16 %v3657
  %v5154 = vunpack.c.l.b16 %v4457
  %v5155 = vunpack.c.l.b16 %v3787
  %v5156 = vunpack.c.l.b16 %v4841
  %v5157 = vunpack.c.l.b16 %v3530
  %v5158 = vunpack.c.l.b16 %v4080
  %v5159 = vunpack.c.l.b16 %v3658
  %v5160 = vunpack.c.l.b16 %v4464
  %v5161 = vunpack.c.l.b16 %v3788
  %v5162 = vunpack.c.l.b16 %v4848
  %v5163 = vunpack.c.l.b16 %v3531
  %v5164 = vunpack.c.l.b16 %v4087
  %v5165 = vunpack.c.l.b16 %v3659
  %v5166 = vunpack.c.l.b16 %v4471
  %v5167 = vunpack.c.l.b16 %v3789
  %v5168 = vunpack.c.l.b16 %v4855
  %v5169 = vunpack.c.l.b16 %v3532
  %v5170 = vunpack.c.l.b16 %v4094
  %v5171 = vunpack.c.l.b16 %v3660
  %v5172 = vunpack.c.l.b16 %v4478
  %v5173 = vunpack.c.l.b16 %v3790
  %v5174 = vunpack.c.l.b16 %v4862
  %v5175 = vunpack.c.l.b16 %v3533
  %v5176 = vunpack.c.l.b16 %v4101
  %v5177 = vunpack.c.l.b16 %v3661
  %v5178 = vunpack.c.l.b16 %v4485
  %v5179 = vunpack.c.l.b16 %v3791
  %v5180 = vunpack.c.l.b16 %v4869
  %v5181 = vunpack.c.l.b16 %v3534
  %v5182 = vunpack.c.l.b16 %v4108
  %v5183 = vunpack.c.l.b16 %v3662
  %v5184 = vunpack.c.l.b16 %v4492
  %v5185 = vunpack.c.l.b16 %v3792
  %v5186 = vunpack.c.l.b16 %v4876
  %v5187 = vunpack.c.l.b16 %v3535
  %v5188 = vunpack.c.l.b16 %v4115
  %v5189 = vunpack.c.l.b16 %v3663
  %v5190 = vunpack.c.l.b16 %v4499
  %v5191 = vunpack.c.l.b16 %v3793
  %v5192 = vunpack.c.l.b16 %v4883
  %v5193 = vunpack.c.l.b16 %v3536
  %v5194 = vunpack.c.l.b16 %v4122
  %v5195 = vunpack.c.l.b16 %v3664
  %v5196 = vunpack.c.l.b16 %v4506
  %v5197 = vunpack.c.l.b16 %v3794
  %v5198 = vunpack.c.l.b16 %v4890
  %v5199 = vunpack.c.l.b16 %v3537
  %v5200 = vunpack.c.l.b16 %v4129
  %v5201 = vunpack.c.l.b16 %v3665
  %v5202 = vunpack.c.l.b16 %v4513
  %v5203 = vunpack.c.l.b16 %v3795
  %v5204 = vunpack.c.l.b16 %v4897
  %v5205 = vunpack.c.l.b16 %v3538
  %v5206 = vunpack.c.l.b16 %v4136
  %v5207 = vunpack.c.l.b16 %v3666
  %v5208 = vunpack.c.l.b16 %v4520
  %v5209 = vunpack.c.l.b16 %v3796
  %v5210 = vunpack.c.l.b16 %v4904
  %v5211 = vunpack.c.l.b16 %v3539
  %v5212 = vunpack.c.l.b16 %v4143
  %v5213 = vunpack.c.l.b16 %v3667
  %v5214 = vunpack.c.l.b16 %v4527
  %v5215 = vunpack.c.l.b16 %v3797
  %v5216 = vunpack.c.l.b16 %v4911
  %v5217 = vunpack.c.l.b16 %v3540
  %v5218 = vunpack.c.l.b16 %v4150
  %v5219 = vunpack.c.l.b16 %v3668
  %v5220 = vunpack.c.l.b16 %v4534
  %v5221 = vunpack.c.l.b16 %v3798
  %v5222 = vunpack.c.l.b16 %v4918
  %v5223 = vunpack.c.l.b16 %v3541
  %v5224 = vunpack.c.l.b16 %v4157
  %v5225 = vunpack.c.l.b16 %v3669
  %v5226 = vunpack.c.l.b16 %v4541
  %v5227 = vunpack.c.l.b16 %v3799
  %v5228 = vunpack.c.l.b16 %v4925
  %v5229 = vunpack.c.l.b16 %v3542
  %v5230 = vunpack.c.l.b16 %v4164
  %v5231 = vunpack.c.l.b16 %v3670
  %v5232 = vunpack.c.l.b16 %v4548
  %v5233 = vunpack.c.l.b16 %v3800
  %v5234 = vunpack.c.l.b16 %v4932
  %v5235 = vunpack.c.l.b16 %v3543
  %v5236 = vunpack.c.l.b16 %v4171
  %v5237 = vunpack.c.l.b16 %v3671
  %v5238 = vunpack.c.l.b16 %v4555
  %v5239 = vunpack.c.l.b16 %v3801
  %v5240 = vunpack.c.l.b16 %v4939
  %v5241 = vunpack.c.l.b16 %v3544
  %v5242 = vunpack.c.l.b16 %v4178
  %v5243 = vunpack.c.l.b16 %v3672
  %v5244 = vunpack.c.l.b16 %v4562
  %v5245 = vunpack.c.l.b16 %v3802
  %v5246 = vunpack.c.l.b16 %v4946
  %v5247 = vunpack.c.l.b16 %v3545
  %v5248 = vunpack.c.l.b16 %v4185
  %v5249 = vunpack.c.l.b16 %v3673
  %v5250 = vunpack.c.l.b16 %v4569
  %v5251 = vunpack.c.l.b16 %v3803
  %v5252 = vunpack.c.l.b16 %v4953
  %v5253 = vunpack.c.l.b16 %v3546
  %v5254 = vunpack.c.l.b16 %v4192
  %v5255 = vunpack.c.l.b16 %v3674
  %v5256 = vunpack.c.l.b16 %v4576
  %v5257 = vunpack.c.l.b16 %v3804
  %v5258 = vunpack.c.l.b16 %v4960
  %v5259 = vunpack.c.l.b16 %v3547
  %v5260 = vunpack.c.l.b16 %v4199
  %v5261 = vunpack.c.l.b16 %v3675
  %v5262 = vunpack.c.l.b16 %v4583
  %v5263 = vunpack.c.l.b16 %v3805
  %v5264 = vunpack.c.l.b16 %v4967
  %v5265 = vunpack.c.l.b16 %v3548
  %v5266 = vunpack.c.l.b16 %v4206
  %v5267 = vunpack.c.l.b16 %v3676
  %v5268 = vunpack.c.l.b16 %v4590
  %v5269 = vunpack.c.l.b16 %v3806
  %v5270 = vunpack.c.l.b16 %v4974
  %v5271 = vunpack.c.l.b16 %v3549
  %v5272 = vunpack.c.l.b16 %v4213
  %v5273 = vunpack.c.l.b16 %v3677
  %v5274 = vunpack.c.l.b16 %v4597
  %v5275 = vunpack.c.l.b16 %v3807
  %v5276 = vunpack.c.l.b16 %v4981
  %v5277 = vunpack.c.l.b16 %v3550
  %v5278 = vunpack.c.l.b16 %v4220
  %v5279 = vunpack.c.l.b16 %v3678
  %v5280 = vunpack.c.l.b16 %v4604
  %v5281 = vunpack.c.l.b16 %v3808
  %v5282 = vunpack.c.l.b16 %v4988
  %v5283 = vunpack.c.l.b16 %v3551
  %v5284 = vunpack.c.l.b16 %v4227
  %v5285 = vunpack.c.l.b16 %v3679
  %v5286 = vunpack.c.l.b16 %v4611
  %v5287 = vunpack.c.l.b16 %v3809
  %v5288 = vunpack.c.l.b16 %v4995
  %v5289 = vunpack.c.l.b16 %v3552
  %v5290 = vunpack.c.l.b16 %v4234
  %v5291 = vunpack.c.l.b16 %v3680
  %v5292 = vunpack.c.l.b16 %v4618
  %v5293 = vunpack.c.l.b16 %v3810
  %v5294 = vunpack.c.l.b16 %v5002
  %v5295 = vunpack.c.l.b16 %v3553
  %v5296 = vunpack.c.l.b16 %v4241
  %v5297 = vunpack.c.l.b16 %v3681
  %v5298 = vunpack.c.l.b16 %v4625
  %v5299 = vunpack.c.l.b16 %v3811
  %v5300 = vunpack.c.l.b16 %v5009
  %v5301 = vunpack.c.l.b16 %v3554
  %v5302 = vunpack.c.l.b16 %v4248
  %v5303 = vunpack.c.l.b16 %v3682
  %v5304 = vunpack.c.l.b16 %v4632
  %v5305 = vunpack.c.l.b16 %v3812
  %v5306 = vunpack.c.l.b16 %v5016
  %v5307 = vunpack.c.l.b16 %v3555
  %v5308 = vunpack.c.l.b16 %v4255
  %v5309 = vunpack.c.l.b16 %v3683
  %v5310 = vunpack.c.l.b16 %v4639
  %v5311 = vunpack.c.l.b16 %v3813
  %v5312 = vunpack.c.l.b16 %v5023
  %v5313 = vunpack.c.l.b16 %v3556
  %v5314 = vunpack.c.l.b16 %v4262
  %v5315 = vunpack.c.l.b16 %v3684
  %v5316 = vunpack.c.l.b16 %v4646
  %v5317 = vunpack.c.l.b16 %v3814
  %v5318 = vunpack.c.l.b16 %v5030
  %v5351 = vunpack.c.l.b16 %v3589
  %v5352 = vunpack.c.l.b16 %v3590
  %v5353 = vunpack.c.l.b16 %v3591
  %v5354 = vunpack.c.l.b16 %v3592
  %v5355 = vunpack.c.l.b16 %v3593
  %v5356 = vunpack.c.l.b16 %v3594
  %v5357 = vunpack.c.l.b16 %v3595
  %v5358 = vunpack.c.l.b16 %v3596
  %v5359 = vunpack.c.l.b16 %v3597
  %v5360 = vunpack.c.l.b16 %v3598
  %v5361 = vunpack.c.l.b16 %v3599
  %v5362 = vunpack.c.l.b16 %v3600
  %v5363 = vunpack.c.l.b16 %v3601
  %v5364 = vunpack.c.l.b16 %v3602
  %v5365 = vunpack.c.l.b16 %v3603
  %v5366 = vunpack.c.l.b16 %v3604
  %v5367 = vunpack.c.l.b16 %v3605
  %v5368 = vunpack.c.l.b16 %v3606
  %v5369 = vunpack.c.l.b16 %v3607
  %v5370 = vunpack.c.l.b16 %v3608
  %v5371 = vunpack.c.l.b16 %v3609
  %v5372 = vunpack.c.l.b16 %v3610
  %v5373 = vunpack.c.l.b16 %v3611
  %v5374 = vunpack.c.l.b16 %v3612
  %v5375 = vunpack.c.l.b16 %v3613
  %v5376 = vunpack.c.l.b16 %v3614
  %v5377 = vunpack.c.l.b16 %v3615
  %v5378 = vunpack.c.l.b16 %v3616
  %v5379 = vunpack.c.l.b16 %v3617
  %v5380 = vunpack.c.l.b16 %v3618
  %v5381 = vunpack.c.l.b16 %v3619
  %v5382 = vunpack.c.l.b16 %v3620
  %v5383 = vpack.c.b16 %v5351, %v5127
  %v5384 = vpack.c.b16 %v5352, %v5133
  %v5385 = vpack.c.b16 %v5353, %v5139
  %v5386 = vpack.c.b16 %v5354, %v5145
  %v5387 = vpack.c.b16 %v5355, %v5151
  %v5388 = vpack.c.b16 %v5356, %v5157
  %v5389 = vpack.c.b16 %v5357, %v5163
  %v5390 = vpack.c.b16 %v5358, %v5169
  %v5391 = vpack.c.b16 %v5359, %v5175
  %v5392 = vpack.c.b16 %v5360, %v5181
  %v5393 = vpack.c.b16 %v5361, %v5187
  %v5394 = vpack.c.b16 %v5362, %v5193
  %v5395 = vpack.c.b16 %v5363, %v5199
  %v5396 = vpack.c.b16 %v5364, %v5205
  %v5397 = vpack.c.b16 %v5365, %v5211
  %v5398 = vpack.c.b16 %v5366, %v5217
  %v5399 = vpack.c.b16 %v5367, %v5223
  %v5400 = vpack.c.b16 %v5368, %v5229
  %v5401 = vpack.c.b16 %v5369, %v5235
  %v5402 = vpack.c.b16 %v5370, %v5241
  %v5403 = vpack.c.b16 %v5371, %v5247
  %v5404 = vpack.c.b16 %v5372, %v5253
  %v5405 = vpack.c.b16 %v5373, %v5259
  %v5406 = vpack.c.b16 %v5374, %v5265
  %v5407 = vpack.c.b16 %v5375, %v5271
  %v5408 = vpack.c.b16 %v5376, %v5277
  %v5409 = vpack.c.b16 %v5377, %v5283
  %v5410 = vpack.c.b16 %v5378, %v5289
  %v5411 = vpack.c.b16 %v5379, %v5295
  %v5412 = vpack.c.b16 %v5380, %v5301
  %v5413 = vpack.c.b16 %v5381, %v5307
  %v5414 = vpack.c.b16 %v5382, %v5313
  %v5416 = vshrl.u32 %v5383, 16
  %v5418 = vshll.u32 %v5383, 16
  %v5420 = vrot.slane %v5418, 1
  %v5421 = vor.u32 %v5416, %v5420
  %v5423 = vshrl.u32 %v5384, 16
  %v5425 = vshll.u32 %v5384, 16
  %v5427 = vrot.slane %v5425, 1
  %v5428 = vor.u32 %v5423, %v5427
  %v5430 = vshrl.u32 %v5385, 16
  %v5432 = vshll.u32 %v5385, 16
  %v5434 = vrot.slane %v5432, 1
  %v5435 = vor.u32 %v5430, %v5434
  %v5437 = vshrl.u32 %v5386, 16
  %v5439 = vshll.u32 %v5386, 16
  %v5441 = vrot.slane %v5439, 1
  %v5442 = vor.u32 %v5437, %v5441
  %v5444 = vshrl.u32 %v5387, 16
  %v5446 = vshll.u32 %v5387, 16
  %v5448 = vrot.slane %v5446, 1
  %v5449 = vor.u32 %v5444, %v5448
  %v5451 = vshrl.u32 %v5388, 16
  %v5453 = vshll.u32 %v5388, 16
  %v5455 = vrot.slane %v5453, 1
  %v5456 = vor.u32 %v5451, %v5455
  %v5458 = vshrl.u32 %v5389, 16
  %v5460 = vshll.u32 %v5389, 16
  %v5462 = vrot.slane %v5460, 1
  %v5463 = vor.u32 %v5458, %v5462
  %v5465 = vshrl.u32 %v5390, 16
  %v5467 = vshll.u32 %v5390, 16
  %v5469 = vrot.slane %v5467, 1
  %v5470 = vor.u32 %v5465, %v5469
  %v5472 = vshrl.u32 %v5391, 16
  %v5474 = vshll.u32 %v5391, 16
  %v5476 = vrot.slane %v5474, 1
  %v5477 = vor.u32 %v5472, %v5476
  %v5479 = vshrl.u32 %v5392, 16
  %v5481 = vshll.u32 %v5392, 16
  %v5483 = vrot.slane %v5481, 1
  %v5484 = vor.u32 %v5479, %v5483
  %v5486 = vshrl.u32 %v5393, 16
  %v5488 = vshll.u32 %v5393, 16
  %v5490 = vrot.slane %v5488, 1
  %v5491 = vor.u32 %v5486, %v5490
  %v5493 = vshrl.u32 %v5394, 16
  %v5495 = vshll.u32 %v5394, 16
  %v5497 = vrot.slane %v5495, 1
  %v5498 = vor.u32 %v5493, %v5497
  %v5500 = vshrl.u32 %v5395, 16
  %v5502 = vshll.u32 %v5395, 16
  %v5504 = vrot.slane %v5502, 1
  %v5505 = vor.u32 %v5500, %v5504
  %v5507 = vshrl.u32 %v5396, 16
  %v5509 = vshll.u32 %v5396, 16
  %v5511 = vrot.slane %v5509, 1
  %v5512 = vor.u32 %v5507, %v5511
  %v5514 = vshrl.u32 %v5397, 16
  %v5516 = vshll.u32 %v5397, 16
  %v5518 = vrot.slane %v5516, 1
  %v5519 = vor.u32 %v5514, %v5518
  %v5521 = vshrl.u32 %v5398, 16
  %v5523 = vshll.u32 %v5398, 16
  %v5525 = vrot.slane %v5523, 1
  %v5526 = vor.u32 %v5521, %v5525
  %v5528 = vshrl.u32 %v5399, 16
  %v5530 = vshll.u32 %v5399, 16
  %v5532 = vrot.slane %v5530, 1
  %v5533 = vor.u32 %v5528, %v5532
  %v5535 = vshrl.u32 %v5400, 16
  %v5537 = vshll.u32 %v5400, 16
  %v5539 = vrot.slane %v5537, 1
  %v5540 = vor.u32 %v5535, %v5539
  %v5542 = vshrl.u32 %v5401, 16
  %v5544 = vshll.u32 %v5401, 16
  %v5546 = vrot.slane %v5544, 1
  %v5547 = vor.u32 %v5542, %v5546
  %v5549 = vshrl.u32 %v5402, 16
  %v5551 = vshll.u32 %v5402, 16
  %v5553 = vrot.slane %v5551, 1
  %v5554 = vor.u32 %v5549, %v5553
  %v5556 = vshrl.u32 %v5403, 16
  %v5558 = vshll.u32 %v5403, 16
  %v5560 = vrot.slane %v5558, 1
  %v5561 = vor.u32 %v5556, %v5560
  %v5563 = vshrl.u32 %v5404, 16
  %v5565 = vshll.u32 %v5404, 16
  %v5567 = vrot.slane %v5565, 1
  %v5568 = vor.u32 %v5563, %v5567
  %v5570 = vshrl.u32 %v5405, 16
  %v5572 = vshll.u32 %v5405, 16
  %v5574 = vrot.slane %v5572, 1
  %v5575 = vor.u32 %v5570, %v5574
  %v5577 = vshrl.u32 %v5406, 16
  %v5579 = vshll.u32 %v5406, 16
  %v5581 = vrot.slane %v5579, 1
  %v5582 = vor.u32 %v5577, %v5581
  %v5584 = vshrl.u32 %v5407, 16
  %v5586 = vshll.u32 %v5407, 16
  %v5588 = vrot.slane %v5586, 1
  %v5589 = vor.u32 %v5584, %v5588
  %v5591 = vshrl.u32 %v5408, 16
  %v5593 = vshll.u32 %v5408, 16
  %v5595 = vrot.slane %v5593, 1
  %v5596 = vor.u32 %v5591, %v5595
  %v5598 = vshrl.u32 %v5409, 16
  %v5600 = vshll.u32 %v5409, 16
  %v5602 = vrot.slane %v5600, 1
  %v5603 = vor.u32 %v5598, %v5602
  %v5605 = vshrl.u32 %v5410, 16
  %v5607 = vshll.u32 %v5410, 16
  %v5609 = vrot.slane %v5607, 1
  %v5610 = vor.u32 %v5605, %v5609
  %v5612 = vshrl.u32 %v5411, 16
  %v5614 = vshll.u32 %v5411, 16
  %v5616 = vrot.slane %v5614, 1
  %v5617 = vor.u32 %v5612, %v5616
  %v5619 = vshrl.u32 %v5412, 16
  %v5621 = vshll.u32 %v5412, 16
  %v5623 = vrot.slane %v5621, 1
  %v5624 = vor.u32 %v5619, %v5623
  %v5626 = vshrl.u32 %v5413, 16
  %v5628 = vshll.u32 %v5413, 16
  %v5630 = vrot.slane %v5628, 1
  %v5631 = vor.u32 %v5626, %v5630
  %v5633 = vshrl.u32 %v5414, 16
  %v5635 = vshll.u32 %v5414, 16
  %v5637 = vrot.slane %v5635, 1
  %v5638 = vor.u32 %v5633, %v5637
  %v5671 = vunpack.c.l.b16 %v3717
  %v5672 = vunpack.c.l.b16 %v3718
  %v5673 = vunpack.c.l.b16 %v3719
  %v5674 = vunpack.c.l.b16 %v3720
  %v5675 = vunpack.c.l.b16 %v3721
  %v5676 = vunpack.c.l.b16 %v3722
  %v5677 = vunpack.c.l.b16 %v3723
  %v5678 = vunpack.c.l.b16 %v3724
  %v5679 = vunpack.c.l.b16 %v3725
  %v5680 = vunpack.c.l.b16 %v3726
  %v5681 = vunpack.c.l.b16 %v3727
  %v5682 = vunpack.c.l.b16 %v3728
  %v5683 = vunpack.c.l.b16 %v3729
  %v5684 = vunpack.c.l.b16 %v3730
  %v5685 = vunpack.c.l.b16 %v3731
  %v5686 = vunpack.c.l.b16 %v3732
  %v5687 = vunpack.c.l.b16 %v3733
  %v5688 = vunpack.c.l.b16 %v3734
  %v5689 = vunpack.c.l.b16 %v3735
  %v5690 = vunpack.c.l.b16 %v3736
  %v5691 = vunpack.c.l.b16 %v3737
  %v5692 = vunpack.c.l.b16 %v3738
  %v5693 = vunpack.c.l.b16 %v3739
  %v5694 = vunpack.c.l.b16 %v3740
  %v5695 = vunpack.c.l.b16 %v3741
  %v5696 = vunpack.c.l.b16 %v3742
  %v5697 = vunpack.c.l.b16 %v3743
  %v5698 = vunpack.c.l.b16 %v3744
  %v5699 = vunpack.c.l.b16 %v3745
  %v5700 = vunpack.c.l.b16 %v3746
  %v5701 = vunpack.c.l.b16 %v3747
  %v5702 = vunpack.c.l.b16 %v3748
  %v5703 = vpack.c.b16 %v5671, %v5129
  %v5704 = vpack.c.b16 %v5672, %v5135
  %v5705 = vpack.c.b16 %v5673, %v5141
  %v5706 = vpack.c.b16 %v5674, %v5147
  %v5707 = vpack.c.b16 %v5675, %v5153
  %v5708 = vpack.c.b16 %v5676, %v5159
  %v5709 = vpack.c.b16 %v5677, %v5165
  %v5710 = vpack.c.b16 %v5678, %v5171
  %v5711 = vpack.c.b16 %v5679, %v5177
  %v5712 = vpack.c.b16 %v5680, %v5183
  %v5713 = vpack.c.b16 %v5681, %v5189
  %v5714 = vpack.c.b16 %v5682, %v5195
  %v5715 = vpack.c.b16 %v5683, %v5201
  %v5716 = vpack.c.b16 %v5684, %v5207
  %v5717 = vpack.c.b16 %v5685, %v5213
  %v5718 = vpack.c.b16 %v5686, %v5219
  %v5719 = vpack.c.b16 %v5687, %v5225
  %v5720 = vpack.c.b16 %v5688, %v5231
  %v5721 = vpack.c.b16 %v5689, %v5237
  %v5722 = vpack.c.b16 %v5690, %v5243
  %v5723 = vpack.c.b16 %v5691, %v5249
  %v5724 = vpack.c.b16 %v5692, %v5255
  %v5725 = vpack.c.b16 %v5693, %v5261
  %v5726 = vpack.c.b16 %v5694, %v5267
  %v5727 = vpack.c.b16 %v5695, %v5273
  %v5728 = vpack.c.b16 %v5696, %v5279
  %v5729 = vpack.c.b16 %v5697, %v5285
  %v5730 = vpack.c.b16 %v5698, %v5291
  %v5731 = vpack.c.b16 %v5699, %v5297
  %v5732 = vpack.c.b16 %v5700, %v5303
  %v5733 = vpack.c.b16 %v5701, %v5309
  %v5734 = vpack.c.b16 %v5702, %v5315
  %v5736 = vshrl.u32 %v5703, 16
  %v5738 = vshll.u32 %v5703, 16
  %v5740 = vrot.slane %v5738, 1
  %v5741 = vor.u32 %v5736, %v5740
  %v5743 = vshrl.u32 %v5704, 16
  %v5745 = vshll.u32 %v5704, 16
  %v5747 = vrot.slane %v5745, 1
  %v5748 = vor.u32 %v5743, %v5747
  %v5750 = vshrl.u32 %v5705, 16
  %v5752 = vshll.u32 %v5705, 16
  %v5754 = vrot.slane %v5752, 1
  %v5755 = vor.u32 %v5750, %v5754
  %v5757 = vshrl.u32 %v5706, 16
  %v5759 = vshll.u32 %v5706, 16
  %v5761 = vrot.slane %v5759, 1
  %v5762 = vor.u32 %v5757, %v5761
  %v5764 = vshrl.u32 %v5707, 16
  %v5766 = vshll.u32 %v5707, 16
  %v5768 = vrot.slane %v5766, 1
  %v5769 = vor.u32 %v5764, %v5768
  %v5771 = vshrl.u32 %v5708, 16
  %v5773 = vshll.u32 %v5708, 16
  %v5775 = vrot.slane %v5773, 1
  %v5776 = vor.u32 %v5771, %v5775
  %v5778 = vshrl.u32 %v5709, 16
  %v5780 = vshll.u32 %v5709, 16
  %v5782 = vrot.slane %v5780, 1
  %v5783 = vor.u32 %v5778, %v5782
  %v5785 = vshrl.u32 %v5710, 16
  %v5787 = vshll.u32 %v5710, 16
  %v5789 = vrot.slane %v5787, 1
  %v5790 = vor.u32 %v5785, %v5789
  %v5792 = vshrl.u32 %v5711, 16
  %v5794 = vshll.u32 %v5711, 16
  %v5796 = vrot.slane %v5794, 1
  %v5797 = vor.u32 %v5792, %v5796
  %v5799 = vshrl.u32 %v5712, 16
  %v5801 = vshll.u32 %v5712, 16
  %v5803 = vrot.slane %v5801, 1
  %v5804 = vor.u32 %v5799, %v5803
  %v5806 = vshrl.u32 %v5713, 16
  %v5808 = vshll.u32 %v5713, 16
  %v5810 = vrot.slane %v5808, 1
  %v5811 = vor.u32 %v5806, %v5810
  %v5813 = vshrl.u32 %v5714, 16
  %v5815 = vshll.u32 %v5714, 16
  %v5817 = vrot.slane %v5815, 1
  %v5818 = vor.u32 %v5813, %v5817
  %v5820 = vshrl.u32 %v5715, 16
  %v5822 = vshll.u32 %v5715, 16
  %v5824 = vrot.slane %v5822, 1
  %v5825 = vor.u32 %v5820, %v5824
  %v5827 = vshrl.u32 %v5716, 16
  %v5829 = vshll.u32 %v5716, 16
  %v5831 = vrot.slane %v5829, 1
  %v5832 = vor.u32 %v5827, %v5831
  %v5834 = vshrl.u32 %v5717, 16
  %v5836 = vshll.u32 %v5717, 16
  %v5838 = vrot.slane %v5836, 1
  %v5839 = vor.u32 %v5834, %v5838
  %v5841 = vshrl.u32 %v5718, 16
  %v5843 = vshll.u32 %v5718, 16
  %v5845 = vrot.slane %v5843, 1
  %v5846 = vor.u32 %v5841, %v5845
  %v5848 = vshrl.u32 %v5719, 16
  %v5850 = vshll.u32 %v5719, 16
  %v5852 = vrot.slane %v5850, 1
  %v5853 = vor.u32 %v5848, %v5852
  %v5855 = vshrl.u32 %v5720, 16
  %v5857 = vshll.u32 %v5720, 16
  %v5859 = vrot.slane %v5857, 1
  %v5860 = vor.u32 %v5855, %v5859
  %v5862 = vshrl.u32 %v5721, 16
  %v5864 = vshll.u32 %v5721, 16
  %v5866 = vrot.slane %v5864, 1
  %v5867 = vor.u32 %v5862, %v5866
  %v5869 = vshrl.u32 %v5722, 16
  %v5871 = vshll.u32 %v5722, 16
  %v5873 = vrot.slane %v5871, 1
  %v5874 = vor.u32 %v5869, %v5873
  %v5876 = vshrl.u32 %v5723, 16
  %v5878 = vshll.u32 %v5723, 16
  %v5880 = vrot.slane %v5878, 1
  %v5881 = vor.u32 %v5876, %v5880
  %v5883 = vshrl.u32 %v5724, 16
  %v5885 = vshll.u32 %v5724, 16
  %v5887 = vrot.slane %v5885, 1
  %v5888 = vor.u32 %v5883, %v5887
  %v5890 = vshrl.u32 %v5725, 16
  %v5892 = vshll.u32 %v5725, 16
  %v5894 = vrot.slane %v5892, 1
  %v5895 = vor.u32 %v5890, %v5894
  %v5897 = vshrl.u32 %v5726, 16
  %v5899 = vshll.u32 %v5726, 16
  %v5901 = vrot.slane %v5899, 1
  %v5902 = vor.u32 %v5897, %v5901
  %v5904 = vshrl.u32 %v5727, 16
  %v5906 = vshll.u32 %v5727, 16
  %v5908 = vrot.slane %v5906, 1
  %v5909 = vor.u32 %v5904, %v5908
  %v5911 = vshrl.u32 %v5728, 16
  %v5913 = vshll.u32 %v5728, 16
  %v5915 = vrot.slane %v5913, 1
  %v5916 = vor.u32 %v5911, %v5915
  %v5918 = vshrl.u32 %v5729, 16
  %v5920 = vshll.u32 %v5729, 16
  %v5922 = vrot.slane %v5920, 1
  %v5923 = vor.u32 %v5918, %v5922
  %v5925 = vshrl.u32 %v5730, 16
  %v5927 = vshll.u32 %v5730, 16
  %v5929 = vrot.slane %v5927, 1
  %v5930 = vor.u32 %v5925, %v5929
  %v5932 = vshrl.u32 %v5731, 16
  %v5934 = vshll.u32 %v5731, 16
  %v5936 = vrot.slane %v5934, 1
  %v5937 = vor.u32 %v5932, %v5936
  %v5939 = vshrl.u32 %v5732, 16
  %v5941 = vshll.u32 %v5732, 16
  %v5943 = vrot.slane %v5941, 1
  %v5944 = vor.u32 %v5939, %v5943
  %v5946 = vshrl.u32 %v5733, 16
  %v5948 = vshll.u32 %v5733, 16
  %v5950 = vrot.slane %v5948, 1
  %v5951 = vor.u32 %v5946, %v5950
  %v5953 = vshrl.u32 %v5734, 16
  %v5955 = vshll.u32 %v5734, 16
  %v5957 = vrot.slane %v5955, 1
  %v5958 = vor.u32 %v5953, %v5957
  %v5991 = vunpack.c.l.b16 %v3847
  %v5992 = vunpack.c.l.b16 %v3848
  %v5993 = vunpack.c.l.b16 %v3849
  %v5994 = vunpack.c.l.b16 %v3850
  %v5995 = vunpack.c.l.b16 %v3851
  %v5996 = vunpack.c.l.b16 %v3852
  %v5997 = vunpack.c.l.b16 %v3853
  %v5998 = vunpack.c.l.b16 %v3854
  %v5999 = vunpack.c.l.b16 %v3855
  %v6000 = vunpack.c.l.b16 %v3856
  %v6001 = vunpack.c.l.b16 %v3857
  %v6002 = vunpack.c.l.b16 %v3858
  %v6003 = vunpack.c.l.b16 %v3859
  %v6004 = vunpack.c.l.b16 %v3860
  %v6005 = vunpack.c.l.b16 %v3861
  %v6006 = vunpack.c.l.b16 %v3862
  %v6007 = vunpack.c.l.b16 %v3863
  %v6008 = vunpack.c.l.b16 %v3864
  %v6009 = vunpack.c.l.b16 %v3865
  %v6010 = vunpack.c.l.b16 %v3866
  %v6011 = vunpack.c.l.b16 %v3867
  %v6012 = vunpack.c.l.b16 %v3868
  %v6013 = vunpack.c.l.b16 %v3869
  %v6014 = vunpack.c.l.b16 %v3870
  %v6015 = vunpack.c.l.b16 %v3871
  %v6016 = vunpack.c.l.b16 %v3872
  %v6017 = vunpack.c.l.b16 %v3873
  %v6018 = vunpack.c.l.b16 %v3874
  %v6019 = vunpack.c.l.b16 %v3875
  %v6020 = vunpack.c.l.b16 %v3876
  %v6021 = vunpack.c.l.b16 %v3877
  %v6022 = vunpack.c.l.b16 %v3878
  %v6023 = vpack.c.b16 %v5991, %v5131
  %v6024 = vpack.c.b16 %v5992, %v5137
  %v6025 = vpack.c.b16 %v5993, %v5143
  %v6026 = vpack.c.b16 %v5994, %v5149
  %v6027 = vpack.c.b16 %v5995, %v5155
  %v6028 = vpack.c.b16 %v5996, %v5161
  %v6029 = vpack.c.b16 %v5997, %v5167
  %v6030 = vpack.c.b16 %v5998, %v5173
  %v6031 = vpack.c.b16 %v5999, %v5179
  %v6032 = vpack.c.b16 %v6000, %v5185
  %v6033 = vpack.c.b16 %v6001, %v5191
  %v6034 = vpack.c.b16 %v6002, %v5197
  %v6035 = vpack.c.b16 %v6003, %v5203
  %v6036 = vpack.c.b16 %v6004, %v5209
  %v6037 = vpack.c.b16 %v6005, %v5215
  %v6038 = vpack.c.b16 %v6006, %v5221
  %v6039 = vpack.c.b16 %v6007, %v5227
  %v6040 = vpack.c.b16 %v6008, %v5233
  %v6041 = vpack.c.b16 %v6009, %v5239
  %v6042 = vpack.c.b16 %v6010, %v5245
  %v6043 = vpack.c.b16 %v6011, %v5251
  %v6044 = vpack.c.b16 %v6012, %v5257
  %v6045 = vpack.c.b16 %v6013, %v5263
  %v6046 = vpack.c.b16 %v6014, %v5269
  %v6047 = vpack.c.b16 %v6015, %v5275
  %v6048 = vpack.c.b16 %v6016, %v5281
  %v6049 = vpack.c.b16 %v6017, %v5287
  %v6050 = vpack.c.b16 %v6018, %v5293
  %v6051 = vpack.c.b16 %v6019, %v5299
  %v6052 = vpack.c.b16 %v6020, %v5305
  %v6053 = vpack.c.b16 %v6021, %v5311
  %v6054 = vpack.c.b16 %v6022, %v5317
  %v6056 = vshrl.u32 %v6023, 16
  %v6058 = vshll.u32 %v6023, 16
  %v6060 = vrot.slane %v6058, 1
  %v6061 = vor.u32 %v6056, %v6060
  %v6063 = vshrl.u32 %v6024, 16
  %v6065 = vshll.u32 %v6024, 16
  %v6067 = vrot.slane %v6065, 1
  %v6068 = vor.u32 %v6063, %v6067
  %v6070 = vshrl.u32 %v6025, 16
  %v6072 = vshll.u32 %v6025, 16
  %v6074 = vrot.slane %v6072, 1
  %v6075 = vor.u32 %v6070, %v6074
  %v6077 = vshrl.u32 %v6026, 16
  %v6079 = vshll.u32 %v6026, 16
  %v6081 = vrot.slane %v6079, 1
  %v6082 = vor.u32 %v6077, %v6081
  %v6084 = vshrl.u32 %v6027, 16
  %v6086 = vshll.u32 %v6027, 16
  %v6088 = vrot.slane %v6086, 1
  %v6089 = vor.u32 %v6084, %v6088
  %v6091 = vshrl.u32 %v6028, 16
  %v6093 = vshll.u32 %v6028, 16
  %v6095 = vrot.slane %v6093, 1
  %v6096 = vor.u32 %v6091, %v6095
  %v6098 = vshrl.u32 %v6029, 16
  %v6100 = vshll.u32 %v6029, 16
  %v6102 = vrot.slane %v6100, 1
  %v6103 = vor.u32 %v6098, %v6102
  %v6105 = vshrl.u32 %v6030, 16
  %v6107 = vshll.u32 %v6030, 16
  %v6109 = vrot.slane %v6107, 1
  %v6110 = vor.u32 %v6105, %v6109
  %v6112 = vshrl.u32 %v6031, 16
  %v6114 = vshll.u32 %v6031, 16
  %v6116 = vrot.slane %v6114, 1
  %v6117 = vor.u32 %v6112, %v6116
  %v6119 = vshrl.u32 %v6032, 16
  %v6121 = vshll.u32 %v6032, 16
  %v6123 = vrot.slane %v6121, 1
  %v6124 = vor.u32 %v6119, %v6123
  %v6126 = vshrl.u32 %v6033, 16
  %v6128 = vshll.u32 %v6033, 16
  %v6130 = vrot.slane %v6128, 1
  %v6131 = vor.u32 %v6126, %v6130
  %v6133 = vshrl.u32 %v6034, 16
  %v6135 = vshll.u32 %v6034, 16
  %v6137 = vrot.slane %v6135, 1
  %v6138 = vor.u32 %v6133, %v6137
  %v6140 = vshrl.u32 %v6035, 16
  %v6142 = vshll.u32 %v6035, 16
  %v6144 = vrot.slane %v6142, 1
  %v6145 = vor.u32 %v6140, %v6144
  %v6147 = vshrl.u32 %v6036, 16
  %v6149 = vshll.u32 %v6036, 16
  %v6151 = vrot.slane %v6149, 1
  %v6152 = vor.u32 %v6147, %v6151
  %v6154 = vshrl.u32 %v6037, 16
  %v6156 = vshll.u32 %v6037, 16
  %v6158 = vrot.slane %v6156, 1
  %v6159 = vor.u32 %v6154, %v6158
  %v6161 = vshrl.u32 %v6038, 16
  %v6163 = vshll.u32 %v6038, 16
  %v6165 = vrot.slane %v6163, 1
  %v6166 = vor.u32 %v6161, %v6165
  %v6168 = vshrl.u32 %v6039, 16
  %v6170 = vshll.u32 %v6039, 16
  %v6172 = vrot.slane %v6170, 1
  %v6173 = vor.u32 %v6168, %v6172
  %v6175 = vshrl.u32 %v6040, 16
  %v6177 = vshll.u32 %v6040, 16
  %v6179 = vrot.slane %v6177, 1
  %v6180 = vor.u32 %v6175, %v6179
  %v6182 = vshrl.u32 %v6041, 16
  %v6184 = vshll.u32 %v6041, 16
  %v6186 = vrot.slane %v6184, 1
  %v6187 = vor.u32 %v6182, %v6186
  %v6189 = vshrl.u32 %v6042, 16
  %v6191 = vshll.u32 %v6042, 16
  %v6193 = vrot.slane %v6191, 1
  %v6194 = vor.u32 %v6189, %v6193
  %v6196 = vshrl.u32 %v6043, 16
  %v6198 = vshll.u32 %v6043, 16
  %v6200 = vrot.slane %v6198, 1
  %v6201 = vor.u32 %v6196, %v6200
  %v6203 = vshrl.u32 %v6044, 16
  %v6205 = vshll.u32 %v6044, 16
  %v6207 = vrot.slane %v6205, 1
  %v6208 = vor.u32 %v6203, %v6207
  %v6210 = vshrl.u32 %v6045, 16
  %v6212 = vshll.u32 %v6045, 16
  %v6214 = vrot.slane %v6212, 1
  %v6215 = vor.u32 %v6210, %v6214
  %v6217 = vshrl.u32 %v6046, 16
  %v6219 = vshll.u32 %v6046, 16
  %v6221 = vrot.slane %v6219, 1
  %v6222 = vor.u32 %v6217, %v6221
  %v6224 = vshrl.u32 %v6047, 16
  %v6226 = vshll.u32 %v6047, 16
  %v6228 = vrot.slane %v6226, 1
  %v6229 = vor.u32 %v6224, %v6228
  %v6231 = vshrl.u32 %v6048, 16
  %v6233 = vshll.u32 %v6048, 16
  %v6235 = vrot.slane %v6233, 1
  %v6236 = vor.u32 %v6231, %v6235
  %v6238 = vshrl.u32 %v6049, 16
  %v6240 = vshll.u32 %v6049, 16
  %v6242 = vrot.slane %v6240, 1
  %v6243 = vor.u32 %v6238, %v6242
  %v6245 = vshrl.u32 %v6050, 16
  %v6247 = vshll.u32 %v6050, 16
  %v6249 = vrot.slane %v6247, 1
  %v6250 = vor.u32 %v6245, %v6249
  %v6252 = vshrl.u32 %v6051, 16
  %v6254 = vshll.u32 %v6051, 16
  %v6256 = vrot.slane %v6254, 1
  %v6257 = vor.u32 %v6252, %v6256
  %v6259 = vshrl.u32 %v6052, 16
  %v6261 = vshll.u32 %v6052, 16
  %v6263 = vrot.slane %v6261, 1
  %v6264 = vor.u32 %v6259, %v6263
  %v6266 = vshrl.u32 %v6053, 16
  %v6268 = vshll.u32 %v6053, 16
  %v6270 = vrot.slane %v6268, 1
  %v6271 = vor.u32 %v6266, %v6270
  %v6273 = vshrl.u32 %v6054, 16
  %v6275 = vshll.u32 %v6054, 16
  %v6277 = vrot.slane %v6275, 1
  %v6278 = vor.u32 %v6273, %v6277
  %v6279 = vunpack.c.l.b16 %v5421
  %v6280 = vunpack.c.l.b16 %v5741
  %v6281 = vunpack.c.l.b16 %v6061
  %v6282 = vunpack.c.l.b16 %v5428
  %v6283 = vunpack.c.l.b16 %v5748
  %v6284 = vunpack.c.l.b16 %v6068
  %v6285 = vunpack.c.l.b16 %v5435
  %v6286 = vunpack.c.l.b16 %v5755
  %v6287 = vunpack.c.l.b16 %v6075
  %v6288 = vunpack.c.l.b16 %v5442
  %v6289 = vunpack.c.l.b16 %v5762
  %v6290 = vunpack.c.l.b16 %v6082
  %v6291 = vunpack.c.l.b16 %v5449
  %v6292 = vunpack.c.l.b16 %v5769
  %v6293 = vunpack.c.l.b16 %v6089
  %v6294 = vunpack.c.l.b16 %v5456
  %v6295 = vunpack.c.l.b16 %v5776
  %v6296 = vunpack.c.l.b16 %v6096
  %v6297 = vunpack.c.l.b16 %v5463
  %v6298 = vunpack.c.l.b16 %v5783
  %v6299 = vunpack.c.l.b16 %v6103
  %v6300 = vunpack.c.l.b16 %v5470
  %v6301 = vunpack.c.l.b16 %v5790
  %v6302 = vunpack.c.l.b16 %v6110
  %v6303 = vunpack.c.l.b16 %v5477
  %v6304 = vunpack.c.l.b16 %v5797
  %v6305 = vunpack.c.l.b16 %v6117
  %v6306 = vunpack.c.l.b16 %v5484
  %v6307 = vunpack.c.l.b16 %v5804
  %v6308 = vunpack.c.l.b16 %v6124
  %v6309 = vunpack.c.l.b16 %v5491
  %v6310 = vunpack.c.l.b16 %v5811
  %v6311 = vunpack.c.l.b16 %v6131
  %v6312 = vunpack.c.l.b16 %v5498
  %v6313 = vunpack.c.l.b16 %v5818
  %v6314 = vunpack.c.l.b16 %v6138
  %v6315 = vunpack.c.l.b16 %v5505
  %v6316 = vunpack.c.l.b16 %v5825
  %v6317 = vunpack.c.l.b16 %v6145
  %v6318 = vunpack.c.l.b16 %v5512
  %v6319 = vunpack.c.l.b16 %v5832
  %v6320 = vunpack.c.l.b16 %v6152
  %v6321 = vunpack.c.l.b16 %v5519
  %v6322 = vunpack.c.l.b16 %v5839
  %v6323 = vunpack.c.l.b16 %v6159
  %v6324 = vunpack.c.l.b16 %v5526
  %v6325 = vunpack.c.l.b16 %v5846
  %v6326 = vunpack.c.l.b16 %v6166
  %v6327 = vunpack.c.l.b16 %v5533
  %v6328 = vunpack.c.l.b16 %v5853
  %v6329 = vunpack.c.l.b16 %v6173
  %v6330 = vunpack.c.l.b16 %v5540
  %v6331 = vunpack.c.l.b16 %v5860
  %v6332 = vunpack.c.l.b16 %v6180
  %v6333 = vunpack.c.l.b16 %v5547
  %v6334 = vunpack.c.l.b16 %v5867
  %v6335 = vunpack.c.l.b16 %v6187
  %v6336 = vunpack.c.l.b16 %v5554
  %v6337 = vunpack.c.l.b16 %v5874
  %v6338 = vunpack.c.l.b16 %v6194
  %v6339 = vunpack.c.l.b16 %v5561
  %v6340 = vunpack.c.l.b16 %v5881
  %v6341 = vunpack.c.l.b16 %v6201
  %v6342 = vunpack.c.l.b16 %v5568
  %v6343 = vunpack.c.l.b16 %v5888
  %v6344 = vunpack.c.l.b16 %v6208
  %v6345 = vunpack.c.l.b16 %v5575
  %v6346 = vunpack.c.l.b16 %v5895
  %v6347 = vunpack.c.l.b16 %v6215
  %v6348 = vunpack.c.l.b16 %v5582
  %v6349 = vunpack.c.l.b16 %v5902
  %v6350 = vunpack.c.l.b16 %v6222
  %v6351 = vunpack.c.l.b16 %v5589
  %v6352 = vunpack.c.l.b16 %v5909
  %v6353 = vunpack.c.l.b16 %v6229
  %v6354 = vunpack.c.l.b16 %v5596
  %v6355 = vunpack.c.l.b16 %v5916
  %v6356 = vunpack.c.l.b16 %v6236
  %v6357 = vunpack.c.l.b16 %v5603
  %v6358 = vunpack.c.l.b16 %v5923
  %v6359 = vunpack.c.l.b16 %v6243
  %v6360 = vunpack.c.l.b16 %v5610
  %v6361 = vunpack.c.l.b16 %v5930
  %v6362 = vunpack.c.l.b16 %v6250
  %v6363 = vunpack.c.l.b16 %v5617
  %v6364 = vunpack.c.l.b16 %v5937
  %v6365 = vunpack.c.l.b16 %v6257
  %v6366 = vunpack.c.l.b16 %v5624
  %v6367 = vunpack.c.l.b16 %v5944
  %v6368 = vunpack.c.l.b16 %v6264
  %v6369 = vunpack.c.l.b16 %v5631
  %v6370 = vunpack.c.l.b16 %v5951
  %v6371 = vunpack.c.l.b16 %v6271
  %v6372 = vunpack.c.l.b16 %v5638
  %v6373 = vunpack.c.l.b16 %v5958
  %v6374 = vunpack.c.l.b16 %v6278
  %v6375 = vld [vmem:[%s3] sm:$0xf]
  %v6376 = vld [vmem:[%s3 + $0x4] sm:$0xf]
  %v6377 = vld [vmem:[%s3 + $0x8] sm:$0xf]
  %v6378 = vld [vmem:[%s3 + $0xc] sm:$0xf]
  %v6379 = vld [vmem:[%s3 + $0x10] sm:$0xf]
  %v6380 = vld [vmem:[%s3 + $0x14] sm:$0xf]
  %v6381 = vld [vmem:[%s3 + $0x18] sm:$0xf]
  %v6382 = vld [vmem:[%s3 + $0x1c] sm:$0xf]
  %v6383 = vld [vmem:[%s3 + $0x20] sm:$0xf]
  %v6384 = vld [vmem:[%s3 + $0x24] sm:$0xf]
  %v6385 = vld [vmem:[%s3 + $0x28] sm:$0xf]
  %v6386 = vld [vmem:[%s3 + $0x2c] sm:$0xf]
  %v6387 = vld [vmem:[%s3 + $0x30] sm:$0xf]
  %v6388 = vld [vmem:[%s3 + $0x34] sm:$0xf]
  %v6389 = vld [vmem:[%s3 + $0x38] sm:$0xf]
  %v6390 = vld [vmem:[%s3 + $0x3c] sm:$0xf]
  %v6391 = vld [vmem:[%s3 + $0x40] sm:$0xf]
  %v6392 = vld [vmem:[%s3 + $0x44] sm:$0xf]
  %v6393 = vld [vmem:[%s3 + $0x48] sm:$0xf]
  %v6394 = vld [vmem:[%s3 + $0x4c] sm:$0xf]
  %v6395 = vld [vmem:[%s3 + $0x50] sm:$0xf]
  %v6396 = vld [vmem:[%s3 + $0x54] sm:$0xf]
  %v6397 = vld [vmem:[%s3 + $0x58] sm:$0xf]
  %v6398 = vld [vmem:[%s3 + $0x5c] sm:$0xf]
  %v6399 = vld [vmem:[%s3 + $0x60] sm:$0xf]
  %v6400 = vld [vmem:[%s3 + $0x64] sm:$0xf]
  %v6401 = vld [vmem:[%s3 + $0x68] sm:$0xf]
  %v6402 = vld [vmem:[%s3 + $0x6c] sm:$0xf]
  %v6403 = vld [vmem:[%s3 + $0x70] sm:$0xf]
  %v6404 = vld [vmem:[%s3 + $0x74] sm:$0xf]
  %v6405 = vld [vmem:[%s3 + $0x78] sm:$0xf]
  %v6406 = vld [vmem:[%s3 + $0x7c] sm:$0xf]
  %v6407 = vld [vmem:[%s3 + $0x80] sm:$0xf]
  %v6408 = vld [vmem:[%s3 + $0x84] sm:$0xf]
  %v6409 = vld [vmem:[%s3 + $0x88] sm:$0xf]
  %v6410 = vld [vmem:[%s3 + $0x8c] sm:$0xf]
  %v6411 = vld [vmem:[%s3 + $0x90] sm:$0xf]
  %v6412 = vld [vmem:[%s3 + $0x94] sm:$0xf]
  %v6413 = vld [vmem:[%s3 + $0x98] sm:$0xf]
  %v6414 = vld [vmem:[%s3 + $0x9c] sm:$0xf]
  %v6415 = vld [vmem:[%s3 + $0xa0] sm:$0xf]
  %v6416 = vld [vmem:[%s3 + $0xa4] sm:$0xf]
  %v6417 = vld [vmem:[%s3 + $0xa8] sm:$0xf]
  %v6418 = vld [vmem:[%s3 + $0xac] sm:$0xf]
  %v6419 = vld [vmem:[%s3 + $0xb0] sm:$0xf]
  %v6420 = vld [vmem:[%s3 + $0xb4] sm:$0xf]
  %v6421 = vld [vmem:[%s3 + $0xb8] sm:$0xf]
  %v6422 = vld [vmem:[%s3 + $0xbc] sm:$0xf]
  %v6423 = vld [vmem:[%s3 + $0xc0] sm:$0xf]
  %v6424 = vld [vmem:[%s3 + $0xc4] sm:$0xf]
  %v6425 = vld [vmem:[%s3 + $0xc8] sm:$0xf]
  %v6426 = vld [vmem:[%s3 + $0xcc] sm:$0xf]
  %v6427 = vld [vmem:[%s3 + $0xd0] sm:$0xf]
  %v6428 = vld [vmem:[%s3 + $0xd4] sm:$0xf]
  %v6429 = vld [vmem:[%s3 + $0xd8] sm:$0xf]
  %v6430 = vld [vmem:[%s3 + $0xdc] sm:$0xf]
  %v6431 = vld [vmem:[%s3 + $0xe0] sm:$0xf]
  %v6432 = vld [vmem:[%s3 + $0xe4] sm:$0xf]
  %v6433 = vld [vmem:[%s3 + $0xe8] sm:$0xf]
  %v6434 = vld [vmem:[%s3 + $0xec] sm:$0xf]
  %v6435 = vld [vmem:[%s3 + $0xf0] sm:$0xf]
  %v6436 = vld [vmem:[%s3 + $0xf4] sm:$0xf]
  %v6437 = vld [vmem:[%s3 + $0xf8] sm:$0xf]
  %v6438 = vld [vmem:[%s3 + $0xfc] sm:$0xf]
  %v6439 = vld [vmem:[%s3 + $0x100] sm:$0xf]
  %v6440 = vld [vmem:[%s3 + $0x104] sm:$0xf]
  %v6441 = vld [vmem:[%s3 + $0x108] sm:$0xf]
  %v6442 = vld [vmem:[%s3 + $0x10c] sm:$0xf]
  %v6443 = vld [vmem:[%s3 + $0x110] sm:$0xf]
  %v6444 = vld [vmem:[%s3 + $0x114] sm:$0xf]
  %v6445 = vld [vmem:[%s3 + $0x118] sm:$0xf]
  %v6446 = vld [vmem:[%s3 + $0x11c] sm:$0xf]
  %v6447 = vld [vmem:[%s3 + $0x120] sm:$0xf]
  %v6448 = vld [vmem:[%s3 + $0x124] sm:$0xf]
  %v6449 = vld [vmem:[%s3 + $0x128] sm:$0xf]
  %v6450 = vld [vmem:[%s3 + $0x12c] sm:$0xf]
  %v6451 = vld [vmem:[%s3 + $0x130] sm:$0xf]
  %v6452 = vld [vmem:[%s3 + $0x134] sm:$0xf]
  %v6453 = vld [vmem:[%s3 + $0x138] sm:$0xf]
  %v6454 = vld [vmem:[%s3 + $0x13c] sm:$0xf]
  %v6455 = vld [vmem:[%s3 + $0x140] sm:$0xf]
  %v6456 = vld [vmem:[%s3 + $0x144] sm:$0xf]
  %v6457 = vld [vmem:[%s3 + $0x148] sm:$0xf]
  %v6458 = vld [vmem:[%s3 + $0x14c] sm:$0xf]
  %v6459 = vld [vmem:[%s3 + $0x150] sm:$0xf]
  %v6460 = vld [vmem:[%s3 + $0x154] sm:$0xf]
  %v6461 = vld [vmem:[%s3 + $0x158] sm:$0xf]
  %v6462 = vld [vmem:[%s3 + $0x15c] sm:$0xf]
  %v6463 = vld [vmem:[%s3 + $0x160] sm:$0xf]
  %v6464 = vld [vmem:[%s3 + $0x164] sm:$0xf]
  %v6465 = vld [vmem:[%s3 + $0x168] sm:$0xf]
  %v6466 = vld [vmem:[%s3 + $0x16c] sm:$0xf]
  %v6467 = vld [vmem:[%s3 + $0x170] sm:$0xf]
  %v6468 = vld [vmem:[%s3 + $0x174] sm:$0xf]
  %v6469 = vld [vmem:[%s3 + $0x178] sm:$0xf]
  %v6470 = vld [vmem:[%s3 + $0x17c] sm:$0xf]
  %v6471 = vld [vmem:[%s3 + $0x180] sm:$0xf]
  %v6472 = vld [vmem:[%s3 + $0x184] sm:$0xf]
  %v6473 = vld [vmem:[%s3 + $0x188] sm:$0xf]
  %v6474 = vld [vmem:[%s3 + $0x18c] sm:$0xf]
  %v6475 = vld [vmem:[%s3 + $0x190] sm:$0xf]
  %v6476 = vld [vmem:[%s3 + $0x194] sm:$0xf]
  %v6477 = vld [vmem:[%s3 + $0x198] sm:$0xf]
  %v6478 = vld [vmem:[%s3 + $0x19c] sm:$0xf]
  %v6479 = vld [vmem:[%s3 + $0x1a0] sm:$0xf]
  %v6480 = vld [vmem:[%s3 + $0x1a4] sm:$0xf]
  %v6481 = vld [vmem:[%s3 + $0x1a8] sm:$0xf]
  %v6482 = vld [vmem:[%s3 + $0x1ac] sm:$0xf]
  %v6483 = vld [vmem:[%s3 + $0x1b0] sm:$0xf]
  %v6484 = vld [vmem:[%s3 + $0x1b4] sm:$0xf]
  %v6485 = vld [vmem:[%s3 + $0x1b8] sm:$0xf]
  %v6486 = vld [vmem:[%s3 + $0x1bc] sm:$0xf]
  %v6487 = vld [vmem:[%s3 + $0x1c0] sm:$0xf]
  %v6488 = vld [vmem:[%s3 + $0x1c4] sm:$0xf]
  %v6489 = vld [vmem:[%s3 + $0x1c8] sm:$0xf]
  %v6490 = vld [vmem:[%s3 + $0x1cc] sm:$0xf]
  %v6491 = vld [vmem:[%s3 + $0x1d0] sm:$0xf]
  %v6492 = vld [vmem:[%s3 + $0x1d4] sm:$0xf]
  %v6493 = vld [vmem:[%s3 + $0x1d8] sm:$0xf]
  %v6494 = vld [vmem:[%s3 + $0x1dc] sm:$0xf]
  %v6495 = vld [vmem:[%s3 + $0x1e0] sm:$0xf]
  %v6496 = vld [vmem:[%s3 + $0x1e4] sm:$0xf]
  %v6497 = vld [vmem:[%s3 + $0x1e8] sm:$0xf]
  %v6498 = vld [vmem:[%s3 + $0x1ec] sm:$0xf]
  %v6499 = vld [vmem:[%s3 + $0x1f0] sm:$0xf]
  %v6500 = vld [vmem:[%s3 + $0x1f4] sm:$0xf]
  %v6501 = vld [vmem:[%s3 + $0x1f8] sm:$0xf]
  %v6502 = vld [vmem:[%s3 + $0x1fc] sm:$0xf]
  %v6503 = vld [vmem:[%s3 + $0x200] sm:$0xf]
  %v6504 = vld [vmem:[%s3 + $0x204] sm:$0xf]
  %v6505 = vld [vmem:[%s3 + $0x208] sm:$0xf]
  %v6506 = vld [vmem:[%s3 + $0x20c] sm:$0xf]
  %v6507 = vld [vmem:[%s3 + $0x210] sm:$0xf]
  %v6508 = vld [vmem:[%s3 + $0x214] sm:$0xf]
  %v6509 = vld [vmem:[%s3 + $0x218] sm:$0xf]
  %v6510 = vld [vmem:[%s3 + $0x21c] sm:$0xf]
  %v6511 = vld [vmem:[%s3 + $0x220] sm:$0xf]
  %v6512 = vld [vmem:[%s3 + $0x224] sm:$0xf]
  %v6513 = vld [vmem:[%s3 + $0x228] sm:$0xf]
  %v6514 = vld [vmem:[%s3 + $0x22c] sm:$0xf]
  %v6515 = vld [vmem:[%s3 + $0x230] sm:$0xf]
  %v6516 = vld [vmem:[%s3 + $0x234] sm:$0xf]
  %v6517 = vld [vmem:[%s3 + $0x238] sm:$0xf]
  %v6518 = vld [vmem:[%s3 + $0x23c] sm:$0xf]
  %v6519 = vpack.c.b16 %v3945, %v3943
  %v6520 = vpack.c.b16 %v5133, %v5127
  %v6521 = vpack.c.b16 %v5134, %v5128
  %v6522 = vpack.c.b16 %v4329, %v4327
  %v6523 = vpack.c.b16 %v5135, %v5129
  %v6524 = vpack.c.b16 %v5136, %v5130
  %v6525 = vpack.c.b16 %v4713, %v4711
  %v6526 = vpack.c.b16 %v5137, %v5131
  %v6527 = vpack.c.b16 %v5138, %v5132
  %v6528 = vpack.c.b16 %v3949, %v3947
  %v6529 = vpack.c.b16 %v5145, %v5139
  %v6530 = vpack.c.b16 %v5146, %v5140
  %v6531 = vpack.c.b16 %v4333, %v4331
  %v6532 = vpack.c.b16 %v5147, %v5141
  %v6533 = vpack.c.b16 %v5148, %v5142
  %v6534 = vpack.c.b16 %v4717, %v4715
  %v6535 = vpack.c.b16 %v5149, %v5143
  %v6536 = vpack.c.b16 %v5150, %v5144
  %v6537 = vpack.c.b16 %v3953, %v3951
  %v6538 = vpack.c.b16 %v5157, %v5151
  %v6539 = vpack.c.b16 %v5158, %v5152
  %v6540 = vpack.c.b16 %v4337, %v4335
  %v6541 = vpack.c.b16 %v5159, %v5153
  %v6542 = vpack.c.b16 %v5160, %v5154
  %v6543 = vpack.c.b16 %v4721, %v4719
  %v6544 = vpack.c.b16 %v5161, %v5155
  %v6545 = vpack.c.b16 %v5162, %v5156
  %v6546 = vpack.c.b16 %v3957, %v3955
  %v6547 = vpack.c.b16 %v5169, %v5163
  %v6548 = vpack.c.b16 %v5170, %v5164
  %v6549 = vpack.c.b16 %v4341, %v4339
  %v6550 = vpack.c.b16 %v5171, %v5165
  %v6551 = vpack.c.b16 %v5172, %v5166
  %v6552 = vpack.c.b16 %v4725, %v4723
  %v6553 = vpack.c.b16 %v5173, %v5167
  %v6554 = vpack.c.b16 %v5174, %v5168
  %v6555 = vpack.c.b16 %v3961, %v3959
  %v6556 = vpack.c.b16 %v5181, %v5175
  %v6557 = vpack.c.b16 %v5182, %v5176
  %v6558 = vpack.c.b16 %v4345, %v4343
  %v6559 = vpack.c.b16 %v5183, %v5177
  %v6560 = vpack.c.b16 %v5184, %v5178
  %v6561 = vpack.c.b16 %v4729, %v4727
  %v6562 = vpack.c.b16 %v5185, %v5179
  %v6563 = vpack.c.b16 %v5186, %v5180
  %v6564 = vpack.c.b16 %v3965, %v3963
  %v6565 = vpack.c.b16 %v5193, %v5187
  %v6566 = vpack.c.b16 %v5194, %v5188
  %v6567 = vpack.c.b16 %v4349, %v4347
  %v6568 = vpack.c.b16 %v5195, %v5189
  %v6569 = vpack.c.b16 %v5196, %v5190
  %v6570 = vpack.c.b16 %v4733, %v4731
  %v6571 = vpack.c.b16 %v5197, %v5191
  %v6572 = vpack.c.b16 %v5198, %v5192
  %v6573 = vpack.c.b16 %v3969, %v3967
  %v6574 = vpack.c.b16 %v5205, %v5199
  %v6575 = vpack.c.b16 %v5206, %v5200
  %v6576 = vpack.c.b16 %v4353, %v4351
  %v6577 = vpack.c.b16 %v5207, %v5201
  %v6578 = vpack.c.b16 %v5208, %v5202
  %v6579 = vpack.c.b16 %v4737, %v4735
  %v6580 = vpack.c.b16 %v5209, %v5203
  %v6581 = vpack.c.b16 %v5210, %v5204
  %v6582 = vpack.c.b16 %v3973, %v3971
  %v6583 = vpack.c.b16 %v5217, %v5211
  %v6584 = vpack.c.b16 %v5218, %v5212
  %v6585 = vpack.c.b16 %v4357, %v4355
  %v6586 = vpack.c.b16 %v5219, %v5213
  %v6587 = vpack.c.b16 %v5220, %v5214
  %v6588 = vpack.c.b16 %v4741, %v4739
  %v6589 = vpack.c.b16 %v5221, %v5215
  %v6590 = vpack.c.b16 %v5222, %v5216
  %v6591 = vpack.c.b16 %v3977, %v3975
  %v6592 = vpack.c.b16 %v5229, %v5223
  %v6593 = vpack.c.b16 %v5230, %v5224
  %v6594 = vpack.c.b16 %v4361, %v4359
  %v6595 = vpack.c.b16 %v5231, %v5225
  %v6596 = vpack.c.b16 %v5232, %v5226
  %v6597 = vpack.c.b16 %v4745, %v4743
  %v6598 = vpack.c.b16 %v5233, %v5227
  %v6599 = vpack.c.b16 %v5234, %v5228
  %v6600 = vpack.c.b16 %v3981, %v3979
  %v6601 = vpack.c.b16 %v5241, %v5235
  %v6602 = vpack.c.b16 %v5242, %v5236
  %v6603 = vpack.c.b16 %v4365, %v4363
  %v6604 = vpack.c.b16 %v5243, %v5237
  %v6605 = vpack.c.b16 %v5244, %v5238
  %v6606 = vpack.c.b16 %v4749, %v4747
  %v6607 = vpack.c.b16 %v5245, %v5239
  %v6608 = vpack.c.b16 %v5246, %v5240
  %v6609 = vpack.c.b16 %v3985, %v3983
  %v6610 = vpack.c.b16 %v5253, %v5247
  %v6611 = vpack.c.b16 %v5254, %v5248
  %v6612 = vpack.c.b16 %v4369, %v4367
  %v6613 = vpack.c.b16 %v5255, %v5249
  %v6614 = vpack.c.b16 %v5256, %v5250
  %v6615 = vpack.c.b16 %v4753, %v4751
  %v6616 = vpack.c.b16 %v5257, %v5251
  %v6617 = vpack.c.b16 %v5258, %v5252
  %v6618 = vpack.c.b16 %v3989, %v3987
  %v6619 = vpack.c.b16 %v5265, %v5259
  %v6620 = vpack.c.b16 %v5266, %v5260
  %v6621 = vpack.c.b16 %v4373, %v4371
  %v6622 = vpack.c.b16 %v5267, %v5261
  %v6623 = vpack.c.b16 %v5268, %v5262
  %v6624 = vpack.c.b16 %v4757, %v4755
  %v6625 = vpack.c.b16 %v5269, %v5263
  %v6626 = vpack.c.b16 %v5270, %v5264
  %v6627 = vpack.c.b16 %v3993, %v3991
  %v6628 = vpack.c.b16 %v5277, %v5271
  %v6629 = vpack.c.b16 %v5278, %v5272
  %v6630 = vpack.c.b16 %v4377, %v4375
  %v6631 = vpack.c.b16 %v5279, %v5273
  %v6632 = vpack.c.b16 %v5280, %v5274
  %v6633 = vpack.c.b16 %v4761, %v4759
  %v6634 = vpack.c.b16 %v5281, %v5275
  %v6635 = vpack.c.b16 %v5282, %v5276
  %v6636 = vpack.c.b16 %v3997, %v3995
  %v6637 = vpack.c.b16 %v5289, %v5283
  %v6638 = vpack.c.b16 %v5290, %v5284
  %v6639 = vpack.c.b16 %v4381, %v4379
  %v6640 = vpack.c.b16 %v5291, %v5285
  %v6641 = vpack.c.b16 %v5292, %v5286
  %v6642 = vpack.c.b16 %v4765, %v4763
  %v6643 = vpack.c.b16 %v5293, %v5287
  %v6644 = vpack.c.b16 %v5294, %v5288
  %v6645 = vpack.c.b16 %v4001, %v3999
  %v6646 = vpack.c.b16 %v5301, %v5295
  %v6647 = vpack.c.b16 %v5302, %v5296
  %v6648 = vpack.c.b16 %v4385, %v4383
  %v6649 = vpack.c.b16 %v5303, %v5297
  %v6650 = vpack.c.b16 %v5304, %v5298
  %v6651 = vpack.c.b16 %v4769, %v4767
  %v6652 = vpack.c.b16 %v5305, %v5299
  %v6653 = vpack.c.b16 %v5306, %v5300
  %v6654 = vpack.c.b16 %v4005, %v4003
  %v6655 = vpack.c.b16 %v5313, %v5307
  %v6656 = vpack.c.b16 %v5314, %v5308
  %v6657 = vpack.c.b16 %v4389, %v4387
  %v6658 = vpack.c.b16 %v5315, %v5309
  %v6659 = vpack.c.b16 %v5316, %v5310
  %v6660 = vpack.c.b16 %v4773, %v4771
  %v6661 = vpack.c.b16 %v5317, %v5311
  %v6662 = vpack.c.b16 %v5318, %v5312
  %v6951 = vunpack.c.l.b16 %v6375
  %v6952 = vunpack.c.l.b16 %v6376
  %v6953 = vunpack.c.l.b16 %v6377
  %v6954 = vunpack.c.l.b16 %v6378
  %v6955 = vunpack.c.l.b16 %v6379
  %v6956 = vunpack.c.l.b16 %v6380
  %v6957 = vunpack.c.l.b16 %v6381
  %v6958 = vunpack.c.l.b16 %v6382
  %v6959 = vunpack.c.l.b16 %v6383
  %v6960 = vunpack.c.l.b16 %v6384
  %v6961 = vunpack.c.l.b16 %v6385
  %v6962 = vunpack.c.l.b16 %v6386
  %v6963 = vunpack.c.l.b16 %v6387
  %v6964 = vunpack.c.l.b16 %v6388
  %v6965 = vunpack.c.l.b16 %v6389
  %v6966 = vunpack.c.l.b16 %v6390
  %v6967 = vunpack.c.l.b16 %v6391
  %v6968 = vunpack.c.l.b16 %v6392
  %v6969 = vunpack.c.l.b16 %v6393
  %v6970 = vunpack.c.l.b16 %v6394
  %v6971 = vunpack.c.l.b16 %v6395
  %v6972 = vunpack.c.l.b16 %v6396
  %v6973 = vunpack.c.l.b16 %v6397
  %v6974 = vunpack.c.l.b16 %v6398
  %v6975 = vunpack.c.l.b16 %v6399
  %v6976 = vunpack.c.l.b16 %v6400
  %v6977 = vunpack.c.l.b16 %v6401
  %v6978 = vunpack.c.l.b16 %v6402
  %v6979 = vunpack.c.l.b16 %v6403
  %v6980 = vunpack.c.l.b16 %v6404
  %v6981 = vunpack.c.l.b16 %v6405
  %v6982 = vunpack.c.l.b16 %v6406
  %v6983 = vunpack.c.l.b16 %v6407
  %v6984 = vunpack.c.l.b16 %v6408
  %v6985 = vunpack.c.l.b16 %v6409
  %v6986 = vunpack.c.l.b16 %v6410
  %v6987 = vunpack.c.l.b16 %v6411
  %v6988 = vunpack.c.l.b16 %v6412
  %v6989 = vunpack.c.l.b16 %v6413
  %v6990 = vunpack.c.l.b16 %v6414
  %v6991 = vunpack.c.l.b16 %v6415
  %v6992 = vunpack.c.l.b16 %v6416
  %v6993 = vunpack.c.l.b16 %v6417
  %v6994 = vunpack.c.l.b16 %v6418
  %v6995 = vunpack.c.l.b16 %v6419
  %v6996 = vunpack.c.l.b16 %v6420
  %v6997 = vunpack.c.l.b16 %v6421
  %v6998 = vunpack.c.l.b16 %v6422
  %v6999 = vunpack.c.l.b16 %v6423
  %v7000 = vunpack.c.l.b16 %v6424
  %v7001 = vunpack.c.l.b16 %v6425
  %v7002 = vunpack.c.l.b16 %v6426
  %v7003 = vunpack.c.l.b16 %v6427
  %v7004 = vunpack.c.l.b16 %v6428
  %v7005 = vunpack.c.l.b16 %v6429
  %v7006 = vunpack.c.l.b16 %v6430
  %v7007 = vunpack.c.l.b16 %v6431
  %v7008 = vunpack.c.l.b16 %v6432
  %v7009 = vunpack.c.l.b16 %v6433
  %v7010 = vunpack.c.l.b16 %v6434
  %v7011 = vunpack.c.l.b16 %v6435
  %v7012 = vunpack.c.l.b16 %v6436
  %v7013 = vunpack.c.l.b16 %v6437
  %v7014 = vunpack.c.l.b16 %v6438
  %v7015 = vunpack.c.l.b16 %v6439
  %v7016 = vunpack.c.l.b16 %v6440
  %v7017 = vunpack.c.l.b16 %v6441
  %v7018 = vunpack.c.l.b16 %v6442
  %v7019 = vunpack.c.l.b16 %v6443
  %v7020 = vunpack.c.l.b16 %v6444
  %v7021 = vunpack.c.l.b16 %v6445
  %v7022 = vunpack.c.l.b16 %v6446
  %v7023 = vunpack.c.l.b16 %v6447
  %v7024 = vunpack.c.l.b16 %v6448
  %v7025 = vunpack.c.l.b16 %v6449
  %v7026 = vunpack.c.l.b16 %v6450
  %v7027 = vunpack.c.l.b16 %v6451
  %v7028 = vunpack.c.l.b16 %v6452
  %v7029 = vunpack.c.l.b16 %v6453
  %v7030 = vunpack.c.l.b16 %v6454
  %v7031 = vunpack.c.l.b16 %v6455
  %v7032 = vunpack.c.l.b16 %v6456
  %v7033 = vunpack.c.l.b16 %v6457
  %v7034 = vunpack.c.l.b16 %v6458
  %v7035 = vunpack.c.l.b16 %v6459
  %v7036 = vunpack.c.l.b16 %v6460
  %v7037 = vunpack.c.l.b16 %v6461
  %v7038 = vunpack.c.l.b16 %v6462
  %v7039 = vunpack.c.l.b16 %v6463
  %v7040 = vunpack.c.l.b16 %v6464
  %v7041 = vunpack.c.l.b16 %v6465
  %v7042 = vunpack.c.l.b16 %v6466
  %v7043 = vunpack.c.l.b16 %v6467
  %v7044 = vunpack.c.l.b16 %v6468
  %v7045 = vunpack.c.l.b16 %v6469
  %v7046 = vunpack.c.l.b16 %v6470
  %v7047 = vunpack.c.l.b16 %v6471
  %v7048 = vunpack.c.l.b16 %v6472
  %v7049 = vunpack.c.l.b16 %v6473
  %v7050 = vunpack.c.l.b16 %v6474
  %v7051 = vunpack.c.l.b16 %v6475
  %v7052 = vunpack.c.l.b16 %v6476
  %v7053 = vunpack.c.l.b16 %v6477
  %v7054 = vunpack.c.l.b16 %v6478
  %v7055 = vunpack.c.l.b16 %v6479
  %v7056 = vunpack.c.l.b16 %v6480
  %v7057 = vunpack.c.l.b16 %v6481
  %v7058 = vunpack.c.l.b16 %v6482
  %v7059 = vunpack.c.l.b16 %v6483
  %v7060 = vunpack.c.l.b16 %v6484
  %v7061 = vunpack.c.l.b16 %v6485
  %v7062 = vunpack.c.l.b16 %v6486
  %v7063 = vunpack.c.l.b16 %v6487
  %v7064 = vunpack.c.l.b16 %v6488
  %v7065 = vunpack.c.l.b16 %v6489
  %v7066 = vunpack.c.l.b16 %v6490
  %v7067 = vunpack.c.l.b16 %v6491
  %v7068 = vunpack.c.l.b16 %v6492
  %v7069 = vunpack.c.l.b16 %v6493
  %v7070 = vunpack.c.l.b16 %v6494
  %v7071 = vunpack.c.l.b16 %v6495
  %v7072 = vunpack.c.l.b16 %v6496
  %v7073 = vunpack.c.l.b16 %v6497
  %v7074 = vunpack.c.l.b16 %v6498
  %v7075 = vunpack.c.l.b16 %v6499
  %v7076 = vunpack.c.l.b16 %v6500
  %v7077 = vunpack.c.l.b16 %v6501
  %v7078 = vunpack.c.l.b16 %v6502
  %v7079 = vunpack.c.l.b16 %v6503
  %v7080 = vunpack.c.l.b16 %v6504
  %v7081 = vunpack.c.l.b16 %v6505
  %v7082 = vunpack.c.l.b16 %v6506
  %v7083 = vunpack.c.l.b16 %v6507
  %v7084 = vunpack.c.l.b16 %v6508
  %v7085 = vunpack.c.l.b16 %v6509
  %v7086 = vunpack.c.l.b16 %v6510
  %v7087 = vunpack.c.l.b16 %v6511
  %v7088 = vunpack.c.l.b16 %v6512
  %v7089 = vunpack.c.l.b16 %v6513
  %v7090 = vunpack.c.l.b16 %v6514
  %v7091 = vunpack.c.l.b16 %v6515
  %v7092 = vunpack.c.l.b16 %v6516
  %v7093 = vunpack.c.l.b16 %v6517
  %v7094 = vunpack.c.l.b16 %v6518
  %v7095 = vpack.c.b16 %v6952, %v6951
  %v7096 = vpack.c.b16 %v6954, %v6953
  %v7097 = vpack.c.b16 %v6956, %v6955
  %v7098 = vpack.c.b16 %v6958, %v6957
  %v7099 = vpack.c.b16 %v6960, %v6959
  %v7100 = vpack.c.b16 %v6962, %v6961
  %v7101 = vpack.c.b16 %v6964, %v6963
  %v7102 = vpack.c.b16 %v6966, %v6965
  %v7103 = vpack.c.b16 %v6968, %v6967
  %v7104 = vpack.c.b16 %v6970, %v6969
  %v7105 = vpack.c.b16 %v6972, %v6971
  %v7106 = vpack.c.b16 %v6974, %v6973
  %v7107 = vpack.c.b16 %v6976, %v6975
  %v7108 = vpack.c.b16 %v6978, %v6977
  %v7109 = vpack.c.b16 %v6980, %v6979
  %v7110 = vpack.c.b16 %v6982, %v6981
  %v7111 = vpack.c.b16 %v6984, %v6983
  %v7112 = vpack.c.b16 %v6986, %v6985
  %v7113 = vpack.c.b16 %v6988, %v6987
  %v7114 = vpack.c.b16 %v6990, %v6989
  %v7115 = vpack.c.b16 %v6992, %v6991
  %v7116 = vpack.c.b16 %v6994, %v6993
  %v7117 = vpack.c.b16 %v6996, %v6995
  %v7118 = vpack.c.b16 %v6998, %v6997
  %v7119 = vpack.c.b16 %v7000, %v6999
  %v7120 = vpack.c.b16 %v7002, %v7001
  %v7121 = vpack.c.b16 %v7004, %v7003
  %v7122 = vpack.c.b16 %v7006, %v7005
  %v7123 = vpack.c.b16 %v7008, %v7007
  %v7124 = vpack.c.b16 %v7010, %v7009
  %v7125 = vpack.c.b16 %v7012, %v7011
  %v7126 = vpack.c.b16 %v7014, %v7013
  %v7127 = vpack.c.b16 %v7016, %v7015
  %v7128 = vpack.c.b16 %v7018, %v7017
  %v7129 = vpack.c.b16 %v7020, %v7019
  %v7130 = vpack.c.b16 %v7022, %v7021
  %v7131 = vpack.c.b16 %v7024, %v7023
  %v7132 = vpack.c.b16 %v7026, %v7025
  %v7133 = vpack.c.b16 %v7028, %v7027
  %v7134 = vpack.c.b16 %v7030, %v7029
  %v7135 = vpack.c.b16 %v7032, %v7031
  %v7136 = vpack.c.b16 %v7034, %v7033
  %v7137 = vpack.c.b16 %v7036, %v7035
  %v7138 = vpack.c.b16 %v7038, %v7037
  %v7139 = vpack.c.b16 %v7040, %v7039
  %v7140 = vpack.c.b16 %v7042, %v7041
  %v7141 = vpack.c.b16 %v7044, %v7043
  %v7142 = vpack.c.b16 %v7046, %v7045
  %v7143 = vpack.c.b16 %v7048, %v7047
  %v7144 = vpack.c.b16 %v7050, %v7049
  %v7145 = vpack.c.b16 %v7052, %v7051
  %v7146 = vpack.c.b16 %v7054, %v7053
  %v7147 = vpack.c.b16 %v7056, %v7055
  %v7148 = vpack.c.b16 %v7058, %v7057
  %v7149 = vpack.c.b16 %v7060, %v7059
  %v7150 = vpack.c.b16 %v7062, %v7061
  %v7151 = vpack.c.b16 %v7064, %v7063
  %v7152 = vpack.c.b16 %v7066, %v7065
  %v7153 = vpack.c.b16 %v7068, %v7067
  %v7154 = vpack.c.b16 %v7070, %v7069
  %v7155 = vpack.c.b16 %v7072, %v7071
  %v7156 = vpack.c.b16 %v7074, %v7073
  %v7157 = vpack.c.b16 %v7076, %v7075
  %v7158 = vpack.c.b16 %v7078, %v7077
  %v7159 = vpack.c.b16 %v7080, %v7079
  %v7160 = vpack.c.b16 %v7082, %v7081
  %v7161 = vpack.c.b16 %v7084, %v7083
  %v7162 = vpack.c.b16 %v7086, %v7085
  %v7163 = vpack.c.b16 %v7088, %v7087
  %v7164 = vpack.c.b16 %v7090, %v7089
  %v7165 = vpack.c.b16 %v7092, %v7091
  %v7166 = vpack.c.b16 %v7094, %v7093
  %7239 = vmatprep.subr.bf16.mxu0 0
  %7240 = vmatpush1.bf16.msra.mxu0 %v7095
  %7241 = vmatprep.subr.bf16.mxu0 0
  %7242 = vmatpush1.bf16.msra.mxu0 %v7096
  %7243 = vmatprep.subr.bf16.mxu0 0
  %7244 = vmatpush1.bf16.msra.mxu0 %v7097
  %7245 = vmatprep.subr.bf16.mxu0 0
  %7246 = vmatpush1.bf16.msra.mxu0 %v7098
  %7247 = vmatprep.subr.bf16.mxu0 0
  %7248 = vmatpush1.bf16.msra.mxu0 %v7099
  %7249 = vmatprep.subr.bf16.mxu0 0
  %7250 = vmatpush1.bf16.msra.mxu0 %v7100
  %7251 = vmatprep.subr.bf16.mxu0 0
  %7252 = vmatpush1.bf16.msra.mxu0 %v7101
  %7253 = vmatprep.subr.bf16.mxu0 0
  %7254 = vmatpush1.bf16.msra.mxu0 %v7102
  %7255 = vmatprep.subr.bf16.mxu0 0
  %7256 = vmatpush1.bf16.msra.mxu0 %v7103
  %7257 = vmatprep.subr.bf16.mxu0 0
  %7258 = vmatpush1.bf16.msra.mxu0 %v7104
  %7259 = vmatprep.subr.bf16.mxu0 0
  %7260 = vmatpush1.bf16.msra.mxu0 %v7105
  %7261 = vmatprep.subr.bf16.mxu0 0
  %7262 = vmatpush1.bf16.msra.mxu0 %v7106
  %7263 = vmatprep.subr.bf16.mxu0 0
  %7264 = vmatpush1.bf16.msra.mxu0 %v7107
  %7265 = vmatprep.subr.bf16.mxu0 0
  %7266 = vmatpush1.bf16.msra.mxu0 %v7108
  %7267 = vmatprep.subr.bf16.mxu0 0
  %7268 = vmatpush1.bf16.msra.mxu0 %v7109
  %7269 = vmatprep.subr.bf16.mxu0 0
  %7270 = vmatpush1.bf16.msra.mxu0 %v7110
  %7271 = vmatprep.mubr.bf16.mxu0 %v6520
  %7272 = vmatmul.mubr.bf16.gmra.mrb[0].mxu0 %v6519
  %v7273 = vpop.f32.mrb[0].mxu0
  %v7274 = vadd.f32 0.0, %v7273
  %v7275 = vpop.f32.mrb[0].mxu0
  %v7276 = vpop.f32.mrb[0].mxu0
  %v7277 = vadd.f32 0.0, %v7276
  %v7278 = vpop.f32.mrb[0].mxu0
  %7279 = vmatprep.mubr.bf16.mxu0 %v6529
  %7280 = vmatmul.mubr.bf16.gmra.mrb[0].mxu0 %v6528
  %v7281 = vpop.f32.mrb[0].mxu0
  %v7282 = vadd.f32 0.0, %v7281
  %v7283 = vpop.f32.mrb[0].mxu0
  %v7284 = vpop.f32.mrb[0].mxu0
  %v7285 = vadd.f32 0.0, %v7284
  %v7286 = vpop.f32.mrb[0].mxu0
  %7287 = vmatprep.mubr.bf16.mxu0 %v6538
  %7288 = vmatmul.mubr.bf16.gmra.mrb[0].mxu0 %v6537
  %v7289 = vpop.f32.mrb[0].mxu0
  %v7290 = vadd.f32 0.0, %v7289
  %v7291 = vpop.f32.mrb[0].mxu0
  %v7292 = vpop.f32.mrb[0].mxu0
  %v7293 = vadd.f32 0.0, %v7292
  %v7294 = vpop.f32.mrb[0].mxu0
  %7295 = vmatprep.mubr.bf16.mxu0 %v6547
  %7296 = vmatmul.mubr.bf16.gmra.mrb[0].mxu0 %v6546
  %v7297 = vpop.f32.mrb[0].mxu0
  %v7298 = vadd.f32 0.0, %v7297
  %v7299 = vpop.f32.mrb[0].mxu0
  %v7300 = vpop.f32.mrb[0].mxu0
  %v7301 = vadd.f32 0.0, %v7300
  %v7302 = vpop.f32.mrb[0].mxu0
  %7303 = vmatprep.mubr.bf16.mxu0 %v6556
  %7304 = vmatmul.mubr.bf16.gmra.mrb[0].mxu0 %v6555
  %v7305 = vpop.f32.mrb[0].mxu0
  %v7306 = vadd.f32 0.0, %v7305
  %v7307 = vpop.f32.mrb[0].mxu0
  %v7308 = vpop.f32.mrb[0].mxu0
  %v7309 = vadd.f32 0.0, %v7308
  %v7310 = vpop.f32.mrb[0].mxu0
  %7311 = vmatprep.mubr.bf16.mxu0 %v6565
  %7312 = vmatmul.mubr.bf16.gmra.mrb[0].mxu0 %v6564
  %v7313 = vpop.f32.mrb[0].mxu0
  %v7314 = vadd.f32 0.0, %v7313
  %v7315 = vpop.f32.mrb[0].mxu0
  %v7316 = vpop.f32.mrb[0].mxu0
  %v7317 = vadd.f32 0.0, %v7316
  %v7318 = vpop.f32.mrb[0].mxu0
  %7319 = vmatprep.mubr.bf16.mxu0 %v6574
  %7320 = vmatmul.mubr.bf16.gmra.mrb[0].mxu0 %v6573
  %v7321 = vpop.f32.mrb[0].mxu0
  %v7322 = vadd.f32 0.0, %v7321
  %v7323 = vpop.f32.mrb[0].mxu0
  %v7324 = vpop.f32.mrb[0].mxu0
  %v7325 = vadd.f32 0.0, %v7324
  %v7326 = vpop.f32.mrb[0].mxu0
  %7327 = vmatprep.mubr.bf16.mxu0 %v6583
  %7328 = vmatmul.mubr.bf16.gmra.mrb[0].mxu0 %v6582
  %v7329 = vpop.f32.mrb[0].mxu0
  %v7330 = vadd.f32 0.0, %v7329
  %v7331 = vpop.f32.mrb[0].mxu0
  %v7332 = vpop.f32.mrb[0].mxu0
  %v7333 = vadd.f32 0.0, %v7332
  %v7334 = vpop.f32.mrb[0].mxu0
  %7335 = vmatprep.mubr.bf16.mxu0 %v6592
  %7336 = vmatmul.mubr.bf16.gmra.mrb[0].mxu0 %v6591
  %v7337 = vpop.f32.mrb[0].mxu0
  %v7338 = vadd.f32 0.0, %v7337
  %v7339 = vpop.f32.mrb[0].mxu0
  %v7340 = vpop.f32.mrb[0].mxu0
  %v7341 = vadd.f32 0.0, %v7340
  %v7342 = vpop.f32.mrb[0].mxu0
  %7343 = vmatprep.mubr.bf16.mxu0 %v6601
  %7344 = vmatmul.mubr.bf16.gmra.mrb[0].mxu0 %v6600
  %v7345 = vpop.f32.mrb[0].mxu0
  %v7346 = vadd.f32 0.0, %v7345
  %v7347 = vpop.f32.mrb[0].mxu0
  %v7348 = vpop.f32.mrb[0].mxu0
  %v7349 = vadd.f32 0.0, %v7348
  %v7350 = vpop.f32.mrb[0].mxu0
  %7351 = vmatprep.mubr.bf16.mxu0 %v6610
  %7352 = vmatmul.mubr.bf16.gmra.mrb[0].mxu0 %v6609
  %v7353 = vpop.f32.mrb[0].mxu0
  %v7354 = vadd.f32 0.0, %v7353
  %v7355 = vpop.f32.mrb[0].mxu0
  %v7356 = vpop.f32.mrb[0].mxu0
  %v7357 = vadd.f32 0.0, %v7356
  %v7358 = vpop.f32.mrb[0].mxu0
  %7359 = vmatprep.mubr.bf16.mxu0 %v6619
  %7360 = vmatmul.mubr.bf16.gmra.mrb[0].mxu0 %v6618
  %v7361 = vpop.f32.mrb[0].mxu0
  %v7362 = vadd.f32 0.0, %v7361
  %v7363 = vpop.f32.mrb[0].mxu0
  %v7364 = vpop.f32.mrb[0].mxu0
  %v7365 = vadd.f32 0.0, %v7364
  %v7366 = vpop.f32.mrb[0].mxu0
  %7367 = vmatprep.mubr.bf16.mxu0 %v6628
  %7368 = vmatmul.mubr.bf16.gmra.mrb[0].mxu0 %v6627
  %v7369 = vpop.f32.mrb[0].mxu0
  %v7370 = vadd.f32 0.0, %v7369
  %v7371 = vpop.f32.mrb[0].mxu0
  %v7372 = vpop.f32.mrb[0].mxu0
  %v7373 = vadd.f32 0.0, %v7372
  %v7374 = vpop.f32.mrb[0].mxu0
  %7375 = vmatprep.mubr.bf16.mxu0 %v6637
  %7376 = vmatmul.mubr.bf16.gmra.mrb[0].mxu0 %v6636
  %v7377 = vpop.f32.mrb[0].mxu0
  %v7378 = vadd.f32 0.0, %v7377
  %v7379 = vpop.f32.mrb[0].mxu0
  %v7380 = vpop.f32.mrb[0].mxu0
  %v7381 = vadd.f32 0.0, %v7380
  %v7382 = vpop.f32.mrb[0].mxu0
  %7383 = vmatprep.mubr.bf16.mxu0 %v6646
  %7384 = vmatmul.mubr.bf16.gmra.mrb[0].mxu0 %v6645
  %v7385 = vpop.f32.mrb[0].mxu0
  %v7386 = vadd.f32 0.0, %v7385
  %v7387 = vpop.f32.mrb[0].mxu0
  %v7388 = vpop.f32.mrb[0].mxu0
  %v7389 = vadd.f32 0.0, %v7388
  %v7390 = vpop.f32.mrb[0].mxu0
  %7391 = vmatprep.mubr.bf16.mxu0 %v6655
  %7392 = vmatmul.mubr.bf16.gmra.mrb[0].mxu0 %v6654
  %v7393 = vpop.f32.mrb[0].mxu0
  %v7394 = vadd.f32 0.0, %v7393
  %v7395 = vpop.f32.mrb[0].mxu0
  %v7396 = vpop.f32.mrb[0].mxu0
  %v7397 = vadd.f32 0.0, %v7396
  %v7398 = vpop.f32.mrb[0].mxu0
  %7399 = vdwg.mxu0
  %7400 = vmatprep.subr.bf16.mxu0 0
  %7401 = vmatpush1.bf16.msra.mxu0 %v7111
  %7402 = vmatprep.subr.bf16.mxu0 0
  %7403 = vmatpush1.bf16.msra.mxu0 %v7112
  %7404 = vmatprep.subr.bf16.mxu0 0
  %7405 = vmatpush1.bf16.msra.mxu0 %v7113
  %7406 = vmatprep.subr.bf16.mxu0 0
  %7407 = vmatpush1.bf16.msra.mxu0 %v7114
  %7408 = vmatprep.subr.bf16.mxu0 0
  %7409 = vmatpush1.bf16.msra.mxu0 %v7115
  %7410 = vmatprep.subr.bf16.mxu0 0
  %7411 = vmatpush1.bf16.msra.mxu0 %v7116
  %7412 = vmatprep.subr.bf16.mxu0 0
  %7413 = vmatpush1.bf16.msra.mxu0 %v7117
  %7414 = vmatprep.subr.bf16.mxu0 0
  %7415 = vmatpush1.bf16.msra.mxu0 %v7118
  %7416 = vmatprep.subr.bf16.mxu0 0
  %7417 = vmatpush1.bf16.msra.mxu0 %v7119
  %7418 = vmatprep.subr.bf16.mxu0 0
  %7419 = vmatpush1.bf16.msra.mxu0 %v7120
  %7420 = vmatprep.subr.bf16.mxu0 0
  %7421 = vmatpush1.bf16.msra.mxu0 %v7121
  %7422 = vmatprep.subr.bf16.mxu0 0
  %7423 = vmatpush1.bf16.msra.mxu0 %v7122
  %7424 = vmatprep.subr.bf16.mxu0 0
  %7425 = vmatpush1.bf16.msra.mxu0 %v7123
  %7426 = vmatprep.subr.bf16.mxu0 0
  %7427 = vmatpush1.bf16.msra.mxu0 %v7124
  %7428 = vmatprep.subr.bf16.mxu0 0
  %7429 = vmatpush1.bf16.msra.mxu0 %v7125
  %7430 = vmatprep.subr.bf16.mxu0 0
  %7431 = vmatpush1.bf16.msra.mxu0 %v7126
  %7432 = vmatprep.mubr.bf16.mxu0 %v6522
  %7433 = vmatmul.mubr.bf16.gmra.mrb[0].mxu0 %v6521
  %v7434 = vpop.f32.mrb[0].mxu0
  %v7435 = vadd.f32 %v7274, %v7434
  %v7436 = vpop.f32.mrb[0].mxu0
  %v7437 = vpop.f32.mrb[0].mxu0
  %v7438 = vadd.f32 %v7277, %v7437
  %v7439 = vpop.f32.mrb[0].mxu0
  %7440 = vmatprep.mubr.bf16.mxu0 %v6531
  %7441 = vmatmul.mubr.bf16.gmra.mrb[0].mxu0 %v6530
  %v7442 = vpop.f32.mrb[0].mxu0
  %v7443 = vadd.f32 %v7282, %v7442
  %v7444 = vpop.f32.mrb[0].mxu0
  %v7445 = vpop.f32.mrb[0].mxu0
  %v7446 = vadd.f32 %v7285, %v7445
  %v7447 = vpop.f32.mrb[0].mxu0
  %7448 = vmatprep.mubr.bf16.mxu0 %v6540
  %7449 = vmatmul.mubr.bf16.gmra.mrb[0].mxu0 %v6539
  %v7450 = vpop.f32.mrb[0].mxu0
  %v7451 = vadd.f32 %v7290, %v7450
  %v7452 = vpop.f32.mrb[0].mxu0
  %v7453 = vpop.f32.mrb[0].mxu0
  %v7454 = vadd.f32 %v7293, %v7453
  %v7455 = vpop.f32.mrb[0].mxu0
  %7456 = vmatprep.mubr.bf16.mxu0 %v6549
  %7457 = vmatmul.mubr.bf16.gmra.mrb[0].mxu0 %v6548
  %v7458 = vpop.f32.mrb[0].mxu0
  %v7459 = vadd.f32 %v7298, %v7458
  %v7460 = vpop.f32.mrb[0].mxu0
  %v7461 = vpop.f32.mrb[0].mxu0
  %v7462 = vadd.f32 %v7301, %v7461
  %v7463 = vpop.f32.mrb[0].mxu0
  %7464 = vmatprep.mubr.bf16.mxu0 %v6558
  %7465 = vmatmul.mubr.bf16.gmra.mrb[0].mxu0 %v6557
  %v7466 = vpop.f32.mrb[0].mxu0
  %v7467 = vadd.f32 %v7306, %v7466
  %v7468 = vpop.f32.mrb[0].mxu0
  %v7469 = vpop.f32.mrb[0].mxu0
  %v7470 = vadd.f32 %v7309, %v7469
  %v7471 = vpop.f32.mrb[0].mxu0
  %7472 = vmatprep.mubr.bf16.mxu0 %v6567
  %7473 = vmatmul.mubr.bf16.gmra.mrb[0].mxu0 %v6566
  %v7474 = vpop.f32.mrb[0].mxu0
  %v7475 = vadd.f32 %v7314, %v7474
  %v7476 = vpop.f32.mrb[0].mxu0
  %v7477 = vpop.f32.mrb[0].mxu0
  %v7478 = vadd.f32 %v7317, %v7477
  %v7479 = vpop.f32.mrb[0].mxu0
  %7480 = vmatprep.mubr.bf16.mxu0 %v6576
  %7481 = vmatmul.mubr.bf16.gmra.mrb[0].mxu0 %v6575
  %v7482 = vpop.f32.mrb[0].mxu0
  %v7483 = vadd.f32 %v7322, %v7482
  %v7484 = vpop.f32.mrb[0].mxu0
  %v7485 = vpop.f32.mrb[0].mxu0
  %v7486 = vadd.f32 %v7325, %v7485
  %v7487 = vpop.f32.mrb[0].mxu0
  %7488 = vmatprep.mubr.bf16.mxu0 %v6585
  %7489 = vmatmul.mubr.bf16.gmra.mrb[0].mxu0 %v6584
  %v7490 = vpop.f32.mrb[0].mxu0
  %v7491 = vadd.f32 %v7330, %v7490
  %v7492 = vpop.f32.mrb[0].mxu0
  %v7493 = vpop.f32.mrb[0].mxu0
  %v7494 = vadd.f32 %v7333, %v7493
  %v7495 = vpop.f32.mrb[0].mxu0
  %7496 = vmatprep.mubr.bf16.mxu0 %v6594
  %7497 = vmatmul.mubr.bf16.gmra.mrb[0].mxu0 %v6593
  %v7498 = vpop.f32.mrb[0].mxu0
  %v7499 = vadd.f32 %v7338, %v7498
  %v7500 = vpop.f32.mrb[0].mxu0
  %v7501 = vpop.f32.mrb[0].mxu0
  %v7502 = vadd.f32 %v7341, %v7501
  %v7503 = vpop.f32.mrb[0].mxu0
  %7504 = vmatprep.mubr.bf16.mxu0 %v6603
  %7505 = vmatmul.mubr.bf16.gmra.mrb[0].mxu0 %v6602
  %v7506 = vpop.f32.mrb[0].mxu0
  %v7507 = vadd.f32 %v7346, %v7506
  %v7508 = vpop.f32.mrb[0].mxu0
  %v7509 = vpop.f32.mrb[0].mxu0
  %v7510 = vadd.f32 %v7349, %v7509
  %v7511 = vpop.f32.mrb[0].mxu0
  %7512 = vmatprep.mubr.bf16.mxu0 %v6612
  %7513 = vmatmul.mubr.bf16.gmra.mrb[0].mxu0 %v6611
  %v7514 = vpop.f32.mrb[0].mxu0
  %v7515 = vadd.f32 %v7354, %v7514
  %v7516 = vpop.f32.mrb[0].mxu0
  %v7517 = vpop.f32.mrb[0].mxu0
  %v7518 = vadd.f32 %v7357, %v7517
  %v7519 = vpop.f32.mrb[0].mxu0
  %7520 = vmatprep.mubr.bf16.mxu0 %v6621
  %7521 = vmatmul.mubr.bf16.gmra.mrb[0].mxu0 %v6620
  %v7522 = vpop.f32.mrb[0].mxu0
  %v7523 = vadd.f32 %v7362, %v7522
  %v7524 = vpop.f32.mrb[0].mxu0
  %v7525 = vpop.f32.mrb[0].mxu0
  %v7526 = vadd.f32 %v7365, %v7525
  %v7527 = vpop.f32.mrb[0].mxu0
  %7528 = vmatprep.mubr.bf16.mxu0 %v6630
  %7529 = vmatmul.mubr.bf16.gmra.mrb[0].mxu0 %v6629
  %v7530 = vpop.f32.mrb[0].mxu0
  %v7531 = vadd.f32 %v7370, %v7530
  %v7532 = vpop.f32.mrb[0].mxu0
  %v7533 = vpop.f32.mrb[0].mxu0
  %v7534 = vadd.f32 %v7373, %v7533
  %v7535 = vpop.f32.mrb[0].mxu0
  %7536 = vmatprep.mubr.bf16.mxu0 %v6639
  %7537 = vmatmul.mubr.bf16.gmra.mrb[0].mxu0 %v6638
  %v7538 = vpop.f32.mrb[0].mxu0
  %v7539 = vadd.f32 %v7378, %v7538
  %v7540 = vpop.f32.mrb[0].mxu0
  %v7541 = vpop.f32.mrb[0].mxu0
  %v7542 = vadd.f32 %v7381, %v7541
  %v7543 = vpop.f32.mrb[0].mxu0
  %7544 = vmatprep.mubr.bf16.mxu0 %v6648
  %7545 = vmatmul.mubr.bf16.gmra.mrb[0].mxu0 %v6647
  %v7546 = vpop.f32.mrb[0].mxu0
  %v7547 = vadd.f32 %v7386, %v7546
  %v7548 = vpop.f32.mrb[0].mxu0
  %v7549 = vpop.f32.mrb[0].mxu0
  %v7550 = vadd.f32 %v7389, %v7549
  %v7551 = vpop.f32.mrb[0].mxu0
  %7552 = vmatprep.mubr.bf16.mxu0 %v6657
  %7553 = vmatmul.mubr.bf16.gmra.mrb[0].mxu0 %v6656
  %v7554 = vpop.f32.mrb[0].mxu0
  %v7555 = vadd.f32 %v7394, %v7554
  %v7556 = vpop.f32.mrb[0].mxu0
  %v7557 = vpop.f32.mrb[0].mxu0
  %v7558 = vadd.f32 %v7397, %v7557
  %v7559 = vpop.f32.mrb[0].mxu0
  %7560 = vdwg.mxu0
  %7561 = vmatprep.subr.bf16.mxu0 0
  %7562 = vmatpush1.bf16.msra.mxu0 %v7127
  %7563 = vmatprep.subr.bf16.mxu0 0
  %7564 = vmatpush1.bf16.msra.mxu0 %v7128
  %7565 = vmatprep.subr.bf16.mxu0 0
  %7566 = vmatpush1.bf16.msra.mxu0 %v7129
  %7567 = vmatprep.subr.bf16.mxu0 0
  %7568 = vmatpush1.bf16.msra.mxu0 %v7130
  %7569 = vmatprep.subr.bf16.mxu0 0
  %7570 = vmatpush1.bf16.msra.mxu0 %v7131
  %7571 = vmatprep.subr.bf16.mxu0 0
  %7572 = vmatpush1.bf16.msra.mxu0 %v7132
  %7573 = vmatprep.subr.bf16.mxu0 0
  %7574 = vmatpush1.bf16.msra.mxu0 %v7133
  %7575 = vmatprep.subr.bf16.mxu0 0
  %7576 = vmatpush1.bf16.msra.mxu0 %v7134
  %7577 = vmatprep.subr.bf16.mxu0 0
  %7578 = vmatpush1.bf16.msra.mxu0 %v7135
  %7579 = vmatprep.subr.bf16.mxu0 0
  %7580 = vmatpush1.bf16.msra.mxu0 %v7136
  %7581 = vmatprep.subr.bf16.mxu0 0
  %7582 = vmatpush1.bf16.msra.mxu0 %v7137
  %7583 = vmatprep.subr.bf16.mxu0 0
  %7584 = vmatpush1.bf16.msra.mxu0 %v7138
  %7585 = vmatprep.subr.bf16.mxu0 0
  %7586 = vmatpush1.bf16.msra.mxu0 %v7139
  %7587 = vmatprep.subr.bf16.mxu0 0
  %7588 = vmatpush1.bf16.msra.mxu0 %v7140
  %7589 = vmatprep.subr.bf16.mxu0 0
  %7590 = vmatpush1.bf16.msra.mxu0 %v7141
  %7591 = vmatprep.subr.bf16.mxu0 0
  %7592 = vmatpush1.bf16.msra.mxu0 %v7142
  %7593 = vmatprep.mubr.bf16.mxu0 %v6524
  %7594 = vmatmul.mubr.bf16.gmra.mrb[0].mxu0 %v6523
  %v7595 = vpop.f32.mrb[0].mxu0
  %v7596 = vadd.f32 %v7435, %v7595
  %v7597 = vpop.f32.mrb[0].mxu0
  %v7598 = vpop.f32.mrb[0].mxu0
  %v7599 = vadd.f32 %v7438, %v7598
  %v7600 = vpop.f32.mrb[0].mxu0
  %7601 = vmatprep.mubr.bf16.mxu0 %v6533
  %7602 = vmatmul.mubr.bf16.gmra.mrb[0].mxu0 %v6532
  %v7603 = vpop.f32.mrb[0].mxu0
  %v7604 = vadd.f32 %v7443, %v7603
  %v7605 = vpop.f32.mrb[0].mxu0
  %v7606 = vpop.f32.mrb[0].mxu0
  %v7607 = vadd.f32 %v7446, %v7606
  %v7608 = vpop.f32.mrb[0].mxu0
  %7609 = vmatprep.mubr.bf16.mxu0 %v6542
  %7610 = vmatmul.mubr.bf16.gmra.mrb[0].mxu0 %v6541
  %v7611 = vpop.f32.mrb[0].mxu0
  %v7612 = vadd.f32 %v7451, %v7611
  %v7613 = vpop.f32.mrb[0].mxu0
  %v7614 = vpop.f32.mrb[0].mxu0
  %v7615 = vadd.f32 %v7454, %v7614
  %v7616 = vpop.f32.mrb[0].mxu0
  %7617 = vmatprep.mubr.bf16.mxu0 %v6551
  %7618 = vmatmul.mubr.bf16.gmra.mrb[0].mxu0 %v6550
  %v7619 = vpop.f32.mrb[0].mxu0
  %v7620 = vadd.f32 %v7459, %v7619
  %v7621 = vpop.f32.mrb[0].mxu0
  %v7622 = vpop.f32.mrb[0].mxu0
  %v7623 = vadd.f32 %v7462, %v7622
  %v7624 = vpop.f32.mrb[0].mxu0
  %7625 = vmatprep.mubr.bf16.mxu0 %v6560
  %7626 = vmatmul.mubr.bf16.gmra.mrb[0].mxu0 %v6559
  %v7627 = vpop.f32.mrb[0].mxu0
  %v7628 = vadd.f32 %v7467, %v7627
  %v7629 = vpop.f32.mrb[0].mxu0
  %v7630 = vpop.f32.mrb[0].mxu0
  %v7631 = vadd.f32 %v7470, %v7630
  %v7632 = vpop.f32.mrb[0].mxu0
  %7633 = vmatprep.mubr.bf16.mxu0 %v6569
  %7634 = vmatmul.mubr.bf16.gmra.mrb[0].mxu0 %v6568
  %v7635 = vpop.f32.mrb[0].mxu0
  %v7636 = vadd.f32 %v7475, %v7635
  %v7637 = vpop.f32.mrb[0].mxu0
  %v7638 = vpop.f32.mrb[0].mxu0
  %v7639 = vadd.f32 %v7478, %v7638
  %v7640 = vpop.f32.mrb[0].mxu0
  %7641 = vmatprep.mubr.bf16.mxu0 %v6578
  %7642 = vmatmul.mubr.bf16.gmra.mrb[0].mxu0 %v6577
  %v7643 = vpop.f32.mrb[0].mxu0
  %v7644 = vadd.f32 %v7483, %v7643
  %v7645 = vpop.f32.mrb[0].mxu0
  %v7646 = vpop.f32.mrb[0].mxu0
  %v7647 = vadd.f32 %v7486, %v7646
  %v7648 = vpop.f32.mrb[0].mxu0
  %7649 = vmatprep.mubr.bf16.mxu0 %v6587
  %7650 = vmatmul.mubr.bf16.gmra.mrb[0].mxu0 %v6586
  %v7651 = vpop.f32.mrb[0].mxu0
  %v7652 = vadd.f32 %v7491, %v7651
  %v7653 = vpop.f32.mrb[0].mxu0
  %v7654 = vpop.f32.mrb[0].mxu0
  %v7655 = vadd.f32 %v7494, %v7654
  %v7656 = vpop.f32.mrb[0].mxu0
  %7657 = vmatprep.mubr.bf16.mxu0 %v6596
  %7658 = vmatmul.mubr.bf16.gmra.mrb[0].mxu0 %v6595
  %v7659 = vpop.f32.mrb[0].mxu0
  %v7660 = vadd.f32 %v7499, %v7659
  %v7661 = vpop.f32.mrb[0].mxu0
  %v7662 = vpop.f32.mrb[0].mxu0
  %v7663 = vadd.f32 %v7502, %v7662
  %v7664 = vpop.f32.mrb[0].mxu0
  %7665 = vmatprep.mubr.bf16.mxu0 %v6605
  %7666 = vmatmul.mubr.bf16.gmra.mrb[0].mxu0 %v6604
  %v7667 = vpop.f32.mrb[0].mxu0
  %v7668 = vadd.f32 %v7507, %v7667
  %v7669 = vpop.f32.mrb[0].mxu0
  %v7670 = vpop.f32.mrb[0].mxu0
  %v7671 = vadd.f32 %v7510, %v7670
  %v7672 = vpop.f32.mrb[0].mxu0
  %7673 = vmatprep.mubr.bf16.mxu0 %v6614
  %7674 = vmatmul.mubr.bf16.gmra.mrb[0].mxu0 %v6613
  %v7675 = vpop.f32.mrb[0].mxu0
  %v7676 = vadd.f32 %v7515, %v7675
  %v7677 = vpop.f32.mrb[0].mxu0
  %v7678 = vpop.f32.mrb[0].mxu0
  %v7679 = vadd.f32 %v7518, %v7678
  %v7680 = vpop.f32.mrb[0].mxu0
  %7681 = vmatprep.mubr.bf16.mxu0 %v6623
  %7682 = vmatmul.mubr.bf16.gmra.mrb[0].mxu0 %v6622
  %v7683 = vpop.f32.mrb[0].mxu0
  %v7684 = vadd.f32 %v7523, %v7683
  %v7685 = vpop.f32.mrb[0].mxu0
  %v7686 = vpop.f32.mrb[0].mxu0
  %v7687 = vadd.f32 %v7526, %v7686
  %v7688 = vpop.f32.mrb[0].mxu0
  %7689 = vmatprep.mubr.bf16.mxu0 %v6632
  %7690 = vmatmul.mubr.bf16.gmra.mrb[0].mxu0 %v6631
  %v7691 = vpop.f32.mrb[0].mxu0
  %v7692 = vadd.f32 %v7531, %v7691
  %v7693 = vpop.f32.mrb[0].mxu0
  %v7694 = vpop.f32.mrb[0].mxu0
  %v7695 = vadd.f32 %v7534, %v7694
  %v7696 = vpop.f32.mrb[0].mxu0
  %7697 = vmatprep.mubr.bf16.mxu0 %v6641
  %7698 = vmatmul.mubr.bf16.gmra.mrb[0].mxu0 %v6640
  %v7699 = vpop.f32.mrb[0].mxu0
  %v7700 = vadd.f32 %v7539, %v7699
  %v7701 = vpop.f32.mrb[0].mxu0
  %v7702 = vpop.f32.mrb[0].mxu0
  %v7703 = vadd.f32 %v7542, %v7702
  %v7704 = vpop.f32.mrb[0].mxu0
  %7705 = vmatprep.mubr.bf16.mxu0 %v6650
  %7706 = vmatmul.mubr.bf16.gmra.mrb[0].mxu0 %v6649
  %v7707 = vpop.f32.mrb[0].mxu0
  %v7708 = vadd.f32 %v7547, %v7707
  %v7709 = vpop.f32.mrb[0].mxu0
  %v7710 = vpop.f32.mrb[0].mxu0
  %v7711 = vadd.f32 %v7550, %v7710
  %v7712 = vpop.f32.mrb[0].mxu0
  %7713 = vmatprep.mubr.bf16.mxu0 %v6659
  %7714 = vmatmul.mubr.bf16.gmra.mrb[0].mxu0 %v6658
  %v7715 = vpop.f32.mrb[0].mxu0
  %v7716 = vadd.f32 %v7555, %v7715
  %v7717 = vpop.f32.mrb[0].mxu0
  %v7718 = vpop.f32.mrb[0].mxu0
  %v7719 = vadd.f32 %v7558, %v7718
  %v7720 = vpop.f32.mrb[0].mxu0
  %7721 = vdwg.mxu0
  %7722 = vmatprep.subr.bf16.mxu0 0
  %7723 = vmatpush1.bf16.msra.mxu0 %v7143
  %7724 = vmatprep.subr.bf16.mxu0 0
  %7725 = vmatpush1.bf16.msra.mxu0 %v7144
  %7726 = vmatprep.subr.bf16.mxu0 0
  %7727 = vmatpush1.bf16.msra.mxu0 %v7145
  %7728 = vmatprep.subr.bf16.mxu0 0
  %7729 = vmatpush1.bf16.msra.mxu0 %v7146
  %7730 = vmatprep.subr.bf16.mxu0 0
  %7731 = vmatpush1.bf16.msra.mxu0 %v7147
  %7732 = vmatprep.subr.bf16.mxu0 0
  %7733 = vmatpush1.bf16.msra.mxu0 %v7148
  %7734 = vmatprep.subr.bf16.mxu0 0
  %7735 = vmatpush1.bf16.msra.mxu0 %v7149
  %7736 = vmatprep.subr.bf16.mxu0 0
  %7737 = vmatpush1.bf16.msra.mxu0 %v7150
  %7738 = vmatprep.subr.bf16.mxu0 0
  %7739 = vmatpush1.bf16.msra.mxu0 %v7151
  %7740 = vmatprep.subr.bf16.mxu0 0
  %7741 = vmatpush1.bf16.msra.mxu0 %v7152
  %7742 = vmatprep.subr.bf16.mxu0 0
  %7743 = vmatpush1.bf16.msra.mxu0 %v7153
  %7744 = vmatprep.subr.bf16.mxu0 0
  %7745 = vmatpush1.bf16.msra.mxu0 %v7154
  %7746 = vmatprep.subr.bf16.mxu0 0
  %7747 = vmatpush1.bf16.msra.mxu0 %v7155
  %7748 = vmatprep.subr.bf16.mxu0 0
  %7749 = vmatpush1.bf16.msra.mxu0 %v7156
  %7750 = vmatprep.subr.bf16.mxu0 0
  %7751 = vmatpush1.bf16.msra.mxu0 %v7157
  %7752 = vmatprep.subr.bf16.mxu0 0
  %7753 = vmatpush1.bf16.msra.mxu0 %v7158
  %7754 = vmatprep.mubr.bf16.mxu0 %v6526
  %7755 = vmatmul.mubr.bf16.gmra.mrb[0].mxu0 %v6525
  %v7756 = vpop.f32.mrb[0].mxu0
  %v7757 = vadd.f32 %v7596, %v7756
  %v7758 = vpop.f32.mrb[0].mxu0
  %v7759 = vpop.f32.mrb[0].mxu0
  %v7760 = vadd.f32 %v7599, %v7759
  %v7761 = vpop.f32.mrb[0].mxu0
  %7762 = vmatprep.mubr.bf16.mxu0 %v6535
  %7763 = vmatmul.mubr.bf16.gmra.mrb[0].mxu0 %v6534
  %v7764 = vpop.f32.mrb[0].mxu0
  %v7765 = vadd.f32 %v7604, %v7764
  %v7766 = vpop.f32.mrb[0].mxu0
  %v7767 = vpop.f32.mrb[0].mxu0
  %v7768 = vadd.f32 %v7607, %v7767
  %v7769 = vpop.f32.mrb[0].mxu0
  %7770 = vmatprep.mubr.bf16.mxu0 %v6544
  %7771 = vmatmul.mubr.bf16.gmra.mrb[0].mxu0 %v6543
  %v7772 = vpop.f32.mrb[0].mxu0
  %v7773 = vadd.f32 %v7612, %v7772
  %v7774 = vpop.f32.mrb[0].mxu0
  %v7775 = vpop.f32.mrb[0].mxu0
  %v7776 = vadd.f32 %v7615, %v7775
  %v7777 = vpop.f32.mrb[0].mxu0
  %7778 = vmatprep.mubr.bf16.mxu0 %v6553
  %7779 = vmatmul.mubr.bf16.gmra.mrb[0].mxu0 %v6552
  %v7780 = vpop.f32.mrb[0].mxu0
  %v7781 = vadd.f32 %v7620, %v7780
  %v7782 = vpop.f32.mrb[0].mxu0
  %v7783 = vpop.f32.mrb[0].mxu0
  %v7784 = vadd.f32 %v7623, %v7783
  %v7785 = vpop.f32.mrb[0].mxu0
  %7786 = vmatprep.mubr.bf16.mxu0 %v6562
  %7787 = vmatmul.mubr.bf16.gmra.mrb[0].mxu0 %v6561
  %v7788 = vpop.f32.mrb[0].mxu0
  %v7789 = vadd.f32 %v7628, %v7788
  %v7790 = vpop.f32.mrb[0].mxu0
  %v7791 = vpop.f32.mrb[0].mxu0
  %v7792 = vadd.f32 %v7631, %v7791
  %v7793 = vpop.f32.mrb[0].mxu0
  %7794 = vmatprep.mubr.bf16.mxu0 %v6571
  %7795 = vmatmul.mubr.bf16.gmra.mrb[0].mxu0 %v6570
  %v7796 = vpop.f32.mrb[0].mxu0
  %v7797 = vadd.f32 %v7636, %v7796
  %v7798 = vpop.f32.mrb[0].mxu0
  %v7799 = vpop.f32.mrb[0].mxu0
  %v7800 = vadd.f32 %v7639, %v7799
  %v7801 = vpop.f32.mrb[0].mxu0
  %7802 = vmatprep.mubr.bf16.mxu0 %v6580
  %7803 = vmatmul.mubr.bf16.gmra.mrb[0].mxu0 %v6579
  %v7804 = vpop.f32.mrb[0].mxu0
  %v7805 = vadd.f32 %v7644, %v7804
  %v7806 = vpop.f32.mrb[0].mxu0
  %v7807 = vpop.f32.mrb[0].mxu0
  %v7808 = vadd.f32 %v7647, %v7807
  %v7809 = vpop.f32.mrb[0].mxu0
  %7810 = vmatprep.mubr.bf16.mxu0 %v6589
  %7811 = vmatmul.mubr.bf16.gmra.mrb[0].mxu0 %v6588
  %v7812 = vpop.f32.mrb[0].mxu0
  %v7813 = vadd.f32 %v7652, %v7812
  %v7814 = vpop.f32.mrb[0].mxu0
  %v7815 = vpop.f32.mrb[0].mxu0
  %v7816 = vadd.f32 %v7655, %v7815
  %v7817 = vpop.f32.mrb[0].mxu0
  %7818 = vmatprep.mubr.bf16.mxu0 %v6598
  %7819 = vmatmul.mubr.bf16.gmra.mrb[0].mxu0 %v6597
  %v7820 = vpop.f32.mrb[0].mxu0
  %v7821 = vadd.f32 %v7660, %v7820
  %v7822 = vpop.f32.mrb[0].mxu0
  %v7823 = vpop.f32.mrb[0].mxu0
  %v7824 = vadd.f32 %v7663, %v7823
  %v7825 = vpop.f32.mrb[0].mxu0
  %7826 = vmatprep.mubr.bf16.mxu0 %v6607
  %7827 = vmatmul.mubr.bf16.gmra.mrb[0].mxu0 %v6606
  %v7828 = vpop.f32.mrb[0].mxu0
  %v7829 = vadd.f32 %v7668, %v7828
  %v7830 = vpop.f32.mrb[0].mxu0
  %v7831 = vpop.f32.mrb[0].mxu0
  %v7832 = vadd.f32 %v7671, %v7831
  %v7833 = vpop.f32.mrb[0].mxu0
  %7834 = vmatprep.mubr.bf16.mxu0 %v6616
  %7835 = vmatmul.mubr.bf16.gmra.mrb[0].mxu0 %v6615
  %v7836 = vpop.f32.mrb[0].mxu0
  %v7837 = vadd.f32 %v7676, %v7836
  %v7838 = vpop.f32.mrb[0].mxu0
  %v7839 = vpop.f32.mrb[0].mxu0
  %v7840 = vadd.f32 %v7679, %v7839
  %v7841 = vpop.f32.mrb[0].mxu0
  %7842 = vmatprep.mubr.bf16.mxu0 %v6625
  %7843 = vmatmul.mubr.bf16.gmra.mrb[0].mxu0 %v6624
  %v7844 = vpop.f32.mrb[0].mxu0
  %v7845 = vadd.f32 %v7684, %v7844
  %v7846 = vpop.f32.mrb[0].mxu0
  %v7847 = vpop.f32.mrb[0].mxu0
  %v7848 = vadd.f32 %v7687, %v7847
  %v7849 = vpop.f32.mrb[0].mxu0
  %7850 = vmatprep.mubr.bf16.mxu0 %v6634
  %7851 = vmatmul.mubr.bf16.gmra.mrb[0].mxu0 %v6633
  %v7852 = vpop.f32.mrb[0].mxu0
  %v7853 = vadd.f32 %v7692, %v7852
  %v7854 = vpop.f32.mrb[0].mxu0
  %v7855 = vpop.f32.mrb[0].mxu0
  %v7856 = vadd.f32 %v7695, %v7855
  %v7857 = vpop.f32.mrb[0].mxu0
  %7858 = vmatprep.mubr.bf16.mxu0 %v6643
  %7859 = vmatmul.mubr.bf16.gmra.mrb[0].mxu0 %v6642
  %v7860 = vpop.f32.mrb[0].mxu0
  %v7861 = vadd.f32 %v7700, %v7860
  %v7862 = vpop.f32.mrb[0].mxu0
  %v7863 = vpop.f32.mrb[0].mxu0
  %v7864 = vadd.f32 %v7703, %v7863
  %v7865 = vpop.f32.mrb[0].mxu0
  %7866 = vmatprep.mubr.bf16.mxu0 %v6652
  %7867 = vmatmul.mubr.bf16.gmra.mrb[0].mxu0 %v6651
  %v7868 = vpop.f32.mrb[0].mxu0
  %v7869 = vadd.f32 %v7708, %v7868
  %v7870 = vpop.f32.mrb[0].mxu0
  %v7871 = vpop.f32.mrb[0].mxu0
  %v7872 = vadd.f32 %v7711, %v7871
  %v7873 = vpop.f32.mrb[0].mxu0
  %7874 = vmatprep.mubr.bf16.mxu0 %v6661
  %7875 = vmatmul.mubr.bf16.gmra.mrb[0].mxu0 %v6660
  %v7876 = vpop.f32.mrb[0].mxu0
  %v7877 = vadd.f32 %v7716, %v7876
  %v7878 = vpop.f32.mrb[0].mxu0
  %v7879 = vpop.f32.mrb[0].mxu0
  %v7880 = vadd.f32 %v7719, %v7879
  %v7881 = vpop.f32.mrb[0].mxu0
  %7882 = vdwg.mxu0
  %7883 = vmatprep.subr.bf16.mxu0 0
  %7884 = vmatpush1.bf16.msra.mxu0 %v7159
  %7885 = vmatprep.subr.bf16.mxu0 0
  %7886 = vmatpush1.bf16.msra.mxu0 %v7160
  %7887 = vmatprep.subr.bf16.mxu0 0
  %7888 = vmatpush1.bf16.msra.mxu0 %v7161
  %7889 = vmatprep.subr.bf16.mxu0 0
  %7890 = vmatpush1.bf16.msra.mxu0 %v7162
  %7891 = vmatprep.subr.bf16.mxu0 0
  %7892 = vmatpush1.bf16.msra.mxu0 %v7163
  %7893 = vmatprep.subr.bf16.mxu0 0
  %7894 = vmatpush1.bf16.msra.mxu0 %v7164
  %7895 = vmatprep.subr.bf16.mxu0 0
  %7896 = vmatpush1.bf16.msra.mxu0 %v7165
  %7897 = vmatprep.subr.bf16.mxu0 0
  %7898 = vmatpush1.bf16.msra.mxu0 %v7166
  %7899 = vmatprep.subr.bf16.mxu0 0
  %7900 = vmatpush1.bf16.msra.mxu0 0
  %7901 = vmatprep.subr.bf16.mxu0 0
  %7902 = vmatpush1.bf16.msra.mxu0 0
  %7903 = vmatprep.subr.bf16.mxu0 0
  %7904 = vmatpush1.bf16.msra.mxu0 0
  %7905 = vmatprep.subr.bf16.mxu0 0
  %7906 = vmatpush1.bf16.msra.mxu0 0
  %7907 = vmatprep.subr.bf16.mxu0 0
  %7908 = vmatpush1.bf16.msra.mxu0 0
  %7909 = vmatprep.subr.bf16.mxu0 0
  %7910 = vmatpush1.bf16.msra.mxu0 0
  %7911 = vmatprep.subr.bf16.mxu0 0
  %7912 = vmatpush1.bf16.msra.mxu0 0
  %7913 = vmatprep.subr.bf16.mxu0 0
  %7914 = vmatpush1.bf16.msra.mxu0 0
  %7915 = vmatprep.mubr.bf16.mxu0 0
  %7916 = vmatmul.mubr.bf16.gmra.mrb[0].mxu0 %v6527
  %v7917 = vpop.f32.mrb[0].mxu0
  %v7918 = vadd.f32 %v7757, %v7917
  %v7919 = vpop.f32.mrb[0].mxu0
  %v7920 = vpop.f32.mrb[0].mxu0
  %v7921 = vadd.f32 %v7760, %v7920
  %v7922 = vpop.f32.mrb[0].mxu0
  %7923 = vmatprep.mubr.bf16.mxu0 0
  %7924 = vmatmul.mubr.bf16.gmra.mrb[0].mxu0 %v6536
  %v7925 = vpop.f32.mrb[0].mxu0
  %v7926 = vadd.f32 %v7765, %v7925
  %v7927 = vpop.f32.mrb[0].mxu0
  %v7928 = vpop.f32.mrb[0].mxu0
  %v7929 = vadd.f32 %v7768, %v7928
  %v7930 = vpop.f32.mrb[0].mxu0
  %7931 = vmatprep.mubr.bf16.mxu0 0
  %7932 = vmatmul.mubr.bf16.gmra.mrb[0].mxu0 %v6545
  %v7933 = vpop.f32.mrb[0].mxu0
  %v7934 = vadd.f32 %v7773, %v7933
  %v7935 = vpop.f32.mrb[0].mxu0
  %v7936 = vpop.f32.mrb[0].mxu0
  %v7937 = vadd.f32 %v7776, %v7936
  %v7938 = vpop.f32.mrb[0].mxu0
  %7939 = vmatprep.mubr.bf16.mxu0 0
  %7940 = vmatmul.mubr.bf16.gmra.mrb[0].mxu0 %v6554
  %v7941 = vpop.f32.mrb[0].mxu0
  %v7942 = vadd.f32 %v7781, %v7941
  %v7943 = vpop.f32.mrb[0].mxu0
  %v7944 = vpop.f32.mrb[0].mxu0
  %v7945 = vadd.f32 %v7784, %v7944
  %v7946 = vpop.f32.mrb[0].mxu0
  %7947 = vmatprep.mubr.bf16.mxu0 0
  %7948 = vmatmul.mubr.bf16.gmra.mrb[0].mxu0 %v6563
  %v7949 = vpop.f32.mrb[0].mxu0
  %v7950 = vadd.f32 %v7789, %v7949
  %v7951 = vpop.f32.mrb[0].mxu0
  %v7952 = vpop.f32.mrb[0].mxu0
  %v7953 = vadd.f32 %v7792, %v7952
  %v7954 = vpop.f32.mrb[0].mxu0
  %7955 = vmatprep.mubr.bf16.mxu0 0
  %7956 = vmatmul.mubr.bf16.gmra.mrb[0].mxu0 %v6572
  %v7957 = vpop.f32.mrb[0].mxu0
  %v7958 = vadd.f32 %v7797, %v7957
  %v7959 = vpop.f32.mrb[0].mxu0
  %v7960 = vpop.f32.mrb[0].mxu0
  %v7961 = vadd.f32 %v7800, %v7960
  %v7962 = vpop.f32.mrb[0].mxu0
  %7963 = vmatprep.mubr.bf16.mxu0 0
  %7964 = vmatmul.mubr.bf16.gmra.mrb[0].mxu0 %v6581
  %v7965 = vpop.f32.mrb[0].mxu0
  %v7966 = vadd.f32 %v7805, %v7965
  %v7967 = vpop.f32.mrb[0].mxu0
  %v7968 = vpop.f32.mrb[0].mxu0
  %v7969 = vadd.f32 %v7808, %v7968
  %v7970 = vpop.f32.mrb[0].mxu0
  %7971 = vmatprep.mubr.bf16.mxu0 0
  %7972 = vmatmul.mubr.bf16.gmra.mrb[0].mxu0 %v6590
  %v7973 = vpop.f32.mrb[0].mxu0
  %v7974 = vadd.f32 %v7813, %v7973
  %v7975 = vpop.f32.mrb[0].mxu0
  %v7976 = vpop.f32.mrb[0].mxu0
  %v7977 = vadd.f32 %v7816, %v7976
  %v7978 = vpop.f32.mrb[0].mxu0
  %7979 = vmatprep.mubr.bf16.mxu0 0
  %7980 = vmatmul.mubr.bf16.gmra.mrb[0].mxu0 %v6599
  %v7981 = vpop.f32.mrb[0].mxu0
  %v7982 = vadd.f32 %v7821, %v7981
  %v7983 = vpop.f32.mrb[0].mxu0
  %v7984 = vpop.f32.mrb[0].mxu0
  %v7985 = vadd.f32 %v7824, %v7984
  %v7986 = vpop.f32.mrb[0].mxu0
  %7987 = vmatprep.mubr.bf16.mxu0 0
  %7988 = vmatmul.mubr.bf16.gmra.mrb[0].mxu0 %v6608
  %v7989 = vpop.f32.mrb[0].mxu0
  %v7990 = vadd.f32 %v7829, %v7989
  %v7991 = vpop.f32.mrb[0].mxu0
  %v7992 = vpop.f32.mrb[0].mxu0
  %v7993 = vadd.f32 %v7832, %v7992
  %v7994 = vpop.f32.mrb[0].mxu0
  %7995 = vmatprep.mubr.bf16.mxu0 0
  %7996 = vmatmul.mubr.bf16.gmra.mrb[0].mxu0 %v6617
  %v7997 = vpop.f32.mrb[0].mxu0
  %v7998 = vadd.f32 %v7837, %v7997
  %v7999 = vpop.f32.mrb[0].mxu0
  %v8000 = vpop.f32.mrb[0].mxu0
  %v8001 = vadd.f32 %v7840, %v8000
  %v8002 = vpop.f32.mrb[0].mxu0
  %8003 = vmatprep.mubr.bf16.mxu0 0
  %8004 = vmatmul.mubr.bf16.gmra.mrb[0].mxu0 %v6626
  %v8005 = vpop.f32.mrb[0].mxu0
  %v8006 = vadd.f32 %v7845, %v8005
  %v8007 = vpop.f32.mrb[0].mxu0
  %v8008 = vpop.f32.mrb[0].mxu0
  %v8009 = vadd.f32 %v7848, %v8008
  %v8010 = vpop.f32.mrb[0].mxu0
  %8011 = vmatprep.mubr.bf16.mxu0 0
  %8012 = vmatmul.mubr.bf16.gmra.mrb[0].mxu0 %v6635
  %v8013 = vpop.f32.mrb[0].mxu0
  %v8014 = vadd.f32 %v7853, %v8013
  %v8015 = vpop.f32.mrb[0].mxu0
  %v8016 = vpop.f32.mrb[0].mxu0
  %v8017 = vadd.f32 %v7856, %v8016
  %v8018 = vpop.f32.mrb[0].mxu0
  %8019 = vmatprep.mubr.bf16.mxu0 0
  %8020 = vmatmul.mubr.bf16.gmra.mrb[0].mxu0 %v6644
  %v8021 = vpop.f32.mrb[0].mxu0
  %v8022 = vadd.f32 %v7861, %v8021
  %v8023 = vpop.f32.mrb[0].mxu0
  %v8024 = vpop.f32.mrb[0].mxu0
  %v8025 = vadd.f32 %v7864, %v8024
  %v8026 = vpop.f32.mrb[0].mxu0
  %8027 = vmatprep.mubr.bf16.mxu0 0
  %8028 = vmatmul.mubr.bf16.gmra.mrb[0].mxu0 %v6653
  %v8029 = vpop.f32.mrb[0].mxu0
  %v8030 = vadd.f32 %v7869, %v8029
  %v8031 = vpop.f32.mrb[0].mxu0
  %v8032 = vpop.f32.mrb[0].mxu0
  %v8033 = vadd.f32 %v7872, %v8032
  %v8034 = vpop.f32.mrb[0].mxu0
  %8035 = vmatprep.mubr.bf16.mxu0 0
  %8036 = vmatmul.mubr.bf16.gmra.mrb[0].mxu0 %v6662
  %v8037 = vpop.f32.mrb[0].mxu0
  %v8038 = vadd.f32 %v7877, %v8037
  %v8039 = vpop.f32.mrb[0].mxu0
  %v8040 = vpop.f32.mrb[0].mxu0
  %v8041 = vadd.f32 %v7880, %v8040
  %v8042 = vpop.f32.mrb[0].mxu0
  %8043 = vdwg.mxu0
  %v8044 = vpack.c.b16 %v6282, %v6279
  %v8045 = vpack.c.b16 %v6283, %v6280
  %v8046 = vpack.c.b16 %v6284, %v6281
  %v8047 = vpack.c.b16 %v6288, %v6285
  %v8048 = vpack.c.b16 %v6289, %v6286
  %v8049 = vpack.c.b16 %v6290, %v6287
  %v8050 = vpack.c.b16 %v6294, %v6291
  %v8051 = vpack.c.b16 %v6295, %v6292
  %v8052 = vpack.c.b16 %v6296, %v6293
  %v8053 = vpack.c.b16 %v6300, %v6297
  %v8054 = vpack.c.b16 %v6301, %v6298
  %v8055 = vpack.c.b16 %v6302, %v6299
  %v8056 = vpack.c.b16 %v6306, %v6303
  %v8057 = vpack.c.b16 %v6307, %v6304
  %v8058 = vpack.c.b16 %v6308, %v6305
  %v8059 = vpack.c.b16 %v6312, %v6309
  %v8060 = vpack.c.b16 %v6313, %v6310
  %v8061 = vpack.c.b16 %v6314, %v6311
  %v8062 = vpack.c.b16 %v6318, %v6315
  %v8063 = vpack.c.b16 %v6319, %v6316
  %v8064 = vpack.c.b16 %v6320, %v6317
  %v8065 = vpack.c.b16 %v6324, %v6321
  %v8066 = vpack.c.b16 %v6325, %v6322
  %v8067 = vpack.c.b16 %v6326, %v6323
  %v8068 = vpack.c.b16 %v6330, %v6327
  %v8069 = vpack.c.b16 %v6331, %v6328
  %v8070 = vpack.c.b16 %v6332, %v6329
  %v8071 = vpack.c.b16 %v6336, %v6333
  %v8072 = vpack.c.b16 %v6337, %v6334
  %v8073 = vpack.c.b16 %v6338, %v6335
  %v8074 = vpack.c.b16 %v6342, %v6339
  %v8075 = vpack.c.b16 %v6343, %v6340
  %v8076 = vpack.c.b16 %v6344, %v6341
  %v8077 = vpack.c.b16 %v6348, %v6345
  %v8078 = vpack.c.b16 %v6349, %v6346
  %v8079 = vpack.c.b16 %v6350, %v6347
  %v8080 = vpack.c.b16 %v6354, %v6351
  %v8081 = vpack.c.b16 %v6355, %v6352
  %v8082 = vpack.c.b16 %v6356, %v6353
  %v8083 = vpack.c.b16 %v6360, %v6357
  %v8084 = vpack.c.b16 %v6361, %v6358
  %v8085 = vpack.c.b16 %v6362, %v6359
  %v8086 = vpack.c.b16 %v6366, %v6363
  %v8087 = vpack.c.b16 %v6367, %v6364
  %v8088 = vpack.c.b16 %v6368, %v6365
  %v8089 = vpack.c.b16 %v6372, %v6369
  %v8090 = vpack.c.b16 %v6373, %v6370
  %v8091 = vpack.c.b16 %v6374, %v6371
  %8140 = vmatprep.subr.bf16.mxu0 0
  %8141 = vmatpush1.bf16.msra.mxu0 %v7095
  %8142 = vmatprep.subr.bf16.mxu0 0
  %8143 = vmatpush1.bf16.msra.mxu0 %v7096
  %8144 = vmatprep.subr.bf16.mxu0 0
  %8145 = vmatpush1.bf16.msra.mxu0 %v7097
  %8146 = vmatprep.subr.bf16.mxu0 0
  %8147 = vmatpush1.bf16.msra.mxu0 %v7098
  %8148 = vmatprep.subr.bf16.mxu0 0
  %8149 = vmatpush1.bf16.msra.mxu0 %v7099
  %8150 = vmatprep.subr.bf16.mxu0 0
  %8151 = vmatpush1.bf16.msra.mxu0 %v7100
  %8152 = vmatprep.subr.bf16.mxu0 0
  %8153 = vmatpush1.bf16.msra.mxu0 %v7101
  %8154 = vmatprep.subr.bf16.mxu0 0
  %8155 = vmatpush1.bf16.msra.mxu0 %v7102
  %8156 = vmatprep.subr.bf16.mxu0 0
  %8157 = vmatpush1.bf16.msra.mxu0 %v7103
  %8158 = vmatprep.subr.bf16.mxu0 0
  %8159 = vmatpush1.bf16.msra.mxu0 %v7104
  %8160 = vmatprep.subr.bf16.mxu0 0
  %8161 = vmatpush1.bf16.msra.mxu0 %v7105
  %8162 = vmatprep.subr.bf16.mxu0 0
  %8163 = vmatpush1.bf16.msra.mxu0 %v7106
  %8164 = vmatprep.subr.bf16.mxu0 0
  %8165 = vmatpush1.bf16.msra.mxu0 %v7107
  %8166 = vmatprep.subr.bf16.mxu0 0
  %8167 = vmatpush1.bf16.msra.mxu0 %v7108
  %8168 = vmatprep.subr.bf16.mxu0 0
  %8169 = vmatpush1.bf16.msra.mxu0 %v7109
  %8170 = vmatprep.subr.bf16.mxu0 0
  %8171 = vmatpush1.bf16.msra.mxu0 %v7110
  %8172 = vmatprep.mubr.bf16.mxu0 %v6521
  %8173 = vmatmul.mubr.bf16.gmra.mrb[0].mxu0 %v6520
  %v8174 = vpop.f32.mrb[0].mxu0
  %v8175 = vadd.f32 0.0, %v8174
  %v8176 = vpop.f32.mrb[0].mxu0
  %v8177 = vpop.f32.mrb[0].mxu0
  %v8178 = vadd.f32 0.0, %v8177
  %v8179 = vpop.f32.mrb[0].mxu0
  %8180 = vmatprep.mubr.bf16.mxu0 %v6530
  %8181 = vmatmul.mubr.bf16.gmra.mrb[0].mxu0 %v6529
  %v8182 = vpop.f32.mrb[0].mxu0
  %v8183 = vadd.f32 0.0, %v8182
  %v8184 = vpop.f32.mrb[0].mxu0
  %v8185 = vpop.f32.mrb[0].mxu0
  %v8186 = vadd.f32 0.0, %v8185
  %v8187 = vpop.f32.mrb[0].mxu0
  %8188 = vmatprep.mubr.bf16.mxu0 %v6539
  %8189 = vmatmul.mubr.bf16.gmra.mrb[0].mxu0 %v6538
  %v8190 = vpop.f32.mrb[0].mxu0
  %v8191 = vadd.f32 0.0, %v8190
  %v8192 = vpop.f32.mrb[0].mxu0
  %v8193 = vpop.f32.mrb[0].mxu0
  %v8194 = vadd.f32 0.0, %v8193
  %v8195 = vpop.f32.mrb[0].mxu0
  %8196 = vmatprep.mubr.bf16.mxu0 %v6548
  %8197 = vmatmul.mubr.bf16.gmra.mrb[0].mxu0 %v6547
  %v8198 = vpop.f32.mrb[0].mxu0
  %v8199 = vadd.f32 0.0, %v8198
  %v8200 = vpop.f32.mrb[0].mxu0
  %v8201 = vpop.f32.mrb[0].mxu0
  %v8202 = vadd.f32 0.0, %v8201
  %v8203 = vpop.f32.mrb[0].mxu0
  %8204 = vmatprep.mubr.bf16.mxu0 %v6557
  %8205 = vmatmul.mubr.bf16.gmra.mrb[0].mxu0 %v6556
  %v8206 = vpop.f32.mrb[0].mxu0
  %v8207 = vadd.f32 0.0, %v8206
  %v8208 = vpop.f32.mrb[0].mxu0
  %v8209 = vpop.f32.mrb[0].mxu0
  %v8210 = vadd.f32 0.0, %v8209
  %v8211 = vpop.f32.mrb[0].mxu0
  %8212 = vmatprep.mubr.bf16.mxu0 %v6566
  %8213 = vmatmul.mubr.bf16.gmra.mrb[0].mxu0 %v6565
  %v8214 = vpop.f32.mrb[0].mxu0
  %v8215 = vadd.f32 0.0, %v8214
  %v8216 = vpop.f32.mrb[0].mxu0
  %v8217 = vpop.f32.mrb[0].mxu0
  %v8218 = vadd.f32 0.0, %v8217
  %v8219 = vpop.f32.mrb[0].mxu0
  %8220 = vmatprep.mubr.bf16.mxu0 %v6575
  %8221 = vmatmul.mubr.bf16.gmra.mrb[0].mxu0 %v6574
  %v8222 = vpop.f32.mrb[0].mxu0
  %v8223 = vadd.f32 0.0, %v8222
  %v8224 = vpop.f32.mrb[0].mxu0
  %v8225 = vpop.f32.mrb[0].mxu0
  %v8226 = vadd.f32 0.0, %v8225
  %v8227 = vpop.f32.mrb[0].mxu0
  %8228 = vmatprep.mubr.bf16.mxu0 %v6584
  %8229 = vmatmul.mubr.bf16.gmra.mrb[0].mxu0 %v6583
  %v8230 = vpop.f32.mrb[0].mxu0
  %v8231 = vadd.f32 0.0, %v8230
  %v8232 = vpop.f32.mrb[0].mxu0
  %v8233 = vpop.f32.mrb[0].mxu0
  %v8234 = vadd.f32 0.0, %v8233
  %v8235 = vpop.f32.mrb[0].mxu0
  %8236 = vmatprep.mubr.bf16.mxu0 %v6593
  %8237 = vmatmul.mubr.bf16.gmra.mrb[0].mxu0 %v6592
  %v8238 = vpop.f32.mrb[0].mxu0
  %v8239 = vadd.f32 0.0, %v8238
  %v8240 = vpop.f32.mrb[0].mxu0
  %v8241 = vpop.f32.mrb[0].mxu0
  %v8242 = vadd.f32 0.0, %v8241
  %v8243 = vpop.f32.mrb[0].mxu0
  %8244 = vmatprep.mubr.bf16.mxu0 %v6602
  %8245 = vmatmul.mubr.bf16.gmra.mrb[0].mxu0 %v6601
  %v8246 = vpop.f32.mrb[0].mxu0
  %v8247 = vadd.f32 0.0, %v8246
  %v8248 = vpop.f32.mrb[0].mxu0
  %v8249 = vpop.f32.mrb[0].mxu0
  %v8250 = vadd.f32 0.0, %v8249
  %v8251 = vpop.f32.mrb[0].mxu0
  %8252 = vmatprep.mubr.bf16.mxu0 %v6611
  %8253 = vmatmul.mubr.bf16.gmra.mrb[0].mxu0 %v6610
  %v8254 = vpop.f32.mrb[0].mxu0
  %v8255 = vadd.f32 0.0, %v8254
  %v8256 = vpop.f32.mrb[0].mxu0
  %v8257 = vpop.f32.mrb[0].mxu0
  %v8258 = vadd.f32 0.0, %v8257
  %v8259 = vpop.f32.mrb[0].mxu0
  %8260 = vmatprep.mubr.bf16.mxu0 %v6620
  %8261 = vmatmul.mubr.bf16.gmra.mrb[0].mxu0 %v6619
  %v8262 = vpop.f32.mrb[0].mxu0
  %v8263 = vadd.f32 0.0, %v8262
  %v8264 = vpop.f32.mrb[0].mxu0
  %v8265 = vpop.f32.mrb[0].mxu0
  %v8266 = vadd.f32 0.0, %v8265
  %v8267 = vpop.f32.mrb[0].mxu0
  %8268 = vmatprep.mubr.bf16.mxu0 %v6629
  %8269 = vmatmul.mubr.bf16.gmra.mrb[0].mxu0 %v6628
  %v8270 = vpop.f32.mrb[0].mxu0
  %v8271 = vadd.f32 0.0, %v8270
  %v8272 = vpop.f32.mrb[0].mxu0
  %v8273 = vpop.f32.mrb[0].mxu0
  %v8274 = vadd.f32 0.0, %v8273
  %v8275 = vpop.f32.mrb[0].mxu0
  %8276 = vmatprep.mubr.bf16.mxu0 %v6638
  %8277 = vmatmul.mubr.bf16.gmra.mrb[0].mxu0 %v6637
  %v8278 = vpop.f32.mrb[0].mxu0
  %v8279 = vadd.f32 0.0, %v8278
  %v8280 = vpop.f32.mrb[0].mxu0
  %v8281 = vpop.f32.mrb[0].mxu0
  %v8282 = vadd.f32 0.0, %v8281
  %v8283 = vpop.f32.mrb[0].mxu0
  %8284 = vmatprep.mubr.bf16.mxu0 %v6647
  %8285 = vmatmul.mubr.bf16.gmra.mrb[0].mxu0 %v6646
  %v8286 = vpop.f32.mrb[0].mxu0
  %v8287 = vadd.f32 0.0, %v8286
  %v8288 = vpop.f32.mrb[0].mxu0
  %v8289 = vpop.f32.mrb[0].mxu0
  %v8290 = vadd.f32 0.0, %v8289
  %v8291 = vpop.f32.mrb[0].mxu0
  %8292 = vmatprep.mubr.bf16.mxu0 %v6656
  %8293 = vmatmul.mubr.bf16.gmra.mrb[0].mxu0 %v6655
  %v8294 = vpop.f32.mrb[0].mxu0
  %v8295 = vadd.f32 0.0, %v8294
  %v8296 = vpop.f32.mrb[0].mxu0
  %v8297 = vpop.f32.mrb[0].mxu0
  %v8298 = vadd.f32 0.0, %v8297
  %v8299 = vpop.f32.mrb[0].mxu0
  %8300 = vdwg.mxu0
  %8301 = vmatprep.subr.bf16.mxu0 0
  %8302 = vmatpush1.bf16.msra.mxu0 %v7111
  %8303 = vmatprep.subr.bf16.mxu0 0
  %8304 = vmatpush1.bf16.msra.mxu0 %v7112
  %8305 = vmatprep.subr.bf16.mxu0 0
  %8306 = vmatpush1.bf16.msra.mxu0 %v7113
  %8307 = vmatprep.subr.bf16.mxu0 0
  %8308 = vmatpush1.bf16.msra.mxu0 %v7114
  %8309 = vmatprep.subr.bf16.mxu0 0
  %8310 = vmatpush1.bf16.msra.mxu0 %v7115
  %8311 = vmatprep.subr.bf16.mxu0 0
  %8312 = vmatpush1.bf16.msra.mxu0 %v7116
  %8313 = vmatprep.subr.bf16.mxu0 0
  %8314 = vmatpush1.bf16.msra.mxu0 %v7117
  %8315 = vmatprep.subr.bf16.mxu0 0
  %8316 = vmatpush1.bf16.msra.mxu0 %v7118
  %8317 = vmatprep.subr.bf16.mxu0 0
  %8318 = vmatpush1.bf16.msra.mxu0 %v7119
  %8319 = vmatprep.subr.bf16.mxu0 0
  %8320 = vmatpush1.bf16.msra.mxu0 %v7120
  %8321 = vmatprep.subr.bf16.mxu0 0
  %8322 = vmatpush1.bf16.msra.mxu0 %v7121
  %8323 = vmatprep.subr.bf16.mxu0 0
  %8324 = vmatpush1.bf16.msra.mxu0 %v7122
  %8325 = vmatprep.subr.bf16.mxu0 0
  %8326 = vmatpush1.bf16.msra.mxu0 %v7123
  %8327 = vmatprep.subr.bf16.mxu0 0
  %8328 = vmatpush1.bf16.msra.mxu0 %v7124
  %8329 = vmatprep.subr.bf16.mxu0 0
  %8330 = vmatpush1.bf16.msra.mxu0 %v7125
  %8331 = vmatprep.subr.bf16.mxu0 0
  %8332 = vmatpush1.bf16.msra.mxu0 %v7126
  %8333 = vmatprep.mubr.bf16.mxu0 %v6523
  %8334 = vmatmul.mubr.bf16.gmra.mrb[0].mxu0 %v8044
  %v8335 = vpop.f32.mrb[0].mxu0
  %v8336 = vadd.f32 %v8175, %v8335
  %v8337 = vpop.f32.mrb[0].mxu0
  %v8338 = vpop.f32.mrb[0].mxu0
  %v8339 = vadd.f32 %v8178, %v8338
  %v8340 = vpop.f32.mrb[0].mxu0
  %8341 = vmatprep.mubr.bf16.mxu0 %v6532
  %8342 = vmatmul.mubr.bf16.gmra.mrb[0].mxu0 %v8047
  %v8343 = vpop.f32.mrb[0].mxu0
  %v8344 = vadd.f32 %v8183, %v8343
  %v8345 = vpop.f32.mrb[0].mxu0
  %v8346 = vpop.f32.mrb[0].mxu0
  %v8347 = vadd.f32 %v8186, %v8346
  %v8348 = vpop.f32.mrb[0].mxu0
  %8349 = vmatprep.mubr.bf16.mxu0 %v6541
  %8350 = vmatmul.mubr.bf16.gmra.mrb[0].mxu0 %v8050
  %v8351 = vpop.f32.mrb[0].mxu0
  %v8352 = vadd.f32 %v8191, %v8351
  %v8353 = vpop.f32.mrb[0].mxu0
  %v8354 = vpop.f32.mrb[0].mxu0
  %v8355 = vadd.f32 %v8194, %v8354
  %v8356 = vpop.f32.mrb[0].mxu0
  %8357 = vmatprep.mubr.bf16.mxu0 %v6550
  %8358 = vmatmul.mubr.bf16.gmra.mrb[0].mxu0 %v8053
  %v8359 = vpop.f32.mrb[0].mxu0
  %v8360 = vadd.f32 %v8199, %v8359
  %v8361 = vpop.f32.mrb[0].mxu0
  %v8362 = vpop.f32.mrb[0].mxu0
  %v8363 = vadd.f32 %v8202, %v8362
  %v8364 = vpop.f32.mrb[0].mxu0
  %8365 = vmatprep.mubr.bf16.mxu0 %v6559
  %8366 = vmatmul.mubr.bf16.gmra.mrb[0].mxu0 %v8056
  %v8367 = vpop.f32.mrb[0].mxu0
  %v8368 = vadd.f32 %v8207, %v8367
  %v8369 = vpop.f32.mrb[0].mxu0
  %v8370 = vpop.f32.mrb[0].mxu0
  %v8371 = vadd.f32 %v8210, %v8370
  %v8372 = vpop.f32.mrb[0].mxu0
  %8373 = vmatprep.mubr.bf16.mxu0 %v6568
  %8374 = vmatmul.mubr.bf16.gmra.mrb[0].mxu0 %v8059
  %v8375 = vpop.f32.mrb[0].mxu0
  %v8376 = vadd.f32 %v8215, %v8375
  %v8377 = vpop.f32.mrb[0].mxu0
  %v8378 = vpop.f32.mrb[0].mxu0
  %v8379 = vadd.f32 %v8218, %v8378
  %v8380 = vpop.f32.mrb[0].mxu0
  %8381 = vmatprep.mubr.bf16.mxu0 %v6577
  %8382 = vmatmul.mubr.bf16.gmra.mrb[0].mxu0 %v8062
  %v8383 = vpop.f32.mrb[0].mxu0
  %v8384 = vadd.f32 %v8223, %v8383
  %v8385 = vpop.f32.mrb[0].mxu0
  %v8386 = vpop.f32.mrb[0].mxu0
  %v8387 = vadd.f32 %v8226, %v8386
  %v8388 = vpop.f32.mrb[0].mxu0
  %8389 = vmatprep.mubr.bf16.mxu0 %v6586
  %8390 = vmatmul.mubr.bf16.gmra.mrb[0].mxu0 %v8065
  %v8391 = vpop.f32.mrb[0].mxu0
  %v8392 = vadd.f32 %v8231, %v8391
  %v8393 = vpop.f32.mrb[0].mxu0
  %v8394 = vpop.f32.mrb[0].mxu0
  %v8395 = vadd.f32 %v8234, %v8394
  %v8396 = vpop.f32.mrb[0].mxu0
  %8397 = vmatprep.mubr.bf16.mxu0 %v6595
  %8398 = vmatmul.mubr.bf16.gmra.mrb[0].mxu0 %v8068
  %v8399 = vpop.f32.mrb[0].mxu0
  %v8400 = vadd.f32 %v8239, %v8399
  %v8401 = vpop.f32.mrb[0].mxu0
  %v8402 = vpop.f32.mrb[0].mxu0
  %v8403 = vadd.f32 %v8242, %v8402
  %v8404 = vpop.f32.mrb[0].mxu0
  %8405 = vmatprep.mubr.bf16.mxu0 %v6604
  %8406 = vmatmul.mubr.bf16.gmra.mrb[0].mxu0 %v8071
  %v8407 = vpop.f32.mrb[0].mxu0
  %v8408 = vadd.f32 %v8247, %v8407
  %v8409 = vpop.f32.mrb[0].mxu0
  %v8410 = vpop.f32.mrb[0].mxu0
  %v8411 = vadd.f32 %v8250, %v8410
  %v8412 = vpop.f32.mrb[0].mxu0
  %8413 = vmatprep.mubr.bf16.mxu0 %v6613
  %8414 = vmatmul.mubr.bf16.gmra.mrb[0].mxu0 %v8074
  %v8415 = vpop.f32.mrb[0].mxu0
  %v8416 = vadd.f32 %v8255, %v8415
  %v8417 = vpop.f32.mrb[0].mxu0
  %v8418 = vpop.f32.mrb[0].mxu0
  %v8419 = vadd.f32 %v8258, %v8418
  %v8420 = vpop.f32.mrb[0].mxu0
  %8421 = vmatprep.mubr.bf16.mxu0 %v6622
  %8422 = vmatmul.mubr.bf16.gmra.mrb[0].mxu0 %v8077
  %v8423 = vpop.f32.mrb[0].mxu0
  %v8424 = vadd.f32 %v8263, %v8423
  %v8425 = vpop.f32.mrb[0].mxu0
  %v8426 = vpop.f32.mrb[0].mxu0
  %v8427 = vadd.f32 %v8266, %v8426
  %v8428 = vpop.f32.mrb[0].mxu0
  %8429 = vmatprep.mubr.bf16.mxu0 %v6631
  %8430 = vmatmul.mubr.bf16.gmra.mrb[0].mxu0 %v8080
  %v8431 = vpop.f32.mrb[0].mxu0
  %v8432 = vadd.f32 %v8271, %v8431
  %v8433 = vpop.f32.mrb[0].mxu0
  %v8434 = vpop.f32.mrb[0].mxu0
  %v8435 = vadd.f32 %v8274, %v8434
  %v8436 = vpop.f32.mrb[0].mxu0
  %8437 = vmatprep.mubr.bf16.mxu0 %v6640
  %8438 = vmatmul.mubr.bf16.gmra.mrb[0].mxu0 %v8083
  %v8439 = vpop.f32.mrb[0].mxu0
  %v8440 = vadd.f32 %v8279, %v8439
  %v8441 = vpop.f32.mrb[0].mxu0
  %v8442 = vpop.f32.mrb[0].mxu0
  %v8443 = vadd.f32 %v8282, %v8442
  %v8444 = vpop.f32.mrb[0].mxu0
  %8445 = vmatprep.mubr.bf16.mxu0 %v6649
  %8446 = vmatmul.mubr.bf16.gmra.mrb[0].mxu0 %v8086
  %v8447 = vpop.f32.mrb[0].mxu0
  %v8448 = vadd.f32 %v8287, %v8447
  %v8449 = vpop.f32.mrb[0].mxu0
  %v8450 = vpop.f32.mrb[0].mxu0
  %v8451 = vadd.f32 %v8290, %v8450
  %v8452 = vpop.f32.mrb[0].mxu0
  %8453 = vmatprep.mubr.bf16.mxu0 %v6658
  %8454 = vmatmul.mubr.bf16.gmra.mrb[0].mxu0 %v8089
  %v8455 = vpop.f32.mrb[0].mxu0
  %v8456 = vadd.f32 %v8295, %v8455
  %v8457 = vpop.f32.mrb[0].mxu0
  %v8458 = vpop.f32.mrb[0].mxu0
  %v8459 = vadd.f32 %v8298, %v8458
  %v8460 = vpop.f32.mrb[0].mxu0
  %8461 = vdwg.mxu0
  %8462 = vmatprep.subr.bf16.mxu0 0
  %8463 = vmatpush1.bf16.msra.mxu0 %v7127
  %8464 = vmatprep.subr.bf16.mxu0 0
  %8465 = vmatpush1.bf16.msra.mxu0 %v7128
  %8466 = vmatprep.subr.bf16.mxu0 0
  %8467 = vmatpush1.bf16.msra.mxu0 %v7129
  %8468 = vmatprep.subr.bf16.mxu0 0
  %8469 = vmatpush1.bf16.msra.mxu0 %v7130
  %8470 = vmatprep.subr.bf16.mxu0 0
  %8471 = vmatpush1.bf16.msra.mxu0 %v7131
  %8472 = vmatprep.subr.bf16.mxu0 0
  %8473 = vmatpush1.bf16.msra.mxu0 %v7132
  %8474 = vmatprep.subr.bf16.mxu0 0
  %8475 = vmatpush1.bf16.msra.mxu0 %v7133
  %8476 = vmatprep.subr.bf16.mxu0 0
  %8477 = vmatpush1.bf16.msra.mxu0 %v7134
  %8478 = vmatprep.subr.bf16.mxu0 0
  %8479 = vmatpush1.bf16.msra.mxu0 %v7135
  %8480 = vmatprep.subr.bf16.mxu0 0
  %8481 = vmatpush1.bf16.msra.mxu0 %v7136
  %8482 = vmatprep.subr.bf16.mxu0 0
  %8483 = vmatpush1.bf16.msra.mxu0 %v7137
  %8484 = vmatprep.subr.bf16.mxu0 0
  %8485 = vmatpush1.bf16.msra.mxu0 %v7138
  %8486 = vmatprep.subr.bf16.mxu0 0
  %8487 = vmatpush1.bf16.msra.mxu0 %v7139
  %8488 = vmatprep.subr.bf16.mxu0 0
  %8489 = vmatpush1.bf16.msra.mxu0 %v7140
  %8490 = vmatprep.subr.bf16.mxu0 0
  %8491 = vmatpush1.bf16.msra.mxu0 %v7141
  %8492 = vmatprep.subr.bf16.mxu0 0
  %8493 = vmatpush1.bf16.msra.mxu0 %v7142
  %8494 = vmatprep.mubr.bf16.mxu0 %v8045
  %8495 = vmatmul.mubr.bf16.gmra.mrb[0].mxu0 %v6524
  %v8496 = vpop.f32.mrb[0].mxu0
  %v8497 = vadd.f32 %v8336, %v8496
  %v8498 = vpop.f32.mrb[0].mxu0
  %v8499 = vpop.f32.mrb[0].mxu0
  %v8500 = vadd.f32 %v8339, %v8499
  %v8501 = vpop.f32.mrb[0].mxu0
  %8502 = vmatprep.mubr.bf16.mxu0 %v8048
  %8503 = vmatmul.mubr.bf16.gmra.mrb[0].mxu0 %v6533
  %v8504 = vpop.f32.mrb[0].mxu0
  %v8505 = vadd.f32 %v8344, %v8504
  %v8506 = vpop.f32.mrb[0].mxu0
  %v8507 = vpop.f32.mrb[0].mxu0
  %v8508 = vadd.f32 %v8347, %v8507
  %v8509 = vpop.f32.mrb[0].mxu0
  %8510 = vmatprep.mubr.bf16.mxu0 %v8051
  %8511 = vmatmul.mubr.bf16.gmra.mrb[0].mxu0 %v6542
  %v8512 = vpop.f32.mrb[0].mxu0
  %v8513 = vadd.f32 %v8352, %v8512
  %v8514 = vpop.f32.mrb[0].mxu0
  %v8515 = vpop.f32.mrb[0].mxu0
  %v8516 = vadd.f32 %v8355, %v8515
  %v8517 = vpop.f32.mrb[0].mxu0
  %8518 = vmatprep.mubr.bf16.mxu0 %v8054
  %8519 = vmatmul.mubr.bf16.gmra.mrb[0].mxu0 %v6551
  %v8520 = vpop.f32.mrb[0].mxu0
  %v8521 = vadd.f32 %v8360, %v8520
  %v8522 = vpop.f32.mrb[0].mxu0
  %v8523 = vpop.f32.mrb[0].mxu0
  %v8524 = vadd.f32 %v8363, %v8523
  %v8525 = vpop.f32.mrb[0].mxu0
  %8526 = vmatprep.mubr.bf16.mxu0 %v8057
  %8527 = vmatmul.mubr.bf16.gmra.mrb[0].mxu0 %v6560
  %v8528 = vpop.f32.mrb[0].mxu0
  %v8529 = vadd.f32 %v8368, %v8528
  %v8530 = vpop.f32.mrb[0].mxu0
  %v8531 = vpop.f32.mrb[0].mxu0
  %v8532 = vadd.f32 %v8371, %v8531
  %v8533 = vpop.f32.mrb[0].mxu0
  %8534 = vmatprep.mubr.bf16.mxu0 %v8060
  %8535 = vmatmul.mubr.bf16.gmra.mrb[0].mxu0 %v6569
  %v8536 = vpop.f32.mrb[0].mxu0
  %v8537 = vadd.f32 %v8376, %v8536
  %v8538 = vpop.f32.mrb[0].mxu0
  %v8539 = vpop.f32.mrb[0].mxu0
  %v8540 = vadd.f32 %v8379, %v8539
  %v8541 = vpop.f32.mrb[0].mxu0
  %8542 = vmatprep.mubr.bf16.mxu0 %v8063
  %8543 = vmatmul.mubr.bf16.gmra.mrb[0].mxu0 %v6578
  %v8544 = vpop.f32.mrb[0].mxu0
  %v8545 = vadd.f32 %v8384, %v8544
  %v8546 = vpop.f32.mrb[0].mxu0
  %v8547 = vpop.f32.mrb[0].mxu0
  %v8548 = vadd.f32 %v8387, %v8547
  %v8549 = vpop.f32.mrb[0].mxu0
  %8550 = vmatprep.mubr.bf16.mxu0 %v8066
  %8551 = vmatmul.mubr.bf16.gmra.mrb[0].mxu0 %v6587
  %v8552 = vpop.f32.mrb[0].mxu0
  %v8553 = vadd.f32 %v8392, %v8552
  %v8554 = vpop.f32.mrb[0].mxu0
  %v8555 = vpop.f32.mrb[0].mxu0
  %v8556 = vadd.f32 %v8395, %v8555
  %v8557 = vpop.f32.mrb[0].mxu0
  %8558 = vmatprep.mubr.bf16.mxu0 %v8069
  %8559 = vmatmul.mubr.bf16.gmra.mrb[0].mxu0 %v6596
  %v8560 = vpop.f32.mrb[0].mxu0
  %v8561 = vadd.f32 %v8400, %v8560
  %v8562 = vpop.f32.mrb[0].mxu0
  %v8563 = vpop.f32.mrb[0].mxu0
  %v8564 = vadd.f32 %v8403, %v8563
  %v8565 = vpop.f32.mrb[0].mxu0
  %8566 = vmatprep.mubr.bf16.mxu0 %v8072
  %8567 = vmatmul.mubr.bf16.gmra.mrb[0].mxu0 %v6605
  %v8568 = vpop.f32.mrb[0].mxu0
  %v8569 = vadd.f32 %v8408, %v8568
  %v8570 = vpop.f32.mrb[0].mxu0
  %v8571 = vpop.f32.mrb[0].mxu0
  %v8572 = vadd.f32 %v8411, %v8571
  %v8573 = vpop.f32.mrb[0].mxu0
  %8574 = vmatprep.mubr.bf16.mxu0 %v8075
  %8575 = vmatmul.mubr.bf16.gmra.mrb[0].mxu0 %v6614
  %v8576 = vpop.f32.mrb[0].mxu0
  %v8577 = vadd.f32 %v8416, %v8576
  %v8578 = vpop.f32.mrb[0].mxu0
  %v8579 = vpop.f32.mrb[0].mxu0
  %v8580 = vadd.f32 %v8419, %v8579
  %v8581 = vpop.f32.mrb[0].mxu0
  %8582 = vmatprep.mubr.bf16.mxu0 %v8078
  %8583 = vmatmul.mubr.bf16.gmra.mrb[0].mxu0 %v6623
  %v8584 = vpop.f32.mrb[0].mxu0
  %v8585 = vadd.f32 %v8424, %v8584
  %v8586 = vpop.f32.mrb[0].mxu0
  %v8587 = vpop.f32.mrb[0].mxu0
  %v8588 = vadd.f32 %v8427, %v8587
  %v8589 = vpop.f32.mrb[0].mxu0
  %8590 = vmatprep.mubr.bf16.mxu0 %v8081
  %8591 = vmatmul.mubr.bf16.gmra.mrb[0].mxu0 %v6632
  %v8592 = vpop.f32.mrb[0].mxu0
  %v8593 = vadd.f32 %v8432, %v8592
  %v8594 = vpop.f32.mrb[0].mxu0
  %v8595 = vpop.f32.mrb[0].mxu0
  %v8596 = vadd.f32 %v8435, %v8595
  %v8597 = vpop.f32.mrb[0].mxu0
  %8598 = vmatprep.mubr.bf16.mxu0 %v8084
  %8599 = vmatmul.mubr.bf16.gmra.mrb[0].mxu0 %v6641
  %v8600 = vpop.f32.mrb[0].mxu0
  %v8601 = vadd.f32 %v8440, %v8600
  %v8602 = vpop.f32.mrb[0].mxu0
  %v8603 = vpop.f32.mrb[0].mxu0
  %v8604 = vadd.f32 %v8443, %v8603
  %v8605 = vpop.f32.mrb[0].mxu0
  %8606 = vmatprep.mubr.bf16.mxu0 %v8087
  %8607 = vmatmul.mubr.bf16.gmra.mrb[0].mxu0 %v6650
  %v8608 = vpop.f32.mrb[0].mxu0
  %v8609 = vadd.f32 %v8448, %v8608
  %v8610 = vpop.f32.mrb[0].mxu0
  %v8611 = vpop.f32.mrb[0].mxu0
  %v8612 = vadd.f32 %v8451, %v8611
  %v8613 = vpop.f32.mrb[0].mxu0
  %8614 = vmatprep.mubr.bf16.mxu0 %v8090
  %8615 = vmatmul.mubr.bf16.gmra.mrb[0].mxu0 %v6659
  %v8616 = vpop.f32.mrb[0].mxu0
  %v8617 = vadd.f32 %v8456, %v8616
  %v8618 = vpop.f32.mrb[0].mxu0
  %v8619 = vpop.f32.mrb[0].mxu0
  %v8620 = vadd.f32 %v8459, %v8619
  %v8621 = vpop.f32.mrb[0].mxu0
  %8622 = vdwg.mxu0
  %8623 = vmatprep.subr.bf16.mxu0 0
  %8624 = vmatpush1.bf16.msra.mxu0 %v7143
  %8625 = vmatprep.subr.bf16.mxu0 0
  %8626 = vmatpush1.bf16.msra.mxu0 %v7144
  %8627 = vmatprep.subr.bf16.mxu0 0
  %8628 = vmatpush1.bf16.msra.mxu0 %v7145
  %8629 = vmatprep.subr.bf16.mxu0 0
  %8630 = vmatpush1.bf16.msra.mxu0 %v7146
  %8631 = vmatprep.subr.bf16.mxu0 0
  %8632 = vmatpush1.bf16.msra.mxu0 %v7147
  %8633 = vmatprep.subr.bf16.mxu0 0
  %8634 = vmatpush1.bf16.msra.mxu0 %v7148
  %8635 = vmatprep.subr.bf16.mxu0 0
  %8636 = vmatpush1.bf16.msra.mxu0 %v7149
  %8637 = vmatprep.subr.bf16.mxu0 0
  %8638 = vmatpush1.bf16.msra.mxu0 %v7150
  %8639 = vmatprep.subr.bf16.mxu0 0
  %8640 = vmatpush1.bf16.msra.mxu0 %v7151
  %8641 = vmatprep.subr.bf16.mxu0 0
  %8642 = vmatpush1.bf16.msra.mxu0 %v7152
  %8643 = vmatprep.subr.bf16.mxu0 0
  %8644 = vmatpush1.bf16.msra.mxu0 %v7153
  %8645 = vmatprep.subr.bf16.mxu0 0
  %8646 = vmatpush1.bf16.msra.mxu0 %v7154
  %8647 = vmatprep.subr.bf16.mxu0 0
  %8648 = vmatpush1.bf16.msra.mxu0 %v7155
  %8649 = vmatprep.subr.bf16.mxu0 0
  %8650 = vmatpush1.bf16.msra.mxu0 %v7156
  %8651 = vmatprep.subr.bf16.mxu0 0
  %8652 = vmatpush1.bf16.msra.mxu0 %v7157
  %8653 = vmatprep.subr.bf16.mxu0 0
  %8654 = vmatpush1.bf16.msra.mxu0 %v7158
  %8655 = vmatprep.mubr.bf16.mxu0 %v6527
  %8656 = vmatmul.mubr.bf16.gmra.mrb[0].mxu0 %v6526
  %v8657 = vpop.f32.mrb[0].mxu0
  %v8658 = vadd.f32 %v8497, %v8657
  %v8659 = vpop.f32.mrb[0].mxu0
  %v8660 = vpop.f32.mrb[0].mxu0
  %v8661 = vadd.f32 %v8500, %v8660
  %v8662 = vpop.f32.mrb[0].mxu0
  %8663 = vmatprep.mubr.bf16.mxu0 %v6536
  %8664 = vmatmul.mubr.bf16.gmra.mrb[0].mxu0 %v6535
  %v8665 = vpop.f32.mrb[0].mxu0
  %v8666 = vadd.f32 %v8505, %v8665
  %v8667 = vpop.f32.mrb[0].mxu0
  %v8668 = vpop.f32.mrb[0].mxu0
  %v8669 = vadd.f32 %v8508, %v8668
  %v8670 = vpop.f32.mrb[0].mxu0
  %8671 = vmatprep.mubr.bf16.mxu0 %v6545
  %8672 = vmatmul.mubr.bf16.gmra.mrb[0].mxu0 %v6544
  %v8673 = vpop.f32.mrb[0].mxu0
  %v8674 = vadd.f32 %v8513, %v8673
  %v8675 = vpop.f32.mrb[0].mxu0
  %v8676 = vpop.f32.mrb[0].mxu0
  %v8677 = vadd.f32 %v8516, %v8676
  %v8678 = vpop.f32.mrb[0].mxu0
  %8679 = vmatprep.mubr.bf16.mxu0 %v6554
  %8680 = vmatmul.mubr.bf16.gmra.mrb[0].mxu0 %v6553
  %v8681 = vpop.f32.mrb[0].mxu0
  %v8682 = vadd.f32 %v8521, %v8681
  %v8683 = vpop.f32.mrb[0].mxu0
  %v8684 = vpop.f32.mrb[0].mxu0
  %v8685 = vadd.f32 %v8524, %v8684
  %v8686 = vpop.f32.mrb[0].mxu0
  %8687 = vmatprep.mubr.bf16.mxu0 %v6563
  %8688 = vmatmul.mubr.bf16.gmra.mrb[0].mxu0 %v6562
  %v8689 = vpop.f32.mrb[0].mxu0
  %v8690 = vadd.f32 %v8529, %v8689
  %v8691 = vpop.f32.mrb[0].mxu0
  %v8692 = vpop.f32.mrb[0].mxu0
  %v8693 = vadd.f32 %v8532, %v8692
  %v8694 = vpop.f32.mrb[0].mxu0
  %8695 = vmatprep.mubr.bf16.mxu0 %v6572
  %8696 = vmatmul.mubr.bf16.gmra.mrb[0].mxu0 %v6571
  %v8697 = vpop.f32.mrb[0].mxu0
  %v8698 = vadd.f32 %v8537, %v8697
  %v8699 = vpop.f32.mrb[0].mxu0
  %v8700 = vpop.f32.mrb[0].mxu0
  %v8701 = vadd.f32 %v8540, %v8700
  %v8702 = vpop.f32.mrb[0].mxu0
  %8703 = vmatprep.mubr.bf16.mxu0 %v6581
  %8704 = vmatmul.mubr.bf16.gmra.mrb[0].mxu0 %v6580
  %v8705 = vpop.f32.mrb[0].mxu0
  %v8706 = vadd.f32 %v8545, %v8705
  %v8707 = vpop.f32.mrb[0].mxu0
  %v8708 = vpop.f32.mrb[0].mxu0
  %v8709 = vadd.f32 %v8548, %v8708
  %v8710 = vpop.f32.mrb[0].mxu0
  %8711 = vmatprep.mubr.bf16.mxu0 %v6590
  %8712 = vmatmul.mubr.bf16.gmra.mrb[0].mxu0 %v6589
  %v8713 = vpop.f32.mrb[0].mxu0
  %v8714 = vadd.f32 %v8553, %v8713
  %v8715 = vpop.f32.mrb[0].mxu0
  %v8716 = vpop.f32.mrb[0].mxu0
  %v8717 = vadd.f32 %v8556, %v8716
  %v8718 = vpop.f32.mrb[0].mxu0
  %8719 = vmatprep.mubr.bf16.mxu0 %v6599
  %8720 = vmatmul.mubr.bf16.gmra.mrb[0].mxu0 %v6598
  %v8721 = vpop.f32.mrb[0].mxu0
  %v8722 = vadd.f32 %v8561, %v8721
  %v8723 = vpop.f32.mrb[0].mxu0
  %v8724 = vpop.f32.mrb[0].mxu0
  %v8725 = vadd.f32 %v8564, %v8724
  %v8726 = vpop.f32.mrb[0].mxu0
  %8727 = vmatprep.mubr.bf16.mxu0 %v6608
  %8728 = vmatmul.mubr.bf16.gmra.mrb[0].mxu0 %v6607
  %v8729 = vpop.f32.mrb[0].mxu0
  %v8730 = vadd.f32 %v8569, %v8729
  %v8731 = vpop.f32.mrb[0].mxu0
  %v8732 = vpop.f32.mrb[0].mxu0
  %v8733 = vadd.f32 %v8572, %v8732
  %v8734 = vpop.f32.mrb[0].mxu0
  %8735 = vmatprep.mubr.bf16.mxu0 %v6617
  %8736 = vmatmul.mubr.bf16.gmra.mrb[0].mxu0 %v6616
  %v8737 = vpop.f32.mrb[0].mxu0
  %v8738 = vadd.f32 %v8577, %v8737
  %v8739 = vpop.f32.mrb[0].mxu0
  %v8740 = vpop.f32.mrb[0].mxu0
  %v8741 = vadd.f32 %v8580, %v8740
  %v8742 = vpop.f32.mrb[0].mxu0
  %8743 = vmatprep.mubr.bf16.mxu0 %v6626
  %8744 = vmatmul.mubr.bf16.gmra.mrb[0].mxu0 %v6625
  %v8745 = vpop.f32.mrb[0].mxu0
  %v8746 = vadd.f32 %v8585, %v8745
  %v8747 = vpop.f32.mrb[0].mxu0
  %v8748 = vpop.f32.mrb[0].mxu0
  %v8749 = vadd.f32 %v8588, %v8748
  %v8750 = vpop.f32.mrb[0].mxu0
  %8751 = vmatprep.mubr.bf16.mxu0 %v6635
  %8752 = vmatmul.mubr.bf16.gmra.mrb[0].mxu0 %v6634
  %v8753 = vpop.f32.mrb[0].mxu0
  %v8754 = vadd.f32 %v8593, %v8753
  %v8755 = vpop.f32.mrb[0].mxu0
  %v8756 = vpop.f32.mrb[0].mxu0
  %v8757 = vadd.f32 %v8596, %v8756
  %v8758 = vpop.f32.mrb[0].mxu0
  %8759 = vmatprep.mubr.bf16.mxu0 %v6644
  %8760 = vmatmul.mubr.bf16.gmra.mrb[0].mxu0 %v6643
  %v8761 = vpop.f32.mrb[0].mxu0
  %v8762 = vadd.f32 %v8601, %v8761
  %v8763 = vpop.f32.mrb[0].mxu0
  %v8764 = vpop.f32.mrb[0].mxu0
  %v8765 = vadd.f32 %v8604, %v8764
  %v8766 = vpop.f32.mrb[0].mxu0
  %8767 = vmatprep.mubr.bf16.mxu0 %v6653
  %8768 = vmatmul.mubr.bf16.gmra.mrb[0].mxu0 %v6652
  %v8769 = vpop.f32.mrb[0].mxu0
  %v8770 = vadd.f32 %v8609, %v8769
  %v8771 = vpop.f32.mrb[0].mxu0
  %v8772 = vpop.f32.mrb[0].mxu0
  %v8773 = vadd.f32 %v8612, %v8772
  %v8774 = vpop.f32.mrb[0].mxu0
  %8775 = vmatprep.mubr.bf16.mxu0 %v6662
  %8776 = vmatmul.mubr.bf16.gmra.mrb[0].mxu0 %v6661
  %v8777 = vpop.f32.mrb[0].mxu0
  %v8778 = vadd.f32 %v8617, %v8777
  %v8779 = vpop.f32.mrb[0].mxu0
  %v8780 = vpop.f32.mrb[0].mxu0
  %v8781 = vadd.f32 %v8620, %v8780
  %v8782 = vpop.f32.mrb[0].mxu0
  %8783 = vdwg.mxu0
  %8784 = vmatprep.subr.bf16.mxu0 0
  %8785 = vmatpush1.bf16.msra.mxu0 %v7159
  %8786 = vmatprep.subr.bf16.mxu0 0
  %8787 = vmatpush1.bf16.msra.mxu0 %v7160
  %8788 = vmatprep.subr.bf16.mxu0 0
  %8789 = vmatpush1.bf16.msra.mxu0 %v7161
  %8790 = vmatprep.subr.bf16.mxu0 0
  %8791 = vmatpush1.bf16.msra.mxu0 %v7162
  %8792 = vmatprep.subr.bf16.mxu0 0
  %8793 = vmatpush1.bf16.msra.mxu0 %v7163
  %8794 = vmatprep.subr.bf16.mxu0 0
  %8795 = vmatpush1.bf16.msra.mxu0 %v7164
  %8796 = vmatprep.subr.bf16.mxu0 0
  %8797 = vmatpush1.bf16.msra.mxu0 %v7165
  %8798 = vmatprep.subr.bf16.mxu0 0
  %8799 = vmatpush1.bf16.msra.mxu0 %v7166
  %8800 = vmatprep.subr.bf16.mxu0 0
  %8801 = vmatpush1.bf16.msra.mxu0 0
  %8802 = vmatprep.subr.bf16.mxu0 0
  %8803 = vmatpush1.bf16.msra.mxu0 0
  %8804 = vmatprep.subr.bf16.mxu0 0
  %8805 = vmatpush1.bf16.msra.mxu0 0
  %8806 = vmatprep.subr.bf16.mxu0 0
  %8807 = vmatpush1.bf16.msra.mxu0 0
  %8808 = vmatprep.subr.bf16.mxu0 0
  %8809 = vmatpush1.bf16.msra.mxu0 0
  %8810 = vmatprep.subr.bf16.mxu0 0
  %8811 = vmatpush1.bf16.msra.mxu0 0
  %8812 = vmatprep.subr.bf16.mxu0 0
  %8813 = vmatpush1.bf16.msra.mxu0 0
  %8814 = vmatprep.subr.bf16.mxu0 0
  %8815 = vmatpush1.bf16.msra.mxu0 0
  %8816 = vmatprep.mubr.bf16.mxu0 0
  %8817 = vmatmul.mubr.bf16.gmra.mrb[0].mxu0 %v8046
  %v8818 = vpop.f32.mrb[0].mxu0
  %v8819 = vadd.f32 %v8658, %v8818
  %v8820 = vpop.f32.mrb[0].mxu0
  %v8821 = vpop.f32.mrb[0].mxu0
  %v8822 = vadd.f32 %v8661, %v8821
  %v8823 = vpop.f32.mrb[0].mxu0
  %8824 = vmatprep.mubr.bf16.mxu0 0
  %8825 = vmatmul.mubr.bf16.gmra.mrb[0].mxu0 %v8049
  %v8826 = vpop.f32.mrb[0].mxu0
  %v8827 = vadd.f32 %v8666, %v8826
  %v8828 = vpop.f32.mrb[0].mxu0
  %v8829 = vpop.f32.mrb[0].mxu0
  %v8830 = vadd.f32 %v8669, %v8829
  %v8831 = vpop.f32.mrb[0].mxu0
  %8832 = vmatprep.mubr.bf16.mxu0 0
  %8833 = vmatmul.mubr.bf16.gmra.mrb[0].mxu0 %v8052
  %v8834 = vpop.f32.mrb[0].mxu0
  %v8835 = vadd.f32 %v8674, %v8834
  %v8836 = vpop.f32.mrb[0].mxu0
  %v8837 = vpop.f32.mrb[0].mxu0
  %v8838 = vadd.f32 %v8677, %v8837
  %v8839 = vpop.f32.mrb[0].mxu0
  %8840 = vmatprep.mubr.bf16.mxu0 0
  %8841 = vmatmul.mubr.bf16.gmra.mrb[0].mxu0 %v8055
  %v8842 = vpop.f32.mrb[0].mxu0
  %v8843 = vadd.f32 %v8682, %v8842
  %v8844 = vpop.f32.mrb[0].mxu0
  %v8845 = vpop.f32.mrb[0].mxu0
  %v8846 = vadd.f32 %v8685, %v8845
  %v8847 = vpop.f32.mrb[0].mxu0
  %8848 = vmatprep.mubr.bf16.mxu0 0
  %8849 = vmatmul.mubr.bf16.gmra.mrb[0].mxu0 %v8058
  %v8850 = vpop.f32.mrb[0].mxu0
  %v8851 = vadd.f32 %v8690, %v8850
  %v8852 = vpop.f32.mrb[0].mxu0
  %v8853 = vpop.f32.mrb[0].mxu0
  %v8854 = vadd.f32 %v8693, %v8853
  %v8855 = vpop.f32.mrb[0].mxu0
  %8856 = vmatprep.mubr.bf16.mxu0 0
  %8857 = vmatmul.mubr.bf16.gmra.mrb[0].mxu0 %v8061
  %v8858 = vpop.f32.mrb[0].mxu0
  %v8859 = vadd.f32 %v8698, %v8858
  %v8860 = vpop.f32.mrb[0].mxu0
  %v8861 = vpop.f32.mrb[0].mxu0
  %v8862 = vadd.f32 %v8701, %v8861
  %v8863 = vpop.f32.mrb[0].mxu0
  %8864 = vmatprep.mubr.bf16.mxu0 0
  %8865 = vmatmul.mubr.bf16.gmra.mrb[0].mxu0 %v8064
  %v8866 = vpop.f32.mrb[0].mxu0
  %v8867 = vadd.f32 %v8706, %v8866
  %v8868 = vpop.f32.mrb[0].mxu0
  %v8869 = vpop.f32.mrb[0].mxu0
  %v8870 = vadd.f32 %v8709, %v8869
  %v8871 = vpop.f32.mrb[0].mxu0
  %8872 = vmatprep.mubr.bf16.mxu0 0
  %8873 = vmatmul.mubr.bf16.gmra.mrb[0].mxu0 %v8067
  %v8874 = vpop.f32.mrb[0].mxu0
  %v8875 = vadd.f32 %v8714, %v8874
  %v8876 = vpop.f32.mrb[0].mxu0
  %v8877 = vpop.f32.mrb[0].mxu0
  %v8878 = vadd.f32 %v8717, %v8877
  %v8879 = vpop.f32.mrb[0].mxu0
  %8880 = vmatprep.mubr.bf16.mxu0 0
  %8881 = vmatmul.mubr.bf16.gmra.mrb[0].mxu0 %v8070
  %v8882 = vpop.f32.mrb[0].mxu0
  %v8883 = vadd.f32 %v8722, %v8882
  %v8884 = vpop.f32.mrb[0].mxu0
  %v8885 = vpop.f32.mrb[0].mxu0
  %v8886 = vadd.f32 %v8725, %v8885
  %v8887 = vpop.f32.mrb[0].mxu0
  %8888 = vmatprep.mubr.bf16.mxu0 0
  %8889 = vmatmul.mubr.bf16.gmra.mrb[0].mxu0 %v8073
  %v8890 = vpop.f32.mrb[0].mxu0
  %v8891 = vadd.f32 %v8730, %v8890
  %v8892 = vpop.f32.mrb[0].mxu0
  %v8893 = vpop.f32.mrb[0].mxu0
  %v8894 = vadd.f32 %v8733, %v8893
  %v8895 = vpop.f32.mrb[0].mxu0
  %8896 = vmatprep.mubr.bf16.mxu0 0
  %8897 = vmatmul.mubr.bf16.gmra.mrb[0].mxu0 %v8076
  %v8898 = vpop.f32.mrb[0].mxu0
  %v8899 = vadd.f32 %v8738, %v8898
  %v8900 = vpop.f32.mrb[0].mxu0
  %v8901 = vpop.f32.mrb[0].mxu0
  %v8902 = vadd.f32 %v8741, %v8901
  %v8903 = vpop.f32.mrb[0].mxu0
  %8904 = vmatprep.mubr.bf16.mxu0 0
  %8905 = vmatmul.mubr.bf16.gmra.mrb[0].mxu0 %v8079
  %v8906 = vpop.f32.mrb[0].mxu0
  %v8907 = vadd.f32 %v8746, %v8906
  %v8908 = vpop.f32.mrb[0].mxu0
  %v8909 = vpop.f32.mrb[0].mxu0
  %v8910 = vadd.f32 %v8749, %v8909
  %v8911 = vpop.f32.mrb[0].mxu0
  %8912 = vmatprep.mubr.bf16.mxu0 0
  %8913 = vmatmul.mubr.bf16.gmra.mrb[0].mxu0 %v8082
  %v8914 = vpop.f32.mrb[0].mxu0
  %v8915 = vadd.f32 %v8754, %v8914
  %v8916 = vpop.f32.mrb[0].mxu0
  %v8917 = vpop.f32.mrb[0].mxu0
  %v8918 = vadd.f32 %v8757, %v8917
  %v8919 = vpop.f32.mrb[0].mxu0
  %8920 = vmatprep.mubr.bf16.mxu0 0
  %8921 = vmatmul.mubr.bf16.gmra.mrb[0].mxu0 %v8085
  %v8922 = vpop.f32.mrb[0].mxu0
  %v8923 = vadd.f32 %v8762, %v8922
  %v8924 = vpop.f32.mrb[0].mxu0
  %v8925 = vpop.f32.mrb[0].mxu0
  %v8926 = vadd.f32 %v8765, %v8925
  %v8927 = vpop.f32.mrb[0].mxu0
  %8928 = vmatprep.mubr.bf16.mxu0 0
  %8929 = vmatmul.mubr.bf16.gmra.mrb[0].mxu0 %v8088
  %v8930 = vpop.f32.mrb[0].mxu0
  %v8931 = vadd.f32 %v8770, %v8930
  %v8932 = vpop.f32.mrb[0].mxu0
  %v8933 = vpop.f32.mrb[0].mxu0
  %v8934 = vadd.f32 %v8773, %v8933
  %v8935 = vpop.f32.mrb[0].mxu0
  %8936 = vmatprep.mubr.bf16.mxu0 0
  %8937 = vmatmul.mubr.bf16.gmra.mrb[0].mxu0 %v8091
  %v8938 = vpop.f32.mrb[0].mxu0
  %v8939 = vadd.f32 %v8778, %v8938
  %v8940 = vpop.f32.mrb[0].mxu0
  %v8941 = vpop.f32.mrb[0].mxu0
  %v8942 = vadd.f32 %v8781, %v8941
  %v8943 = vpop.f32.mrb[0].mxu0
  %8944 = vdwg.mxu0
  %v8945 = vmax.f32 %v7918, %v8819
  %v8946 = vmax.f32 %v7921, %v8822
  %v8947 = vmax.f32 %v7926, %v8827
  %v8948 = vmax.f32 %v7929, %v8830
  %v8949 = vmax.f32 %v7934, %v8835
  %v8950 = vmax.f32 %v7937, %v8838
  %v8951 = vmax.f32 %v7942, %v8843
  %v8952 = vmax.f32 %v7945, %v8846
  %v8953 = vmax.f32 %v7950, %v8851
  %v8954 = vmax.f32 %v7953, %v8854
  %v8955 = vmax.f32 %v7958, %v8859
  %v8956 = vmax.f32 %v7961, %v8862
  %v8957 = vmax.f32 %v7966, %v8867
  %v8958 = vmax.f32 %v7969, %v8870
  %v8959 = vmax.f32 %v7974, %v8875
  %v8960 = vmax.f32 %v7977, %v8878
  %v8961 = vmax.f32 %v7982, %v8883
  %v8962 = vmax.f32 %v7985, %v8886
  %v8963 = vmax.f32 %v7990, %v8891
  %v8964 = vmax.f32 %v7993, %v8894
  %v8965 = vmax.f32 %v7998, %v8899
  %v8966 = vmax.f32 %v8001, %v8902
  %v8967 = vmax.f32 %v8006, %v8907
  %v8968 = vmax.f32 %v8009, %v8910
  %v8969 = vmax.f32 %v8014, %v8915
  %v8970 = vmax.f32 %v8017, %v8918
  %v8971 = vmax.f32 %v8022, %v8923
  %v8972 = vmax.f32 %v8025, %v8926
  %v8973 = vmax.f32 %v8030, %v8931
  %v8974 = vmax.f32 %v8033, %v8934
  %v8975 = vmax.f32 %v8038, %v8939
  %v8976 = vmax.f32 %v8041, %v8942
  %v8977 = vmax.f32 %v8945, %v8946
  %v8978 = vmax.f32 %v8947, %v8948
  %v8979 = vmax.f32 %v8949, %v8950
  %v8980 = vmax.f32 %v8951, %v8952
  %v8981 = vmax.f32 %v8953, %v8954
  %v8982 = vmax.f32 %v8955, %v8956
  %v8983 = vmax.f32 %v8957, %v8958
  %v8984 = vmax.f32 %v8959, %v8960
  %v8985 = vmax.f32 %v8961, %v8962
  %v8986 = vmax.f32 %v8963, %v8964
  %v8987 = vmax.f32 %v8965, %v8966
  %v8988 = vmax.f32 %v8967, %v8968
  %v8989 = vmax.f32 %v8969, %v8970
  %v8990 = vmax.f32 %v8971, %v8972
  %v8991 = vmax.f32 %v8973, %v8974
  %v8992 = vmax.f32 %v8975, %v8976
  %v8993 = vld [vmem:[%s4] sm:$0x1]
  %v8995 = vlaneseq
  %v8996 = vshrl.u32 %v8995, 7
  %v8997 = vsub.s32 0, %v8996
  %v8998 = vrot.slane %v8993, %v8997
  %v9000 = vadd.f32 %v8977, %v8998
  %v9001 = vadd.f32 %v8978, %v8998
  %v9002 = vadd.f32 %v8979, %v8998
  %v9003 = vadd.f32 %v8980, %v8998
  %v9004 = vadd.f32 %v8981, %v8998
  %v9005 = vadd.f32 %v8982, %v8998
  %v9006 = vadd.f32 %v8983, %v8998
  %v9007 = vadd.f32 %v8984, %v8998
  %v9008 = vadd.f32 %v8985, %v8998
  %v9009 = vadd.f32 %v8986, %v8998
  %v9010 = vadd.f32 %v8987, %v8998
  %v9011 = vadd.f32 %v8988, %v8998
  %v9012 = vadd.f32 %v8989, %v8998
  %v9013 = vadd.f32 %v8990, %v8998
  %v9014 = vadd.f32 %v8991, %v8998
  %v9015 = vadd.f32 %v8992, %v8998
  %v9016 = vmax.f32 %v9000, 0.0
  %v9017 = vmax.f32 %v9001, 0.0
  %v9018 = vmax.f32 %v9002, 0.0
  %v9019 = vmax.f32 %v9003, 0.0
  %v9020 = vmax.f32 %v9004, 0.0
  %v9021 = vmax.f32 %v9005, 0.0
  %v9022 = vmax.f32 %v9006, 0.0
  %v9023 = vmax.f32 %v9007, 0.0
  %v9024 = vmax.f32 %v9008, 0.0
  %v9025 = vmax.f32 %v9009, 0.0
  %v9026 = vmax.f32 %v9010, 0.0
  %v9027 = vmax.f32 %v9011, 0.0
  %v9028 = vmax.f32 %v9012, 0.0
  %v9029 = vmax.f32 %v9013, 0.0
  %v9030 = vmax.f32 %v9014, 0.0
  %v9031 = vmax.f32 %v9015, 0.0
  %v9032 = vpack.c.bf16 %v9016, %v9016
  %v9033 = vpack.c.bf16 %v9017, %v9017
  %v9034 = vpack.c.bf16 %v9018, %v9018
  %v9035 = vpack.c.bf16 %v9019, %v9019
  %v9036 = vpack.c.bf16 %v9020, %v9020
  %v9037 = vpack.c.bf16 %v9021, %v9021
  %v9038 = vpack.c.bf16 %v9022, %v9022
  %v9039 = vpack.c.bf16 %v9023, %v9023
  %v9040 = vpack.c.bf16 %v9024, %v9024
  %v9041 = vpack.c.bf16 %v9025, %v9025
  %v9042 = vpack.c.bf16 %v9026, %v9026
  %v9043 = vpack.c.bf16 %v9027, %v9027
  %v9044 = vpack.c.bf16 %v9028, %v9028
  %v9045 = vpack.c.bf16 %v9029, %v9029
  %v9046 = vpack.c.bf16 %v9030, %v9030
  %v9047 = vpack.c.bf16 %v9031, %v9031
  %9048 = vst [vmem:[%s5] sm:$0xf] %v9032
  %9049 = vst [vmem:[%s5 + $0x4] sm:$0xf] %v9033
  %9050 = vst [vmem:[%s5 + $0x8] sm:$0xf] %v9034
  %9051 = vst [vmem:[%s5 + $0xc] sm:$0xf] %v9035
  %9052 = vst [vmem:[%s5 + $0x10] sm:$0xf] %v9036
  %9053 = vst [vmem:[%s5 + $0x14] sm:$0xf] %v9037
  %9054 = vst [vmem:[%s5 + $0x18] sm:$0xf] %v9038
  %9055 = vst [vmem:[%s5 + $0x1c] sm:$0xf] %v9039
  %9056 = vst [vmem:[%s5 + $0x20] sm:$0xf] %v9040
  %9057 = vst [vmem:[%s5 + $0x24] sm:$0xf] %v9041
  %9058 = vst [vmem:[%s5 + $0x28] sm:$0xf] %v9042
  %9059 = vst [vmem:[%s5 + $0x2c] sm:$0xf] %v9043
  %9060 = vst [vmem:[%s5 + $0x30] sm:$0xf] %v9044
  %9061 = vst [vmem:[%s5 + $0x34] sm:$0xf] %v9045
  %9062 = vst [vmem:[%s5 + $0x38] sm:$0xf] %v9046
  %9063 = vst [vmem:[%s5 + $0x3c] sm:$0xf] %v9047
  // Predicated region
  $region22: #{cnn_forward.2} parent=0 // pred_check
    _
  $region23: #{cnn_forward.2} parent=0 // pred_check_branch
    %9065 = sbr.rel (0) target = $region25
  $region24: #{cnn_forward.2} parent=0 // pred_region
    _
  $region25: #{cnn_forward.2} parent=0 // pred_fallthru
    _
  // Predicated region
  $region26: #{cnn_forward.2} parent=0 // pred_check
    _
  $region27: #{cnn_forward.2} parent=0 // pred_check_branch
    %9067 = sbr.rel (0) target = $region29
  $region28: #{cnn_forward.2} parent=0 // pred_region
    _
  $region29: #{cnn_forward.2} parent=0 // pred_fallthru
    _

</llo_original>
